<compile_context>
chip_gen: v7x
topology: tpu7x:2x2x1
jax: 0.10.0
libtpu: 0.0.40
codegen_flags: <defaults>
</compile_context>

<pallas_src>
import numpy as np
import jax
import jax.numpy as jnp
from jax.experimental import pallas as pl
from jax.experimental.pallas import tpu as pltpu

# problem sizes (small, consistent with the module)
N, C_IN, D, H, W = 2, 4, 4, 16, 16
C_OUT = 8
K = 3            # conv kernel size
EPS = 1e-5       # nn.BatchNorm3d default eps

HW = H * W                    # 256  : one (h, w) plane on the lane axis
DHW = D * HW                  # 1024 : one batch element (depth-major) on the lane axis
NDHW = N * DHW                # 2048 : whole batch on the lane axis
HP, WP = H // 2, W // 2
PHW = HP * WP                 # 64
DPHW = D * PHW                # 256  : pooled batch element on the lane axis
KKKC = K * K * K * C_IN       # 108  : true im2col contraction depth
KPAD = 128                    # contraction padded to the MXU-native 128
PADL = PADR = 384             # zero lane halo so every tap is one contiguous shifted read
XLANES = PADL + DHW + PADR    # 1792
CENTER = (K // 2) * K + K // 2  # (kh=1, kw=1) tap needs no boundary mask


def _boundary_masks():
    """(16, DHW) f32; row kh*3+kw zeroes output columns whose (h, w) tap falls outside the plane."""
    hw = np.arange(DHW) % HW
    h, w = hw // W, hw % W
    m = np.ones((16, DHW), np.float32)
    for kh in range(K):
        for kw in range(K):
            row = np.ones((DHW,), np.float32)
            if kh == 0:
                row *= (h != 0)
            if kh == K - 1:
                row *= (h != H - 1)
            if kw == 0:
                row *= (w != 0)
            if kw == K - 1:
                row *= (w != W - 1)
            m[kh * K + kw] = row
    return m


def _pool_matrix():
    """(DHW, DPHW) f32 block-diagonal AvgPool(1,2,2) operator (0 / 0.25 entries)."""
    src = np.arange(DHW)
    d, hw = src // HW, src % HW
    h, w = hw // W, hw % W
    dst = d * PHW + (h // 2) * WP + (w // 2)
    pool = np.zeros((DHW, DPHW), np.float32)
    pool[src, dst] = 0.25
    return pool


_MASKS = _boundary_masks()
_POOL = _pool_matrix()


def _down_block3d_kernel(x_ref, w_ref, b_ref, g_ref, bt_ref, mask_ref, pool_ref,
                         o_ref, patches_ref):
    # Zero the contraction pad rows once (rows 104..107 are overwritten by tap 26;
    # stale NaNs in rows 108..127 would otherwise poison 0 * NaN in the matmul).
    patches_ref[104:KPAD, :] = jnp.zeros((KPAD - 104, NDHW), jnp.float32)

    # ---- phase 1: im2col patches via direct VMEM stores (no register concatenate) ----
    # Depth planes are contiguous on the lane axis, so each tap is one shifted
    # (C_IN, DHW) read; H/W boundary wrap-around is zeroed by the precomputed mask,
    # depth padding by the zero lane halo of the padded input.
    for kh in range(K):
        for kw in range(K):
            combo = kh * K + kw
            m = mask_ref[combo:combo + 1, :] if combo != CENTER else None  # (1, DHW)
            for kd in range(K):
                t = (kd * K + kh) * K + kw
                start = PADL + (kd - 1) * HW + (kh - 1) * W + (kw - 1)
                for n in range(N):
                    tap = x_ref[n, :, start:start + DHW]          # (C_IN, DHW)
                    if m is not None:
                        tap = tap * m
                    patches_ref[t * C_IN:(t + 1) * C_IN,
                                n * DHW:(n + 1) * DHW] = tap

    # ---- phase 2: one MXU matmul for the whole batch + bias ----
    conv = jnp.dot(w_ref[...], patches_ref[...],
                   preferred_element_type=jnp.float32) + b_ref[...]   # (C_OUT, NDHW)

    # ---- phase 3: training-mode BatchNorm (two-pass variance), scale/shift ----
    # conv is only 16 vregs, so a cross-lane jnp.sum is cheap; a ones-(2048,1) MXU
    # reduction would have a pathological sublane layout and is not worth it here.
    cnt = jnp.float32(NDHW)
    mean = jnp.sum(conv, axis=1, keepdims=True) / cnt                 # (C_OUT, 1)
    centered = conv - mean
    var = jnp.sum(centered * centered, axis=1, keepdims=True) / cnt   # biased variance
    scale = g_ref[...] * jax.lax.rsqrt(var + EPS)                     # rsqrt -> EUP
    y = jnp.maximum(centered * scale + bt_ref[...], 0.0)              # BN + ReLU

    # ---- phase 4: AvgPool(1,2,2) as a block-diagonal matmul; full-width aligned stores ----
    for n in range(N):
        o_ref[n] = jnp.dot(y[:, n * DHW:(n + 1) * DHW], pool_ref[...],
                           preferred_element_type=jnp.float32)        # (C_OUT, DPHW)


@jax.jit
def down_block3d(x_ncdhw, w, b, gamma, beta):
    # Host-side glue: flatten (D, H, W) onto the lane axis and add the zero lane halo.
    x_flat = x_ncdhw.astype(jnp.float32).reshape(N, C_IN, DHW)
    x_pad = jnp.pad(x_flat, ((0, 0), (0, 0), (PADL, PADR)))
    # im2col weight, columns ordered (kd, kh, kw, ci) with ci fastest, padded 108 -> 128.
    w_mat = jnp.transpose(w, (0, 2, 3, 4, 1)).reshape(C_OUT, KKKC).astype(jnp.float32)
    w_mat = jnp.pad(w_mat, ((0, 0), (0, KPAD - KKKC)))

    # TODO(synk): BatchNorm running_mean/running_var buffer updates are a training-mode
    # side effect, not part of the module's forward output; they are not produced here.
    pooled = pl.pallas_call(
        _down_block3d_kernel,
        out_shape=jax.ShapeDtypeStruct((N, C_OUT, DPHW), jnp.float32),
        in_specs=[pl.BlockSpec(memory_space=pltpu.MemorySpace.VMEM)] * 7,
        out_specs=pl.BlockSpec(memory_space=pltpu.MemorySpace.VMEM),
        scratch_shapes=[pltpu.VMEM((KPAD, NDHW), jnp.float32)],   # im2col patches (1 MiB)
    )(x_pad, w_mat,
      b.reshape(C_OUT, 1).astype(jnp.float32),
      gamma.reshape(C_OUT, 1).astype(jnp.float32),
      beta.reshape(C_OUT, 1).astype(jnp.float32),
      jnp.asarray(_MASKS), jnp.asarray(_POOL))

    # free reshape back to the PyTorch NCDHW convention
    return pooled.reshape(N, C_OUT, D, HP, WP)


def _reference(x_ncdhw, w, b, gamma, beta):
    """Pure-JAX reference mirroring the PyTorch forward (training-mode BN)."""
    out = jax.lax.conv_general_dilated(
        x_ncdhw, w, window_strides=(1, 1, 1),
        padding=((1, 1),) * 3,
        dimension_numbers=("NCDHW", "OIDHW", "NCDHW"))
    out = out + b.reshape(1, C_OUT, 1, 1, 1)
    mean = out.mean(axis=(0, 2, 3, 4), keepdims=True)
    var = out.var(axis=(0, 2, 3, 4), keepdims=True)
    out = (out - mean) / jnp.sqrt(var + EPS)
    out = out * gamma.reshape(1, C_OUT, 1, 1, 1) + beta.reshape(1, C_OUT, 1, 1, 1)
    out = jnp.maximum(out, 0.0)
    return out.reshape(N, C_OUT, D, HP, 2, WP, 2).mean(axis=(4, 6))


if __name__ == "__main__":
    key = jax.random.PRNGKey(0)
    kx, kwk, kb, kg, kbt = jax.random.split(key, 5)

    # deterministic parameters; Conv3d weight kept in the PyTorch (C_OUT, C_IN, K, K, K) layout
    x = jax.random.normal(kx, (N, C_IN, D, H, W), dtype=jnp.float32)             # NCDHW input
    w = jax.random.normal(kwk, (C_OUT, C_IN, K, K, K), dtype=jnp.float32) * 0.1
    b = jax.random.normal(kb, (C_OUT,), dtype=jnp.float32) * 0.1
    gamma = 1.0 + 0.1 * jax.random.normal(kg, (C_OUT,), dtype=jnp.float32)
    beta = 0.1 * jax.random.normal(kbt, (C_OUT,), dtype=jnp.float32)

    out = jax.block_until_ready(down_block3d(x, w, b, gamma, beta))
    assert out.shape == (N, C_OUT, D, HP, WP), out.shape

    ref = _reference(x, w, b, gamma, beta)
    if not jnp.allclose(out, ref, atol=5e-3, rtol=5e-3):
        raise AssertionError(
            f"mismatch vs reference, max abs err = {jnp.max(jnp.abs(out - ref))}")
    print("KERNEL_OK")
</pallas_src>

<mosaic_0001>
module attributes {stable_mosaic.version = 11 : i64} {
  func.func @_down_block3d_kernel(%arg0: memref<2x4x1792xf32, #tpu.memory_space<vmem>>, %arg1: memref<8x128xf32, #tpu.memory_space<vmem>>, %arg2: memref<8x1xf32, #tpu.memory_space<vmem>>, %arg3: memref<8x1xf32, #tpu.memory_space<vmem>>, %arg4: memref<8x1xf32, #tpu.memory_space<vmem>>, %arg5: memref<16x1024xf32, #tpu.memory_space<vmem>>, %arg6: memref<1024x256xf32, #tpu.memory_space<vmem>>, %arg7: memref<2x8x256xf32, #tpu.memory_space<vmem>>, %arg8: memref<128x2048xf32, #tpu.memory_space<vmem>>) attributes {dimension_semantics = [], scalar_prefetch = 0 : i64, scratch_operands = 1 : i64, tpu.core_type = #tpu.core_type<tc>} {
    %cst = arith.constant 0.000000e+00 : f32
    %0 = vector.broadcast %cst : f32 to vector<24x2048xf32>
    %c104 = arith.constant 104 : index
    %c0 = arith.constant 0 : index
    %1 = vector.load %arg8[%c104, %c0] : memref<128x2048xf32, #tpu.memory_space<vmem>>, vector<24x2048xf32>
    tpu.vector_store %arg8[%c104, %c0], %0 {strides = array<i32>} : memref<128x2048xf32, #tpu.memory_space<vmem>>, vector<24x2048xf32>,
    %c0_0 = arith.constant 0 : index
    %c0_1 = arith.constant 0 : index
    %2 = vector.load %arg5[%c0_0, %c0_1] : memref<16x1024xf32, #tpu.memory_space<vmem>>, vector<1x1024xf32>
    %c0_2 = arith.constant 0 : index
    %c0_3 = arith.constant 0 : index
    %c111 = arith.constant 111 : index
    %3 = vector.load %arg0[%c0_2, %c0_3, %c111] : memref<2x4x1792xf32, #tpu.memory_space<vmem>>, vector<1x4x1024xf32>
    %4 = vector.shape_cast %3 : vector<1x4x1024xf32> to vector<4x1024xf32>
    %5 = vector.broadcast %2 : vector<1x1024xf32> to vector<4x1024xf32>
    %6 = arith.mulf %4, %5 : vector<4x1024xf32>
    %c0_4 = arith.constant 0 : index
    %c0_5 = arith.constant 0 : index
    %7 = vector.load %arg8[%c0_4, %c0_5] : memref<128x2048xf32, #tpu.memory_space<vmem>>, vector<4x1024xf32>
    tpu.vector_store %arg8[%c0_4, %c0_5], %6 {strides = array<i32>} : memref<128x2048xf32, #tpu.memory_space<vmem>>, vector<4x1024xf32>,
    %c1 = arith.constant 1 : index
    %c0_6 = arith.constant 0 : index
    %c111_7 = arith.constant 111 : index
    %8 = vector.load %arg0[%c1, %c0_6, %c111_7] : memref<2x4x1792xf32, #tpu.memory_space<vmem>>, vector<1x4x1024xf32>
    %9 = vector.shape_cast %8 : vector<1x4x1024xf32> to vector<4x1024xf32>
    %10 = vector.broadcast %2 : vector<1x1024xf32> to vector<4x1024xf32>
    %11 = arith.mulf %9, %10 : vector<4x1024xf32>
    %c0_8 = arith.constant 0 : index
    %c1024 = arith.constant 1024 : index
    %12 = vector.load %arg8[%c0_8, %c1024] : memref<128x2048xf32, #tpu.memory_space<vmem>>, vector<4x1024xf32>
    tpu.vector_store %arg8[%c0_8, %c1024], %11 {strides = array<i32>} : memref<128x2048xf32, #tpu.memory_space<vmem>>, vector<4x1024xf32>,
    %c0_9 = arith.constant 0 : index
    %c0_10 = arith.constant 0 : index
    %c367 = arith.constant 367 : index
    %13 = vector.load %arg0[%c0_9, %c0_10, %c367] : memref<2x4x1792xf32, #tpu.memory_space<vmem>>, vector<1x4x1024xf32>
    %14 = vector.shape_cast %13 : vector<1x4x1024xf32> to vector<4x1024xf32>
    %15 = vector.broadcast %2 : vector<1x1024xf32> to vector<4x1024xf32>
    %16 = arith.mulf %14, %15 : vector<4x1024xf32>
    %c36 = arith.constant 36 : index
    %c0_11 = arith.constant 0 : index
    %17 = vector.load %arg8[%c36, %c0_11] : memref<128x2048xf32, #tpu.memory_space<vmem>>, vector<4x1024xf32>
    tpu.vector_store %arg8[%c36, %c0_11], %16 {strides = array<i32>} : memref<128x2048xf32, #tpu.memory_space<vmem>>, vector<4x1024xf32>,
    %c1_12 = arith.constant 1 : index
    %c0_13 = arith.constant 0 : index
    %c367_14 = arith.constant 367 : index
    %18 = vector.load %arg0[%c1_12, %c0_13, %c367_14] : memref<2x4x1792xf32, #tpu.memory_space<vmem>>, vector<1x4x1024xf32>
    %19 = vector.shape_cast %18 : vector<1x4x1024xf32> to vector<4x1024xf32>
    %20 = vector.broadcast %2 : vector<1x1024xf32> to vector<4x1024xf32>
    %21 = arith.mulf %19, %20 : vector<4x1024xf32>
    %c36_15 = arith.constant 36 : index
    %c1024_16 = arith.constant 1024 : index
    %22 = vector.load %arg8[%c36_15, %c1024_16] : memref<128x2048xf32, #tpu.memory_space<vmem>>, vector<4x1024xf32>
    tpu.vector_store %arg8[%c36_15, %c1024_16], %21 {strides = array<i32>} : memref<128x2048xf32, #tpu.memory_space<vmem>>, vector<4x1024xf32>,
    %c0_17 = arith.constant 0 : index
    %c0_18 = arith.constant 0 : index
    %c623 = arith.constant 623 : index
    %23 = vector.load %arg0[%c0_17, %c0_18, %c623] : memref<2x4x1792xf32, #tpu.memory_space<vmem>>, vector<1x4x1024xf32>
    %24 = vector.shape_cast %23 : vector<1x4x1024xf32> to vector<4x1024xf32>
    %25 = vector.broadcast %2 : vector<1x1024xf32> to vector<4x1024xf32>
    %26 = arith.mulf %24, %25 : vector<4x1024xf32>
    %c72 = arith.constant 72 : index
    %c0_19 = arith.constant 0 : index
    %27 = vector.load %arg8[%c72, %c0_19] : memref<128x2048xf32, #tpu.memory_space<vmem>>, vector<4x1024xf32>
    tpu.vector_store %arg8[%c72, %c0_19], %26 {strides = array<i32>} : memref<128x2048xf32, #tpu.memory_space<vmem>>, vector<4x1024xf32>,
    %c1_20 = arith.constant 1 : index
    %c0_21 = arith.constant 0 : index
    %c623_22 = arith.constant 623 : index
    %28 = vector.load %arg0[%c1_20, %c0_21, %c623_22] : memref<2x4x1792xf32, #tpu.memory_space<vmem>>, vector<1x4x1024xf32>
    %29 = vector.shape_cast %28 : vector<1x4x1024xf32> to vector<4x1024xf32>
    %30 = vector.broadcast %2 : vector<1x1024xf32> to vector<4x1024xf32>
    %31 = arith.mulf %29, %30 : vector<4x1024xf32>
    %c72_23 = arith.constant 72 : index
    %c1024_24 = arith.constant 1024 : index
    %32 = vector.load %arg8[%c72_23, %c1024_24] : memref<128x2048xf32, #tpu.memory_space<vmem>>, vector<4x1024xf32>
    tpu.vector_store %arg8[%c72_23, %c1024_24], %31 {strides = array<i32>} : memref<128x2048xf32, #tpu.memory_space<vmem>>, vector<4x1024xf32>,
    %c1_25 = arith.constant 1 : index
    %c0_26 = arith.constant 0 : index
    %33 = vector.load %arg5[%c1_25, %c0_26] : memref<16x1024xf32, #tpu.memory_space<vmem>>, vector<1x1024xf32>
    %c0_27 = arith.constant 0 : index
    %c0_28 = arith.constant 0 : index
    %c112 = arith.constant 112 : index
    %34 = vector.load %arg0[%c0_27, %c0_28, %c112] : memref<2x4x1792xf32, #tpu.memory_space<vmem>>, vector<1x4x1024xf32>
    %35 = vector.shape_cast %34 : vector<1x4x1024xf32> to vector<4x1024xf32>
    %36 = vector.broadcast %33 : vector<1x1024xf32> to vector<4x1024xf32>
    %37 = arith.mulf %35, %36 : vector<4x1024xf32>
    %c4 = arith.constant 4 : index
    %c0_29 = arith.constant 0 : index
    %38 = vector.load %arg8[%c4, %c0_29] : memref<128x2048xf32, #tpu.memory_space<vmem>>, vector<4x1024xf32>
    tpu.vector_store %arg8[%c4, %c0_29], %37 {strides = array<i32>} : memref<128x2048xf32, #tpu.memory_space<vmem>>, vector<4x1024xf32>,
    %c1_30 = arith.constant 1 : index
    %c0_31 = arith.constant 0 : index
    %c112_32 = arith.constant 112 : index
    %39 = vector.load %arg0[%c1_30, %c0_31, %c112_32] : memref<2x4x1792xf32, #tpu.memory_space<vmem>>, vector<1x4x1024xf32>
    %40 = vector.shape_cast %39 : vector<1x4x1024xf32> to vector<4x1024xf32>
    %41 = vector.broadcast %33 : vector<1x1024xf32> to vector<4x1024xf32>
    %42 = arith.mulf %40, %41 : vector<4x1024xf32>
    %c4_33 = arith.constant 4 : index
    %c1024_34 = arith.constant 1024 : index
    %43 = vector.load %arg8[%c4_33, %c1024_34] : memref<128x2048xf32, #tpu.memory_space<vmem>>, vector<4x1024xf32>
    tpu.vector_store %arg8[%c4_33, %c1024_34], %42 {strides = array<i32>} : memref<128x2048xf32, #tpu.memory_space<vmem>>, vector<4x1024xf32>,
    %c0_35 = arith.constant 0 : index
    %c0_36 = arith.constant 0 : index
    %c368 = arith.constant 368 : index
    %44 = vector.load %arg0[%c0_35, %c0_36, %c368] : memref<2x4x1792xf32, #tpu.memory_space<vmem>>, vector<1x4x1024xf32>
    %45 = vector.shape_cast %44 : vector<1x4x1024xf32> to vector<4x1024xf32>
    %46 = vector.broadcast %33 : vector<1x1024xf32> to vector<4x1024xf32>
    %47 = arith.mulf %45, %46 : vector<4x1024xf32>
    %c40 = arith.constant 40 : index
    %c0_37 = arith.constant 0 : index
    %48 = vector.load %arg8[%c40, %c0_37] : memref<128x2048xf32, #tpu.memory_space<vmem>>, vector<4x1024xf32>
    tpu.vector_store %arg8[%c40, %c0_37], %47 {strides = array<i32>} : memref<128x2048xf32, #tpu.memory_space<vmem>>, vector<4x1024xf32>,
    %c1_38 = arith.constant 1 : index
    %c0_39 = arith.constant 0 : index
    %c368_40 = arith.constant 368 : index
    %49 = vector.load %arg0[%c1_38, %c0_39, %c368_40] : memref<2x4x1792xf32, #tpu.memory_space<vmem>>, vector<1x4x1024xf32>
    %50 = vector.shape_cast %49 : vector<1x4x1024xf32> to vector<4x1024xf32>
    %51 = vector.broadcast %33 : vector<1x1024xf32> to vector<4x1024xf32>
    %52 = arith.mulf %50, %51 : vector<4x1024xf32>
    %c40_41 = arith.constant 40 : index
    %c1024_42 = arith.constant 1024 : index
    %53 = vector.load %arg8[%c40_41, %c1024_42] : memref<128x2048xf32, #tpu.memory_space<vmem>>, vector<4x1024xf32>
    tpu.vector_store %arg8[%c40_41, %c1024_42], %52 {strides = array<i32>} : memref<128x2048xf32, #tpu.memory_space<vmem>>, vector<4x1024xf32>,
    %c0_43 = arith.constant 0 : index
    %c0_44 = arith.constant 0 : index
    %c624 = arith.constant 624 : index
    %54 = vector.load %arg0[%c0_43, %c0_44, %c624] : memref<2x4x1792xf32, #tpu.memory_space<vmem>>, vector<1x4x1024xf32>
    %55 = vector.shape_cast %54 : vector<1x4x1024xf32> to vector<4x1024xf32>
    %56 = vector.broadcast %33 : vector<1x1024xf32> to vector<4x1024xf32>
    %57 = arith.mulf %55, %56 : vector<4x1024xf32>
    %c76 = arith.constant 76 : index
    %c0_45 = arith.constant 0 : index
    %58 = vector.load %arg8[%c76, %c0_45] : memref<128x2048xf32, #tpu.memory_space<vmem>>, vector<4x1024xf32>
    tpu.vector_store %arg8[%c76, %c0_45], %57 {strides = array<i32>} : memref<128x2048xf32, #tpu.memory_space<vmem>>, vector<4x1024xf32>,
    %c1_46 = arith.constant 1 : index
    %c0_47 = arith.constant 0 : index
    %c624_48 = arith.constant 624 : index
    %59 = vector.load %arg0[%c1_46, %c0_47, %c624_48] : memref<2x4x1792xf32, #tpu.memory_space<vmem>>, vector<1x4x1024xf32>
    %60 = vector.shape_cast %59 : vector<1x4x1024xf32> to vector<4x1024xf32>
    %61 = vector.broadcast %33 : vector<1x1024xf32> to vector<4x1024xf32>
    %62 = arith.mulf %60, %61 : vector<4x1024xf32>
    %c76_49 = arith.constant 76 : index
    %c1024_50 = arith.constant 1024 : index
    %63 = vector.load %arg8[%c76_49, %c1024_50] : memref<128x2048xf32, #tpu.memory_space<vmem>>, vector<4x1024xf32>
    tpu.vector_store %arg8[%c76_49, %c1024_50], %62 {strides = array<i32>} : memref<128x2048xf32, #tpu.memory_space<vmem>>, vector<4x1024xf32>,
    %c2 = arith.constant 2 : index
    %c0_51 = arith.constant 0 : index
    %64 = vector.load %arg5[%c2, %c0_51] : memref<16x1024xf32, #tpu.memory_space<vmem>>, vector<1x1024xf32>
    %c0_52 = arith.constant 0 : index
    %c0_53 = arith.constant 0 : index
    %c113 = arith.constant 113 : index
    %65 = vector.load %arg0[%c0_52, %c0_53, %c113] : memref<2x4x1792xf32, #tpu.memory_space<vmem>>, vector<1x4x1024xf32>
    %66 = vector.shape_cast %65 : vector<1x4x1024xf32> to vector<4x1024xf32>
    %67 = vector.broadcast %64 : vector<1x1024xf32> to vector<4x1024xf32>
    %68 = arith.mulf %66, %67 : vector<4x1024xf32>
    %c8 = arith.constant 8 : index
    %c0_54 = arith.constant 0 : index
    %69 = vector.load %arg8[%c8, %c0_54] : memref<128x2048xf32, #tpu.memory_space<vmem>>, vector<4x1024xf32>
    tpu.vector_store %arg8[%c8, %c0_54], %68 {strides = array<i32>} : memref<128x2048xf32, #tpu.memory_space<vmem>>, vector<4x1024xf32>,
    %c1_55 = arith.constant 1 : index
    %c0_56 = arith.constant 0 : index
    %c113_57 = arith.constant 113 : index
    %70 = vector.load %arg0[%c1_55, %c0_56, %c113_57] : memref<2x4x1792xf32, #tpu.memory_space<vmem>>, vector<1x4x1024xf32>
    %71 = vector.shape_cast %70 : vector<1x4x1024xf32> to vector<4x1024xf32>
    %72 = vector.broadcast %64 : vector<1x1024xf32> to vector<4x1024xf32>
    %73 = arith.mulf %71, %72 : vector<4x1024xf32>
    %c8_58 = arith.constant 8 : index
    %c1024_59 = arith.constant 1024 : index
    %74 = vector.load %arg8[%c8_58, %c1024_59] : memref<128x2048xf32, #tpu.memory_space<vmem>>, vector<4x1024xf32>
    tpu.vector_store %arg8[%c8_58, %c1024_59], %73 {strides = array<i32>} : memref<128x2048xf32, #tpu.memory_space<vmem>>, vector<4x1024xf32>,
    %c0_60 = arith.constant 0 : index
    %c0_61 = arith.constant 0 : index
    %c369 = arith.constant 369 : index
    %75 = vector.load %arg0[%c0_60, %c0_61, %c369] : memref<2x4x1792xf32, #tpu.memory_space<vmem>>, vector<1x4x1024xf32>
    %76 = vector.shape_cast %75 : vector<1x4x1024xf32> to vector<4x1024xf32>
    %77 = vector.broadcast %64 : vector<1x1024xf32> to vector<4x1024xf32>
    %78 = arith.mulf %76, %77 : vector<4x1024xf32>
    %c44 = arith.constant 44 : index
    %c0_62 = arith.constant 0 : index
    %79 = vector.load %arg8[%c44, %c0_62] : memref<128x2048xf32, #tpu.memory_space<vmem>>, vector<4x1024xf32>
    tpu.vector_store %arg8[%c44, %c0_62], %78 {strides = array<i32>} : memref<128x2048xf32, #tpu.memory_space<vmem>>, vector<4x1024xf32>,
    %c1_63 = arith.constant 1 : index
    %c0_64 = arith.constant 0 : index
    %c369_65 = arith.constant 369 : index
    %80 = vector.load %arg0[%c1_63, %c0_64, %c369_65] : memref<2x4x1792xf32, #tpu.memory_space<vmem>>, vector<1x4x1024xf32>
    %81 = vector.shape_cast %80 : vector<1x4x1024xf32> to vector<4x1024xf32>
    %82 = vector.broadcast %64 : vector<1x1024xf32> to vector<4x1024xf32>
    %83 = arith.mulf %81, %82 : vector<4x1024xf32>
    %c44_66 = arith.constant 44 : index
    %c1024_67 = arith.constant 1024 : index
    %84 = vector.load %arg8[%c44_66, %c1024_67] : memref<128x2048xf32, #tpu.memory_space<vmem>>, vector<4x1024xf32>
    tpu.vector_store %arg8[%c44_66, %c1024_67], %83 {strides = array<i32>} : memref<128x2048xf32, #tpu.memory_space<vmem>>, vector<4x1024xf32>,
    %c0_68 = arith.constant 0 : index
    %c0_69 = arith.constant 0 : index
    %c625 = arith.constant 625 : index
    %85 = vector.load %arg0[%c0_68, %c0_69, %c625] : memref<2x4x1792xf32, #tpu.memory_space<vmem>>, vector<1x4x1024xf32>
    %86 = vector.shape_cast %85 : vector<1x4x1024xf32> to vector<4x1024xf32>
    %87 = vector.broadcast %64 : vector<1x1024xf32> to vector<4x1024xf32>
    %88 = arith.mulf %86, %87 : vector<4x1024xf32>
    %c80 = arith.constant 80 : index
    %c0_70 = arith.constant 0 : index
    %89 = vector.load %arg8[%c80, %c0_70] : memref<128x2048xf32, #tpu.memory_space<vmem>>, vector<4x1024xf32>
    tpu.vector_store %arg8[%c80, %c0_70], %88 {strides = array<i32>} : memref<128x2048xf32, #tpu.memory_space<vmem>>, vector<4x1024xf32>,
    %c1_71 = arith.constant 1 : index
    %c0_72 = arith.constant 0 : index
    %c625_73 = arith.constant 625 : index
    %90 = vector.load %arg0[%c1_71, %c0_72, %c625_73] : memref<2x4x1792xf32, #tpu.memory_space<vmem>>, vector<1x4x1024xf32>
    %91 = vector.shape_cast %90 : vector<1x4x1024xf32> to vector<4x1024xf32>
    %92 = vector.broadcast %64 : vector<1x1024xf32> to vector<4x1024xf32>
    %93 = arith.mulf %91, %92 : vector<4x1024xf32>
    %c80_74 = arith.constant 80 : index
    %c1024_75 = arith.constant 1024 : index
    %94 = vector.load %arg8[%c80_74, %c1024_75] : memref<128x2048xf32, #tpu.memory_space<vmem>>, vector<4x1024xf32>
    tpu.vector_store %arg8[%c80_74, %c1024_75], %93 {strides = array<i32>} : memref<128x2048xf32, #tpu.memory_space<vmem>>, vector<4x1024xf32>,
    %c3 = arith.constant 3 : index
    %c0_76 = arith.constant 0 : index
    %95 = vector.load %arg5[%c3, %c0_76] : memref<16x1024xf32, #tpu.memory_space<vmem>>, vector<1x1024xf32>
    %c0_77 = arith.constant 0 : index
    %c0_78 = arith.constant 0 : index
    %c127 = arith.constant 127 : index
    %96 = vector.load %arg0[%c0_77, %c0_78, %c127] : memref<2x4x1792xf32, #tpu.memory_space<vmem>>, vector<1x4x1024xf32>
    %97 = vector.shape_cast %96 : vector<1x4x1024xf32> to vector<4x1024xf32>
    %98 = vector.broadcast %95 : vector<1x1024xf32> to vector<4x1024xf32>
    %99 = arith.mulf %97, %98 : vector<4x1024xf32>
    %c12 = arith.constant 12 : index
    %c0_79 = arith.constant 0 : index
    %100 = vector.load %arg8[%c12, %c0_79] : memref<128x2048xf32, #tpu.memory_space<vmem>>, vector<4x1024xf32>
    tpu.vector_store %arg8[%c12, %c0_79], %99 {strides = array<i32>} : memref<128x2048xf32, #tpu.memory_space<vmem>>, vector<4x1024xf32>,
    %c1_80 = arith.constant 1 : index
    %c0_81 = arith.constant 0 : index
    %c127_82 = arith.constant 127 : index
    %101 = vector.load %arg0[%c1_80, %c0_81, %c127_82] : memref<2x4x1792xf32, #tpu.memory_space<vmem>>, vector<1x4x1024xf32>
    %102 = vector.shape_cast %101 : vector<1x4x1024xf32> to vector<4x1024xf32>
    %103 = vector.broadcast %95 : vector<1x1024xf32> to vector<4x1024xf32>
    %104 = arith.mulf %102, %103 : vector<4x1024xf32>
    %c12_83 = arith.constant 12 : index
    %c1024_84 = arith.constant 1024 : index
    %105 = vector.load %arg8[%c12_83, %c1024_84] : memref<128x2048xf32, #tpu.memory_space<vmem>>, vector<4x1024xf32>
    tpu.vector_store %arg8[%c12_83, %c1024_84], %104 {strides = array<i32>} : memref<128x2048xf32, #tpu.memory_space<vmem>>, vector<4x1024xf32>,
    %c0_85 = arith.constant 0 : index
    %c0_86 = arith.constant 0 : index
    %c383 = arith.constant 383 : index
    %106 = vector.load %arg0[%c0_85, %c0_86, %c383] : memref<2x4x1792xf32, #tpu.memory_space<vmem>>, vector<1x4x1024xf32>
    %107 = vector.shape_cast %106 : vector<1x4x1024xf32> to vector<4x1024xf32>
    %108 = vector.broadcast %95 : vector<1x1024xf32> to vector<4x1024xf32>
    %109 = arith.mulf %107, %108 : vector<4x1024xf32>
    %c48 = arith.constant 48 : index
    %c0_87 = arith.constant 0 : index
    %110 = vector.load %arg8[%c48, %c0_87] : memref<128x2048xf32, #tpu.memory_space<vmem>>, vector<4x1024xf32>
    tpu.vector_store %arg8[%c48, %c0_87], %109 {strides = array<i32>} : memref<128x2048xf32, #tpu.memory_space<vmem>>, vector<4x1024xf32>,
    %c1_88 = arith.constant 1 : index
    %c0_89 = arith.constant 0 : index
    %c383_90 = arith.constant 383 : index
    %111 = vector.load %arg0[%c1_88, %c0_89, %c383_90] : memref<2x4x1792xf32, #tpu.memory_space<vmem>>, vector<1x4x1024xf32>
    %112 = vector.shape_cast %111 : vector<1x4x1024xf32> to vector<4x1024xf32>
    %113 = vector.broadcast %95 : vector<1x1024xf32> to vector<4x1024xf32>
    %114 = arith.mulf %112, %113 : vector<4x1024xf32>
    %c48_91 = arith.constant 48 : index
    %c1024_92 = arith.constant 1024 : index
    %115 = vector.load %arg8[%c48_91, %c1024_92] : memref<128x2048xf32, #tpu.memory_space<vmem>>, vector<4x1024xf32>
    tpu.vector_store %arg8[%c48_91, %c1024_92], %114 {strides = array<i32>} : memref<128x2048xf32, #tpu.memory_space<vmem>>, vector<4x1024xf32>,
    %c0_93 = arith.constant 0 : index
    %c0_94 = arith.constant 0 : index
    %c639 = arith.constant 639 : index
    %116 = vector.load %arg0[%c0_93, %c0_94, %c639] : memref<2x4x1792xf32, #tpu.memory_space<vmem>>, vector<1x4x1024xf32>
    %117 = vector.shape_cast %116 : vector<1x4x1024xf32> to vector<4x1024xf32>
    %118 = vector.broadcast %95 : vector<1x1024xf32> to vector<4x1024xf32>
    %119 = arith.mulf %117, %118 : vector<4x1024xf32>
    %c84 = arith.constant 84 : index
    %c0_95 = arith.constant 0 : index
    %120 = vector.load %arg8[%c84, %c0_95] : memref<128x2048xf32, #tpu.memory_space<vmem>>, vector<4x1024xf32>
    tpu.vector_store %arg8[%c84, %c0_95], %119 {strides = array<i32>} : memref<128x2048xf32, #tpu.memory_space<vmem>>, vector<4x1024xf32>,
    %c1_96 = arith.constant 1 : index
    %c0_97 = arith.constant 0 : index
    %c639_98 = arith.constant 639 : index
    %121 = vector.load %arg0[%c1_96, %c0_97, %c639_98] : memref<2x4x1792xf32, #tpu.memory_space<vmem>>, vector<1x4x1024xf32>
    %122 = vector.shape_cast %121 : vector<1x4x1024xf32> to vector<4x1024xf32>
    %123 = vector.broadcast %95 : vector<1x1024xf32> to vector<4x1024xf32>
    %124 = arith.mulf %122, %123 : vector<4x1024xf32>
    %c84_99 = arith.constant 84 : index
    %c1024_100 = arith.constant 1024 : index
    %125 = vector.load %arg8[%c84_99, %c1024_100] : memref<128x2048xf32, #tpu.memory_space<vmem>>, vector<4x1024xf32>
    tpu.vector_store %arg8[%c84_99, %c1024_100], %124 {strides = array<i32>} : memref<128x2048xf32, #tpu.memory_space<vmem>>, vector<4x1024xf32>,
    %c0_101 = arith.constant 0 : index
    %c0_102 = arith.constant 0 : index
    %c128 = arith.constant 128 : index
    %126 = vector.load %arg0[%c0_101, %c0_102, %c128] : memref<2x4x1792xf32, #tpu.memory_space<vmem>>, vector<1x4x1024xf32>
    %127 = vector.shape_cast %126 : vector<1x4x1024xf32> to vector<4x1024xf32>
    %c16 = arith.constant 16 : index
    %c0_103 = arith.constant 0 : index
    %128 = vector.load %arg8[%c16, %c0_103] : memref<128x2048xf32, #tpu.memory_space<vmem>>, vector<4x1024xf32>
    tpu.vector_store %arg8[%c16, %c0_103], %127 {strides = array<i32>} : memref<128x2048xf32, #tpu.memory_space<vmem>>, vector<4x1024xf32>,
    %c1_104 = arith.constant 1 : index
    %c0_105 = arith.constant 0 : index
    %c128_106 = arith.constant 128 : index
    %129 = vector.load %arg0[%c1_104, %c0_105, %c128_106] : memref<2x4x1792xf32, #tpu.memory_space<vmem>>, vector<1x4x1024xf32>
    %130 = vector.shape_cast %129 : vector<1x4x1024xf32> to vector<4x1024xf32>
    %c16_107 = arith.constant 16 : index
    %c1024_108 = arith.constant 1024 : index
    %131 = vector.load %arg8[%c16_107, %c1024_108] : memref<128x2048xf32, #tpu.memory_space<vmem>>, vector<4x1024xf32>
    tpu.vector_store %arg8[%c16_107, %c1024_108], %130 {strides = array<i32>} : memref<128x2048xf32, #tpu.memory_space<vmem>>, vector<4x1024xf32>,
    %c0_109 = arith.constant 0 : index
    %c0_110 = arith.constant 0 : index
    %c384 = arith.constant 384 : index
    %132 = vector.load %arg0[%c0_109, %c0_110, %c384] : memref<2x4x1792xf32, #tpu.memory_space<vmem>>, vector<1x4x1024xf32>
    %133 = vector.shape_cast %132 : vector<1x4x1024xf32> to vector<4x1024xf32>
    %c52 = arith.constant 52 : index
    %c0_111 = arith.constant 0 : index
    %134 = vector.load %arg8[%c52, %c0_111] : memref<128x2048xf32, #tpu.memory_space<vmem>>, vector<4x1024xf32>
    tpu.vector_store %arg8[%c52, %c0_111], %133 {strides = array<i32>} : memref<128x2048xf32, #tpu.memory_space<vmem>>, vector<4x1024xf32>,
    %c1_112 = arith.constant 1 : index
    %c0_113 = arith.constant 0 : index
    %c384_114 = arith.constant 384 : index
    %135 = vector.load %arg0[%c1_112, %c0_113, %c384_114] : memref<2x4x1792xf32, #tpu.memory_space<vmem>>, vector<1x4x1024xf32>
    %136 = vector.shape_cast %135 : vector<1x4x1024xf32> to vector<4x1024xf32>
    %c52_115 = arith.constant 52 : index
    %c1024_116 = arith.constant 1024 : index
    %137 = vector.load %arg8[%c52_115, %c1024_116] : memref<128x2048xf32, #tpu.memory_space<vmem>>, vector<4x1024xf32>
    tpu.vector_store %arg8[%c52_115, %c1024_116], %136 {strides = array<i32>} : memref<128x2048xf32, #tpu.memory_space<vmem>>, vector<4x1024xf32>,
    %c0_117 = arith.constant 0 : index
    %c0_118 = arith.constant 0 : index
    %c640 = arith.constant 640 : index
    %138 = vector.load %arg0[%c0_117, %c0_118, %c640] : memref<2x4x1792xf32, #tpu.memory_space<vmem>>, vector<1x4x1024xf32>
    %139 = vector.shape_cast %138 : vector<1x4x1024xf32> to vector<4x1024xf32>
    %c88 = arith.constant 88 : index
    %c0_119 = arith.constant 0 : index
    %140 = vector.load %arg8[%c88, %c0_119] : memref<128x2048xf32, #tpu.memory_space<vmem>>, vector<4x1024xf32>
    tpu.vector_store %arg8[%c88, %c0_119], %139 {strides = array<i32>} : memref<128x2048xf32, #tpu.memory_space<vmem>>, vector<4x1024xf32>,
    %c1_120 = arith.constant 1 : index
    %c0_121 = arith.constant 0 : index
    %c640_122 = arith.constant 640 : index
    %141 = vector.load %arg0[%c1_120, %c0_121, %c640_122] : memref<2x4x1792xf32, #tpu.memory_space<vmem>>, vector<1x4x1024xf32>
    %142 = vector.shape_cast %141 : vector<1x4x1024xf32> to vector<4x1024xf32>
    %c88_123 = arith.constant 88 : index
    %c1024_124 = arith.constant 1024 : index
    %143 = vector.load %arg8[%c88_123, %c1024_124] : memref<128x2048xf32, #tpu.memory_space<vmem>>, vector<4x1024xf32>
    tpu.vector_store %arg8[%c88_123, %c1024_124], %142 {strides = array<i32>} : memref<128x2048xf32, #tpu.memory_space<vmem>>, vector<4x1024xf32>,
    %c5 = arith.constant 5 : index
    %c0_125 = arith.constant 0 : index
    %144 = vector.load %arg5[%c5, %c0_125] : memref<16x1024xf32, #tpu.memory_space<vmem>>, vector<1x1024xf32>
    %c0_126 = arith.constant 0 : index
    %c0_127 = arith.constant 0 : index
    %c129 = arith.constant 129 : index
    %145 = vector.load %arg0[%c0_126, %c0_127, %c129] : memref<2x4x1792xf32, #tpu.memory_space<vmem>>, vector<1x4x1024xf32>
    %146 = vector.shape_cast %145 : vector<1x4x1024xf32> to vector<4x1024xf32>
    %147 = vector.broadcast %144 : vector<1x1024xf32> to vector<4x1024xf32>
    %148 = arith.mulf %146, %147 : vector<4x1024xf32>
    %c20 = arith.constant 20 : index
    %c0_128 = arith.constant 0 : index
    %149 = vector.load %arg8[%c20, %c0_128] : memref<128x2048xf32, #tpu.memory_space<vmem>>, vector<4x1024xf32>
    tpu.vector_store %arg8[%c20, %c0_128], %148 {strides = array<i32>} : memref<128x2048xf32, #tpu.memory_space<vmem>>, vector<4x1024xf32>,
    %c1_129 = arith.constant 1 : index
    %c0_130 = arith.constant 0 : index
    %c129_131 = arith.constant 129 : index
    %150 = vector.load %arg0[%c1_129, %c0_130, %c129_131] : memref<2x4x1792xf32, #tpu.memory_space<vmem>>, vector<1x4x1024xf32>
    %151 = vector.shape_cast %150 : vector<1x4x1024xf32> to vector<4x1024xf32>
    %152 = vector.broadcast %144 : vector<1x1024xf32> to vector<4x1024xf32>
    %153 = arith.mulf %151, %152 : vector<4x1024xf32>
    %c20_132 = arith.constant 20 : index
    %c1024_133 = arith.constant 1024 : index
    %154 = vector.load %arg8[%c20_132, %c1024_133] : memref<128x2048xf32, #tpu.memory_space<vmem>>, vector<4x1024xf32>
    tpu.vector_store %arg8[%c20_132, %c1024_133], %153 {strides = array<i32>} : memref<128x2048xf32, #tpu.memory_space<vmem>>, vector<4x1024xf32>,
    %c0_134 = arith.constant 0 : index
    %c0_135 = arith.constant 0 : index
    %c385 = arith.constant 385 : index
    %155 = vector.load %arg0[%c0_134, %c0_135, %c385] : memref<2x4x1792xf32, #tpu.memory_space<vmem>>, vector<1x4x1024xf32>
    %156 = vector.shape_cast %155 : vector<1x4x1024xf32> to vector<4x1024xf32>
    %157 = vector.broadcast %144 : vector<1x1024xf32> to vector<4x1024xf32>
    %158 = arith.mulf %156, %157 : vector<4x1024xf32>
    %c56 = arith.constant 56 : index
    %c0_136 = arith.constant 0 : index
    %159 = vector.load %arg8[%c56, %c0_136] : memref<128x2048xf32, #tpu.memory_space<vmem>>, vector<4x1024xf32>
    tpu.vector_store %arg8[%c56, %c0_136], %158 {strides = array<i32>} : memref<128x2048xf32, #tpu.memory_space<vmem>>, vector<4x1024xf32>,
    %c1_137 = arith.constant 1 : index
    %c0_138 = arith.constant 0 : index
    %c385_139 = arith.constant 385 : index
    %160 = vector.load %arg0[%c1_137, %c0_138, %c385_139] : memref<2x4x1792xf32, #tpu.memory_space<vmem>>, vector<1x4x1024xf32>
    %161 = vector.shape_cast %160 : vector<1x4x1024xf32> to vector<4x1024xf32>
    %162 = vector.broadcast %144 : vector<1x1024xf32> to vector<4x1024xf32>
    %163 = arith.mulf %161, %162 : vector<4x1024xf32>
    %c56_140 = arith.constant 56 : index
    %c1024_141 = arith.constant 1024 : index
    %164 = vector.load %arg8[%c56_140, %c1024_141] : memref<128x2048xf32, #tpu.memory_space<vmem>>, vector<4x1024xf32>
    tpu.vector_store %arg8[%c56_140, %c1024_141], %163 {strides = array<i32>} : memref<128x2048xf32, #tpu.memory_space<vmem>>, vector<4x1024xf32>,
    %c0_142 = arith.constant 0 : index
    %c0_143 = arith.constant 0 : index
    %c641 = arith.constant 641 : index
    %165 = vector.load %arg0[%c0_142, %c0_143, %c641] : memref<2x4x1792xf32, #tpu.memory_space<vmem>>, vector<1x4x1024xf32>
    %166 = vector.shape_cast %165 : vector<1x4x1024xf32> to vector<4x1024xf32>
    %167 = vector.broadcast %144 : vector<1x1024xf32> to vector<4x1024xf32>
    %168 = arith.mulf %166, %167 : vector<4x1024xf32>
    %c92 = arith.constant 92 : index
    %c0_144 = arith.constant 0 : index
    %169 = vector.load %arg8[%c92, %c0_144] : memref<128x2048xf32, #tpu.memory_space<vmem>>, vector<4x1024xf32>
    tpu.vector_store %arg8[%c92, %c0_144], %168 {strides = array<i32>} : memref<128x2048xf32, #tpu.memory_space<vmem>>, vector<4x1024xf32>,
    %c1_145 = arith.constant 1 : index
    %c0_146 = arith.constant 0 : index
    %c641_147 = arith.constant 641 : index
    %170 = vector.load %arg0[%c1_145, %c0_146, %c641_147] : memref<2x4x1792xf32, #tpu.memory_space<vmem>>, vector<1x4x1024xf32>
    %171 = vector.shape_cast %170 : vector<1x4x1024xf32> to vector<4x1024xf32>
    %172 = vector.broadcast %144 : vector<1x1024xf32> to vector<4x1024xf32>
    %173 = arith.mulf %171, %172 : vector<4x1024xf32>
    %c92_148 = arith.constant 92 : index
    %c1024_149 = arith.constant 1024 : index
    %174 = vector.load %arg8[%c92_148, %c1024_149] : memref<128x2048xf32, #tpu.memory_space<vmem>>, vector<4x1024xf32>
    tpu.vector_store %arg8[%c92_148, %c1024_149], %173 {strides = array<i32>} : memref<128x2048xf32, #tpu.memory_space<vmem>>, vector<4x1024xf32>,
    %c6 = arith.constant 6 : index
    %c0_150 = arith.constant 0 : index
    %175 = vector.load %arg5[%c6, %c0_150] : memref<16x1024xf32, #tpu.memory_space<vmem>>, vector<1x1024xf32>
    %c0_151 = arith.constant 0 : index
    %c0_152 = arith.constant 0 : index
    %c143 = arith.constant 143 : index
    %176 = vector.load %arg0[%c0_151, %c0_152, %c143] : memref<2x4x1792xf32, #tpu.memory_space<vmem>>, vector<1x4x1024xf32>
    %177 = vector.shape_cast %176 : vector<1x4x1024xf32> to vector<4x1024xf32>
    %178 = vector.broadcast %175 : vector<1x1024xf32> to vector<4x1024xf32>
    %179 = arith.mulf %177, %178 : vector<4x1024xf32>
    %c24 = arith.constant 24 : index
    %c0_153 = arith.constant 0 : index
    %180 = vector.load %arg8[%c24, %c0_153] : memref<128x2048xf32, #tpu.memory_space<vmem>>, vector<4x1024xf32>
    tpu.vector_store %arg8[%c24, %c0_153], %179 {strides = array<i32>} : memref<128x2048xf32, #tpu.memory_space<vmem>>, vector<4x1024xf32>,
    %c1_154 = arith.constant 1 : index
    %c0_155 = arith.constant 0 : index
    %c143_156 = arith.constant 143 : index
    %181 = vector.load %arg0[%c1_154, %c0_155, %c143_156] : memref<2x4x1792xf32, #tpu.memory_space<vmem>>, vector<1x4x1024xf32>
    %182 = vector.shape_cast %181 : vector<1x4x1024xf32> to vector<4x1024xf32>
    %183 = vector.broadcast %175 : vector<1x1024xf32> to vector<4x1024xf32>
    %184 = arith.mulf %182, %183 : vector<4x1024xf32>
    %c24_157 = arith.constant 24 : index
    %c1024_158 = arith.constant 1024 : index
    %185 = vector.load %arg8[%c24_157, %c1024_158] : memref<128x2048xf32, #tpu.memory_space<vmem>>, vector<4x1024xf32>
    tpu.vector_store %arg8[%c24_157, %c1024_158], %184 {strides = array<i32>} : memref<128x2048xf32, #tpu.memory_space<vmem>>, vector<4x1024xf32>,
    %c0_159 = arith.constant 0 : index
    %c0_160 = arith.constant 0 : index
    %c399 = arith.constant 399 : index
    %186 = vector.load %arg0[%c0_159, %c0_160, %c399] : memref<2x4x1792xf32, #tpu.memory_space<vmem>>, vector<1x4x1024xf32>
    %187 = vector.shape_cast %186 : vector<1x4x1024xf32> to vector<4x1024xf32>
    %188 = vector.broadcast %175 : vector<1x1024xf32> to vector<4x1024xf32>
    %189 = arith.mulf %187, %188 : vector<4x1024xf32>
    %c60 = arith.constant 60 : index
    %c0_161 = arith.constant 0 : index
    %190 = vector.load %arg8[%c60, %c0_161] : memref<128x2048xf32, #tpu.memory_space<vmem>>, vector<4x1024xf32>
    tpu.vector_store %arg8[%c60, %c0_161], %189 {strides = array<i32>} : memref<128x2048xf32, #tpu.memory_space<vmem>>, vector<4x1024xf32>,
    %c1_162 = arith.constant 1 : index
    %c0_163 = arith.constant 0 : index
    %c399_164 = arith.constant 399 : index
    %191 = vector.load %arg0[%c1_162, %c0_163, %c399_164] : memref<2x4x1792xf32, #tpu.memory_space<vmem>>, vector<1x4x1024xf32>
    %192 = vector.shape_cast %191 : vector<1x4x1024xf32> to vector<4x1024xf32>
    %193 = vector.broadcast %175 : vector<1x1024xf32> to vector<4x1024xf32>
    %194 = arith.mulf %192, %193 : vector<4x1024xf32>
    %c60_165 = arith.constant 60 : index
    %c1024_166 = arith.constant 1024 : index
    %195 = vector.load %arg8[%c60_165, %c1024_166] : memref<128x2048xf32, #tpu.memory_space<vmem>>, vector<4x1024xf32>
    tpu.vector_store %arg8[%c60_165, %c1024_166], %194 {strides = array<i32>} : memref<128x2048xf32, #tpu.memory_space<vmem>>, vector<4x1024xf32>,
    %c0_167 = arith.constant 0 : index
    %c0_168 = arith.constant 0 : index
    %c655 = arith.constant 655 : index
    %196 = vector.load %arg0[%c0_167, %c0_168, %c655] : memref<2x4x1792xf32, #tpu.memory_space<vmem>>, vector<1x4x1024xf32>
    %197 = vector.shape_cast %196 : vector<1x4x1024xf32> to vector<4x1024xf32>
    %198 = vector.broadcast %175 : vector<1x1024xf32> to vector<4x1024xf32>
    %199 = arith.mulf %197, %198 : vector<4x1024xf32>
    %c96 = arith.constant 96 : index
    %c0_169 = arith.constant 0 : index
    %200 = vector.load %arg8[%c96, %c0_169] : memref<128x2048xf32, #tpu.memory_space<vmem>>, vector<4x1024xf32>
    tpu.vector_store %arg8[%c96, %c0_169], %199 {strides = array<i32>} : memref<128x2048xf32, #tpu.memory_space<vmem>>, vector<4x1024xf32>,
    %c1_170 = arith.constant 1 : index
    %c0_171 = arith.constant 0 : index
    %c655_172 = arith.constant 655 : index
    %201 = vector.load %arg0[%c1_170, %c0_171, %c655_172] : memref<2x4x1792xf32, #tpu.memory_space<vmem>>, vector<1x4x1024xf32>
    %202 = vector.shape_cast %201 : vector<1x4x1024xf32> to vector<4x1024xf32>
    %203 = vector.broadcast %175 : vector<1x1024xf32> to vector<4x1024xf32>
    %204 = arith.mulf %202, %203 : vector<4x1024xf32>
    %c96_173 = arith.constant 96 : index
    %c1024_174 = arith.constant 1024 : index
    %205 = vector.load %arg8[%c96_173, %c1024_174] : memref<128x2048xf32, #tpu.memory_space<vmem>>, vector<4x1024xf32>
    tpu.vector_store %arg8[%c96_173, %c1024_174], %204 {strides = array<i32>} : memref<128x2048xf32, #tpu.memory_space<vmem>>, vector<4x1024xf32>,
    %c7 = arith.constant 7 : index
    %c0_175 = arith.constant 0 : index
    %206 = vector.load %arg5[%c7, %c0_175] : memref<16x1024xf32, #tpu.memory_space<vmem>>, vector<1x1024xf32>
    %c0_176 = arith.constant 0 : index
    %c0_177 = arith.constant 0 : index
    %c144 = arith.constant 144 : index
    %207 = vector.load %arg0[%c0_176, %c0_177, %c144] : memref<2x4x1792xf32, #tpu.memory_space<vmem>>, vector<1x4x1024xf32>
    %208 = vector.shape_cast %207 : vector<1x4x1024xf32> to vector<4x1024xf32>
    %209 = vector.broadcast %206 : vector<1x1024xf32> to vector<4x1024xf32>
    %210 = arith.mulf %208, %209 : vector<4x1024xf32>
    %c28 = arith.constant 28 : index
    %c0_178 = arith.constant 0 : index
    %211 = vector.load %arg8[%c28, %c0_178] : memref<128x2048xf32, #tpu.memory_space<vmem>>, vector<4x1024xf32>
    tpu.vector_store %arg8[%c28, %c0_178], %210 {strides = array<i32>} : memref<128x2048xf32, #tpu.memory_space<vmem>>, vector<4x1024xf32>,
    %c1_179 = arith.constant 1 : index
    %c0_180 = arith.constant 0 : index
    %c144_181 = arith.constant 144 : index
    %212 = vector.load %arg0[%c1_179, %c0_180, %c144_181] : memref<2x4x1792xf32, #tpu.memory_space<vmem>>, vector<1x4x1024xf32>
    %213 = vector.shape_cast %212 : vector<1x4x1024xf32> to vector<4x1024xf32>
    %214 = vector.broadcast %206 : vector<1x1024xf32> to vector<4x1024xf32>
    %215 = arith.mulf %213, %214 : vector<4x1024xf32>
    %c28_182 = arith.constant 28 : index
    %c1024_183 = arith.constant 1024 : index
    %216 = vector.load %arg8[%c28_182, %c1024_183] : memref<128x2048xf32, #tpu.memory_space<vmem>>, vector<4x1024xf32>
    tpu.vector_store %arg8[%c28_182, %c1024_183], %215 {strides = array<i32>} : memref<128x2048xf32, #tpu.memory_space<vmem>>, vector<4x1024xf32>,
    %c0_184 = arith.constant 0 : index
    %c0_185 = arith.constant 0 : index
    %c400 = arith.constant 400 : index
    %217 = vector.load %arg0[%c0_184, %c0_185, %c400] : memref<2x4x1792xf32, #tpu.memory_space<vmem>>, vector<1x4x1024xf32>
    %218 = vector.shape_cast %217 : vector<1x4x1024xf32> to vector<4x1024xf32>
    %219 = vector.broadcast %206 : vector<1x1024xf32> to vector<4x1024xf32>
    %220 = arith.mulf %218, %219 : vector<4x1024xf32>
    %c64 = arith.constant 64 : index
    %c0_186 = arith.constant 0 : index
    %221 = vector.load %arg8[%c64, %c0_186] : memref<128x2048xf32, #tpu.memory_space<vmem>>, vector<4x1024xf32>
    tpu.vector_store %arg8[%c64, %c0_186], %220 {strides = array<i32>} : memref<128x2048xf32, #tpu.memory_space<vmem>>, vector<4x1024xf32>,
    %c1_187 = arith.constant 1 : index
    %c0_188 = arith.constant 0 : index
    %c400_189 = arith.constant 400 : index
    %222 = vector.load %arg0[%c1_187, %c0_188, %c400_189] : memref<2x4x1792xf32, #tpu.memory_space<vmem>>, vector<1x4x1024xf32>
    %223 = vector.shape_cast %222 : vector<1x4x1024xf32> to vector<4x1024xf32>
    %224 = vector.broadcast %206 : vector<1x1024xf32> to vector<4x1024xf32>
    %225 = arith.mulf %223, %224 : vector<4x1024xf32>
    %c64_190 = arith.constant 64 : index
    %c1024_191 = arith.constant 1024 : index
    %226 = vector.load %arg8[%c64_190, %c1024_191] : memref<128x2048xf32, #tpu.memory_space<vmem>>, vector<4x1024xf32>
    tpu.vector_store %arg8[%c64_190, %c1024_191], %225 {strides = array<i32>} : memref<128x2048xf32, #tpu.memory_space<vmem>>, vector<4x1024xf32>,
    %c0_192 = arith.constant 0 : index
    %c0_193 = arith.constant 0 : index
    %c656 = arith.constant 656 : index
    %227 = vector.load %arg0[%c0_192, %c0_193, %c656] : memref<2x4x1792xf32, #tpu.memory_space<vmem>>, vector<1x4x1024xf32>
    %228 = vector.shape_cast %227 : vector<1x4x1024xf32> to vector<4x1024xf32>
    %229 = vector.broadcast %206 : vector<1x1024xf32> to vector<4x1024xf32>
    %230 = arith.mulf %228, %229 : vector<4x1024xf32>
    %c100 = arith.constant 100 : index
    %c0_194 = arith.constant 0 : index
    %231 = vector.load %arg8[%c100, %c0_194] : memref<128x2048xf32, #tpu.memory_space<vmem>>, vector<4x1024xf32>
    tpu.vector_store %arg8[%c100, %c0_194], %230 {strides = array<i32>} : memref<128x2048xf32, #tpu.memory_space<vmem>>, vector<4x1024xf32>,
    %c1_195 = arith.constant 1 : index
    %c0_196 = arith.constant 0 : index
    %c656_197 = arith.constant 656 : index
    %232 = vector.load %arg0[%c1_195, %c0_196, %c656_197] : memref<2x4x1792xf32, #tpu.memory_space<vmem>>, vector<1x4x1024xf32>
    %233 = vector.shape_cast %232 : vector<1x4x1024xf32> to vector<4x1024xf32>
    %234 = vector.broadcast %206 : vector<1x1024xf32> to vector<4x1024xf32>
    %235 = arith.mulf %233, %234 : vector<4x1024xf32>
    %c100_198 = arith.constant 100 : index
    %c1024_199 = arith.constant 1024 : index
    %236 = vector.load %arg8[%c100_198, %c1024_199] : memref<128x2048xf32, #tpu.memory_space<vmem>>, vector<4x1024xf32>
    tpu.vector_store %arg8[%c100_198, %c1024_199], %235 {strides = array<i32>} : memref<128x2048xf32, #tpu.memory_space<vmem>>, vector<4x1024xf32>,
    %c8_200 = arith.constant 8 : index
    %c0_201 = arith.constant 0 : index
    %237 = vector.load %arg5[%c8_200, %c0_201] : memref<16x1024xf32, #tpu.memory_space<vmem>>, vector<1x1024xf32>
    %c0_202 = arith.constant 0 : index
    %c0_203 = arith.constant 0 : index
    %c145 = arith.constant 145 : index
    %238 = vector.load %arg0[%c0_202, %c0_203, %c145] : memref<2x4x1792xf32, #tpu.memory_space<vmem>>, vector<1x4x1024xf32>
    %239 = vector.shape_cast %238 : vector<1x4x1024xf32> to vector<4x1024xf32>
    %240 = vector.broadcast %237 : vector<1x1024xf32> to vector<4x1024xf32>
    %241 = arith.mulf %239, %240 : vector<4x1024xf32>
    %c32 = arith.constant 32 : index
    %c0_204 = arith.constant 0 : index
    %242 = vector.load %arg8[%c32, %c0_204] : memref<128x2048xf32, #tpu.memory_space<vmem>>, vector<4x1024xf32>
    tpu.vector_store %arg8[%c32, %c0_204], %241 {strides = array<i32>} : memref<128x2048xf32, #tpu.memory_space<vmem>>, vector<4x1024xf32>,
    %c1_205 = arith.constant 1 : index
    %c0_206 = arith.constant 0 : index
    %c145_207 = arith.constant 145 : index
    %243 = vector.load %arg0[%c1_205, %c0_206, %c145_207] : memref<2x4x1792xf32, #tpu.memory_space<vmem>>, vector<1x4x1024xf32>
    %244 = vector.shape_cast %243 : vector<1x4x1024xf32> to vector<4x1024xf32>
    %245 = vector.broadcast %237 : vector<1x1024xf32> to vector<4x1024xf32>
    %246 = arith.mulf %244, %245 : vector<4x1024xf32>
    %c32_208 = arith.constant 32 : index
    %c1024_209 = arith.constant 1024 : index
    %247 = vector.load %arg8[%c32_208, %c1024_209] : memref<128x2048xf32, #tpu.memory_space<vmem>>, vector<4x1024xf32>
    tpu.vector_store %arg8[%c32_208, %c1024_209], %246 {strides = array<i32>} : memref<128x2048xf32, #tpu.memory_space<vmem>>, vector<4x1024xf32>,
    %c0_210 = arith.constant 0 : index
    %c0_211 = arith.constant 0 : index
    %c401 = arith.constant 401 : index
    %248 = vector.load %arg0[%c0_210, %c0_211, %c401] : memref<2x4x1792xf32, #tpu.memory_space<vmem>>, vector<1x4x1024xf32>
    %249 = vector.shape_cast %248 : vector<1x4x1024xf32> to vector<4x1024xf32>
    %250 = vector.broadcast %237 : vector<1x1024xf32> to vector<4x1024xf32>
    %251 = arith.mulf %249, %250 : vector<4x1024xf32>
    %c68 = arith.constant 68 : index
    %c0_212 = arith.constant 0 : index
    %252 = vector.load %arg8[%c68, %c0_212] : memref<128x2048xf32, #tpu.memory_space<vmem>>, vector<4x1024xf32>
    tpu.vector_store %arg8[%c68, %c0_212], %251 {strides = array<i32>} : memref<128x2048xf32, #tpu.memory_space<vmem>>, vector<4x1024xf32>,
    %c1_213 = arith.constant 1 : index
    %c0_214 = arith.constant 0 : index
    %c401_215 = arith.constant 401 : index
    %253 = vector.load %arg0[%c1_213, %c0_214, %c401_215] : memref<2x4x1792xf32, #tpu.memory_space<vmem>>, vector<1x4x1024xf32>
    %254 = vector.shape_cast %253 : vector<1x4x1024xf32> to vector<4x1024xf32>
    %255 = vector.broadcast %237 : vector<1x1024xf32> to vector<4x1024xf32>
    %256 = arith.mulf %254, %255 : vector<4x1024xf32>
    %c68_216 = arith.constant 68 : index
    %c1024_217 = arith.constant 1024 : index
    %257 = vector.load %arg8[%c68_216, %c1024_217] : memref<128x2048xf32, #tpu.memory_space<vmem>>, vector<4x1024xf32>
    tpu.vector_store %arg8[%c68_216, %c1024_217], %256 {strides = array<i32>} : memref<128x2048xf32, #tpu.memory_space<vmem>>, vector<4x1024xf32>,
    %c0_218 = arith.constant 0 : index
    %c0_219 = arith.constant 0 : index
    %c657 = arith.constant 657 : index
    %258 = vector.load %arg0[%c0_218, %c0_219, %c657] : memref<2x4x1792xf32, #tpu.memory_space<vmem>>, vector<1x4x1024xf32>
    %259 = vector.shape_cast %258 : vector<1x4x1024xf32> to vector<4x1024xf32>
    %260 = vector.broadcast %237 : vector<1x1024xf32> to vector<4x1024xf32>
    %261 = arith.mulf %259, %260 : vector<4x1024xf32>
    %c104_220 = arith.constant 104 : index
    %c0_221 = arith.constant 0 : index
    %262 = vector.load %arg8[%c104_220, %c0_221] : memref<128x2048xf32, #tpu.memory_space<vmem>>, vector<4x1024xf32>
    tpu.vector_store %arg8[%c104_220, %c0_221], %261 {strides = array<i32>} : memref<128x2048xf32, #tpu.memory_space<vmem>>, vector<4x1024xf32>,
    %c1_222 = arith.constant 1 : index
    %c0_223 = arith.constant 0 : index
    %c657_224 = arith.constant 657 : index
    %263 = vector.load %arg0[%c1_222, %c0_223, %c657_224] : memref<2x4x1792xf32, #tpu.memory_space<vmem>>, vector<1x4x1024xf32>
    %264 = vector.shape_cast %263 : vector<1x4x1024xf32> to vector<4x1024xf32>
    %265 = vector.broadcast %237 : vector<1x1024xf32> to vector<4x1024xf32>
    %266 = arith.mulf %264, %265 : vector<4x1024xf32>
    %c104_225 = arith.constant 104 : index
    %c1024_226 = arith.constant 1024 : index
    %267 = vector.load %arg8[%c104_225, %c1024_226] : memref<128x2048xf32, #tpu.memory_space<vmem>>, vector<4x1024xf32>
    tpu.vector_store %arg8[%c104_225, %c1024_226], %266 {strides = array<i32>} : memref<128x2048xf32, #tpu.memory_space<vmem>>, vector<4x1024xf32>,
    %c0_227 = arith.constant 0 : index
    %c0_228 = arith.constant 0 : index
    %268 = vector.load %arg1[%c0_227, %c0_228] : memref<8x128xf32, #tpu.memory_space<vmem>>, vector<8x128xf32>
    %c0_229 = arith.constant 0 : index
    %c0_230 = arith.constant 0 : index
    %269 = vector.load %arg8[%c0_229, %c0_230] : memref<128x2048xf32, #tpu.memory_space<vmem>>, vector<128x2048xf32>
    %cst_231 = arith.constant dense<0.000000e+00> : vector<8x2048xf32>
    %270 = tpu.matmul %268, %269, %cst_231 {dimension_numbers = #tpu.dot_dimension_numbers<[1], [0], [0], [1], [0, 0, 1, 1], [], []>} : vector<8x128xf32>, vector<128x2048xf32>, vector<8x2048xf32> -> vector<8x2048xf32>
    %c0_232 = arith.constant 0 : index
    %c0_233 = arith.constant 0 : index
    %271 = vector.load %arg2[%c0_232, %c0_233] : memref<8x1xf32, #tpu.memory_space<vmem>>, vector<8x1xf32>
    %272 = vector.broadcast %271 : vector<8x1xf32> to vector<8x2048xf32>
    %273 = arith.addf %270, %272 : vector<8x2048xf32>
    %cst_234 = arith.constant dense<0.000000e+00> : vector<8xf32>
    %274 = vector.multi_reduction <add>, %273, %cst_234 [1] : vector<8x2048xf32> to vector<8xf32>
    %275 = vector.shape_cast %274 : vector<8xf32> to vector<8x1xf32>
    %cst_235 = arith.constant 2.048000e+03 : f32
    %276 = vector.broadcast %cst_235 : f32 to vector<8x1xf32>
    %277 = arith.divf %275, %276 : vector<8x1xf32>
    %278 = vector.broadcast %277 : vector<8x1xf32> to vector<8x2048xf32>
    %279 = arith.subf %273, %278 : vector<8x2048xf32>
    %280 = arith.mulf %279, %279 : vector<8x2048xf32>
    %cst_236 = arith.constant dense<0.000000e+00> : vector<8xf32>
    %281 = vector.multi_reduction <add>, %280, %cst_236 [1] : vector<8x2048xf32> to vector<8xf32>
    %282 = vector.shape_cast %281 : vector<8xf32> to vector<8x1xf32>
    %cst_237 = arith.constant 2.048000e+03 : f32
    %283 = vector.broadcast %cst_237 : f32 to vector<8x1xf32>
    %284 = arith.divf %282, %283 : vector<8x1xf32>
    %c0_238 = arith.constant 0 : index
    %c0_239 = arith.constant 0 : index
    %285 = vector.load %arg3[%c0_238, %c0_239] : memref<8x1xf32, #tpu.memory_space<vmem>>, vector<8x1xf32>
    %cst_240 = arith.constant 9.99999974E-6 : f32
    %286 = vector.broadcast %cst_240 : f32 to vector<8x1xf32>
    %287 = arith.addf %284, %286 : vector<8x1xf32>
    %288 = math.rsqrt %287 : vector<8x1xf32>
    %289 = arith.mulf %285, %288 : vector<8x1xf32>
    %290 = vector.broadcast %289 : vector<8x1xf32> to vector<8x2048xf32>
    %291 = arith.mulf %279, %290 : vector<8x2048xf32>
    %c0_241 = arith.constant 0 : index
    %c0_242 = arith.constant 0 : index
    %292 = vector.load %arg4[%c0_241, %c0_242] : memref<8x1xf32, #tpu.memory_space<vmem>>, vector<8x1xf32>
    %293 = vector.broadcast %292 : vector<8x1xf32> to vector<8x2048xf32>
    %294 = arith.addf %291, %293 : vector<8x2048xf32>
    %cst_243 = arith.constant 0.000000e+00 : f32
    %295 = vector.broadcast %cst_243 : f32 to vector<8x2048xf32>
    %296 = arith.maximumf %294, %295 : vector<8x2048xf32>
    %297 = vector.extract_strided_slice %296 {offsets = [0, 0], sizes = [8, 1024], strides = [1, 1]} : vector<8x2048xf32> to vector<8x1024xf32>
    %c0_244 = arith.constant 0 : index
    %c0_245 = arith.constant 0 : index
    %298 = vector.load %arg6[%c0_244, %c0_245] : memref<1024x256xf32, #tpu.memory_space<vmem>>, vector<1024x256xf32>
    %cst_246 = arith.constant dense<0.000000e+00> : vector<8x256xf32>
    %299 = tpu.matmul %297, %298, %cst_246 {dimension_numbers = #tpu.dot_dimension_numbers<[1], [0], [0], [1], [0, 0, 1, 1], [], []>} : vector<8x1024xf32>, vector<1024x256xf32>, vector<8x256xf32> -> vector<8x256xf32>
    %c0_247 = arith.constant 0 : index
    %c0_248 = arith.constant 0 : index
    %c0_249 = arith.constant 0 : index
    %300 = vector.load %arg7[%c0_247, %c0_248, %c0_249] : memref<2x8x256xf32, #tpu.memory_space<vmem>>, vector<1x8x256xf32>
    %301 = vector.shape_cast %300 : vector<1x8x256xf32> to vector<8x256xf32>
    %302 = vector.shape_cast %299 : vector<8x256xf32> to vector<1x8x256xf32>
    tpu.vector_store %arg7[%c0_247, %c0_248, %c0_249], %302 {strides = array<i32>} : memref<2x8x256xf32, #tpu.memory_space<vmem>>, vector<1x8x256xf32>,
    %303 = vector.extract_strided_slice %296 {offsets = [0, 1024], sizes = [8, 1024], strides = [1, 1]} : vector<8x2048xf32> to vector<8x1024xf32>
    %c0_250 = arith.constant 0 : index
    %c0_251 = arith.constant 0 : index
    %304 = vector.load %arg6[%c0_250, %c0_251] : memref<1024x256xf32, #tpu.memory_space<vmem>>, vector<1024x256xf32>
    %cst_252 = arith.constant dense<0.000000e+00> : vector<8x256xf32>
    %305 = tpu.matmul %303, %304, %cst_252 {dimension_numbers = #tpu.dot_dimension_numbers<[1], [0], [0], [1], [0, 0, 1, 1], [], []>} : vector<8x1024xf32>, vector<1024x256xf32>, vector<8x256xf32> -> vector<8x256xf32>
    %c1_253 = arith.constant 1 : index
    %c0_254 = arith.constant 0 : index
    %c0_255 = arith.constant 0 : index
    %306 = vector.load %arg7[%c1_253, %c0_254, %c0_255] : memref<2x8x256xf32, #tpu.memory_space<vmem>>, vector<1x8x256xf32>
    %307 = vector.shape_cast %306 : vector<1x8x256xf32> to vector<8x256xf32>
    %308 = vector.shape_cast %305 : vector<8x256xf32> to vector<1x8x256xf32>
    tpu.vector_store %arg7[%c1_253, %c0_254, %c0_255], %308 {strides = array<i32>} : memref<2x8x256xf32, #tpu.memory_space<vmem>>, vector<1x8x256xf32>,
    return
  }
}

</mosaic_0001>

<llo_original>
// kernel: down_block3d.1
$region0: #{down_block3d.1}
  #allocation0 [shape = 'u32[]', space=smem, size = 0x4, offset = 0x4, fixed_abs, tag = 'smem constant byte address 0x4 - core index']
  #allocation1 [shape = 'u32[144,128]{1,0:T(1,128)}', space=vmem, size = 0x12000, scoped, tag = 'internal scratch']
  #allocation2 [shape = 'f32[128,2048]{1,0:T(8,128)}', space=vmem, size = 0x100000, scoped, tag = 'scratch operand']
  %s0 = inlined_call_operand.vmem [shape: f32[2,4,1792], index: 0, kind: input, shape index: {}]
  %s1 = inlined_call_operand.vmem [shape: f32[8,128], index: 1, kind: input, shape index: {}]
  %s2 = inlined_call_operand.vmem [shape: f32[8,1], index: 2, kind: input, shape index: {}]
  %s3 = inlined_call_operand.vmem [shape: f32[8,1], index: 3, kind: input, shape index: {}]
  %s4 = inlined_call_operand.vmem [shape: f32[8,1], index: 4, kind: input, shape index: {}]
  %s5 = inlined_call_operand.vmem [shape: f32[16,1024], index: 5, kind: input, shape index: {}]
  %s6 = inlined_call_operand.hbm [shape: f32[1024,256], index: 6, kind: input, shape index: {}]
  %s7 = inlined_call_operand.vmem [shape: f32[2,8,256], index: 7, kind: output, shape index: {}]
  %s8 = sld [smem:[#allocation0]]
  $region42: #{down_block3d.1} parent=0
    _
  %s10 = ssub.s32 1, %s8
  %s11 = scalar_select 0, %s10, %s8
  $region1: #{down_block3d.1} parent=0
    #allocation3 [shape = 'u8[1048576]{0}', space=vmem, size = 0x100000, scoped, tag = 'input window, operand 6, single buffered']
    #allocation4 [shape = 's32[1]{0}', space=sflag, size = 0x4, scoped, tag = 'scoped memory for down_block3d.1']
    %12 = vsyncpa [#allocation4], 0
    // Predicated region
    $region2: #{down_block3d.1} parent=1 // pred_check
      _
    $region3: #{down_block3d.1} parent=1 // pred_check_branch
      %14 = sbr.rel (0) target = $region5
    $region4: #{down_block3d.1} parent=1 // pred_region
      _
    $region5: #{down_block3d.1} parent=1 // pred_fallthru
      _
    // Predicated region
    $region6: #{down_block3d.1} parent=1 // pred_check
      _
    $region7: #{down_block3d.1} parent=1 // pred_check_branch
      %16 = sbr.rel (0) target = $region9
    $region8: #{down_block3d.1} parent=1 // pred_region
      _
    $region9: #{down_block3d.1} parent=1 // pred_fallthru
      _
    // Predicated region
    $region10: #{down_block3d.1} parent=1 // pred_check
      _
    $region11: #{down_block3d.1} parent=1 // pred_check_branch
      %18 = sbr.rel (0) target = $region13
    $region12: #{down_block3d.1} parent=1 // pred_region
      _
    $region13: #{down_block3d.1} parent=1 // pred_fallthru
      _
    // Predicated region
    $region14: #{down_block3d.1} parent=1 // pred_check
      _
    $region15: #{down_block3d.1} parent=1 // pred_check_branch
      %20 = sbr.rel (0) target = $region17
    $region16: #{down_block3d.1} parent=1 // pred_region
      _
    $region17: #{down_block3d.1} parent=1 // pred_fallthru
      _
    // Predicated region
    $region18: #{down_block3d.1} parent=1 // pred_check
      _
    $region19: #{down_block3d.1} parent=1 // pred_check_branch
      %22 = sbr.rel (0) target = $region21
    $region20: #{down_block3d.1} parent=1 // pred_region
      _
    $region21: #{down_block3d.1} parent=1 // pred_fallthru
      _
    // Predicated region
    $region22: #{down_block3d.1} parent=1 // pred_check
      _
    $region23: #{down_block3d.1} parent=1 // pred_check_branch
      %24 = sbr.rel (0) target = $region25
    $region24: #{down_block3d.1} parent=1 // pred_region
      _
    $region25: #{down_block3d.1} parent=1 // pred_fallthru
      _
    // Predicated region
    $region26: #{down_block3d.1} parent=1 // pred_check
      _
    $region27: #{down_block3d.1} parent=1 // pred_check_branch
      %26 = sbr.rel (0) target = $region29
    $region28: #{down_block3d.1} parent=1 // pred_region
      %s28 = ssub.s32 32768, 32768
      %29 = vsyncadd [#allocation4], %s28
      %s30 = sshll.u32 [#allocation3], 4
      %s31 = int_to_ptr.vmem [resolvable:$true] %s30
      %36 = dma.hbm_to_vmem [thread:$0]  %s6, 32768, %s31, [#allocation4], 256, 256, 16
    $region29: #{down_block3d.1} parent=1 // pred_fallthru
      _
    // Predicated region
    $region30: #{down_block3d.1} parent=1 // pred_check
      _
    $region31: #{down_block3d.1} parent=1 // pred_check_branch
      %38 = sbr.rel (0) target = $region33
    $region32: #{down_block3d.1} parent=1 // pred_region
      %39 = dma.done [#allocation4], 32768
    $region33: #{down_block3d.1} parent=1 // pred_fallthru
      _
    %40 = vst [vmem:[#allocation2 + $0x680] sm:$0xff] 0.0
    %41 = vst [vmem:[#allocation2 + $0x688] sm:$0xff] 0.0
    %42 = vst [vmem:[#allocation2 + $0x690] sm:$0xff] 0.0
    %43 = vst [vmem:[#allocation2 + $0x698] sm:$0xff] 0.0
    %44 = vst [vmem:[#allocation2 + $0x6a0] sm:$0xff] 0.0
    %45 = vst [vmem:[#allocation2 + $0x6a8] sm:$0xff] 0.0
    %46 = vst [vmem:[#allocation2 + $0x6b0] sm:$0xff] 0.0
    %47 = vst [vmem:[#allocation2 + $0x6b8] sm:$0xff] 0.0
    %48 = vst [vmem:[#allocation2 + $0x6c0] sm:$0xff] 0.0
    %49 = vst [vmem:[#allocation2 + $0x6c8] sm:$0xff] 0.0
    %50 = vst [vmem:[#allocation2 + $0x6d0] sm:$0xff] 0.0
    %51 = vst [vmem:[#allocation2 + $0x6d8] sm:$0xff] 0.0
    %52 = vst [vmem:[#allocation2 + $0x6e0] sm:$0xff] 0.0
    %53 = vst [vmem:[#allocation2 + $0x6e8] sm:$0xff] 0.0
    %54 = vst [vmem:[#allocation2 + $0x6f0] sm:$0xff] 0.0
    %55 = vst [vmem:[#allocation2 + $0x6f8] sm:$0xff] 0.0
    %56 = vst [vmem:[#allocation2 + $0x700] sm:$0xff] 0.0
    %57 = vst [vmem:[#allocation2 + $0x708] sm:$0xff] 0.0
    %58 = vst [vmem:[#allocation2 + $0x710] sm:$0xff] 0.0
    %59 = vst [vmem:[#allocation2 + $0x718] sm:$0xff] 0.0
    %60 = vst [vmem:[#allocation2 + $0x720] sm:$0xff] 0.0
    %61 = vst [vmem:[#allocation2 + $0x728] sm:$0xff] 0.0
    %62 = vst [vmem:[#allocation2 + $0x730] sm:$0xff] 0.0
    %63 = vst [vmem:[#allocation2 + $0x738] sm:$0xff] 0.0
    %64 = vst [vmem:[#allocation2 + $0x740] sm:$0xff] 0.0
    %65 = vst [vmem:[#allocation2 + $0x748] sm:$0xff] 0.0
    %66 = vst [vmem:[#allocation2 + $0x750] sm:$0xff] 0.0
    %67 = vst [vmem:[#allocation2 + $0x758] sm:$0xff] 0.0
    %68 = vst [vmem:[#allocation2 + $0x760] sm:$0xff] 0.0
    %69 = vst [vmem:[#allocation2 + $0x768] sm:$0xff] 0.0
    %70 = vst [vmem:[#allocation2 + $0x770] sm:$0xff] 0.0
    %71 = vst [vmem:[#allocation2 + $0x778] sm:$0xff] 0.0
    %72 = vst [vmem:[#allocation2 + $0x780] sm:$0xff] 0.0
    %73 = vst [vmem:[#allocation2 + $0x788] sm:$0xff] 0.0
    %74 = vst [vmem:[#allocation2 + $0x790] sm:$0xff] 0.0
    %75 = vst [vmem:[#allocation2 + $0x798] sm:$0xff] 0.0
    %76 = vst [vmem:[#allocation2 + $0x7a0] sm:$0xff] 0.0
    %77 = vst [vmem:[#allocation2 + $0x7a8] sm:$0xff] 0.0
    %78 = vst [vmem:[#allocation2 + $0x7b0] sm:$0xff] 0.0
    %79 = vst [vmem:[#allocation2 + $0x7b8] sm:$0xff] 0.0
    %80 = vst [vmem:[#allocation2 + $0x7c0] sm:$0xff] 0.0
    %81 = vst [vmem:[#allocation2 + $0x7c8] sm:$0xff] 0.0
    %82 = vst [vmem:[#allocation2 + $0x7d0] sm:$0xff] 0.0
    %83 = vst [vmem:[#allocation2 + $0x7d8] sm:$0xff] 0.0
    %84 = vst [vmem:[#allocation2 + $0x7e0] sm:$0xff] 0.0
    %85 = vst [vmem:[#allocation2 + $0x7e8] sm:$0xff] 0.0
    %86 = vst [vmem:[#allocation2 + $0x7f0] sm:$0xff] 0.0
    %87 = vst [vmem:[#allocation2 + $0x7f8] sm:$0xff] 0.0
    %v88 = vld [vmem:[%s5] ss:$8 sm:$0xf]
    %v89 = vld [vmem:[%s5] ss:$8 sm:$0xf0]
    %v90 = vor.u32 %v88, %v89
    %v91 = vld [vmem:[%s0] sm:$0xff]
    %v92 = vld [vmem:[%s0 + $0x8] sm:$0xff]
    %v93 = vld [vmem:[%s0 + $0x10] sm:$0xff]
    %v94 = vld [vmem:[%s0 + $0x18] sm:$0xff]
    %v95 = vld [vmem:[%s0 + $0x20] sm:$0xf]
    %v97 = vlaneseq
    %v98 = vshrl.u32 %v97, 7
    %v99 = vsub.s32 0, %v98
    %v100 = vrot.slane %v90, %v99
    %v101 = vlaneseq
    %v102 = vshrl.u32 %v101, 7
    %v103 = vsub.s32 1, %v102
    %v104 = vrot.slane %v90, %v103
    %v105 = vlaneseq
    %v106 = vshrl.u32 %v105, 7
    %v107 = vsub.s32 2, %v106
    %v108 = vrot.slane %v90, %v107
    %v109 = vlaneseq
    %v110 = vshrl.u32 %v109, 7
    %v111 = vsub.s32 3, %v110
    %v112 = vrot.slane %v90, %v111
    %v113 = vlaneseq
    %v114 = vshrl.u32 %v113, 7
    %v115 = vsub.s32 4, %v114
    %v116 = vrot.slane %v90, %v115
    %v117 = vlaneseq
    %v118 = vshrl.u32 %v117, 7
    %v119 = vsub.s32 5, %v118
    %v120 = vrot.slane %v90, %v119
    %v121 = vlaneseq
    %v122 = vshrl.u32 %v121, 7
    %v123 = vsub.s32 6, %v122
    %v124 = vrot.slane %v90, %v123
    %v125 = vlaneseq
    %v126 = vshrl.u32 %v125, 7
    %v127 = vsub.s32 7, %v126
    %v128 = vrot.slane %v90, %v127
    %v129 = vcombine.low %v100, %v104
    %v130 = vcombine.low %v108, %v112
    %v131 = vcombine.low %v116, %v120
    %v132 = vcombine.low %v124, %v128
    %133 = vrot.lane.b32.xlu0 %v129, 111
    %v134 = vpop.permute.xlu0 %133
    %135 = vrot.lane.b32.xlu0 %v130, 111
    %v136 = vpop.permute.xlu0 %135
    %137 = vrot.lane.b32.xlu0 %v131, 111
    %v138 = vpop.permute.xlu0 %137
    %139 = vrot.lane.b32.xlu0 %v132, 111
    %v140 = vpop.permute.xlu0 %139
    %v141 = vrot.slane %v134, 4
    %v142 = vrot.slane %v136, 4
    %v143 = vrot.slane %v138, 4
    %v144 = vrot.slane %v140, 4
    %vm145 = vcmask 908288
    %v146 = vsel %vm145, %v141, %v134
    %vm147 = vcmask 1043456
    %v148 = vsel %vm147, %v141, %v142
    %v149 = vsel %vm145, %v148, %v136
    %v150 = vsel %vm147, %v142, %v143
    %v151 = vsel %vm145, %v150, %v138
    %v152 = vsel %vm147, %v143, %v144
    %v153 = vsel %vm145, %v152, %v140
    %v159 = vmul.f32 %v91, %v146
    %v160 = vmul.f32 %v92, %v149
    %v161 = vmul.f32 %v93, %v151
    %v162 = vmul.f32 %v94, %v153
    %v163 = vmul.f32 %v95, %v144
    %v169 = vcombine.high %v159, %v159
    %v170 = vcombine.high %v160, %v160
    %v171 = vcombine.high %v161, %v161
    %v172 = vcombine.high %v162, %v162
    %173 = vrot.lane.b32.xlu0 %v159, 17
    %v174 = vpop.permute.xlu0 %173
    %175 = vrot.lane.b32.xlu0 %v169, 17
    %v176 = vpop.permute.xlu0 %175
    %177 = vrot.lane.b32.xlu0 %v160, 17
    %v178 = vpop.permute.xlu0 %177
    %179 = vrot.lane.b32.xlu0 %v170, 17
    %v180 = vpop.permute.xlu0 %179
    %181 = vrot.lane.b32.xlu0 %v161, 17
    %v182 = vpop.permute.xlu0 %181
    %183 = vrot.lane.b32.xlu0 %v171, 17
    %v184 = vpop.permute.xlu0 %183
    %185 = vrot.lane.b32.xlu0 %v162, 17
    %v186 = vpop.permute.xlu0 %185
    %187 = vrot.lane.b32.xlu0 %v172, 17
    %v188 = vpop.permute.xlu0 %187
    %189 = vrot.lane.b32.xlu0 %v163, 17
    %v190 = vpop.permute.xlu0 %189
    %vm191 = vcmask 138240
    %v192 = vsel %vm191, %v174, %v176
    %v193 = vsel %vm191, %v176, %v178
    %v194 = vsel %vm191, %v178, %v180
    %v195 = vsel %vm191, %v180, %v182
    %v196 = vsel %vm191, %v182, %v184
    %v197 = vsel %vm191, %v184, %v186
    %v198 = vsel %vm191, %v186, %v188
    %v199 = vsel %vm191, %v188, %v190
    %208 = vst [vmem:[#allocation2] sm:$0xf] %v192
    %209 = vst [vmem:[#allocation2 + $0x8] sm:$0xf] %v193
    %210 = vst [vmem:[#allocation2 + $0x10] sm:$0xf] %v194
    %211 = vst [vmem:[#allocation2 + $0x18] sm:$0xf] %v195
    %212 = vst [vmem:[#allocation2 + $0x20] sm:$0xf] %v196
    %213 = vst [vmem:[#allocation2 + $0x28] sm:$0xf] %v197
    %214 = vst [vmem:[#allocation2 + $0x30] sm:$0xf] %v198
    %215 = vst [vmem:[#allocation2 + $0x38] sm:$0xf] %v199
    %s216 = scalar_lea.vmem %s0, 56
    %v217 = vld [vmem:[%s216] sm:$0xff]
    %v218 = vld [vmem:[%s216 + $0x8] sm:$0xff]
    %v219 = vld [vmem:[%s216 + $0x10] sm:$0xff]
    %v220 = vld [vmem:[%s216 + $0x18] sm:$0xff]
    %v221 = vld [vmem:[%s216 + $0x20] sm:$0xf]
    %v222 = vmul.f32 %v217, %v146
    %v223 = vmul.f32 %v218, %v149
    %v224 = vmul.f32 %v219, %v151
    %v225 = vmul.f32 %v220, %v153
    %v226 = vmul.f32 %v221, %v144
    %v232 = vcombine.high %v222, %v222
    %v233 = vcombine.high %v223, %v223
    %v234 = vcombine.high %v224, %v224
    %v235 = vcombine.high %v225, %v225
    %236 = vrot.lane.b32.xlu0 %v222, 17
    %v237 = vpop.permute.xlu0 %236
    %238 = vrot.lane.b32.xlu0 %v232, 17
    %v239 = vpop.permute.xlu0 %238
    %240 = vrot.lane.b32.xlu0 %v223, 17
    %v241 = vpop.permute.xlu0 %240
    %242 = vrot.lane.b32.xlu0 %v233, 17
    %v243 = vpop.permute.xlu0 %242
    %244 = vrot.lane.b32.xlu0 %v224, 17
    %v245 = vpop.permute.xlu0 %244
    %246 = vrot.lane.b32.xlu0 %v234, 17
    %v247 = vpop.permute.xlu0 %246
    %248 = vrot.lane.b32.xlu0 %v225, 17
    %v249 = vpop.permute.xlu0 %248
    %250 = vrot.lane.b32.xlu0 %v235, 17
    %v251 = vpop.permute.xlu0 %250
    %252 = vrot.lane.b32.xlu0 %v226, 17
    %v253 = vpop.permute.xlu0 %252
    %v254 = vsel %vm191, %v237, %v239
    %v255 = vsel %vm191, %v239, %v241
    %v256 = vsel %vm191, %v241, %v243
    %v257 = vsel %vm191, %v243, %v245
    %v258 = vsel %vm191, %v245, %v247
    %v259 = vsel %vm191, %v247, %v249
    %v260 = vsel %vm191, %v249, %v251
    %v261 = vsel %vm191, %v251, %v253
    %270 = vst [vmem:[#allocation2 + $0x40] sm:$0xf] %v254
    %271 = vst [vmem:[#allocation2 + $0x48] sm:$0xf] %v255
    %272 = vst [vmem:[#allocation2 + $0x50] sm:$0xf] %v256
    %273 = vst [vmem:[#allocation2 + $0x58] sm:$0xf] %v257
    %274 = vst [vmem:[#allocation2 + $0x60] sm:$0xf] %v258
    %275 = vst [vmem:[#allocation2 + $0x68] sm:$0xf] %v259
    %276 = vst [vmem:[#allocation2 + $0x70] sm:$0xf] %v260
    %277 = vst [vmem:[#allocation2 + $0x78] sm:$0xf] %v261
    %v278 = vld [vmem:[%s0 + $0x8] sm:$0xff]
    %v279 = vld [vmem:[%s0 + $0x10] sm:$0xff]
    %v280 = vld [vmem:[%s0 + $0x18] sm:$0xff]
    %v281 = vld [vmem:[%s0 + $0x20] sm:$0xff]
    %v282 = vld [vmem:[%s0 + $0x28] sm:$0xf]
    %v283 = vmul.f32 %v278, %v146
    %v284 = vmul.f32 %v279, %v149
    %v285 = vmul.f32 %v280, %v151
    %v286 = vmul.f32 %v281, %v153
    %v287 = vmul.f32 %v282, %v144
    %v293 = vcombine.low %v283, %v283
    %v294 = vcombine.low %v284, %v284
    %v295 = vcombine.low %v285, %v285
    %v296 = vcombine.low %v286, %v286
    %v297 = vcombine.low %v287, %v287
    %298 = vrot.lane.b32.xlu0 %v293, 17
    %v299 = vpop.permute.xlu0 %298
    %300 = vrot.lane.b32.xlu0 %v283, 17
    %v301 = vpop.permute.xlu0 %300
    %302 = vrot.lane.b32.xlu0 %v294, 17
    %v303 = vpop.permute.xlu0 %302
    %304 = vrot.lane.b32.xlu0 %v284, 17
    %v305 = vpop.permute.xlu0 %304
    %306 = vrot.lane.b32.xlu0 %v295, 17
    %v307 = vpop.permute.xlu0 %306
    %308 = vrot.lane.b32.xlu0 %v285, 17
    %v309 = vpop.permute.xlu0 %308
    %310 = vrot.lane.b32.xlu0 %v296, 17
    %v311 = vpop.permute.xlu0 %310
    %312 = vrot.lane.b32.xlu0 %v286, 17
    %v313 = vpop.permute.xlu0 %312
    %314 = vrot.lane.b32.xlu0 %v297, 17
    %v315 = vpop.permute.xlu0 %314
    %v316 = vsel %vm191, %v299, %v301
    %v317 = vsel %vm191, %v301, %v303
    %v318 = vsel %vm191, %v303, %v305
    %v319 = vsel %vm191, %v305, %v307
    %v320 = vsel %vm191, %v307, %v309
    %v321 = vsel %vm191, %v309, %v311
    %v322 = vsel %vm191, %v311, %v313
    %v323 = vsel %vm191, %v313, %v315
    %332 = vst [vmem:[#allocation2 + $0x200] sm:$0xf0] %v316
    %333 = vst [vmem:[#allocation2 + $0x208] sm:$0xf0] %v317
    %334 = vst [vmem:[#allocation2 + $0x210] sm:$0xf0] %v318
    %335 = vst [vmem:[#allocation2 + $0x218] sm:$0xf0] %v319
    %336 = vst [vmem:[#allocation2 + $0x220] sm:$0xf0] %v320
    %337 = vst [vmem:[#allocation2 + $0x228] sm:$0xf0] %v321
    %338 = vst [vmem:[#allocation2 + $0x230] sm:$0xf0] %v322
    %339 = vst [vmem:[#allocation2 + $0x238] sm:$0xf0] %v323
    %v340 = vld [vmem:[%s216 + $0x8] sm:$0xff]
    %v341 = vld [vmem:[%s216 + $0x10] sm:$0xff]
    %v342 = vld [vmem:[%s216 + $0x18] sm:$0xff]
    %v343 = vld [vmem:[%s216 + $0x20] sm:$0xff]
    %v344 = vld [vmem:[%s216 + $0x28] sm:$0xf]
    %v345 = vmul.f32 %v340, %v146
    %v346 = vmul.f32 %v341, %v149
    %v347 = vmul.f32 %v342, %v151
    %v348 = vmul.f32 %v343, %v153
    %v349 = vmul.f32 %v344, %v144
    %v355 = vcombine.low %v345, %v345
    %v356 = vcombine.low %v346, %v346
    %v357 = vcombine.low %v347, %v347
    %v358 = vcombine.low %v348, %v348
    %v359 = vcombine.low %v349, %v349
    %360 = vrot.lane.b32.xlu0 %v355, 17
    %v361 = vpop.permute.xlu0 %360
    %362 = vrot.lane.b32.xlu0 %v345, 17
    %v363 = vpop.permute.xlu0 %362
    %364 = vrot.lane.b32.xlu0 %v356, 17
    %v365 = vpop.permute.xlu0 %364
    %366 = vrot.lane.b32.xlu0 %v346, 17
    %v367 = vpop.permute.xlu0 %366
    %368 = vrot.lane.b32.xlu0 %v357, 17
    %v369 = vpop.permute.xlu0 %368
    %370 = vrot.lane.b32.xlu0 %v347, 17
    %v371 = vpop.permute.xlu0 %370
    %372 = vrot.lane.b32.xlu0 %v358, 17
    %v373 = vpop.permute.xlu0 %372
    %374 = vrot.lane.b32.xlu0 %v348, 17
    %v375 = vpop.permute.xlu0 %374
    %376 = vrot.lane.b32.xlu0 %v359, 17
    %v377 = vpop.permute.xlu0 %376
    %v378 = vsel %vm191, %v361, %v363
    %v379 = vsel %vm191, %v363, %v365
    %v380 = vsel %vm191, %v365, %v367
    %v381 = vsel %vm191, %v367, %v369
    %v382 = vsel %vm191, %v369, %v371
    %v383 = vsel %vm191, %v371, %v373
    %v384 = vsel %vm191, %v373, %v375
    %v385 = vsel %vm191, %v375, %v377
    %394 = vst [vmem:[#allocation2 + $0x240] sm:$0xf0] %v378
    %395 = vst [vmem:[#allocation2 + $0x248] sm:$0xf0] %v379
    %396 = vst [vmem:[#allocation2 + $0x250] sm:$0xf0] %v380
    %397 = vst [vmem:[#allocation2 + $0x258] sm:$0xf0] %v381
    %398 = vst [vmem:[#allocation2 + $0x260] sm:$0xf0] %v382
    %399 = vst [vmem:[#allocation2 + $0x268] sm:$0xf0] %v383
    %400 = vst [vmem:[#allocation2 + $0x270] sm:$0xf0] %v384
    %401 = vst [vmem:[#allocation2 + $0x278] sm:$0xf0] %v385
    %v402 = vld [vmem:[%s0 + $0x10] sm:$0xff]
    %v403 = vld [vmem:[%s0 + $0x18] sm:$0xff]
    %v404 = vld [vmem:[%s0 + $0x20] sm:$0xff]
    %v405 = vld [vmem:[%s0 + $0x28] sm:$0xff]
    %v406 = vld [vmem:[%s0 + $0x30] sm:$0xf]
    %v407 = vmul.f32 %v402, %v146
    %v408 = vmul.f32 %v403, %v149
    %v409 = vmul.f32 %v404, %v151
    %v410 = vmul.f32 %v405, %v153
    %v411 = vmul.f32 %v406, %v144
    %v417 = vcombine.high %v407, %v407
    %v418 = vcombine.high %v408, %v408
    %v419 = vcombine.high %v409, %v409
    %v420 = vcombine.high %v410, %v410
    %421 = vrot.lane.b32.xlu0 %v407, 17
    %v422 = vpop.permute.xlu0 %421
    %423 = vrot.lane.b32.xlu0 %v417, 17
    %v424 = vpop.permute.xlu0 %423
    %425 = vrot.lane.b32.xlu0 %v408, 17
    %v426 = vpop.permute.xlu0 %425
    %427 = vrot.lane.b32.xlu0 %v418, 17
    %v428 = vpop.permute.xlu0 %427
    %429 = vrot.lane.b32.xlu0 %v409, 17
    %v430 = vpop.permute.xlu0 %429
    %431 = vrot.lane.b32.xlu0 %v419, 17
    %v432 = vpop.permute.xlu0 %431
    %433 = vrot.lane.b32.xlu0 %v410, 17
    %v434 = vpop.permute.xlu0 %433
    %435 = vrot.lane.b32.xlu0 %v420, 17
    %v436 = vpop.permute.xlu0 %435
    %437 = vrot.lane.b32.xlu0 %v411, 17
    %v438 = vpop.permute.xlu0 %437
    %v439 = vsel %vm191, %v422, %v424
    %v440 = vsel %vm191, %v424, %v426
    %v441 = vsel %vm191, %v426, %v428
    %v442 = vsel %vm191, %v428, %v430
    %v443 = vsel %vm191, %v430, %v432
    %v444 = vsel %vm191, %v432, %v434
    %v445 = vsel %vm191, %v434, %v436
    %v446 = vsel %vm191, %v436, %v438
    %455 = vst [vmem:[#allocation2 + $0x480] sm:$0xf] %v439
    %456 = vst [vmem:[#allocation2 + $0x488] sm:$0xf] %v440
    %457 = vst [vmem:[#allocation2 + $0x490] sm:$0xf] %v441
    %458 = vst [vmem:[#allocation2 + $0x498] sm:$0xf] %v442
    %459 = vst [vmem:[#allocation2 + $0x4a0] sm:$0xf] %v443
    %460 = vst [vmem:[#allocation2 + $0x4a8] sm:$0xf] %v444
    %461 = vst [vmem:[#allocation2 + $0x4b0] sm:$0xf] %v445
    %462 = vst [vmem:[#allocation2 + $0x4b8] sm:$0xf] %v446
    %v463 = vld [vmem:[%s216 + $0x10] sm:$0xff]
    %v464 = vld [vmem:[%s216 + $0x18] sm:$0xff]
    %v465 = vld [vmem:[%s216 + $0x20] sm:$0xff]
    %v466 = vld [vmem:[%s216 + $0x28] sm:$0xff]
    %v467 = vld [vmem:[%s216 + $0x30] sm:$0xf]
    %v468 = vmul.f32 %v463, %v146
    %v469 = vmul.f32 %v464, %v149
    %v470 = vmul.f32 %v465, %v151
    %v471 = vmul.f32 %v466, %v153
    %v472 = vmul.f32 %v467, %v144
    %v478 = vcombine.high %v468, %v468
    %v479 = vcombine.high %v469, %v469
    %v480 = vcombine.high %v470, %v470
    %v481 = vcombine.high %v471, %v471
    %482 = vrot.lane.b32.xlu0 %v468, 17
    %v483 = vpop.permute.xlu0 %482
    %484 = vrot.lane.b32.xlu0 %v478, 17
    %v485 = vpop.permute.xlu0 %484
    %486 = vrot.lane.b32.xlu0 %v469, 17
    %v487 = vpop.permute.xlu0 %486
    %488 = vrot.lane.b32.xlu0 %v479, 17
    %v489 = vpop.permute.xlu0 %488
    %490 = vrot.lane.b32.xlu0 %v470, 17
    %v491 = vpop.permute.xlu0 %490
    %492 = vrot.lane.b32.xlu0 %v480, 17
    %v493 = vpop.permute.xlu0 %492
    %494 = vrot.lane.b32.xlu0 %v471, 17
    %v495 = vpop.permute.xlu0 %494
    %496 = vrot.lane.b32.xlu0 %v481, 17
    %v497 = vpop.permute.xlu0 %496
    %498 = vrot.lane.b32.xlu0 %v472, 17
    %v499 = vpop.permute.xlu0 %498
    %v500 = vsel %vm191, %v483, %v485
    %v501 = vsel %vm191, %v485, %v487
    %v502 = vsel %vm191, %v487, %v489
    %v503 = vsel %vm191, %v489, %v491
    %v504 = vsel %vm191, %v491, %v493
    %v505 = vsel %vm191, %v493, %v495
    %v506 = vsel %vm191, %v495, %v497
    %v507 = vsel %vm191, %v497, %v499
    %516 = vst [vmem:[#allocation2 + $0x4c0] sm:$0xf] %v500
    %517 = vst [vmem:[#allocation2 + $0x4c8] sm:$0xf] %v501
    %518 = vst [vmem:[#allocation2 + $0x4d0] sm:$0xf] %v502
    %519 = vst [vmem:[#allocation2 + $0x4d8] sm:$0xf] %v503
    %520 = vst [vmem:[#allocation2 + $0x4e0] sm:$0xf] %v504
    %521 = vst [vmem:[#allocation2 + $0x4e8] sm:$0xf] %v505
    %522 = vst [vmem:[#allocation2 + $0x4f0] sm:$0xf] %v506
    %523 = vst [vmem:[#allocation2 + $0x4f8] sm:$0xf] %v507
    %s524 = scalar_lea.vmem %s5, 1
    %v525 = vld [vmem:[%s524] ss:$8 sm:$0xf]
    %v526 = vld [vmem:[%s524] ss:$8 sm:$0xf0]
    %v527 = vor.u32 %v525, %v526
    %v528 = vld [vmem:[%s0] sm:$0xff]
    %v529 = vld [vmem:[%s0 + $0x8] sm:$0xff]
    %v530 = vld [vmem:[%s0 + $0x10] sm:$0xff]
    %v531 = vld [vmem:[%s0 + $0x18] sm:$0xff]
    %v532 = vld [vmem:[%s0 + $0x20] sm:$0xf]
    %v534 = vlaneseq
    %v535 = vshrl.u32 %v534, 7
    %v536 = vsub.s32 0, %v535
    %v537 = vrot.slane %v527, %v536
    %v538 = vlaneseq
    %v539 = vshrl.u32 %v538, 7
    %v540 = vsub.s32 1, %v539
    %v541 = vrot.slane %v527, %v540
    %v542 = vlaneseq
    %v543 = vshrl.u32 %v542, 7
    %v544 = vsub.s32 2, %v543
    %v545 = vrot.slane %v527, %v544
    %v546 = vlaneseq
    %v547 = vshrl.u32 %v546, 7
    %v548 = vsub.s32 3, %v547
    %v549 = vrot.slane %v527, %v548
    %v550 = vlaneseq
    %v551 = vshrl.u32 %v550, 7
    %v552 = vsub.s32 4, %v551
    %v553 = vrot.slane %v527, %v552
    %v554 = vlaneseq
    %v555 = vshrl.u32 %v554, 7
    %v556 = vsub.s32 5, %v555
    %v557 = vrot.slane %v527, %v556
    %v558 = vlaneseq
    %v559 = vshrl.u32 %v558, 7
    %v560 = vsub.s32 6, %v559
    %v561 = vrot.slane %v527, %v560
    %v562 = vlaneseq
    %v563 = vshrl.u32 %v562, 7
    %v564 = vsub.s32 7, %v563
    %v565 = vrot.slane %v527, %v564
    %v566 = vcombine.low %v537, %v541
    %v567 = vcombine.low %v545, %v549
    %v568 = vcombine.low %v553, %v557
    %v569 = vcombine.low %v561, %v565
    %570 = vrot.lane.b32.xlu0 %v566, 112
    %v571 = vpop.permute.xlu0 %570
    %572 = vrot.lane.b32.xlu0 %v567, 112
    %v573 = vpop.permute.xlu0 %572
    %574 = vrot.lane.b32.xlu0 %v568, 112
    %v575 = vpop.permute.xlu0 %574
    %576 = vrot.lane.b32.xlu0 %v569, 112
    %v577 = vpop.permute.xlu0 %576
    %v578 = vrot.slane %v571, 4
    %v579 = vrot.slane %v573, 4
    %v580 = vrot.slane %v575, 4
    %v581 = vrot.slane %v577, 4
    %vm582 = vcmask 916480
    %v583 = vsel %vm582, %v578, %v571
    %v584 = vsel %vm147, %v578, %v579
    %v585 = vsel %vm582, %v584, %v573
    %v586 = vsel %vm147, %v579, %v580
    %v587 = vsel %vm582, %v586, %v575
    %v588 = vsel %vm147, %v580, %v581
    %v589 = vsel %vm582, %v588, %v577
    %v595 = vmul.f32 %v528, %v583
    %v596 = vmul.f32 %v529, %v585
    %v597 = vmul.f32 %v530, %v587
    %v598 = vmul.f32 %v531, %v589
    %v599 = vmul.f32 %v532, %v581
    %v605 = vcombine.low %v595, %v595
    %v606 = vcombine.low %v596, %v596
    %v607 = vcombine.low %v597, %v597
    %v608 = vcombine.low %v598, %v598
    %v609 = vcombine.low %v599, %v599
    %610 = vrot.lane.b32.xlu0 %v605, 16
    %v611 = vpop.permute.xlu0 %610
    %612 = vrot.lane.b32.xlu0 %v595, 16
    %v613 = vpop.permute.xlu0 %612
    %614 = vrot.lane.b32.xlu0 %v606, 16
    %v615 = vpop.permute.xlu0 %614
    %616 = vrot.lane.b32.xlu0 %v596, 16
    %v617 = vpop.permute.xlu0 %616
    %618 = vrot.lane.b32.xlu0 %v607, 16
    %v619 = vpop.permute.xlu0 %618
    %620 = vrot.lane.b32.xlu0 %v597, 16
    %v621 = vpop.permute.xlu0 %620
    %622 = vrot.lane.b32.xlu0 %v608, 16
    %v623 = vpop.permute.xlu0 %622
    %624 = vrot.lane.b32.xlu0 %v598, 16
    %v625 = vpop.permute.xlu0 %624
    %626 = vrot.lane.b32.xlu0 %v609, 16
    %v627 = vpop.permute.xlu0 %626
    %vm628 = vcmask 130048
    %v629 = vsel %vm628, %v611, %v613
    %v630 = vsel %vm628, %v613, %v615
    %v631 = vsel %vm628, %v615, %v617
    %v632 = vsel %vm628, %v617, %v619
    %v633 = vsel %vm628, %v619, %v621
    %v634 = vsel %vm628, %v621, %v623
    %v635 = vsel %vm628, %v623, %v625
    %v636 = vsel %vm628, %v625, %v627
    %645 = vst [vmem:[#allocation2] sm:$0xf0] %v629
    %646 = vst [vmem:[#allocation2 + $0x8] sm:$0xf0] %v630
    %647 = vst [vmem:[#allocation2 + $0x10] sm:$0xf0] %v631
    %648 = vst [vmem:[#allocation2 + $0x18] sm:$0xf0] %v632
    %649 = vst [vmem:[#allocation2 + $0x20] sm:$0xf0] %v633
    %650 = vst [vmem:[#allocation2 + $0x28] sm:$0xf0] %v634
    %651 = vst [vmem:[#allocation2 + $0x30] sm:$0xf0] %v635
    %652 = vst [vmem:[#allocation2 + $0x38] sm:$0xf0] %v636
    %v653 = vld [vmem:[%s216] sm:$0xff]
    %v654 = vld [vmem:[%s216 + $0x8] sm:$0xff]
    %v655 = vld [vmem:[%s216 + $0x10] sm:$0xff]
    %v656 = vld [vmem:[%s216 + $0x18] sm:$0xff]
    %v657 = vld [vmem:[%s216 + $0x20] sm:$0xf]
    %v658 = vmul.f32 %v653, %v583
    %v659 = vmul.f32 %v654, %v585
    %v660 = vmul.f32 %v655, %v587
    %v661 = vmul.f32 %v656, %v589
    %v662 = vmul.f32 %v657, %v581
    %v668 = vcombine.low %v658, %v658
    %v669 = vcombine.low %v659, %v659
    %v670 = vcombine.low %v660, %v660
    %v671 = vcombine.low %v661, %v661
    %v672 = vcombine.low %v662, %v662
    %673 = vrot.lane.b32.xlu0 %v668, 16
    %v674 = vpop.permute.xlu0 %673
    %675 = vrot.lane.b32.xlu0 %v658, 16
    %v676 = vpop.permute.xlu0 %675
    %677 = vrot.lane.b32.xlu0 %v669, 16
    %v678 = vpop.permute.xlu0 %677
    %679 = vrot.lane.b32.xlu0 %v659, 16
    %v680 = vpop.permute.xlu0 %679
    %681 = vrot.lane.b32.xlu0 %v670, 16
    %v682 = vpop.permute.xlu0 %681
    %683 = vrot.lane.b32.xlu0 %v660, 16
    %v684 = vpop.permute.xlu0 %683
    %685 = vrot.lane.b32.xlu0 %v671, 16
    %v686 = vpop.permute.xlu0 %685
    %687 = vrot.lane.b32.xlu0 %v661, 16
    %v688 = vpop.permute.xlu0 %687
    %689 = vrot.lane.b32.xlu0 %v672, 16
    %v690 = vpop.permute.xlu0 %689
    %v691 = vsel %vm628, %v674, %v676
    %v692 = vsel %vm628, %v676, %v678
    %v693 = vsel %vm628, %v678, %v680
    %v694 = vsel %vm628, %v680, %v682
    %v695 = vsel %vm628, %v682, %v684
    %v696 = vsel %vm628, %v684, %v686
    %v697 = vsel %vm628, %v686, %v688
    %v698 = vsel %vm628, %v688, %v690
    %707 = vst [vmem:[#allocation2 + $0x40] sm:$0xf0] %v691
    %708 = vst [vmem:[#allocation2 + $0x48] sm:$0xf0] %v692
    %709 = vst [vmem:[#allocation2 + $0x50] sm:$0xf0] %v693
    %710 = vst [vmem:[#allocation2 + $0x58] sm:$0xf0] %v694
    %711 = vst [vmem:[#allocation2 + $0x60] sm:$0xf0] %v695
    %712 = vst [vmem:[#allocation2 + $0x68] sm:$0xf0] %v696
    %713 = vst [vmem:[#allocation2 + $0x70] sm:$0xf0] %v697
    %714 = vst [vmem:[#allocation2 + $0x78] sm:$0xf0] %v698
    %v715 = vld [vmem:[%s0 + $0x8] sm:$0xff]
    %v716 = vld [vmem:[%s0 + $0x10] sm:$0xff]
    %v717 = vld [vmem:[%s0 + $0x18] sm:$0xff]
    %v718 = vld [vmem:[%s0 + $0x20] sm:$0xff]
    %v719 = vld [vmem:[%s0 + $0x28] sm:$0xf]
    %v720 = vmul.f32 %v715, %v583
    %v721 = vmul.f32 %v716, %v585
    %v722 = vmul.f32 %v717, %v587
    %v723 = vmul.f32 %v718, %v589
    %v724 = vmul.f32 %v719, %v581
    %v730 = vcombine.high %v720, %v720
    %v731 = vcombine.high %v721, %v721
    %v732 = vcombine.high %v722, %v722
    %v733 = vcombine.high %v723, %v723
    %734 = vrot.lane.b32.xlu0 %v720, 16
    %v735 = vpop.permute.xlu0 %734
    %736 = vrot.lane.b32.xlu0 %v730, 16
    %v737 = vpop.permute.xlu0 %736
    %738 = vrot.lane.b32.xlu0 %v721, 16
    %v739 = vpop.permute.xlu0 %738
    %740 = vrot.lane.b32.xlu0 %v731, 16
    %v741 = vpop.permute.xlu0 %740
    %742 = vrot.lane.b32.xlu0 %v722, 16
    %v743 = vpop.permute.xlu0 %742
    %744 = vrot.lane.b32.xlu0 %v732, 16
    %v745 = vpop.permute.xlu0 %744
    %746 = vrot.lane.b32.xlu0 %v723, 16
    %v747 = vpop.permute.xlu0 %746
    %748 = vrot.lane.b32.xlu0 %v733, 16
    %v749 = vpop.permute.xlu0 %748
    %750 = vrot.lane.b32.xlu0 %v724, 16
    %v751 = vpop.permute.xlu0 %750
    %v752 = vsel %vm628, %v735, %v737
    %v753 = vsel %vm628, %v737, %v739
    %v754 = vsel %vm628, %v739, %v741
    %v755 = vsel %vm628, %v741, %v743
    %v756 = vsel %vm628, %v743, %v745
    %v757 = vsel %vm628, %v745, %v747
    %v758 = vsel %vm628, %v747, %v749
    %v759 = vsel %vm628, %v749, %v751
    %768 = vst [vmem:[#allocation2 + $0x280] sm:$0xf] %v752
    %769 = vst [vmem:[#allocation2 + $0x288] sm:$0xf] %v753
    %770 = vst [vmem:[#allocation2 + $0x290] sm:$0xf] %v754
    %771 = vst [vmem:[#allocation2 + $0x298] sm:$0xf] %v755
    %772 = vst [vmem:[#allocation2 + $0x2a0] sm:$0xf] %v756
    %773 = vst [vmem:[#allocation2 + $0x2a8] sm:$0xf] %v757
    %774 = vst [vmem:[#allocation2 + $0x2b0] sm:$0xf] %v758
    %775 = vst [vmem:[#allocation2 + $0x2b8] sm:$0xf] %v759
    %v776 = vld [vmem:[%s216 + $0x8] sm:$0xff]
    %v777 = vld [vmem:[%s216 + $0x10] sm:$0xff]
    %v778 = vld [vmem:[%s216 + $0x18] sm:$0xff]
    %v779 = vld [vmem:[%s216 + $0x20] sm:$0xff]
    %v780 = vld [vmem:[%s216 + $0x28] sm:$0xf]
    %v781 = vmul.f32 %v776, %v583
    %v782 = vmul.f32 %v777, %v585
    %v783 = vmul.f32 %v778, %v587
    %v784 = vmul.f32 %v779, %v589
    %v785 = vmul.f32 %v780, %v581
    %v791 = vcombine.high %v781, %v781
    %v792 = vcombine.high %v782, %v782
    %v793 = vcombine.high %v783, %v783
    %v794 = vcombine.high %v784, %v784
    %795 = vrot.lane.b32.xlu0 %v781, 16
    %v796 = vpop.permute.xlu0 %795
    %797 = vrot.lane.b32.xlu0 %v791, 16
    %v798 = vpop.permute.xlu0 %797
    %799 = vrot.lane.b32.xlu0 %v782, 16
    %v800 = vpop.permute.xlu0 %799
    %801 = vrot.lane.b32.xlu0 %v792, 16
    %v802 = vpop.permute.xlu0 %801
    %803 = vrot.lane.b32.xlu0 %v783, 16
    %v804 = vpop.permute.xlu0 %803
    %805 = vrot.lane.b32.xlu0 %v793, 16
    %v806 = vpop.permute.xlu0 %805
    %807 = vrot.lane.b32.xlu0 %v784, 16
    %v808 = vpop.permute.xlu0 %807
    %809 = vrot.lane.b32.xlu0 %v794, 16
    %v810 = vpop.permute.xlu0 %809
    %811 = vrot.lane.b32.xlu0 %v785, 16
    %v812 = vpop.permute.xlu0 %811
    %v813 = vsel %vm628, %v796, %v798
    %v814 = vsel %vm628, %v798, %v800
    %v815 = vsel %vm628, %v800, %v802
    %v816 = vsel %vm628, %v802, %v804
    %v817 = vsel %vm628, %v804, %v806
    %v818 = vsel %vm628, %v806, %v808
    %v819 = vsel %vm628, %v808, %v810
    %v820 = vsel %vm628, %v810, %v812
    %829 = vst [vmem:[#allocation2 + $0x2c0] sm:$0xf] %v813
    %830 = vst [vmem:[#allocation2 + $0x2c8] sm:$0xf] %v814
    %831 = vst [vmem:[#allocation2 + $0x2d0] sm:$0xf] %v815
    %832 = vst [vmem:[#allocation2 + $0x2d8] sm:$0xf] %v816
    %833 = vst [vmem:[#allocation2 + $0x2e0] sm:$0xf] %v817
    %834 = vst [vmem:[#allocation2 + $0x2e8] sm:$0xf] %v818
    %835 = vst [vmem:[#allocation2 + $0x2f0] sm:$0xf] %v819
    %836 = vst [vmem:[#allocation2 + $0x2f8] sm:$0xf] %v820
    %v837 = vld [vmem:[%s0 + $0x10] sm:$0xff]
    %v838 = vld [vmem:[%s0 + $0x18] sm:$0xff]
    %v839 = vld [vmem:[%s0 + $0x20] sm:$0xff]
    %v840 = vld [vmem:[%s0 + $0x28] sm:$0xff]
    %v841 = vld [vmem:[%s0 + $0x30] sm:$0xf]
    %v842 = vmul.f32 %v837, %v583
    %v843 = vmul.f32 %v838, %v585
    %v844 = vmul.f32 %v839, %v587
    %v845 = vmul.f32 %v840, %v589
    %v846 = vmul.f32 %v841, %v581
    %v852 = vcombine.low %v842, %v842
    %v853 = vcombine.low %v843, %v843
    %v854 = vcombine.low %v844, %v844
    %v855 = vcombine.low %v845, %v845
    %v856 = vcombine.low %v846, %v846
    %857 = vrot.lane.b32.xlu0 %v852, 16
    %v858 = vpop.permute.xlu0 %857
    %859 = vrot.lane.b32.xlu0 %v842, 16
    %v860 = vpop.permute.xlu0 %859
    %861 = vrot.lane.b32.xlu0 %v853, 16
    %v862 = vpop.permute.xlu0 %861
    %863 = vrot.lane.b32.xlu0 %v843, 16
    %v864 = vpop.permute.xlu0 %863
    %865 = vrot.lane.b32.xlu0 %v854, 16
    %v866 = vpop.permute.xlu0 %865
    %867 = vrot.lane.b32.xlu0 %v844, 16
    %v868 = vpop.permute.xlu0 %867
    %869 = vrot.lane.b32.xlu0 %v855, 16
    %v870 = vpop.permute.xlu0 %869
    %871 = vrot.lane.b32.xlu0 %v845, 16
    %v872 = vpop.permute.xlu0 %871
    %873 = vrot.lane.b32.xlu0 %v856, 16
    %v874 = vpop.permute.xlu0 %873
    %v875 = vsel %vm628, %v858, %v860
    %v876 = vsel %vm628, %v860, %v862
    %v877 = vsel %vm628, %v862, %v864
    %v878 = vsel %vm628, %v864, %v866
    %v879 = vsel %vm628, %v866, %v868
    %v880 = vsel %vm628, %v868, %v870
    %v881 = vsel %vm628, %v870, %v872
    %v882 = vsel %vm628, %v872, %v874
    %891 = vst [vmem:[#allocation2 + $0x480] sm:$0xf0] %v875
    %892 = vst [vmem:[#allocation2 + $0x488] sm:$0xf0] %v876
    %893 = vst [vmem:[#allocation2 + $0x490] sm:$0xf0] %v877
    %894 = vst [vmem:[#allocation2 + $0x498] sm:$0xf0] %v878
    %895 = vst [vmem:[#allocation2 + $0x4a0] sm:$0xf0] %v879
    %896 = vst [vmem:[#allocation2 + $0x4a8] sm:$0xf0] %v880
    %897 = vst [vmem:[#allocation2 + $0x4b0] sm:$0xf0] %v881
    %898 = vst [vmem:[#allocation2 + $0x4b8] sm:$0xf0] %v882
    %v899 = vld [vmem:[%s216 + $0x10] sm:$0xff]
    %v900 = vld [vmem:[%s216 + $0x18] sm:$0xff]
    %v901 = vld [vmem:[%s216 + $0x20] sm:$0xff]
    %v902 = vld [vmem:[%s216 + $0x28] sm:$0xff]
    %v903 = vld [vmem:[%s216 + $0x30] sm:$0xf]
    %v904 = vmul.f32 %v899, %v583
    %v905 = vmul.f32 %v900, %v585
    %v906 = vmul.f32 %v901, %v587
    %v907 = vmul.f32 %v902, %v589
    %v908 = vmul.f32 %v903, %v581
    %v914 = vcombine.low %v904, %v904
    %v915 = vcombine.low %v905, %v905
    %v916 = vcombine.low %v906, %v906
    %v917 = vcombine.low %v907, %v907
    %v918 = vcombine.low %v908, %v908
    %919 = vrot.lane.b32.xlu0 %v914, 16
    %v920 = vpop.permute.xlu0 %919
    %921 = vrot.lane.b32.xlu0 %v904, 16
    %v922 = vpop.permute.xlu0 %921
    %923 = vrot.lane.b32.xlu0 %v915, 16
    %v924 = vpop.permute.xlu0 %923
    %925 = vrot.lane.b32.xlu0 %v905, 16
    %v926 = vpop.permute.xlu0 %925
    %927 = vrot.lane.b32.xlu0 %v916, 16
    %v928 = vpop.permute.xlu0 %927
    %929 = vrot.lane.b32.xlu0 %v906, 16
    %v930 = vpop.permute.xlu0 %929
    %931 = vrot.lane.b32.xlu0 %v917, 16
    %v932 = vpop.permute.xlu0 %931
    %933 = vrot.lane.b32.xlu0 %v907, 16
    %v934 = vpop.permute.xlu0 %933
    %935 = vrot.lane.b32.xlu0 %v918, 16
    %v936 = vpop.permute.xlu0 %935
    %v937 = vsel %vm628, %v920, %v922
    %v938 = vsel %vm628, %v922, %v924
    %v939 = vsel %vm628, %v924, %v926
    %v940 = vsel %vm628, %v926, %v928
    %v941 = vsel %vm628, %v928, %v930
    %v942 = vsel %vm628, %v930, %v932
    %v943 = vsel %vm628, %v932, %v934
    %v944 = vsel %vm628, %v934, %v936
    %953 = vst [vmem:[#allocation2 + $0x4c0] sm:$0xf0] %v937
    %954 = vst [vmem:[#allocation2 + $0x4c8] sm:$0xf0] %v938
    %955 = vst [vmem:[#allocation2 + $0x4d0] sm:$0xf0] %v939
    %956 = vst [vmem:[#allocation2 + $0x4d8] sm:$0xf0] %v940
    %957 = vst [vmem:[#allocation2 + $0x4e0] sm:$0xf0] %v941
    %958 = vst [vmem:[#allocation2 + $0x4e8] sm:$0xf0] %v942
    %959 = vst [vmem:[#allocation2 + $0x4f0] sm:$0xf0] %v943
    %960 = vst [vmem:[#allocation2 + $0x4f8] sm:$0xf0] %v944
    %s961 = scalar_lea.vmem %s5, 2
    %v962 = vld [vmem:[%s961] ss:$8 sm:$0xf]
    %v963 = vld [vmem:[%s961] ss:$8 sm:$0xf0]
    %v964 = vor.u32 %v962, %v963
    %v965 = vld [vmem:[%s0] sm:$0xff]
    %v966 = vld [vmem:[%s0 + $0x8] sm:$0xff]
    %v967 = vld [vmem:[%s0 + $0x10] sm:$0xff]
    %v968 = vld [vmem:[%s0 + $0x18] sm:$0xff]
    %v969 = vld [vmem:[%s0 + $0x20] sm:$0xf]
    %v971 = vlaneseq
    %v972 = vshrl.u32 %v971, 7
    %v973 = vsub.s32 0, %v972
    %v974 = vrot.slane %v964, %v973
    %v975 = vlaneseq
    %v976 = vshrl.u32 %v975, 7
    %v977 = vsub.s32 1, %v976
    %v978 = vrot.slane %v964, %v977
    %v979 = vlaneseq
    %v980 = vshrl.u32 %v979, 7
    %v981 = vsub.s32 2, %v980
    %v982 = vrot.slane %v964, %v981
    %v983 = vlaneseq
    %v984 = vshrl.u32 %v983, 7
    %v985 = vsub.s32 3, %v984
    %v986 = vrot.slane %v964, %v985
    %v987 = vlaneseq
    %v988 = vshrl.u32 %v987, 7
    %v989 = vsub.s32 4, %v988
    %v990 = vrot.slane %v964, %v989
    %v991 = vlaneseq
    %v992 = vshrl.u32 %v991, 7
    %v993 = vsub.s32 5, %v992
    %v994 = vrot.slane %v964, %v993
    %v995 = vlaneseq
    %v996 = vshrl.u32 %v995, 7
    %v997 = vsub.s32 6, %v996
    %v998 = vrot.slane %v964, %v997
    %v999 = vlaneseq
    %v1000 = vshrl.u32 %v999, 7
    %v1001 = vsub.s32 7, %v1000
    %v1002 = vrot.slane %v964, %v1001
    %v1003 = vcombine.low %v974, %v978
    %v1004 = vcombine.low %v982, %v986
    %v1005 = vcombine.low %v990, %v994
    %v1006 = vcombine.low %v998, %v1002
    %1007 = vrot.lane.b32.xlu0 %v1003, 113
    %v1008 = vpop.permute.xlu0 %1007
    %1009 = vrot.lane.b32.xlu0 %v1004, 113
    %v1010 = vpop.permute.xlu0 %1009
    %1011 = vrot.lane.b32.xlu0 %v1005, 113
    %v1012 = vpop.permute.xlu0 %1011
    %1013 = vrot.lane.b32.xlu0 %v1006, 113
    %v1014 = vpop.permute.xlu0 %1013
    %v1015 = vrot.slane %v1008, 4
    %v1016 = vrot.slane %v1010, 4
    %v1017 = vrot.slane %v1012, 4
    %v1018 = vrot.slane %v1014, 4
    %vm1019 = vcmask 924672
    %v1020 = vsel %vm1019, %v1015, %v1008
    %v1021 = vsel %vm147, %v1015, %v1016
    %v1022 = vsel %vm1019, %v1021, %v1010
    %v1023 = vsel %vm147, %v1016, %v1017
    %v1024 = vsel %vm1019, %v1023, %v1012
    %v1025 = vsel %vm147, %v1017, %v1018
    %v1026 = vsel %vm1019, %v1025, %v1014
    %v1032 = vmul.f32 %v965, %v1020
    %v1033 = vmul.f32 %v966, %v1022
    %v1034 = vmul.f32 %v967, %v1024
    %v1035 = vmul.f32 %v968, %v1026
    %v1036 = vmul.f32 %v969, %v1018
    %v1042 = vcombine.high %v1032, %v1032
    %v1043 = vcombine.high %v1033, %v1033
    %v1044 = vcombine.high %v1034, %v1034
    %v1045 = vcombine.high %v1035, %v1035
    %1046 = vrot.lane.b32.xlu0 %v1032, 15
    %v1047 = vpop.permute.xlu0 %1046
    %1048 = vrot.lane.b32.xlu0 %v1042, 15
    %v1049 = vpop.permute.xlu0 %1048
    %1050 = vrot.lane.b32.xlu0 %v1033, 15
    %v1051 = vpop.permute.xlu0 %1050
    %1052 = vrot.lane.b32.xlu0 %v1043, 15
    %v1053 = vpop.permute.xlu0 %1052
    %1054 = vrot.lane.b32.xlu0 %v1034, 15
    %v1055 = vpop.permute.xlu0 %1054
    %1056 = vrot.lane.b32.xlu0 %v1044, 15
    %v1057 = vpop.permute.xlu0 %1056
    %1058 = vrot.lane.b32.xlu0 %v1035, 15
    %v1059 = vpop.permute.xlu0 %1058
    %1060 = vrot.lane.b32.xlu0 %v1045, 15
    %v1061 = vpop.permute.xlu0 %1060
    %1062 = vrot.lane.b32.xlu0 %v1036, 15
    %v1063 = vpop.permute.xlu0 %1062
    %vm1064 = vcmask 121856
    %v1065 = vsel %vm1064, %v1047, %v1049
    %v1066 = vsel %vm1064, %v1049, %v1051
    %v1067 = vsel %vm1064, %v1051, %v1053
    %v1068 = vsel %vm1064, %v1053, %v1055
    %v1069 = vsel %vm1064, %v1055, %v1057
    %v1070 = vsel %vm1064, %v1057, %v1059
    %v1071 = vsel %vm1064, %v1059, %v1061
    %v1072 = vsel %vm1064, %v1061, %v1063
    %1081 = vst [vmem:[#allocation2 + $0x80] sm:$0xf] %v1065
    %1082 = vst [vmem:[#allocation2 + $0x88] sm:$0xf] %v1066
    %1083 = vst [vmem:[#allocation2 + $0x90] sm:$0xf] %v1067
    %1084 = vst [vmem:[#allocation2 + $0x98] sm:$0xf] %v1068
    %1085 = vst [vmem:[#allocation2 + $0xa0] sm:$0xf] %v1069
    %1086 = vst [vmem:[#allocation2 + $0xa8] sm:$0xf] %v1070
    %1087 = vst [vmem:[#allocation2 + $0xb0] sm:$0xf] %v1071
    %1088 = vst [vmem:[#allocation2 + $0xb8] sm:$0xf] %v1072
    %v1089 = vld [vmem:[%s216] sm:$0xff]
    %v1090 = vld [vmem:[%s216 + $0x8] sm:$0xff]
    %v1091 = vld [vmem:[%s216 + $0x10] sm:$0xff]
    %v1092 = vld [vmem:[%s216 + $0x18] sm:$0xff]
    %v1093 = vld [vmem:[%s216 + $0x20] sm:$0xf]
    %v1094 = vmul.f32 %v1089, %v1020
    %v1095 = vmul.f32 %v1090, %v1022
    %v1096 = vmul.f32 %v1091, %v1024
    %v1097 = vmul.f32 %v1092, %v1026
    %v1098 = vmul.f32 %v1093, %v1018
    %v1104 = vcombine.high %v1094, %v1094
    %v1105 = vcombine.high %v1095, %v1095
    %v1106 = vcombine.high %v1096, %v1096
    %v1107 = vcombine.high %v1097, %v1097
    %1108 = vrot.lane.b32.xlu0 %v1094, 15
    %v1109 = vpop.permute.xlu0 %1108
    %1110 = vrot.lane.b32.xlu0 %v1104, 15
    %v1111 = vpop.permute.xlu0 %1110
    %1112 = vrot.lane.b32.xlu0 %v1095, 15
    %v1113 = vpop.permute.xlu0 %1112
    %1114 = vrot.lane.b32.xlu0 %v1105, 15
    %v1115 = vpop.permute.xlu0 %1114
    %1116 = vrot.lane.b32.xlu0 %v1096, 15
    %v1117 = vpop.permute.xlu0 %1116
    %1118 = vrot.lane.b32.xlu0 %v1106, 15
    %v1119 = vpop.permute.xlu0 %1118
    %1120 = vrot.lane.b32.xlu0 %v1097, 15
    %v1121 = vpop.permute.xlu0 %1120
    %1122 = vrot.lane.b32.xlu0 %v1107, 15
    %v1123 = vpop.permute.xlu0 %1122
    %1124 = vrot.lane.b32.xlu0 %v1098, 15
    %v1125 = vpop.permute.xlu0 %1124
    %v1126 = vsel %vm1064, %v1109, %v1111
    %v1127 = vsel %vm1064, %v1111, %v1113
    %v1128 = vsel %vm1064, %v1113, %v1115
    %v1129 = vsel %vm1064, %v1115, %v1117
    %v1130 = vsel %vm1064, %v1117, %v1119
    %v1131 = vsel %vm1064, %v1119, %v1121
    %v1132 = vsel %vm1064, %v1121, %v1123
    %v1133 = vsel %vm1064, %v1123, %v1125
    %1142 = vst [vmem:[#allocation2 + $0xc0] sm:$0xf] %v1126
    %1143 = vst [vmem:[#allocation2 + $0xc8] sm:$0xf] %v1127
    %1144 = vst [vmem:[#allocation2 + $0xd0] sm:$0xf] %v1128
    %1145 = vst [vmem:[#allocation2 + $0xd8] sm:$0xf] %v1129
    %1146 = vst [vmem:[#allocation2 + $0xe0] sm:$0xf] %v1130
    %1147 = vst [vmem:[#allocation2 + $0xe8] sm:$0xf] %v1131
    %1148 = vst [vmem:[#allocation2 + $0xf0] sm:$0xf] %v1132
    %1149 = vst [vmem:[#allocation2 + $0xf8] sm:$0xf] %v1133
    %v1150 = vld [vmem:[%s0 + $0x8] sm:$0xff]
    %v1151 = vld [vmem:[%s0 + $0x10] sm:$0xff]
    %v1152 = vld [vmem:[%s0 + $0x18] sm:$0xff]
    %v1153 = vld [vmem:[%s0 + $0x20] sm:$0xff]
    %v1154 = vld [vmem:[%s0 + $0x28] sm:$0xf]
    %v1155 = vmul.f32 %v1150, %v1020
    %v1156 = vmul.f32 %v1151, %v1022
    %v1157 = vmul.f32 %v1152, %v1024
    %v1158 = vmul.f32 %v1153, %v1026
    %v1159 = vmul.f32 %v1154, %v1018
    %v1165 = vcombine.low %v1155, %v1155
    %v1166 = vcombine.low %v1156, %v1156
    %v1167 = vcombine.low %v1157, %v1157
    %v1168 = vcombine.low %v1158, %v1158
    %v1169 = vcombine.low %v1159, %v1159
    %1170 = vrot.lane.b32.xlu0 %v1165, 15
    %v1171 = vpop.permute.xlu0 %1170
    %1172 = vrot.lane.b32.xlu0 %v1155, 15
    %v1173 = vpop.permute.xlu0 %1172
    %1174 = vrot.lane.b32.xlu0 %v1166, 15
    %v1175 = vpop.permute.xlu0 %1174
    %1176 = vrot.lane.b32.xlu0 %v1156, 15
    %v1177 = vpop.permute.xlu0 %1176
    %1178 = vrot.lane.b32.xlu0 %v1167, 15
    %v1179 = vpop.permute.xlu0 %1178
    %1180 = vrot.lane.b32.xlu0 %v1157, 15
    %v1181 = vpop.permute.xlu0 %1180
    %1182 = vrot.lane.b32.xlu0 %v1168, 15
    %v1183 = vpop.permute.xlu0 %1182
    %1184 = vrot.lane.b32.xlu0 %v1158, 15
    %v1185 = vpop.permute.xlu0 %1184
    %1186 = vrot.lane.b32.xlu0 %v1169, 15
    %v1187 = vpop.permute.xlu0 %1186
    %v1188 = vsel %vm1064, %v1171, %v1173
    %v1189 = vsel %vm1064, %v1173, %v1175
    %v1190 = vsel %vm1064, %v1175, %v1177
    %v1191 = vsel %vm1064, %v1177, %v1179
    %v1192 = vsel %vm1064, %v1179, %v1181
    %v1193 = vsel %vm1064, %v1181, %v1183
    %v1194 = vsel %vm1064, %v1183, %v1185
    %v1195 = vsel %vm1064, %v1185, %v1187
    %1204 = vst [vmem:[#allocation2 + $0x280] sm:$0xf0] %v1188
    %1205 = vst [vmem:[#allocation2 + $0x288] sm:$0xf0] %v1189
    %1206 = vst [vmem:[#allocation2 + $0x290] sm:$0xf0] %v1190
    %1207 = vst [vmem:[#allocation2 + $0x298] sm:$0xf0] %v1191
    %1208 = vst [vmem:[#allocation2 + $0x2a0] sm:$0xf0] %v1192
    %1209 = vst [vmem:[#allocation2 + $0x2a8] sm:$0xf0] %v1193
    %1210 = vst [vmem:[#allocation2 + $0x2b0] sm:$0xf0] %v1194
    %1211 = vst [vmem:[#allocation2 + $0x2b8] sm:$0xf0] %v1195
    %v1212 = vld [vmem:[%s216 + $0x8] sm:$0xff]
    %v1213 = vld [vmem:[%s216 + $0x10] sm:$0xff]
    %v1214 = vld [vmem:[%s216 + $0x18] sm:$0xff]
    %v1215 = vld [vmem:[%s216 + $0x20] sm:$0xff]
    %v1216 = vld [vmem:[%s216 + $0x28] sm:$0xf]
    %v1217 = vmul.f32 %v1212, %v1020
    %v1218 = vmul.f32 %v1213, %v1022
    %v1219 = vmul.f32 %v1214, %v1024
    %v1220 = vmul.f32 %v1215, %v1026
    %v1221 = vmul.f32 %v1216, %v1018
    %v1227 = vcombine.low %v1217, %v1217
    %v1228 = vcombine.low %v1218, %v1218
    %v1229 = vcombine.low %v1219, %v1219
    %v1230 = vcombine.low %v1220, %v1220
    %v1231 = vcombine.low %v1221, %v1221
    %1232 = vrot.lane.b32.xlu0 %v1227, 15
    %v1233 = vpop.permute.xlu0 %1232
    %1234 = vrot.lane.b32.xlu0 %v1217, 15
    %v1235 = vpop.permute.xlu0 %1234
    %1236 = vrot.lane.b32.xlu0 %v1228, 15
    %v1237 = vpop.permute.xlu0 %1236
    %1238 = vrot.lane.b32.xlu0 %v1218, 15
    %v1239 = vpop.permute.xlu0 %1238
    %1240 = vrot.lane.b32.xlu0 %v1229, 15
    %v1241 = vpop.permute.xlu0 %1240
    %1242 = vrot.lane.b32.xlu0 %v1219, 15
    %v1243 = vpop.permute.xlu0 %1242
    %1244 = vrot.lane.b32.xlu0 %v1230, 15
    %v1245 = vpop.permute.xlu0 %1244
    %1246 = vrot.lane.b32.xlu0 %v1220, 15
    %v1247 = vpop.permute.xlu0 %1246
    %1248 = vrot.lane.b32.xlu0 %v1231, 15
    %v1249 = vpop.permute.xlu0 %1248
    %v1250 = vsel %vm1064, %v1233, %v1235
    %v1251 = vsel %vm1064, %v1235, %v1237
    %v1252 = vsel %vm1064, %v1237, %v1239
    %v1253 = vsel %vm1064, %v1239, %v1241
    %v1254 = vsel %vm1064, %v1241, %v1243
    %v1255 = vsel %vm1064, %v1243, %v1245
    %v1256 = vsel %vm1064, %v1245, %v1247
    %v1257 = vsel %vm1064, %v1247, %v1249
    %1266 = vst [vmem:[#allocation2 + $0x2c0] sm:$0xf0] %v1250
    %1267 = vst [vmem:[#allocation2 + $0x2c8] sm:$0xf0] %v1251
    %1268 = vst [vmem:[#allocation2 + $0x2d0] sm:$0xf0] %v1252
    %1269 = vst [vmem:[#allocation2 + $0x2d8] sm:$0xf0] %v1253
    %1270 = vst [vmem:[#allocation2 + $0x2e0] sm:$0xf0] %v1254
    %1271 = vst [vmem:[#allocation2 + $0x2e8] sm:$0xf0] %v1255
    %1272 = vst [vmem:[#allocation2 + $0x2f0] sm:$0xf0] %v1256
    %1273 = vst [vmem:[#allocation2 + $0x2f8] sm:$0xf0] %v1257
    %v1274 = vld [vmem:[%s0 + $0x10] sm:$0xff]
    %v1275 = vld [vmem:[%s0 + $0x18] sm:$0xff]
    %v1276 = vld [vmem:[%s0 + $0x20] sm:$0xff]
    %v1277 = vld [vmem:[%s0 + $0x28] sm:$0xff]
    %v1278 = vld [vmem:[%s0 + $0x30] sm:$0xf]
    %v1279 = vmul.f32 %v1274, %v1020
    %v1280 = vmul.f32 %v1275, %v1022
    %v1281 = vmul.f32 %v1276, %v1024
    %v1282 = vmul.f32 %v1277, %v1026
    %v1283 = vmul.f32 %v1278, %v1018
    %v1289 = vcombine.high %v1279, %v1279
    %v1290 = vcombine.high %v1280, %v1280
    %v1291 = vcombine.high %v1281, %v1281
    %v1292 = vcombine.high %v1282, %v1282
    %1293 = vrot.lane.b32.xlu0 %v1279, 15
    %v1294 = vpop.permute.xlu0 %1293
    %1295 = vrot.lane.b32.xlu0 %v1289, 15
    %v1296 = vpop.permute.xlu0 %1295
    %1297 = vrot.lane.b32.xlu0 %v1280, 15
    %v1298 = vpop.permute.xlu0 %1297
    %1299 = vrot.lane.b32.xlu0 %v1290, 15
    %v1300 = vpop.permute.xlu0 %1299
    %1301 = vrot.lane.b32.xlu0 %v1281, 15
    %v1302 = vpop.permute.xlu0 %1301
    %1303 = vrot.lane.b32.xlu0 %v1291, 15
    %v1304 = vpop.permute.xlu0 %1303
    %1305 = vrot.lane.b32.xlu0 %v1282, 15
    %v1306 = vpop.permute.xlu0 %1305
    %1307 = vrot.lane.b32.xlu0 %v1292, 15
    %v1308 = vpop.permute.xlu0 %1307
    %1309 = vrot.lane.b32.xlu0 %v1283, 15
    %v1310 = vpop.permute.xlu0 %1309
    %v1311 = vsel %vm1064, %v1294, %v1296
    %v1312 = vsel %vm1064, %v1296, %v1298
    %v1313 = vsel %vm1064, %v1298, %v1300
    %v1314 = vsel %vm1064, %v1300, %v1302
    %v1315 = vsel %vm1064, %v1302, %v1304
    %v1316 = vsel %vm1064, %v1304, %v1306
    %v1317 = vsel %vm1064, %v1306, %v1308
    %v1318 = vsel %vm1064, %v1308, %v1310
    %1327 = vst [vmem:[#allocation2 + $0x500] sm:$0xf] %v1311
    %1328 = vst [vmem:[#allocation2 + $0x508] sm:$0xf] %v1312
    %1329 = vst [vmem:[#allocation2 + $0x510] sm:$0xf] %v1313
    %1330 = vst [vmem:[#allocation2 + $0x518] sm:$0xf] %v1314
    %1331 = vst [vmem:[#allocation2 + $0x520] sm:$0xf] %v1315
    %1332 = vst [vmem:[#allocation2 + $0x528] sm:$0xf] %v1316
    %1333 = vst [vmem:[#allocation2 + $0x530] sm:$0xf] %v1317
    %1334 = vst [vmem:[#allocation2 + $0x538] sm:$0xf] %v1318
    %v1335 = vld [vmem:[%s216 + $0x10] sm:$0xff]
    %v1336 = vld [vmem:[%s216 + $0x18] sm:$0xff]
    %v1337 = vld [vmem:[%s216 + $0x20] sm:$0xff]
    %v1338 = vld [vmem:[%s216 + $0x28] sm:$0xff]
    %v1339 = vld [vmem:[%s216 + $0x30] sm:$0xf]
    %v1340 = vmul.f32 %v1335, %v1020
    %v1341 = vmul.f32 %v1336, %v1022
    %v1342 = vmul.f32 %v1337, %v1024
    %v1343 = vmul.f32 %v1338, %v1026
    %v1344 = vmul.f32 %v1339, %v1018
    %v1350 = vcombine.high %v1340, %v1340
    %v1351 = vcombine.high %v1341, %v1341
    %v1352 = vcombine.high %v1342, %v1342
    %v1353 = vcombine.high %v1343, %v1343
    %1354 = vrot.lane.b32.xlu0 %v1340, 15
    %v1355 = vpop.permute.xlu0 %1354
    %1356 = vrot.lane.b32.xlu0 %v1350, 15
    %v1357 = vpop.permute.xlu0 %1356
    %1358 = vrot.lane.b32.xlu0 %v1341, 15
    %v1359 = vpop.permute.xlu0 %1358
    %1360 = vrot.lane.b32.xlu0 %v1351, 15
    %v1361 = vpop.permute.xlu0 %1360
    %1362 = vrot.lane.b32.xlu0 %v1342, 15
    %v1363 = vpop.permute.xlu0 %1362
    %1364 = vrot.lane.b32.xlu0 %v1352, 15
    %v1365 = vpop.permute.xlu0 %1364
    %1366 = vrot.lane.b32.xlu0 %v1343, 15
    %v1367 = vpop.permute.xlu0 %1366
    %1368 = vrot.lane.b32.xlu0 %v1353, 15
    %v1369 = vpop.permute.xlu0 %1368
    %1370 = vrot.lane.b32.xlu0 %v1344, 15
    %v1371 = vpop.permute.xlu0 %1370
    %v1372 = vsel %vm1064, %v1355, %v1357
    %v1373 = vsel %vm1064, %v1357, %v1359
    %v1374 = vsel %vm1064, %v1359, %v1361
    %v1375 = vsel %vm1064, %v1361, %v1363
    %v1376 = vsel %vm1064, %v1363, %v1365
    %v1377 = vsel %vm1064, %v1365, %v1367
    %v1378 = vsel %vm1064, %v1367, %v1369
    %v1379 = vsel %vm1064, %v1369, %v1371
    %1388 = vst [vmem:[#allocation2 + $0x540] sm:$0xf] %v1372
    %1389 = vst [vmem:[#allocation2 + $0x548] sm:$0xf] %v1373
    %1390 = vst [vmem:[#allocation2 + $0x550] sm:$0xf] %v1374
    %1391 = vst [vmem:[#allocation2 + $0x558] sm:$0xf] %v1375
    %1392 = vst [vmem:[#allocation2 + $0x560] sm:$0xf] %v1376
    %1393 = vst [vmem:[#allocation2 + $0x568] sm:$0xf] %v1377
    %1394 = vst [vmem:[#allocation2 + $0x570] sm:$0xf] %v1378
    %1395 = vst [vmem:[#allocation2 + $0x578] sm:$0xf] %v1379
    %s1396 = scalar_lea.vmem %s5, 3
    %v1397 = vld [vmem:[%s1396] ss:$8 sm:$0xf]
    %v1398 = vld [vmem:[%s1396] ss:$8 sm:$0xf0]
    %v1399 = vor.u32 %v1397, %v1398
    %v1400 = vld [vmem:[%s0] sm:$0xff]
    %v1401 = vld [vmem:[%s0 + $0x8] sm:$0xff]
    %v1402 = vld [vmem:[%s0 + $0x10] sm:$0xff]
    %v1403 = vld [vmem:[%s0 + $0x18] sm:$0xff]
    %v1404 = vld [vmem:[%s0 + $0x20] sm:$0xf]
    %v1406 = vlaneseq
    %v1407 = vshrl.u32 %v1406, 7
    %v1408 = vsub.s32 0, %v1407
    %v1409 = vrot.slane %v1399, %v1408
    %v1410 = vlaneseq
    %v1411 = vshrl.u32 %v1410, 7
    %v1412 = vsub.s32 1, %v1411
    %v1413 = vrot.slane %v1399, %v1412
    %v1414 = vlaneseq
    %v1415 = vshrl.u32 %v1414, 7
    %v1416 = vsub.s32 2, %v1415
    %v1417 = vrot.slane %v1399, %v1416
    %v1418 = vlaneseq
    %v1419 = vshrl.u32 %v1418, 7
    %v1420 = vsub.s32 3, %v1419
    %v1421 = vrot.slane %v1399, %v1420
    %v1422 = vlaneseq
    %v1423 = vshrl.u32 %v1422, 7
    %v1424 = vsub.s32 4, %v1423
    %v1425 = vrot.slane %v1399, %v1424
    %v1426 = vlaneseq
    %v1427 = vshrl.u32 %v1426, 7
    %v1428 = vsub.s32 5, %v1427
    %v1429 = vrot.slane %v1399, %v1428
    %v1430 = vlaneseq
    %v1431 = vshrl.u32 %v1430, 7
    %v1432 = vsub.s32 6, %v1431
    %v1433 = vrot.slane %v1399, %v1432
    %v1434 = vlaneseq
    %v1435 = vshrl.u32 %v1434, 7
    %v1436 = vsub.s32 7, %v1435
    %v1437 = vrot.slane %v1399, %v1436
    %v1438 = vcombine.low %v1409, %v1413
    %v1439 = vcombine.low %v1417, %v1421
    %v1440 = vcombine.low %v1425, %v1429
    %v1441 = vcombine.low %v1433, %v1437
    %1442 = vrot.lane.b32.xlu0 %v1438, 127
    %v1443 = vpop.permute.xlu0 %1442
    %1444 = vrot.lane.b32.xlu0 %v1439, 127
    %v1445 = vpop.permute.xlu0 %1444
    %1446 = vrot.lane.b32.xlu0 %v1440, 127
    %v1447 = vpop.permute.xlu0 %1446
    %1448 = vrot.lane.b32.xlu0 %v1441, 127
    %v1449 = vpop.permute.xlu0 %1448
    %v1450 = vrot.slane %v1443, 4
    %v1451 = vrot.slane %v1445, 4
    %v1452 = vrot.slane %v1447, 4
    %v1453 = vrot.slane %v1449, 4
    %vm1454 = vcmask 1039360
    %v1455 = vsel %vm1454, %v1450, %v1443
    %v1456 = vsel %vm147, %v1450, %v1451
    %v1457 = vsel %vm1454, %v1456, %v1445
    %v1458 = vsel %vm147, %v1451, %v1452
    %v1459 = vsel %vm1454, %v1458, %v1447
    %v1460 = vsel %vm147, %v1452, %v1453
    %v1461 = vsel %vm1454, %v1460, %v1449
    %v1467 = vmul.f32 %v1400, %v1455
    %v1468 = vmul.f32 %v1401, %v1457
    %v1469 = vmul.f32 %v1402, %v1459
    %v1470 = vmul.f32 %v1403, %v1461
    %v1471 = vmul.f32 %v1404, %v1453
    %v1477 = vcombine.low %v1467, %v1467
    %v1478 = vcombine.low %v1468, %v1468
    %v1479 = vcombine.low %v1469, %v1469
    %v1480 = vcombine.low %v1470, %v1470
    %v1481 = vcombine.low %v1471, %v1471
    %1482 = vrot.lane.b32.xlu0 %v1477, 1
    %v1483 = vpop.permute.xlu0 %1482
    %1484 = vrot.lane.b32.xlu0 %v1467, 1
    %v1485 = vpop.permute.xlu0 %1484
    %1486 = vrot.lane.b32.xlu0 %v1478, 1
    %v1487 = vpop.permute.xlu0 %1486
    %1488 = vrot.lane.b32.xlu0 %v1468, 1
    %v1489 = vpop.permute.xlu0 %1488
    %1490 = vrot.lane.b32.xlu0 %v1479, 1
    %v1491 = vpop.permute.xlu0 %1490
    %1492 = vrot.lane.b32.xlu0 %v1469, 1
    %v1493 = vpop.permute.xlu0 %1492
    %1494 = vrot.lane.b32.xlu0 %v1480, 1
    %v1495 = vpop.permute.xlu0 %1494
    %1496 = vrot.lane.b32.xlu0 %v1470, 1
    %v1497 = vpop.permute.xlu0 %1496
    %1498 = vrot.lane.b32.xlu0 %v1481, 1
    %v1499 = vpop.permute.xlu0 %1498
    %vm1500 = vcmask 7168
    %v1501 = vsel %vm1500, %v1483, %v1485
    %v1502 = vsel %vm1500, %v1485, %v1487
    %v1503 = vsel %vm1500, %v1487, %v1489
    %v1504 = vsel %vm1500, %v1489, %v1491
    %v1505 = vsel %vm1500, %v1491, %v1493
    %v1506 = vsel %vm1500, %v1493, %v1495
    %v1507 = vsel %vm1500, %v1495, %v1497
    %v1508 = vsel %vm1500, %v1497, %v1499
    %1517 = vst [vmem:[#allocation2 + $0x80] sm:$0xf0] %v1501
    %1518 = vst [vmem:[#allocation2 + $0x88] sm:$0xf0] %v1502
    %1519 = vst [vmem:[#allocation2 + $0x90] sm:$0xf0] %v1503
    %1520 = vst [vmem:[#allocation2 + $0x98] sm:$0xf0] %v1504
    %1521 = vst [vmem:[#allocation2 + $0xa0] sm:$0xf0] %v1505
    %1522 = vst [vmem:[#allocation2 + $0xa8] sm:$0xf0] %v1506
    %1523 = vst [vmem:[#allocation2 + $0xb0] sm:$0xf0] %v1507
    %1524 = vst [vmem:[#allocation2 + $0xb8] sm:$0xf0] %v1508
    %v1525 = vld [vmem:[%s216] sm:$0xff]
    %v1526 = vld [vmem:[%s216 + $0x8] sm:$0xff]
    %v1527 = vld [vmem:[%s216 + $0x10] sm:$0xff]
    %v1528 = vld [vmem:[%s216 + $0x18] sm:$0xff]
    %v1529 = vld [vmem:[%s216 + $0x20] sm:$0xf]
    %v1530 = vmul.f32 %v1525, %v1455
    %v1531 = vmul.f32 %v1526, %v1457
    %v1532 = vmul.f32 %v1527, %v1459
    %v1533 = vmul.f32 %v1528, %v1461
    %v1534 = vmul.f32 %v1529, %v1453
    %v1540 = vcombine.low %v1530, %v1530
    %v1541 = vcombine.low %v1531, %v1531
    %v1542 = vcombine.low %v1532, %v1532
    %v1543 = vcombine.low %v1533, %v1533
    %v1544 = vcombine.low %v1534, %v1534
    %1545 = vrot.lane.b32.xlu0 %v1540, 1
    %v1546 = vpop.permute.xlu0 %1545
    %1547 = vrot.lane.b32.xlu0 %v1530, 1
    %v1548 = vpop.permute.xlu0 %1547
    %1549 = vrot.lane.b32.xlu0 %v1541, 1
    %v1550 = vpop.permute.xlu0 %1549
    %1551 = vrot.lane.b32.xlu0 %v1531, 1
    %v1552 = vpop.permute.xlu0 %1551
    %1553 = vrot.lane.b32.xlu0 %v1542, 1
    %v1554 = vpop.permute.xlu0 %1553
    %1555 = vrot.lane.b32.xlu0 %v1532, 1
    %v1556 = vpop.permute.xlu0 %1555
    %1557 = vrot.lane.b32.xlu0 %v1543, 1
    %v1558 = vpop.permute.xlu0 %1557
    %1559 = vrot.lane.b32.xlu0 %v1533, 1
    %v1560 = vpop.permute.xlu0 %1559
    %1561 = vrot.lane.b32.xlu0 %v1544, 1
    %v1562 = vpop.permute.xlu0 %1561
    %v1563 = vsel %vm1500, %v1546, %v1548
    %v1564 = vsel %vm1500, %v1548, %v1550
    %v1565 = vsel %vm1500, %v1550, %v1552
    %v1566 = vsel %vm1500, %v1552, %v1554
    %v1567 = vsel %vm1500, %v1554, %v1556
    %v1568 = vsel %vm1500, %v1556, %v1558
    %v1569 = vsel %vm1500, %v1558, %v1560
    %v1570 = vsel %vm1500, %v1560, %v1562
    %1579 = vst [vmem:[#allocation2 + $0xc0] sm:$0xf0] %v1563
    %1580 = vst [vmem:[#allocation2 + $0xc8] sm:$0xf0] %v1564
    %1581 = vst [vmem:[#allocation2 + $0xd0] sm:$0xf0] %v1565
    %1582 = vst [vmem:[#allocation2 + $0xd8] sm:$0xf0] %v1566
    %1583 = vst [vmem:[#allocation2 + $0xe0] sm:$0xf0] %v1567
    %1584 = vst [vmem:[#allocation2 + $0xe8] sm:$0xf0] %v1568
    %1585 = vst [vmem:[#allocation2 + $0xf0] sm:$0xf0] %v1569
    %1586 = vst [vmem:[#allocation2 + $0xf8] sm:$0xf0] %v1570
    %v1587 = vld [vmem:[%s0 + $0x8] sm:$0xff]
    %v1588 = vld [vmem:[%s0 + $0x10] sm:$0xff]
    %v1589 = vld [vmem:[%s0 + $0x18] sm:$0xff]
    %v1590 = vld [vmem:[%s0 + $0x20] sm:$0xff]
    %v1591 = vld [vmem:[%s0 + $0x28] sm:$0xf]
    %v1592 = vmul.f32 %v1587, %v1455
    %v1593 = vmul.f32 %v1588, %v1457
    %v1594 = vmul.f32 %v1589, %v1459
    %v1595 = vmul.f32 %v1590, %v1461
    %v1596 = vmul.f32 %v1591, %v1453
    %v1602 = vcombine.high %v1592, %v1592
    %v1603 = vcombine.high %v1593, %v1593
    %v1604 = vcombine.high %v1594, %v1594
    %v1605 = vcombine.high %v1595, %v1595
    %1606 = vrot.lane.b32.xlu0 %v1592, 1
    %v1607 = vpop.permute.xlu0 %1606
    %1608 = vrot.lane.b32.xlu0 %v1602, 1
    %v1609 = vpop.permute.xlu0 %1608
    %1610 = vrot.lane.b32.xlu0 %v1593, 1
    %v1611 = vpop.permute.xlu0 %1610
    %1612 = vrot.lane.b32.xlu0 %v1603, 1
    %v1613 = vpop.permute.xlu0 %1612
    %1614 = vrot.lane.b32.xlu0 %v1594, 1
    %v1615 = vpop.permute.xlu0 %1614
    %1616 = vrot.lane.b32.xlu0 %v1604, 1
    %v1617 = vpop.permute.xlu0 %1616
    %1618 = vrot.lane.b32.xlu0 %v1595, 1
    %v1619 = vpop.permute.xlu0 %1618
    %1620 = vrot.lane.b32.xlu0 %v1605, 1
    %v1621 = vpop.permute.xlu0 %1620
    %1622 = vrot.lane.b32.xlu0 %v1596, 1
    %v1623 = vpop.permute.xlu0 %1622
    %v1624 = vsel %vm1500, %v1607, %v1609
    %v1625 = vsel %vm1500, %v1609, %v1611
    %v1626 = vsel %vm1500, %v1611, %v1613
    %v1627 = vsel %vm1500, %v1613, %v1615
    %v1628 = vsel %vm1500, %v1615, %v1617
    %v1629 = vsel %vm1500, %v1617, %v1619
    %v1630 = vsel %vm1500, %v1619, %v1621
    %v1631 = vsel %vm1500, %v1621, %v1623
    %1640 = vst [vmem:[#allocation2 + $0x300] sm:$0xf] %v1624
    %1641 = vst [vmem:[#allocation2 + $0x308] sm:$0xf] %v1625
    %1642 = vst [vmem:[#allocation2 + $0x310] sm:$0xf] %v1626
    %1643 = vst [vmem:[#allocation2 + $0x318] sm:$0xf] %v1627
    %1644 = vst [vmem:[#allocation2 + $0x320] sm:$0xf] %v1628
    %1645 = vst [vmem:[#allocation2 + $0x328] sm:$0xf] %v1629
    %1646 = vst [vmem:[#allocation2 + $0x330] sm:$0xf] %v1630
    %1647 = vst [vmem:[#allocation2 + $0x338] sm:$0xf] %v1631
    %v1648 = vld [vmem:[%s216 + $0x8] sm:$0xff]
    %v1649 = vld [vmem:[%s216 + $0x10] sm:$0xff]
    %v1650 = vld [vmem:[%s216 + $0x18] sm:$0xff]
    %v1651 = vld [vmem:[%s216 + $0x20] sm:$0xff]
    %v1652 = vld [vmem:[%s216 + $0x28] sm:$0xf]
    %v1653 = vmul.f32 %v1648, %v1455
    %v1654 = vmul.f32 %v1649, %v1457
    %v1655 = vmul.f32 %v1650, %v1459
    %v1656 = vmul.f32 %v1651, %v1461
    %v1657 = vmul.f32 %v1652, %v1453
    %v1663 = vcombine.high %v1653, %v1653
    %v1664 = vcombine.high %v1654, %v1654
    %v1665 = vcombine.high %v1655, %v1655
    %v1666 = vcombine.high %v1656, %v1656
    %1667 = vrot.lane.b32.xlu0 %v1653, 1
    %v1668 = vpop.permute.xlu0 %1667
    %1669 = vrot.lane.b32.xlu0 %v1663, 1
    %v1670 = vpop.permute.xlu0 %1669
    %1671 = vrot.lane.b32.xlu0 %v1654, 1
    %v1672 = vpop.permute.xlu0 %1671
    %1673 = vrot.lane.b32.xlu0 %v1664, 1
    %v1674 = vpop.permute.xlu0 %1673
    %1675 = vrot.lane.b32.xlu0 %v1655, 1
    %v1676 = vpop.permute.xlu0 %1675
    %1677 = vrot.lane.b32.xlu0 %v1665, 1
    %v1678 = vpop.permute.xlu0 %1677
    %1679 = vrot.lane.b32.xlu0 %v1656, 1
    %v1680 = vpop.permute.xlu0 %1679
    %1681 = vrot.lane.b32.xlu0 %v1666, 1
    %v1682 = vpop.permute.xlu0 %1681
    %1683 = vrot.lane.b32.xlu0 %v1657, 1
    %v1684 = vpop.permute.xlu0 %1683
    %v1685 = vsel %vm1500, %v1668, %v1670
    %v1686 = vsel %vm1500, %v1670, %v1672
    %v1687 = vsel %vm1500, %v1672, %v1674
    %v1688 = vsel %vm1500, %v1674, %v1676
    %v1689 = vsel %vm1500, %v1676, %v1678
    %v1690 = vsel %vm1500, %v1678, %v1680
    %v1691 = vsel %vm1500, %v1680, %v1682
    %v1692 = vsel %vm1500, %v1682, %v1684
    %1701 = vst [vmem:[#allocation2 + $0x340] sm:$0xf] %v1685
    %1702 = vst [vmem:[#allocation2 + $0x348] sm:$0xf] %v1686
    %1703 = vst [vmem:[#allocation2 + $0x350] sm:$0xf] %v1687
    %1704 = vst [vmem:[#allocation2 + $0x358] sm:$0xf] %v1688
    %1705 = vst [vmem:[#allocation2 + $0x360] sm:$0xf] %v1689
    %1706 = vst [vmem:[#allocation2 + $0x368] sm:$0xf] %v1690
    %1707 = vst [vmem:[#allocation2 + $0x370] sm:$0xf] %v1691
    %1708 = vst [vmem:[#allocation2 + $0x378] sm:$0xf] %v1692
    %v1709 = vld [vmem:[%s0 + $0x10] sm:$0xff]
    %v1710 = vld [vmem:[%s0 + $0x18] sm:$0xff]
    %v1711 = vld [vmem:[%s0 + $0x20] sm:$0xff]
    %v1712 = vld [vmem:[%s0 + $0x28] sm:$0xff]
    %v1713 = vld [vmem:[%s0 + $0x30] sm:$0xf]
    %v1714 = vmul.f32 %v1709, %v1455
    %v1715 = vmul.f32 %v1710, %v1457
    %v1716 = vmul.f32 %v1711, %v1459
    %v1717 = vmul.f32 %v1712, %v1461
    %v1718 = vmul.f32 %v1713, %v1453
    %v1724 = vcombine.low %v1714, %v1714
    %v1725 = vcombine.low %v1715, %v1715
    %v1726 = vcombine.low %v1716, %v1716
    %v1727 = vcombine.low %v1717, %v1717
    %v1728 = vcombine.low %v1718, %v1718
    %1729 = vrot.lane.b32.xlu0 %v1724, 1
    %v1730 = vpop.permute.xlu0 %1729
    %1731 = vrot.lane.b32.xlu0 %v1714, 1
    %v1732 = vpop.permute.xlu0 %1731
    %1733 = vrot.lane.b32.xlu0 %v1725, 1
    %v1734 = vpop.permute.xlu0 %1733
    %1735 = vrot.lane.b32.xlu0 %v1715, 1
    %v1736 = vpop.permute.xlu0 %1735
    %1737 = vrot.lane.b32.xlu0 %v1726, 1
    %v1738 = vpop.permute.xlu0 %1737
    %1739 = vrot.lane.b32.xlu0 %v1716, 1
    %v1740 = vpop.permute.xlu0 %1739
    %1741 = vrot.lane.b32.xlu0 %v1727, 1
    %v1742 = vpop.permute.xlu0 %1741
    %1743 = vrot.lane.b32.xlu0 %v1717, 1
    %v1744 = vpop.permute.xlu0 %1743
    %1745 = vrot.lane.b32.xlu0 %v1728, 1
    %v1746 = vpop.permute.xlu0 %1745
    %v1747 = vsel %vm1500, %v1730, %v1732
    %v1748 = vsel %vm1500, %v1732, %v1734
    %v1749 = vsel %vm1500, %v1734, %v1736
    %v1750 = vsel %vm1500, %v1736, %v1738
    %v1751 = vsel %vm1500, %v1738, %v1740
    %v1752 = vsel %vm1500, %v1740, %v1742
    %v1753 = vsel %vm1500, %v1742, %v1744
    %v1754 = vsel %vm1500, %v1744, %v1746
    %1763 = vst [vmem:[#allocation2 + $0x500] sm:$0xf0] %v1747
    %1764 = vst [vmem:[#allocation2 + $0x508] sm:$0xf0] %v1748
    %1765 = vst [vmem:[#allocation2 + $0x510] sm:$0xf0] %v1749
    %1766 = vst [vmem:[#allocation2 + $0x518] sm:$0xf0] %v1750
    %1767 = vst [vmem:[#allocation2 + $0x520] sm:$0xf0] %v1751
    %1768 = vst [vmem:[#allocation2 + $0x528] sm:$0xf0] %v1752
    %1769 = vst [vmem:[#allocation2 + $0x530] sm:$0xf0] %v1753
    %1770 = vst [vmem:[#allocation2 + $0x538] sm:$0xf0] %v1754
    %v1771 = vld [vmem:[%s216 + $0x10] sm:$0xff]
    %v1772 = vld [vmem:[%s216 + $0x18] sm:$0xff]
    %v1773 = vld [vmem:[%s216 + $0x20] sm:$0xff]
    %v1774 = vld [vmem:[%s216 + $0x28] sm:$0xff]
    %v1775 = vld [vmem:[%s216 + $0x30] sm:$0xf]
    %v1776 = vmul.f32 %v1771, %v1455
    %v1777 = vmul.f32 %v1772, %v1457
    %v1778 = vmul.f32 %v1773, %v1459
    %v1779 = vmul.f32 %v1774, %v1461
    %v1780 = vmul.f32 %v1775, %v1453
    %v1786 = vcombine.low %v1776, %v1776
    %v1787 = vcombine.low %v1777, %v1777
    %v1788 = vcombine.low %v1778, %v1778
    %v1789 = vcombine.low %v1779, %v1779
    %v1790 = vcombine.low %v1780, %v1780
    %1791 = vrot.lane.b32.xlu0 %v1786, 1
    %v1792 = vpop.permute.xlu0 %1791
    %1793 = vrot.lane.b32.xlu0 %v1776, 1
    %v1794 = vpop.permute.xlu0 %1793
    %1795 = vrot.lane.b32.xlu0 %v1787, 1
    %v1796 = vpop.permute.xlu0 %1795
    %1797 = vrot.lane.b32.xlu0 %v1777, 1
    %v1798 = vpop.permute.xlu0 %1797
    %1799 = vrot.lane.b32.xlu0 %v1788, 1
    %v1800 = vpop.permute.xlu0 %1799
    %1801 = vrot.lane.b32.xlu0 %v1778, 1
    %v1802 = vpop.permute.xlu0 %1801
    %1803 = vrot.lane.b32.xlu0 %v1789, 1
    %v1804 = vpop.permute.xlu0 %1803
    %1805 = vrot.lane.b32.xlu0 %v1779, 1
    %v1806 = vpop.permute.xlu0 %1805
    %1807 = vrot.lane.b32.xlu0 %v1790, 1
    %v1808 = vpop.permute.xlu0 %1807
    %v1809 = vsel %vm1500, %v1792, %v1794
    %v1810 = vsel %vm1500, %v1794, %v1796
    %v1811 = vsel %vm1500, %v1796, %v1798
    %v1812 = vsel %vm1500, %v1798, %v1800
    %v1813 = vsel %vm1500, %v1800, %v1802
    %v1814 = vsel %vm1500, %v1802, %v1804
    %v1815 = vsel %vm1500, %v1804, %v1806
    %v1816 = vsel %vm1500, %v1806, %v1808
    %1825 = vst [vmem:[#allocation2 + $0x540] sm:$0xf0] %v1809
    %1826 = vst [vmem:[#allocation2 + $0x548] sm:$0xf0] %v1810
    %1827 = vst [vmem:[#allocation2 + $0x550] sm:$0xf0] %v1811
    %1828 = vst [vmem:[#allocation2 + $0x558] sm:$0xf0] %v1812
    %1829 = vst [vmem:[#allocation2 + $0x560] sm:$0xf0] %v1813
    %1830 = vst [vmem:[#allocation2 + $0x568] sm:$0xf0] %v1814
    %1831 = vst [vmem:[#allocation2 + $0x570] sm:$0xf0] %v1815
    %1832 = vst [vmem:[#allocation2 + $0x578] sm:$0xf0] %v1816
    %v1833 = vld [vmem:[%s0 + $0x4] sm:$0xff]
    %v1834 = vld [vmem:[%s0 + $0xc] sm:$0xff]
    %v1835 = vld [vmem:[%s0 + $0x14] sm:$0xff]
    %v1836 = vld [vmem:[%s0 + $0x1c] sm:$0xff]
    %v1841 = vcombine.high %v1833, %v1833
    %v1842 = vcombine.high %v1834, %v1834
    %v1843 = vcombine.high %v1835, %v1835
    %v1844 = vcombine.high %v1836, %v1836
    %1849 = vst [vmem:[#allocation2 + $0x100] sm:$0xf] %v1833
    %1850 = vst [vmem:[#allocation2 + $0x108] sm:$0xf] %v1841
    %1851 = vst [vmem:[#allocation2 + $0x110] sm:$0xf] %v1834
    %1852 = vst [vmem:[#allocation2 + $0x118] sm:$0xf] %v1842
    %1853 = vst [vmem:[#allocation2 + $0x120] sm:$0xf] %v1835
    %1854 = vst [vmem:[#allocation2 + $0x128] sm:$0xf] %v1843
    %1855 = vst [vmem:[#allocation2 + $0x130] sm:$0xf] %v1836
    %1856 = vst [vmem:[#allocation2 + $0x138] sm:$0xf] %v1844
    %v1857 = vld [vmem:[%s216 + $0x4] sm:$0xff]
    %v1858 = vld [vmem:[%s216 + $0xc] sm:$0xff]
    %v1859 = vld [vmem:[%s216 + $0x14] sm:$0xff]
    %v1860 = vld [vmem:[%s216 + $0x1c] sm:$0xff]
    %v1865 = vcombine.high %v1857, %v1857
    %v1866 = vcombine.high %v1858, %v1858
    %v1867 = vcombine.high %v1859, %v1859
    %v1868 = vcombine.high %v1860, %v1860
    %1873 = vst [vmem:[#allocation2 + $0x140] sm:$0xf] %v1857
    %1874 = vst [vmem:[#allocation2 + $0x148] sm:$0xf] %v1865
    %1875 = vst [vmem:[#allocation2 + $0x150] sm:$0xf] %v1858
    %1876 = vst [vmem:[#allocation2 + $0x158] sm:$0xf] %v1866
    %1877 = vst [vmem:[#allocation2 + $0x160] sm:$0xf] %v1859
    %1878 = vst [vmem:[#allocation2 + $0x168] sm:$0xf] %v1867
    %1879 = vst [vmem:[#allocation2 + $0x170] sm:$0xf] %v1860
    %1880 = vst [vmem:[#allocation2 + $0x178] sm:$0xf] %v1868
    %v1881 = vld [vmem:[%s0 + $0xc] sm:$0xff]
    %v1882 = vld [vmem:[%s0 + $0x14] sm:$0xff]
    %v1883 = vld [vmem:[%s0 + $0x1c] sm:$0xff]
    %v1884 = vld [vmem:[%s0 + $0x24] sm:$0xff]
    %v1889 = vcombine.low %v1881, %v1881
    %v1890 = vcombine.low %v1882, %v1882
    %v1891 = vcombine.low %v1883, %v1883
    %v1892 = vcombine.low %v1884, %v1884
    %1897 = vst [vmem:[#allocation2 + $0x300] sm:$0xf0] %v1889
    %1898 = vst [vmem:[#allocation2 + $0x308] sm:$0xf0] %v1881
    %1899 = vst [vmem:[#allocation2 + $0x310] sm:$0xf0] %v1890
    %1900 = vst [vmem:[#allocation2 + $0x318] sm:$0xf0] %v1882
    %1901 = vst [vmem:[#allocation2 + $0x320] sm:$0xf0] %v1891
    %1902 = vst [vmem:[#allocation2 + $0x328] sm:$0xf0] %v1883
    %1903 = vst [vmem:[#allocation2 + $0x330] sm:$0xf0] %v1892
    %1904 = vst [vmem:[#allocation2 + $0x338] sm:$0xf0] %v1884
    %v1905 = vld [vmem:[%s216 + $0xc] sm:$0xff]
    %v1906 = vld [vmem:[%s216 + $0x14] sm:$0xff]
    %v1907 = vld [vmem:[%s216 + $0x1c] sm:$0xff]
    %v1908 = vld [vmem:[%s216 + $0x24] sm:$0xff]
    %v1913 = vcombine.low %v1905, %v1905
    %v1914 = vcombine.low %v1906, %v1906
    %v1915 = vcombine.low %v1907, %v1907
    %v1916 = vcombine.low %v1908, %v1908
    %1921 = vst [vmem:[#allocation2 + $0x340] sm:$0xf0] %v1913
    %1922 = vst [vmem:[#allocation2 + $0x348] sm:$0xf0] %v1905
    %1923 = vst [vmem:[#allocation2 + $0x350] sm:$0xf0] %v1914
    %1924 = vst [vmem:[#allocation2 + $0x358] sm:$0xf0] %v1906
    %1925 = vst [vmem:[#allocation2 + $0x360] sm:$0xf0] %v1915
    %1926 = vst [vmem:[#allocation2 + $0x368] sm:$0xf0] %v1907
    %1927 = vst [vmem:[#allocation2 + $0x370] sm:$0xf0] %v1916
    %1928 = vst [vmem:[#allocation2 + $0x378] sm:$0xf0] %v1908
    %v1929 = vld [vmem:[%s0 + $0x14] sm:$0xff]
    %v1930 = vld [vmem:[%s0 + $0x1c] sm:$0xff]
    %v1931 = vld [vmem:[%s0 + $0x24] sm:$0xff]
    %v1932 = vld [vmem:[%s0 + $0x2c] sm:$0xff]
    %v1937 = vcombine.high %v1929, %v1929
    %v1938 = vcombine.high %v1930, %v1930
    %v1939 = vcombine.high %v1931, %v1931
    %v1940 = vcombine.high %v1932, %v1932
    %1945 = vst [vmem:[#allocation2 + $0x580] sm:$0xf] %v1929
    %1946 = vst [vmem:[#allocation2 + $0x588] sm:$0xf] %v1937
    %1947 = vst [vmem:[#allocation2 + $0x590] sm:$0xf] %v1930
    %1948 = vst [vmem:[#allocation2 + $0x598] sm:$0xf] %v1938
    %1949 = vst [vmem:[#allocation2 + $0x5a0] sm:$0xf] %v1931
    %1950 = vst [vmem:[#allocation2 + $0x5a8] sm:$0xf] %v1939
    %1951 = vst [vmem:[#allocation2 + $0x5b0] sm:$0xf] %v1932
    %1952 = vst [vmem:[#allocation2 + $0x5b8] sm:$0xf] %v1940
    %v1953 = vld [vmem:[%s216 + $0x14] sm:$0xff]
    %v1954 = vld [vmem:[%s216 + $0x1c] sm:$0xff]
    %v1955 = vld [vmem:[%s216 + $0x24] sm:$0xff]
    %v1956 = vld [vmem:[%s216 + $0x2c] sm:$0xff]
    %v1961 = vcombine.high %v1953, %v1953
    %v1962 = vcombine.high %v1954, %v1954
    %v1963 = vcombine.high %v1955, %v1955
    %v1964 = vcombine.high %v1956, %v1956
    %1969 = vst [vmem:[#allocation2 + $0x5c0] sm:$0xf] %v1953
    %1970 = vst [vmem:[#allocation2 + $0x5c8] sm:$0xf] %v1961
    %1971 = vst [vmem:[#allocation2 + $0x5d0] sm:$0xf] %v1954
    %1972 = vst [vmem:[#allocation2 + $0x5d8] sm:$0xf] %v1962
    %1973 = vst [vmem:[#allocation2 + $0x5e0] sm:$0xf] %v1955
    %1974 = vst [vmem:[#allocation2 + $0x5e8] sm:$0xf] %v1963
    %1975 = vst [vmem:[#allocation2 + $0x5f0] sm:$0xf] %v1956
    %1976 = vst [vmem:[#allocation2 + $0x5f8] sm:$0xf] %v1964
    %s1977 = scalar_lea.vmem %s5, 5
    %v1978 = vld [vmem:[%s1977] ss:$8 sm:$0xf]
    %v1979 = vld [vmem:[%s1977] ss:$8 sm:$0xf0]
    %v1980 = vor.u32 %v1978, %v1979
    %v1981 = vld [vmem:[%s0 + $0x4] sm:$0xff]
    %v1982 = vld [vmem:[%s0 + $0xc] sm:$0xff]
    %v1983 = vld [vmem:[%s0 + $0x14] sm:$0xff]
    %v1984 = vld [vmem:[%s0 + $0x1c] sm:$0xff]
    %v1985 = vld [vmem:[%s0 + $0x24] sm:$0xf]
    %v1987 = vlaneseq
    %v1988 = vshrl.u32 %v1987, 7
    %v1989 = vsub.s32 0, %v1988
    %v1990 = vrot.slane %v1980, %v1989
    %v1991 = vlaneseq
    %v1992 = vshrl.u32 %v1991, 7
    %v1993 = vsub.s32 1, %v1992
    %v1994 = vrot.slane %v1980, %v1993
    %v1995 = vlaneseq
    %v1996 = vshrl.u32 %v1995, 7
    %v1997 = vsub.s32 2, %v1996
    %v1998 = vrot.slane %v1980, %v1997
    %v1999 = vlaneseq
    %v2000 = vshrl.u32 %v1999, 7
    %v2001 = vsub.s32 3, %v2000
    %v2002 = vrot.slane %v1980, %v2001
    %v2003 = vlaneseq
    %v2004 = vshrl.u32 %v2003, 7
    %v2005 = vsub.s32 4, %v2004
    %v2006 = vrot.slane %v1980, %v2005
    %v2007 = vlaneseq
    %v2008 = vshrl.u32 %v2007, 7
    %v2009 = vsub.s32 5, %v2008
    %v2010 = vrot.slane %v1980, %v2009
    %v2011 = vlaneseq
    %v2012 = vshrl.u32 %v2011, 7
    %v2013 = vsub.s32 6, %v2012
    %v2014 = vrot.slane %v1980, %v2013
    %v2015 = vlaneseq
    %v2016 = vshrl.u32 %v2015, 7
    %v2017 = vsub.s32 7, %v2016
    %v2018 = vrot.slane %v1980, %v2017
    %v2019 = vcombine.low %v1990, %v1994
    %v2020 = vcombine.low %v1998, %v2002
    %v2021 = vcombine.low %v2006, %v2010
    %v2022 = vcombine.low %v2014, %v2018
    %2023 = vrot.lane.b32.xlu0 %v2019, 1
    %v2024 = vpop.permute.xlu0 %2023
    %2025 = vrot.lane.b32.xlu0 %v2020, 1
    %v2026 = vpop.permute.xlu0 %2025
    %2027 = vrot.lane.b32.xlu0 %v2021, 1
    %v2028 = vpop.permute.xlu0 %2027
    %2029 = vrot.lane.b32.xlu0 %v2022, 1
    %v2030 = vpop.permute.xlu0 %2029
    %v2031 = vrot.slane %v2024, 4
    %v2032 = vrot.slane %v2026, 4
    %v2033 = vrot.slane %v2028, 4
    %v2034 = vrot.slane %v2030, 4
    %v2035 = vsel %vm1500, %v2031, %v2024
    %v2036 = vsel %vm147, %v2031, %v2032
    %v2037 = vsel %vm1500, %v2036, %v2026
    %v2038 = vsel %vm147, %v2032, %v2033
    %v2039 = vsel %vm1500, %v2038, %v2028
    %v2040 = vsel %vm147, %v2033, %v2034
    %v2041 = vsel %vm1500, %v2040, %v2030
    %v2047 = vmul.f32 %v1981, %v2035
    %v2048 = vmul.f32 %v1982, %v2037
    %v2049 = vmul.f32 %v1983, %v2039
    %v2050 = vmul.f32 %v1984, %v2041
    %v2051 = vmul.f32 %v1985, %v2034
    %v2057 = vcombine.low %v2047, %v2047
    %v2058 = vcombine.low %v2048, %v2048
    %v2059 = vcombine.low %v2049, %v2049
    %v2060 = vcombine.low %v2050, %v2050
    %v2061 = vcombine.low %v2051, %v2051
    %2062 = vrot.lane.b32.xlu0 %v2057, 127
    %v2063 = vpop.permute.xlu0 %2062
    %2064 = vrot.lane.b32.xlu0 %v2047, 127
    %v2065 = vpop.permute.xlu0 %2064
    %2066 = vrot.lane.b32.xlu0 %v2058, 127
    %v2067 = vpop.permute.xlu0 %2066
    %2068 = vrot.lane.b32.xlu0 %v2048, 127
    %v2069 = vpop.permute.xlu0 %2068
    %2070 = vrot.lane.b32.xlu0 %v2059, 127
    %v2071 = vpop.permute.xlu0 %2070
    %2072 = vrot.lane.b32.xlu0 %v2049, 127
    %v2073 = vpop.permute.xlu0 %2072
    %2074 = vrot.lane.b32.xlu0 %v2060, 127
    %v2075 = vpop.permute.xlu0 %2074
    %2076 = vrot.lane.b32.xlu0 %v2050, 127
    %v2077 = vpop.permute.xlu0 %2076
    %2078 = vrot.lane.b32.xlu0 %v2061, 127
    %v2079 = vpop.permute.xlu0 %2078
    %v2080 = vsel %vm1454, %v2063, %v2065
    %v2081 = vsel %vm1454, %v2065, %v2067
    %v2082 = vsel %vm1454, %v2067, %v2069
    %v2083 = vsel %vm1454, %v2069, %v2071
    %v2084 = vsel %vm1454, %v2071, %v2073
    %v2085 = vsel %vm1454, %v2073, %v2075
    %v2086 = vsel %vm1454, %v2075, %v2077
    %v2087 = vsel %vm1454, %v2077, %v2079
    %2096 = vst [vmem:[#allocation2 + $0x100] sm:$0xf0] %v2080
    %2097 = vst [vmem:[#allocation2 + $0x108] sm:$0xf0] %v2081
    %2098 = vst [vmem:[#allocation2 + $0x110] sm:$0xf0] %v2082
    %2099 = vst [vmem:[#allocation2 + $0x118] sm:$0xf0] %v2083
    %2100 = vst [vmem:[#allocation2 + $0x120] sm:$0xf0] %v2084
    %2101 = vst [vmem:[#allocation2 + $0x128] sm:$0xf0] %v2085
    %2102 = vst [vmem:[#allocation2 + $0x130] sm:$0xf0] %v2086
    %2103 = vst [vmem:[#allocation2 + $0x138] sm:$0xf0] %v2087
    %v2104 = vld [vmem:[%s216 + $0x4] sm:$0xff]
    %v2105 = vld [vmem:[%s216 + $0xc] sm:$0xff]
    %v2106 = vld [vmem:[%s216 + $0x14] sm:$0xff]
    %v2107 = vld [vmem:[%s216 + $0x1c] sm:$0xff]
    %v2108 = vld [vmem:[%s216 + $0x24] sm:$0xf]
    %v2109 = vmul.f32 %v2104, %v2035
    %v2110 = vmul.f32 %v2105, %v2037
    %v2111 = vmul.f32 %v2106, %v2039
    %v2112 = vmul.f32 %v2107, %v2041
    %v2113 = vmul.f32 %v2108, %v2034
    %v2119 = vcombine.low %v2109, %v2109
    %v2120 = vcombine.low %v2110, %v2110
    %v2121 = vcombine.low %v2111, %v2111
    %v2122 = vcombine.low %v2112, %v2112
    %v2123 = vcombine.low %v2113, %v2113
    %2124 = vrot.lane.b32.xlu0 %v2119, 127
    %v2125 = vpop.permute.xlu0 %2124
    %2126 = vrot.lane.b32.xlu0 %v2109, 127
    %v2127 = vpop.permute.xlu0 %2126
    %2128 = vrot.lane.b32.xlu0 %v2120, 127
    %v2129 = vpop.permute.xlu0 %2128
    %2130 = vrot.lane.b32.xlu0 %v2110, 127
    %v2131 = vpop.permute.xlu0 %2130
    %2132 = vrot.lane.b32.xlu0 %v2121, 127
    %v2133 = vpop.permute.xlu0 %2132
    %2134 = vrot.lane.b32.xlu0 %v2111, 127
    %v2135 = vpop.permute.xlu0 %2134
    %2136 = vrot.lane.b32.xlu0 %v2122, 127
    %v2137 = vpop.permute.xlu0 %2136
    %2138 = vrot.lane.b32.xlu0 %v2112, 127
    %v2139 = vpop.permute.xlu0 %2138
    %2140 = vrot.lane.b32.xlu0 %v2123, 127
    %v2141 = vpop.permute.xlu0 %2140
    %v2142 = vsel %vm1454, %v2125, %v2127
    %v2143 = vsel %vm1454, %v2127, %v2129
    %v2144 = vsel %vm1454, %v2129, %v2131
    %v2145 = vsel %vm1454, %v2131, %v2133
    %v2146 = vsel %vm1454, %v2133, %v2135
    %v2147 = vsel %vm1454, %v2135, %v2137
    %v2148 = vsel %vm1454, %v2137, %v2139
    %v2149 = vsel %vm1454, %v2139, %v2141
    %2158 = vst [vmem:[#allocation2 + $0x140] sm:$0xf0] %v2142
    %2159 = vst [vmem:[#allocation2 + $0x148] sm:$0xf0] %v2143
    %2160 = vst [vmem:[#allocation2 + $0x150] sm:$0xf0] %v2144
    %2161 = vst [vmem:[#allocation2 + $0x158] sm:$0xf0] %v2145
    %2162 = vst [vmem:[#allocation2 + $0x160] sm:$0xf0] %v2146
    %2163 = vst [vmem:[#allocation2 + $0x168] sm:$0xf0] %v2147
    %2164 = vst [vmem:[#allocation2 + $0x170] sm:$0xf0] %v2148
    %2165 = vst [vmem:[#allocation2 + $0x178] sm:$0xf0] %v2149
    %v2166 = vld [vmem:[%s0 + $0xc] sm:$0xff]
    %v2167 = vld [vmem:[%s0 + $0x14] sm:$0xff]
    %v2168 = vld [vmem:[%s0 + $0x1c] sm:$0xff]
    %v2169 = vld [vmem:[%s0 + $0x24] sm:$0xff]
    %v2170 = vld [vmem:[%s0 + $0x2c] sm:$0xf]
    %v2171 = vmul.f32 %v2166, %v2035
    %v2172 = vmul.f32 %v2167, %v2037
    %v2173 = vmul.f32 %v2168, %v2039
    %v2174 = vmul.f32 %v2169, %v2041
    %v2175 = vmul.f32 %v2170, %v2034
    %v2181 = vcombine.high %v2171, %v2171
    %v2182 = vcombine.high %v2172, %v2172
    %v2183 = vcombine.high %v2173, %v2173
    %v2184 = vcombine.high %v2174, %v2174
    %2185 = vrot.lane.b32.xlu0 %v2171, 127
    %v2186 = vpop.permute.xlu0 %2185
    %2187 = vrot.lane.b32.xlu0 %v2181, 127
    %v2188 = vpop.permute.xlu0 %2187
    %2189 = vrot.lane.b32.xlu0 %v2172, 127
    %v2190 = vpop.permute.xlu0 %2189
    %2191 = vrot.lane.b32.xlu0 %v2182, 127
    %v2192 = vpop.permute.xlu0 %2191
    %2193 = vrot.lane.b32.xlu0 %v2173, 127
    %v2194 = vpop.permute.xlu0 %2193
    %2195 = vrot.lane.b32.xlu0 %v2183, 127
    %v2196 = vpop.permute.xlu0 %2195
    %2197 = vrot.lane.b32.xlu0 %v2174, 127
    %v2198 = vpop.permute.xlu0 %2197
    %2199 = vrot.lane.b32.xlu0 %v2184, 127
    %v2200 = vpop.permute.xlu0 %2199
    %2201 = vrot.lane.b32.xlu0 %v2175, 127
    %v2202 = vpop.permute.xlu0 %2201
    %v2203 = vsel %vm1454, %v2186, %v2188
    %v2204 = vsel %vm1454, %v2188, %v2190
    %v2205 = vsel %vm1454, %v2190, %v2192
    %v2206 = vsel %vm1454, %v2192, %v2194
    %v2207 = vsel %vm1454, %v2194, %v2196
    %v2208 = vsel %vm1454, %v2196, %v2198
    %v2209 = vsel %vm1454, %v2198, %v2200
    %v2210 = vsel %vm1454, %v2200, %v2202
    %2219 = vst [vmem:[#allocation2 + $0x380] sm:$0xf] %v2203
    %2220 = vst [vmem:[#allocation2 + $0x388] sm:$0xf] %v2204
    %2221 = vst [vmem:[#allocation2 + $0x390] sm:$0xf] %v2205
    %2222 = vst [vmem:[#allocation2 + $0x398] sm:$0xf] %v2206
    %2223 = vst [vmem:[#allocation2 + $0x3a0] sm:$0xf] %v2207
    %2224 = vst [vmem:[#allocation2 + $0x3a8] sm:$0xf] %v2208
    %2225 = vst [vmem:[#allocation2 + $0x3b0] sm:$0xf] %v2209
    %2226 = vst [vmem:[#allocation2 + $0x3b8] sm:$0xf] %v2210
    %v2227 = vld [vmem:[%s216 + $0xc] sm:$0xff]
    %v2228 = vld [vmem:[%s216 + $0x14] sm:$0xff]
    %v2229 = vld [vmem:[%s216 + $0x1c] sm:$0xff]
    %v2230 = vld [vmem:[%s216 + $0x24] sm:$0xff]
    %v2231 = vld [vmem:[%s216 + $0x2c] sm:$0xf]
    %v2232 = vmul.f32 %v2227, %v2035
    %v2233 = vmul.f32 %v2228, %v2037
    %v2234 = vmul.f32 %v2229, %v2039
    %v2235 = vmul.f32 %v2230, %v2041
    %v2236 = vmul.f32 %v2231, %v2034
    %v2242 = vcombine.high %v2232, %v2232
    %v2243 = vcombine.high %v2233, %v2233
    %v2244 = vcombine.high %v2234, %v2234
    %v2245 = vcombine.high %v2235, %v2235
    %2246 = vrot.lane.b32.xlu0 %v2232, 127
    %v2247 = vpop.permute.xlu0 %2246
    %2248 = vrot.lane.b32.xlu0 %v2242, 127
    %v2249 = vpop.permute.xlu0 %2248
    %2250 = vrot.lane.b32.xlu0 %v2233, 127
    %v2251 = vpop.permute.xlu0 %2250
    %2252 = vrot.lane.b32.xlu0 %v2243, 127
    %v2253 = vpop.permute.xlu0 %2252
    %2254 = vrot.lane.b32.xlu0 %v2234, 127
    %v2255 = vpop.permute.xlu0 %2254
    %2256 = vrot.lane.b32.xlu0 %v2244, 127
    %v2257 = vpop.permute.xlu0 %2256
    %2258 = vrot.lane.b32.xlu0 %v2235, 127
    %v2259 = vpop.permute.xlu0 %2258
    %2260 = vrot.lane.b32.xlu0 %v2245, 127
    %v2261 = vpop.permute.xlu0 %2260
    %2262 = vrot.lane.b32.xlu0 %v2236, 127
    %v2263 = vpop.permute.xlu0 %2262
    %v2264 = vsel %vm1454, %v2247, %v2249
    %v2265 = vsel %vm1454, %v2249, %v2251
    %v2266 = vsel %vm1454, %v2251, %v2253
    %v2267 = vsel %vm1454, %v2253, %v2255
    %v2268 = vsel %vm1454, %v2255, %v2257
    %v2269 = vsel %vm1454, %v2257, %v2259
    %v2270 = vsel %vm1454, %v2259, %v2261
    %v2271 = vsel %vm1454, %v2261, %v2263
    %2280 = vst [vmem:[#allocation2 + $0x3c0] sm:$0xf] %v2264
    %2281 = vst [vmem:[#allocation2 + $0x3c8] sm:$0xf] %v2265
    %2282 = vst [vmem:[#allocation2 + $0x3d0] sm:$0xf] %v2266
    %2283 = vst [vmem:[#allocation2 + $0x3d8] sm:$0xf] %v2267
    %2284 = vst [vmem:[#allocation2 + $0x3e0] sm:$0xf] %v2268
    %2285 = vst [vmem:[#allocation2 + $0x3e8] sm:$0xf] %v2269
    %2286 = vst [vmem:[#allocation2 + $0x3f0] sm:$0xf] %v2270
    %2287 = vst [vmem:[#allocation2 + $0x3f8] sm:$0xf] %v2271
    %v2288 = vld [vmem:[%s0 + $0x14] sm:$0xff]
    %v2289 = vld [vmem:[%s0 + $0x1c] sm:$0xff]
    %v2290 = vld [vmem:[%s0 + $0x24] sm:$0xff]
    %v2291 = vld [vmem:[%s0 + $0x2c] sm:$0xff]
    %v2292 = vld [vmem:[%s0 + $0x34] sm:$0xf]
    %v2293 = vmul.f32 %v2288, %v2035
    %v2294 = vmul.f32 %v2289, %v2037
    %v2295 = vmul.f32 %v2290, %v2039
    %v2296 = vmul.f32 %v2291, %v2041
    %v2297 = vmul.f32 %v2292, %v2034
    %v2303 = vcombine.low %v2293, %v2293
    %v2304 = vcombine.low %v2294, %v2294
    %v2305 = vcombine.low %v2295, %v2295
    %v2306 = vcombine.low %v2296, %v2296
    %v2307 = vcombine.low %v2297, %v2297
    %2308 = vrot.lane.b32.xlu0 %v2303, 127
    %v2309 = vpop.permute.xlu0 %2308
    %2310 = vrot.lane.b32.xlu0 %v2293, 127
    %v2311 = vpop.permute.xlu0 %2310
    %2312 = vrot.lane.b32.xlu0 %v2304, 127
    %v2313 = vpop.permute.xlu0 %2312
    %2314 = vrot.lane.b32.xlu0 %v2294, 127
    %v2315 = vpop.permute.xlu0 %2314
    %2316 = vrot.lane.b32.xlu0 %v2305, 127
    %v2317 = vpop.permute.xlu0 %2316
    %2318 = vrot.lane.b32.xlu0 %v2295, 127
    %v2319 = vpop.permute.xlu0 %2318
    %2320 = vrot.lane.b32.xlu0 %v2306, 127
    %v2321 = vpop.permute.xlu0 %2320
    %2322 = vrot.lane.b32.xlu0 %v2296, 127
    %v2323 = vpop.permute.xlu0 %2322
    %2324 = vrot.lane.b32.xlu0 %v2307, 127
    %v2325 = vpop.permute.xlu0 %2324
    %v2326 = vsel %vm1454, %v2309, %v2311
    %v2327 = vsel %vm1454, %v2311, %v2313
    %v2328 = vsel %vm1454, %v2313, %v2315
    %v2329 = vsel %vm1454, %v2315, %v2317
    %v2330 = vsel %vm1454, %v2317, %v2319
    %v2331 = vsel %vm1454, %v2319, %v2321
    %v2332 = vsel %vm1454, %v2321, %v2323
    %v2333 = vsel %vm1454, %v2323, %v2325
    %2342 = vst [vmem:[#allocation2 + $0x580] sm:$0xf0] %v2326
    %2343 = vst [vmem:[#allocation2 + $0x588] sm:$0xf0] %v2327
    %2344 = vst [vmem:[#allocation2 + $0x590] sm:$0xf0] %v2328
    %2345 = vst [vmem:[#allocation2 + $0x598] sm:$0xf0] %v2329
    %2346 = vst [vmem:[#allocation2 + $0x5a0] sm:$0xf0] %v2330
    %2347 = vst [vmem:[#allocation2 + $0x5a8] sm:$0xf0] %v2331
    %2348 = vst [vmem:[#allocation2 + $0x5b0] sm:$0xf0] %v2332
    %2349 = vst [vmem:[#allocation2 + $0x5b8] sm:$0xf0] %v2333
    %v2350 = vld [vmem:[%s216 + $0x14] sm:$0xff]
    %v2351 = vld [vmem:[%s216 + $0x1c] sm:$0xff]
    %v2352 = vld [vmem:[%s216 + $0x24] sm:$0xff]
    %v2353 = vld [vmem:[%s216 + $0x2c] sm:$0xff]
    %v2354 = vld [vmem:[%s216 + $0x34] sm:$0xf]
    %v2355 = vmul.f32 %v2350, %v2035
    %v2356 = vmul.f32 %v2351, %v2037
    %v2357 = vmul.f32 %v2352, %v2039
    %v2358 = vmul.f32 %v2353, %v2041
    %v2359 = vmul.f32 %v2354, %v2034
    %v2365 = vcombine.low %v2355, %v2355
    %v2366 = vcombine.low %v2356, %v2356
    %v2367 = vcombine.low %v2357, %v2357
    %v2368 = vcombine.low %v2358, %v2358
    %v2369 = vcombine.low %v2359, %v2359
    %2370 = vrot.lane.b32.xlu0 %v2365, 127
    %v2371 = vpop.permute.xlu0 %2370
    %2372 = vrot.lane.b32.xlu0 %v2355, 127
    %v2373 = vpop.permute.xlu0 %2372
    %2374 = vrot.lane.b32.xlu0 %v2366, 127
    %v2375 = vpop.permute.xlu0 %2374
    %2376 = vrot.lane.b32.xlu0 %v2356, 127
    %v2377 = vpop.permute.xlu0 %2376
    %2378 = vrot.lane.b32.xlu0 %v2367, 127
    %v2379 = vpop.permute.xlu0 %2378
    %2380 = vrot.lane.b32.xlu0 %v2357, 127
    %v2381 = vpop.permute.xlu0 %2380
    %2382 = vrot.lane.b32.xlu0 %v2368, 127
    %v2383 = vpop.permute.xlu0 %2382
    %2384 = vrot.lane.b32.xlu0 %v2358, 127
    %v2385 = vpop.permute.xlu0 %2384
    %2386 = vrot.lane.b32.xlu0 %v2369, 127
    %v2387 = vpop.permute.xlu0 %2386
    %v2388 = vsel %vm1454, %v2371, %v2373
    %v2389 = vsel %vm1454, %v2373, %v2375
    %v2390 = vsel %vm1454, %v2375, %v2377
    %v2391 = vsel %vm1454, %v2377, %v2379
    %v2392 = vsel %vm1454, %v2379, %v2381
    %v2393 = vsel %vm1454, %v2381, %v2383
    %v2394 = vsel %vm1454, %v2383, %v2385
    %v2395 = vsel %vm1454, %v2385, %v2387
    %2404 = vst [vmem:[#allocation2 + $0x5c0] sm:$0xf0] %v2388
    %2405 = vst [vmem:[#allocation2 + $0x5c8] sm:$0xf0] %v2389
    %2406 = vst [vmem:[#allocation2 + $0x5d0] sm:$0xf0] %v2390
    %2407 = vst [vmem:[#allocation2 + $0x5d8] sm:$0xf0] %v2391
    %2408 = vst [vmem:[#allocation2 + $0x5e0] sm:$0xf0] %v2392
    %2409 = vst [vmem:[#allocation2 + $0x5e8] sm:$0xf0] %v2393
    %2410 = vst [vmem:[#allocation2 + $0x5f0] sm:$0xf0] %v2394
    %2411 = vst [vmem:[#allocation2 + $0x5f8] sm:$0xf0] %v2395
    %s2412 = scalar_lea.vmem %s5, 6
    %v2413 = vld [vmem:[%s2412] ss:$8 sm:$0xf]
    %v2414 = vld [vmem:[%s2412] ss:$8 sm:$0xf0]
    %v2415 = vor.u32 %v2413, %v2414
    %v2416 = vld [vmem:[%s0 + $0x4] sm:$0xff]
    %v2417 = vld [vmem:[%s0 + $0xc] sm:$0xff]
    %v2418 = vld [vmem:[%s0 + $0x14] sm:$0xff]
    %v2419 = vld [vmem:[%s0 + $0x1c] sm:$0xff]
    %v2420 = vld [vmem:[%s0 + $0x24] sm:$0xf]
    %v2422 = vlaneseq
    %v2423 = vshrl.u32 %v2422, 7
    %v2424 = vsub.s32 0, %v2423
    %v2425 = vrot.slane %v2415, %v2424
    %v2426 = vlaneseq
    %v2427 = vshrl.u32 %v2426, 7
    %v2428 = vsub.s32 1, %v2427
    %v2429 = vrot.slane %v2415, %v2428
    %v2430 = vlaneseq
    %v2431 = vshrl.u32 %v2430, 7
    %v2432 = vsub.s32 2, %v2431
    %v2433 = vrot.slane %v2415, %v2432
    %v2434 = vlaneseq
    %v2435 = vshrl.u32 %v2434, 7
    %v2436 = vsub.s32 3, %v2435
    %v2437 = vrot.slane %v2415, %v2436
    %v2438 = vlaneseq
    %v2439 = vshrl.u32 %v2438, 7
    %v2440 = vsub.s32 4, %v2439
    %v2441 = vrot.slane %v2415, %v2440
    %v2442 = vlaneseq
    %v2443 = vshrl.u32 %v2442, 7
    %v2444 = vsub.s32 5, %v2443
    %v2445 = vrot.slane %v2415, %v2444
    %v2446 = vlaneseq
    %v2447 = vshrl.u32 %v2446, 7
    %v2448 = vsub.s32 6, %v2447
    %v2449 = vrot.slane %v2415, %v2448
    %v2450 = vlaneseq
    %v2451 = vshrl.u32 %v2450, 7
    %v2452 = vsub.s32 7, %v2451
    %v2453 = vrot.slane %v2415, %v2452
    %v2454 = vcombine.low %v2425, %v2429
    %v2455 = vcombine.low %v2433, %v2437
    %v2456 = vcombine.low %v2441, %v2445
    %v2457 = vcombine.low %v2449, %v2453
    %2458 = vrot.lane.b32.xlu0 %v2454, 15
    %v2459 = vpop.permute.xlu0 %2458
    %2460 = vrot.lane.b32.xlu0 %v2455, 15
    %v2461 = vpop.permute.xlu0 %2460
    %2462 = vrot.lane.b32.xlu0 %v2456, 15
    %v2463 = vpop.permute.xlu0 %2462
    %2464 = vrot.lane.b32.xlu0 %v2457, 15
    %v2465 = vpop.permute.xlu0 %2464
    %v2466 = vrot.slane %v2459, 4
    %v2467 = vrot.slane %v2461, 4
    %v2468 = vrot.slane %v2463, 4
    %v2469 = vrot.slane %v2465, 4
    %v2470 = vsel %vm1064, %v2466, %v2459
    %v2471 = vsel %vm147, %v2466, %v2467
    %v2472 = vsel %vm1064, %v2471, %v2461
    %v2473 = vsel %vm147, %v2467, %v2468
    %v2474 = vsel %vm1064, %v2473, %v2463
    %v2475 = vsel %vm147, %v2468, %v2469
    %v2476 = vsel %vm1064, %v2475, %v2465
    %v2482 = vmul.f32 %v2416, %v2470
    %v2483 = vmul.f32 %v2417, %v2472
    %v2484 = vmul.f32 %v2418, %v2474
    %v2485 = vmul.f32 %v2419, %v2476
    %v2486 = vmul.f32 %v2420, %v2469
    %v2492 = vcombine.high %v2482, %v2482
    %v2493 = vcombine.high %v2483, %v2483
    %v2494 = vcombine.high %v2484, %v2484
    %v2495 = vcombine.high %v2485, %v2485
    %2496 = vrot.lane.b32.xlu0 %v2482, 113
    %v2497 = vpop.permute.xlu0 %2496
    %2498 = vrot.lane.b32.xlu0 %v2492, 113
    %v2499 = vpop.permute.xlu0 %2498
    %2500 = vrot.lane.b32.xlu0 %v2483, 113
    %v2501 = vpop.permute.xlu0 %2500
    %2502 = vrot.lane.b32.xlu0 %v2493, 113
    %v2503 = vpop.permute.xlu0 %2502
    %2504 = vrot.lane.b32.xlu0 %v2484, 113
    %v2505 = vpop.permute.xlu0 %2504
    %2506 = vrot.lane.b32.xlu0 %v2494, 113
    %v2507 = vpop.permute.xlu0 %2506
    %2508 = vrot.lane.b32.xlu0 %v2485, 113
    %v2509 = vpop.permute.xlu0 %2508
    %2510 = vrot.lane.b32.xlu0 %v2495, 113
    %v2511 = vpop.permute.xlu0 %2510
    %2512 = vrot.lane.b32.xlu0 %v2486, 113
    %v2513 = vpop.permute.xlu0 %2512
    %v2514 = vsel %vm1019, %v2497, %v2499
    %v2515 = vsel %vm1019, %v2499, %v2501
    %v2516 = vsel %vm1019, %v2501, %v2503
    %v2517 = vsel %vm1019, %v2503, %v2505
    %v2518 = vsel %vm1019, %v2505, %v2507
    %v2519 = vsel %vm1019, %v2507, %v2509
    %v2520 = vsel %vm1019, %v2509, %v2511
    %v2521 = vsel %vm1019, %v2511, %v2513
    %2530 = vst [vmem:[#allocation2 + $0x180] sm:$0xf] %v2514
    %2531 = vst [vmem:[#allocation2 + $0x188] sm:$0xf] %v2515
    %2532 = vst [vmem:[#allocation2 + $0x190] sm:$0xf] %v2516
    %2533 = vst [vmem:[#allocation2 + $0x198] sm:$0xf] %v2517
    %2534 = vst [vmem:[#allocation2 + $0x1a0] sm:$0xf] %v2518
    %2535 = vst [vmem:[#allocation2 + $0x1a8] sm:$0xf] %v2519
    %2536 = vst [vmem:[#allocation2 + $0x1b0] sm:$0xf] %v2520
    %2537 = vst [vmem:[#allocation2 + $0x1b8] sm:$0xf] %v2521
    %v2538 = vld [vmem:[%s216 + $0x4] sm:$0xff]
    %v2539 = vld [vmem:[%s216 + $0xc] sm:$0xff]
    %v2540 = vld [vmem:[%s216 + $0x14] sm:$0xff]
    %v2541 = vld [vmem:[%s216 + $0x1c] sm:$0xff]
    %v2542 = vld [vmem:[%s216 + $0x24] sm:$0xf]
    %v2543 = vmul.f32 %v2538, %v2470
    %v2544 = vmul.f32 %v2539, %v2472
    %v2545 = vmul.f32 %v2540, %v2474
    %v2546 = vmul.f32 %v2541, %v2476
    %v2547 = vmul.f32 %v2542, %v2469
    %v2553 = vcombine.high %v2543, %v2543
    %v2554 = vcombine.high %v2544, %v2544
    %v2555 = vcombine.high %v2545, %v2545
    %v2556 = vcombine.high %v2546, %v2546
    %2557 = vrot.lane.b32.xlu0 %v2543, 113
    %v2558 = vpop.permute.xlu0 %2557
    %2559 = vrot.lane.b32.xlu0 %v2553, 113
    %v2560 = vpop.permute.xlu0 %2559
    %2561 = vrot.lane.b32.xlu0 %v2544, 113
    %v2562 = vpop.permute.xlu0 %2561
    %2563 = vrot.lane.b32.xlu0 %v2554, 113
    %v2564 = vpop.permute.xlu0 %2563
    %2565 = vrot.lane.b32.xlu0 %v2545, 113
    %v2566 = vpop.permute.xlu0 %2565
    %2567 = vrot.lane.b32.xlu0 %v2555, 113
    %v2568 = vpop.permute.xlu0 %2567
    %2569 = vrot.lane.b32.xlu0 %v2546, 113
    %v2570 = vpop.permute.xlu0 %2569
    %2571 = vrot.lane.b32.xlu0 %v2556, 113
    %v2572 = vpop.permute.xlu0 %2571
    %2573 = vrot.lane.b32.xlu0 %v2547, 113
    %v2574 = vpop.permute.xlu0 %2573
    %v2575 = vsel %vm1019, %v2558, %v2560
    %v2576 = vsel %vm1019, %v2560, %v2562
    %v2577 = vsel %vm1019, %v2562, %v2564
    %v2578 = vsel %vm1019, %v2564, %v2566
    %v2579 = vsel %vm1019, %v2566, %v2568
    %v2580 = vsel %vm1019, %v2568, %v2570
    %v2581 = vsel %vm1019, %v2570, %v2572
    %v2582 = vsel %vm1019, %v2572, %v2574
    %2591 = vst [vmem:[#allocation2 + $0x1c0] sm:$0xf] %v2575
    %2592 = vst [vmem:[#allocation2 + $0x1c8] sm:$0xf] %v2576
    %2593 = vst [vmem:[#allocation2 + $0x1d0] sm:$0xf] %v2577
    %2594 = vst [vmem:[#allocation2 + $0x1d8] sm:$0xf] %v2578
    %2595 = vst [vmem:[#allocation2 + $0x1e0] sm:$0xf] %v2579
    %2596 = vst [vmem:[#allocation2 + $0x1e8] sm:$0xf] %v2580
    %2597 = vst [vmem:[#allocation2 + $0x1f0] sm:$0xf] %v2581
    %2598 = vst [vmem:[#allocation2 + $0x1f8] sm:$0xf] %v2582
    %v2599 = vld [vmem:[%s0 + $0xc] sm:$0xff]
    %v2600 = vld [vmem:[%s0 + $0x14] sm:$0xff]
    %v2601 = vld [vmem:[%s0 + $0x1c] sm:$0xff]
    %v2602 = vld [vmem:[%s0 + $0x24] sm:$0xff]
    %v2603 = vld [vmem:[%s0 + $0x2c] sm:$0xf]
    %v2604 = vmul.f32 %v2599, %v2470
    %v2605 = vmul.f32 %v2600, %v2472
    %v2606 = vmul.f32 %v2601, %v2474
    %v2607 = vmul.f32 %v2602, %v2476
    %v2608 = vmul.f32 %v2603, %v2469
    %v2614 = vcombine.low %v2604, %v2604
    %v2615 = vcombine.low %v2605, %v2605
    %v2616 = vcombine.low %v2606, %v2606
    %v2617 = vcombine.low %v2607, %v2607
    %v2618 = vcombine.low %v2608, %v2608
    %2619 = vrot.lane.b32.xlu0 %v2614, 113
    %v2620 = vpop.permute.xlu0 %2619
    %2621 = vrot.lane.b32.xlu0 %v2604, 113
    %v2622 = vpop.permute.xlu0 %2621
    %2623 = vrot.lane.b32.xlu0 %v2615, 113
    %v2624 = vpop.permute.xlu0 %2623
    %2625 = vrot.lane.b32.xlu0 %v2605, 113
    %v2626 = vpop.permute.xlu0 %2625
    %2627 = vrot.lane.b32.xlu0 %v2616, 113
    %v2628 = vpop.permute.xlu0 %2627
    %2629 = vrot.lane.b32.xlu0 %v2606, 113
    %v2630 = vpop.permute.xlu0 %2629
    %2631 = vrot.lane.b32.xlu0 %v2617, 113
    %v2632 = vpop.permute.xlu0 %2631
    %2633 = vrot.lane.b32.xlu0 %v2607, 113
    %v2634 = vpop.permute.xlu0 %2633
    %2635 = vrot.lane.b32.xlu0 %v2618, 113
    %v2636 = vpop.permute.xlu0 %2635
    %v2637 = vsel %vm1019, %v2620, %v2622
    %v2638 = vsel %vm1019, %v2622, %v2624
    %v2639 = vsel %vm1019, %v2624, %v2626
    %v2640 = vsel %vm1019, %v2626, %v2628
    %v2641 = vsel %vm1019, %v2628, %v2630
    %v2642 = vsel %vm1019, %v2630, %v2632
    %v2643 = vsel %vm1019, %v2632, %v2634
    %v2644 = vsel %vm1019, %v2634, %v2636
    %2653 = vst [vmem:[#allocation2 + $0x380] sm:$0xf0] %v2637
    %2654 = vst [vmem:[#allocation2 + $0x388] sm:$0xf0] %v2638
    %2655 = vst [vmem:[#allocation2 + $0x390] sm:$0xf0] %v2639
    %2656 = vst [vmem:[#allocation2 + $0x398] sm:$0xf0] %v2640
    %2657 = vst [vmem:[#allocation2 + $0x3a0] sm:$0xf0] %v2641
    %2658 = vst [vmem:[#allocation2 + $0x3a8] sm:$0xf0] %v2642
    %2659 = vst [vmem:[#allocation2 + $0x3b0] sm:$0xf0] %v2643
    %2660 = vst [vmem:[#allocation2 + $0x3b8] sm:$0xf0] %v2644
    %v2661 = vld [vmem:[%s216 + $0xc] sm:$0xff]
    %v2662 = vld [vmem:[%s216 + $0x14] sm:$0xff]
    %v2663 = vld [vmem:[%s216 + $0x1c] sm:$0xff]
    %v2664 = vld [vmem:[%s216 + $0x24] sm:$0xff]
    %v2665 = vld [vmem:[%s216 + $0x2c] sm:$0xf]
    %v2666 = vmul.f32 %v2661, %v2470
    %v2667 = vmul.f32 %v2662, %v2472
    %v2668 = vmul.f32 %v2663, %v2474
    %v2669 = vmul.f32 %v2664, %v2476
    %v2670 = vmul.f32 %v2665, %v2469
    %v2676 = vcombine.low %v2666, %v2666
    %v2677 = vcombine.low %v2667, %v2667
    %v2678 = vcombine.low %v2668, %v2668
    %v2679 = vcombine.low %v2669, %v2669
    %v2680 = vcombine.low %v2670, %v2670
    %2681 = vrot.lane.b32.xlu0 %v2676, 113
    %v2682 = vpop.permute.xlu0 %2681
    %2683 = vrot.lane.b32.xlu0 %v2666, 113
    %v2684 = vpop.permute.xlu0 %2683
    %2685 = vrot.lane.b32.xlu0 %v2677, 113
    %v2686 = vpop.permute.xlu0 %2685
    %2687 = vrot.lane.b32.xlu0 %v2667, 113
    %v2688 = vpop.permute.xlu0 %2687
    %2689 = vrot.lane.b32.xlu0 %v2678, 113
    %v2690 = vpop.permute.xlu0 %2689
    %2691 = vrot.lane.b32.xlu0 %v2668, 113
    %v2692 = vpop.permute.xlu0 %2691
    %2693 = vrot.lane.b32.xlu0 %v2679, 113
    %v2694 = vpop.permute.xlu0 %2693
    %2695 = vrot.lane.b32.xlu0 %v2669, 113
    %v2696 = vpop.permute.xlu0 %2695
    %2697 = vrot.lane.b32.xlu0 %v2680, 113
    %v2698 = vpop.permute.xlu0 %2697
    %v2699 = vsel %vm1019, %v2682, %v2684
    %v2700 = vsel %vm1019, %v2684, %v2686
    %v2701 = vsel %vm1019, %v2686, %v2688
    %v2702 = vsel %vm1019, %v2688, %v2690
    %v2703 = vsel %vm1019, %v2690, %v2692
    %v2704 = vsel %vm1019, %v2692, %v2694
    %v2705 = vsel %vm1019, %v2694, %v2696
    %v2706 = vsel %vm1019, %v2696, %v2698
    %2715 = vst [vmem:[#allocation2 + $0x3c0] sm:$0xf0] %v2699
    %2716 = vst [vmem:[#allocation2 + $0x3c8] sm:$0xf0] %v2700
    %2717 = vst [vmem:[#allocation2 + $0x3d0] sm:$0xf0] %v2701
    %2718 = vst [vmem:[#allocation2 + $0x3d8] sm:$0xf0] %v2702
    %2719 = vst [vmem:[#allocation2 + $0x3e0] sm:$0xf0] %v2703
    %2720 = vst [vmem:[#allocation2 + $0x3e8] sm:$0xf0] %v2704
    %2721 = vst [vmem:[#allocation2 + $0x3f0] sm:$0xf0] %v2705
    %2722 = vst [vmem:[#allocation2 + $0x3f8] sm:$0xf0] %v2706
    %v2723 = vld [vmem:[%s0 + $0x14] sm:$0xff]
    %v2724 = vld [vmem:[%s0 + $0x1c] sm:$0xff]
    %v2725 = vld [vmem:[%s0 + $0x24] sm:$0xff]
    %v2726 = vld [vmem:[%s0 + $0x2c] sm:$0xff]
    %v2727 = vld [vmem:[%s0 + $0x34] sm:$0xf]
    %v2728 = vmul.f32 %v2723, %v2470
    %v2729 = vmul.f32 %v2724, %v2472
    %v2730 = vmul.f32 %v2725, %v2474
    %v2731 = vmul.f32 %v2726, %v2476
    %v2732 = vmul.f32 %v2727, %v2469
    %v2738 = vcombine.high %v2728, %v2728
    %v2739 = vcombine.high %v2729, %v2729
    %v2740 = vcombine.high %v2730, %v2730
    %v2741 = vcombine.high %v2731, %v2731
    %2742 = vrot.lane.b32.xlu0 %v2728, 113
    %v2743 = vpop.permute.xlu0 %2742
    %2744 = vrot.lane.b32.xlu0 %v2738, 113
    %v2745 = vpop.permute.xlu0 %2744
    %2746 = vrot.lane.b32.xlu0 %v2729, 113
    %v2747 = vpop.permute.xlu0 %2746
    %2748 = vrot.lane.b32.xlu0 %v2739, 113
    %v2749 = vpop.permute.xlu0 %2748
    %2750 = vrot.lane.b32.xlu0 %v2730, 113
    %v2751 = vpop.permute.xlu0 %2750
    %2752 = vrot.lane.b32.xlu0 %v2740, 113
    %v2753 = vpop.permute.xlu0 %2752
    %2754 = vrot.lane.b32.xlu0 %v2731, 113
    %v2755 = vpop.permute.xlu0 %2754
    %2756 = vrot.lane.b32.xlu0 %v2741, 113
    %v2757 = vpop.permute.xlu0 %2756
    %2758 = vrot.lane.b32.xlu0 %v2732, 113
    %v2759 = vpop.permute.xlu0 %2758
    %v2760 = vsel %vm1019, %v2743, %v2745
    %v2761 = vsel %vm1019, %v2745, %v2747
    %v2762 = vsel %vm1019, %v2747, %v2749
    %v2763 = vsel %vm1019, %v2749, %v2751
    %v2764 = vsel %vm1019, %v2751, %v2753
    %v2765 = vsel %vm1019, %v2753, %v2755
    %v2766 = vsel %vm1019, %v2755, %v2757
    %v2767 = vsel %vm1019, %v2757, %v2759
    %2776 = vst [vmem:[#allocation2 + $0x600] sm:$0xf] %v2760
    %2777 = vst [vmem:[#allocation2 + $0x608] sm:$0xf] %v2761
    %2778 = vst [vmem:[#allocation2 + $0x610] sm:$0xf] %v2762
    %2779 = vst [vmem:[#allocation2 + $0x618] sm:$0xf] %v2763
    %2780 = vst [vmem:[#allocation2 + $0x620] sm:$0xf] %v2764
    %2781 = vst [vmem:[#allocation2 + $0x628] sm:$0xf] %v2765
    %2782 = vst [vmem:[#allocation2 + $0x630] sm:$0xf] %v2766
    %2783 = vst [vmem:[#allocation2 + $0x638] sm:$0xf] %v2767
    %v2784 = vld [vmem:[%s216 + $0x14] sm:$0xff]
    %v2785 = vld [vmem:[%s216 + $0x1c] sm:$0xff]
    %v2786 = vld [vmem:[%s216 + $0x24] sm:$0xff]
    %v2787 = vld [vmem:[%s216 + $0x2c] sm:$0xff]
    %v2788 = vld [vmem:[%s216 + $0x34] sm:$0xf]
    %v2789 = vmul.f32 %v2784, %v2470
    %v2790 = vmul.f32 %v2785, %v2472
    %v2791 = vmul.f32 %v2786, %v2474
    %v2792 = vmul.f32 %v2787, %v2476
    %v2793 = vmul.f32 %v2788, %v2469
    %v2799 = vcombine.high %v2789, %v2789
    %v2800 = vcombine.high %v2790, %v2790
    %v2801 = vcombine.high %v2791, %v2791
    %v2802 = vcombine.high %v2792, %v2792
    %2803 = vrot.lane.b32.xlu0 %v2789, 113
    %v2804 = vpop.permute.xlu0 %2803
    %2805 = vrot.lane.b32.xlu0 %v2799, 113
    %v2806 = vpop.permute.xlu0 %2805
    %2807 = vrot.lane.b32.xlu0 %v2790, 113
    %v2808 = vpop.permute.xlu0 %2807
    %2809 = vrot.lane.b32.xlu0 %v2800, 113
    %v2810 = vpop.permute.xlu0 %2809
    %2811 = vrot.lane.b32.xlu0 %v2791, 113
    %v2812 = vpop.permute.xlu0 %2811
    %2813 = vrot.lane.b32.xlu0 %v2801, 113
    %v2814 = vpop.permute.xlu0 %2813
    %2815 = vrot.lane.b32.xlu0 %v2792, 113
    %v2816 = vpop.permute.xlu0 %2815
    %2817 = vrot.lane.b32.xlu0 %v2802, 113
    %v2818 = vpop.permute.xlu0 %2817
    %2819 = vrot.lane.b32.xlu0 %v2793, 113
    %v2820 = vpop.permute.xlu0 %2819
    %v2821 = vsel %vm1019, %v2804, %v2806
    %v2822 = vsel %vm1019, %v2806, %v2808
    %v2823 = vsel %vm1019, %v2808, %v2810
    %v2824 = vsel %vm1019, %v2810, %v2812
    %v2825 = vsel %vm1019, %v2812, %v2814
    %v2826 = vsel %vm1019, %v2814, %v2816
    %v2827 = vsel %vm1019, %v2816, %v2818
    %v2828 = vsel %vm1019, %v2818, %v2820
    %2837 = vst [vmem:[#allocation2 + $0x640] sm:$0xf] %v2821
    %2838 = vst [vmem:[#allocation2 + $0x648] sm:$0xf] %v2822
    %2839 = vst [vmem:[#allocation2 + $0x650] sm:$0xf] %v2823
    %2840 = vst [vmem:[#allocation2 + $0x658] sm:$0xf] %v2824
    %2841 = vst [vmem:[#allocation2 + $0x660] sm:$0xf] %v2825
    %2842 = vst [vmem:[#allocation2 + $0x668] sm:$0xf] %v2826
    %2843 = vst [vmem:[#allocation2 + $0x670] sm:$0xf] %v2827
    %2844 = vst [vmem:[#allocation2 + $0x678] sm:$0xf] %v2828
    %s2845 = scalar_lea.vmem %s5, 7
    %v2846 = vld [vmem:[%s2845] ss:$8 sm:$0xf]
    %v2847 = vld [vmem:[%s2845] ss:$8 sm:$0xf0]
    %v2848 = vor.u32 %v2846, %v2847
    %v2849 = vld [vmem:[%s0 + $0x4] sm:$0xff]
    %v2850 = vld [vmem:[%s0 + $0xc] sm:$0xff]
    %v2851 = vld [vmem:[%s0 + $0x14] sm:$0xff]
    %v2852 = vld [vmem:[%s0 + $0x1c] sm:$0xff]
    %v2853 = vld [vmem:[%s0 + $0x24] sm:$0xf]
    %v2855 = vlaneseq
    %v2856 = vshrl.u32 %v2855, 7
    %v2857 = vsub.s32 0, %v2856
    %v2858 = vrot.slane %v2848, %v2857
    %v2859 = vlaneseq
    %v2860 = vshrl.u32 %v2859, 7
    %v2861 = vsub.s32 1, %v2860
    %v2862 = vrot.slane %v2848, %v2861
    %v2863 = vlaneseq
    %v2864 = vshrl.u32 %v2863, 7
    %v2865 = vsub.s32 2, %v2864
    %v2866 = vrot.slane %v2848, %v2865
    %v2867 = vlaneseq
    %v2868 = vshrl.u32 %v2867, 7
    %v2869 = vsub.s32 3, %v2868
    %v2870 = vrot.slane %v2848, %v2869
    %v2871 = vlaneseq
    %v2872 = vshrl.u32 %v2871, 7
    %v2873 = vsub.s32 4, %v2872
    %v2874 = vrot.slane %v2848, %v2873
    %v2875 = vlaneseq
    %v2876 = vshrl.u32 %v2875, 7
    %v2877 = vsub.s32 5, %v2876
    %v2878 = vrot.slane %v2848, %v2877
    %v2879 = vlaneseq
    %v2880 = vshrl.u32 %v2879, 7
    %v2881 = vsub.s32 6, %v2880
    %v2882 = vrot.slane %v2848, %v2881
    %v2883 = vlaneseq
    %v2884 = vshrl.u32 %v2883, 7
    %v2885 = vsub.s32 7, %v2884
    %v2886 = vrot.slane %v2848, %v2885
    %v2887 = vcombine.low %v2858, %v2862
    %v2888 = vcombine.low %v2866, %v2870
    %v2889 = vcombine.low %v2874, %v2878
    %v2890 = vcombine.low %v2882, %v2886
    %2891 = vrot.lane.b32.xlu0 %v2887, 16
    %v2892 = vpop.permute.xlu0 %2891
    %2893 = vrot.lane.b32.xlu0 %v2888, 16
    %v2894 = vpop.permute.xlu0 %2893
    %2895 = vrot.lane.b32.xlu0 %v2889, 16
    %v2896 = vpop.permute.xlu0 %2895
    %2897 = vrot.lane.b32.xlu0 %v2890, 16
    %v2898 = vpop.permute.xlu0 %2897
    %v2899 = vrot.slane %v2892, 4
    %v2900 = vrot.slane %v2894, 4
    %v2901 = vrot.slane %v2896, 4
    %v2902 = vrot.slane %v2898, 4
    %v2903 = vsel %vm628, %v2899, %v2892
    %v2904 = vsel %vm147, %v2899, %v2900
    %v2905 = vsel %vm628, %v2904, %v2894
    %v2906 = vsel %vm147, %v2900, %v2901
    %v2907 = vsel %vm628, %v2906, %v2896
    %v2908 = vsel %vm147, %v2901, %v2902
    %v2909 = vsel %vm628, %v2908, %v2898
    %v2915 = vmul.f32 %v2849, %v2903
    %v2916 = vmul.f32 %v2850, %v2905
    %v2917 = vmul.f32 %v2851, %v2907
    %v2918 = vmul.f32 %v2852, %v2909
    %v2919 = vmul.f32 %v2853, %v2902
    %v2925 = vcombine.low %v2915, %v2915
    %v2926 = vcombine.low %v2916, %v2916
    %v2927 = vcombine.low %v2917, %v2917
    %v2928 = vcombine.low %v2918, %v2918
    %v2929 = vcombine.low %v2919, %v2919
    %2930 = vrot.lane.b32.xlu0 %v2925, 112
    %v2931 = vpop.permute.xlu0 %2930
    %2932 = vrot.lane.b32.xlu0 %v2915, 112
    %v2933 = vpop.permute.xlu0 %2932
    %2934 = vrot.lane.b32.xlu0 %v2926, 112
    %v2935 = vpop.permute.xlu0 %2934
    %2936 = vrot.lane.b32.xlu0 %v2916, 112
    %v2937 = vpop.permute.xlu0 %2936
    %2938 = vrot.lane.b32.xlu0 %v2927, 112
    %v2939 = vpop.permute.xlu0 %2938
    %2940 = vrot.lane.b32.xlu0 %v2917, 112
    %v2941 = vpop.permute.xlu0 %2940
    %2942 = vrot.lane.b32.xlu0 %v2928, 112
    %v2943 = vpop.permute.xlu0 %2942
    %2944 = vrot.lane.b32.xlu0 %v2918, 112
    %v2945 = vpop.permute.xlu0 %2944
    %2946 = vrot.lane.b32.xlu0 %v2929, 112
    %v2947 = vpop.permute.xlu0 %2946
    %v2948 = vsel %vm582, %v2931, %v2933
    %v2949 = vsel %vm582, %v2933, %v2935
    %v2950 = vsel %vm582, %v2935, %v2937
    %v2951 = vsel %vm582, %v2937, %v2939
    %v2952 = vsel %vm582, %v2939, %v2941
    %v2953 = vsel %vm582, %v2941, %v2943
    %v2954 = vsel %vm582, %v2943, %v2945
    %v2955 = vsel %vm582, %v2945, %v2947
    %2964 = vst [vmem:[#allocation2 + $0x180] sm:$0xf0] %v2948
    %2965 = vst [vmem:[#allocation2 + $0x188] sm:$0xf0] %v2949
    %2966 = vst [vmem:[#allocation2 + $0x190] sm:$0xf0] %v2950
    %2967 = vst [vmem:[#allocation2 + $0x198] sm:$0xf0] %v2951
    %2968 = vst [vmem:[#allocation2 + $0x1a0] sm:$0xf0] %v2952
    %2969 = vst [vmem:[#allocation2 + $0x1a8] sm:$0xf0] %v2953
    %2970 = vst [vmem:[#allocation2 + $0x1b0] sm:$0xf0] %v2954
    %2971 = vst [vmem:[#allocation2 + $0x1b8] sm:$0xf0] %v2955
    %v2972 = vld [vmem:[%s216 + $0x4] sm:$0xff]
    %v2973 = vld [vmem:[%s216 + $0xc] sm:$0xff]
    %v2974 = vld [vmem:[%s216 + $0x14] sm:$0xff]
    %v2975 = vld [vmem:[%s216 + $0x1c] sm:$0xff]
    %v2976 = vld [vmem:[%s216 + $0x24] sm:$0xf]
    %v2977 = vmul.f32 %v2972, %v2903
    %v2978 = vmul.f32 %v2973, %v2905
    %v2979 = vmul.f32 %v2974, %v2907
    %v2980 = vmul.f32 %v2975, %v2909
    %v2981 = vmul.f32 %v2976, %v2902
    %v2987 = vcombine.low %v2977, %v2977
    %v2988 = vcombine.low %v2978, %v2978
    %v2989 = vcombine.low %v2979, %v2979
    %v2990 = vcombine.low %v2980, %v2980
    %v2991 = vcombine.low %v2981, %v2981
    %2992 = vrot.lane.b32.xlu0 %v2987, 112
    %v2993 = vpop.permute.xlu0 %2992
    %2994 = vrot.lane.b32.xlu0 %v2977, 112
    %v2995 = vpop.permute.xlu0 %2994
    %2996 = vrot.lane.b32.xlu0 %v2988, 112
    %v2997 = vpop.permute.xlu0 %2996
    %2998 = vrot.lane.b32.xlu0 %v2978, 112
    %v2999 = vpop.permute.xlu0 %2998
    %3000 = vrot.lane.b32.xlu0 %v2989, 112
    %v3001 = vpop.permute.xlu0 %3000
    %3002 = vrot.lane.b32.xlu0 %v2979, 112
    %v3003 = vpop.permute.xlu0 %3002
    %3004 = vrot.lane.b32.xlu0 %v2990, 112
    %v3005 = vpop.permute.xlu0 %3004
    %3006 = vrot.lane.b32.xlu0 %v2980, 112
    %v3007 = vpop.permute.xlu0 %3006
    %3008 = vrot.lane.b32.xlu0 %v2991, 112
    %v3009 = vpop.permute.xlu0 %3008
    %v3010 = vsel %vm582, %v2993, %v2995
    %v3011 = vsel %vm582, %v2995, %v2997
    %v3012 = vsel %vm582, %v2997, %v2999
    %v3013 = vsel %vm582, %v2999, %v3001
    %v3014 = vsel %vm582, %v3001, %v3003
    %v3015 = vsel %vm582, %v3003, %v3005
    %v3016 = vsel %vm582, %v3005, %v3007
    %v3017 = vsel %vm582, %v3007, %v3009
    %3026 = vst [vmem:[#allocation2 + $0x1c0] sm:$0xf0] %v3010
    %3027 = vst [vmem:[#allocation2 + $0x1c8] sm:$0xf0] %v3011
    %3028 = vst [vmem:[#allocation2 + $0x1d0] sm:$0xf0] %v3012
    %3029 = vst [vmem:[#allocation2 + $0x1d8] sm:$0xf0] %v3013
    %3030 = vst [vmem:[#allocation2 + $0x1e0] sm:$0xf0] %v3014
    %3031 = vst [vmem:[#allocation2 + $0x1e8] sm:$0xf0] %v3015
    %3032 = vst [vmem:[#allocation2 + $0x1f0] sm:$0xf0] %v3016
    %3033 = vst [vmem:[#allocation2 + $0x1f8] sm:$0xf0] %v3017
    %v3034 = vld [vmem:[%s0 + $0xc] sm:$0xff]
    %v3035 = vld [vmem:[%s0 + $0x14] sm:$0xff]
    %v3036 = vld [vmem:[%s0 + $0x1c] sm:$0xff]
    %v3037 = vld [vmem:[%s0 + $0x24] sm:$0xff]
    %v3038 = vld [vmem:[%s0 + $0x2c] sm:$0xf]
    %v3039 = vmul.f32 %v3034, %v2903
    %v3040 = vmul.f32 %v3035, %v2905
    %v3041 = vmul.f32 %v3036, %v2907
    %v3042 = vmul.f32 %v3037, %v2909
    %v3043 = vmul.f32 %v3038, %v2902
    %v3049 = vcombine.high %v3039, %v3039
    %v3050 = vcombine.high %v3040, %v3040
    %v3051 = vcombine.high %v3041, %v3041
    %v3052 = vcombine.high %v3042, %v3042
    %3053 = vrot.lane.b32.xlu0 %v3039, 112
    %v3054 = vpop.permute.xlu0 %3053
    %3055 = vrot.lane.b32.xlu0 %v3049, 112
    %v3056 = vpop.permute.xlu0 %3055
    %3057 = vrot.lane.b32.xlu0 %v3040, 112
    %v3058 = vpop.permute.xlu0 %3057
    %3059 = vrot.lane.b32.xlu0 %v3050, 112
    %v3060 = vpop.permute.xlu0 %3059
    %3061 = vrot.lane.b32.xlu0 %v3041, 112
    %v3062 = vpop.permute.xlu0 %3061
    %3063 = vrot.lane.b32.xlu0 %v3051, 112
    %v3064 = vpop.permute.xlu0 %3063
    %3065 = vrot.lane.b32.xlu0 %v3042, 112
    %v3066 = vpop.permute.xlu0 %3065
    %3067 = vrot.lane.b32.xlu0 %v3052, 112
    %v3068 = vpop.permute.xlu0 %3067
    %3069 = vrot.lane.b32.xlu0 %v3043, 112
    %v3070 = vpop.permute.xlu0 %3069
    %v3071 = vsel %vm582, %v3054, %v3056
    %v3072 = vsel %vm582, %v3056, %v3058
    %v3073 = vsel %vm582, %v3058, %v3060
    %v3074 = vsel %vm582, %v3060, %v3062
    %v3075 = vsel %vm582, %v3062, %v3064
    %v3076 = vsel %vm582, %v3064, %v3066
    %v3077 = vsel %vm582, %v3066, %v3068
    %v3078 = vsel %vm582, %v3068, %v3070
    %3087 = vst [vmem:[#allocation2 + $0x400] sm:$0xf] %v3071
    %3088 = vst [vmem:[#allocation2 + $0x408] sm:$0xf] %v3072
    %3089 = vst [vmem:[#allocation2 + $0x410] sm:$0xf] %v3073
    %3090 = vst [vmem:[#allocation2 + $0x418] sm:$0xf] %v3074
    %3091 = vst [vmem:[#allocation2 + $0x420] sm:$0xf] %v3075
    %3092 = vst [vmem:[#allocation2 + $0x428] sm:$0xf] %v3076
    %3093 = vst [vmem:[#allocation2 + $0x430] sm:$0xf] %v3077
    %3094 = vst [vmem:[#allocation2 + $0x438] sm:$0xf] %v3078
    %v3095 = vld [vmem:[%s216 + $0xc] sm:$0xff]
    %v3096 = vld [vmem:[%s216 + $0x14] sm:$0xff]
    %v3097 = vld [vmem:[%s216 + $0x1c] sm:$0xff]
    %v3098 = vld [vmem:[%s216 + $0x24] sm:$0xff]
    %v3099 = vld [vmem:[%s216 + $0x2c] sm:$0xf]
    %v3100 = vmul.f32 %v3095, %v2903
    %v3101 = vmul.f32 %v3096, %v2905
    %v3102 = vmul.f32 %v3097, %v2907
    %v3103 = vmul.f32 %v3098, %v2909
    %v3104 = vmul.f32 %v3099, %v2902
    %v3110 = vcombine.high %v3100, %v3100
    %v3111 = vcombine.high %v3101, %v3101
    %v3112 = vcombine.high %v3102, %v3102
    %v3113 = vcombine.high %v3103, %v3103
    %3114 = vrot.lane.b32.xlu0 %v3100, 112
    %v3115 = vpop.permute.xlu0 %3114
    %3116 = vrot.lane.b32.xlu0 %v3110, 112
    %v3117 = vpop.permute.xlu0 %3116
    %3118 = vrot.lane.b32.xlu0 %v3101, 112
    %v3119 = vpop.permute.xlu0 %3118
    %3120 = vrot.lane.b32.xlu0 %v3111, 112
    %v3121 = vpop.permute.xlu0 %3120
    %3122 = vrot.lane.b32.xlu0 %v3102, 112
    %v3123 = vpop.permute.xlu0 %3122
    %3124 = vrot.lane.b32.xlu0 %v3112, 112
    %v3125 = vpop.permute.xlu0 %3124
    %3126 = vrot.lane.b32.xlu0 %v3103, 112
    %v3127 = vpop.permute.xlu0 %3126
    %3128 = vrot.lane.b32.xlu0 %v3113, 112
    %v3129 = vpop.permute.xlu0 %3128
    %3130 = vrot.lane.b32.xlu0 %v3104, 112
    %v3131 = vpop.permute.xlu0 %3130
    %v3132 = vsel %vm582, %v3115, %v3117
    %v3133 = vsel %vm582, %v3117, %v3119
    %v3134 = vsel %vm582, %v3119, %v3121
    %v3135 = vsel %vm582, %v3121, %v3123
    %v3136 = vsel %vm582, %v3123, %v3125
    %v3137 = vsel %vm582, %v3125, %v3127
    %v3138 = vsel %vm582, %v3127, %v3129
    %v3139 = vsel %vm582, %v3129, %v3131
    %3148 = vst [vmem:[#allocation2 + $0x440] sm:$0xf] %v3132
    %3149 = vst [vmem:[#allocation2 + $0x448] sm:$0xf] %v3133
    %3150 = vst [vmem:[#allocation2 + $0x450] sm:$0xf] %v3134
    %3151 = vst [vmem:[#allocation2 + $0x458] sm:$0xf] %v3135
    %3152 = vst [vmem:[#allocation2 + $0x460] sm:$0xf] %v3136
    %3153 = vst [vmem:[#allocation2 + $0x468] sm:$0xf] %v3137
    %3154 = vst [vmem:[#allocation2 + $0x470] sm:$0xf] %v3138
    %3155 = vst [vmem:[#allocation2 + $0x478] sm:$0xf] %v3139
    %v3156 = vld [vmem:[%s0 + $0x14] sm:$0xff]
    %v3157 = vld [vmem:[%s0 + $0x1c] sm:$0xff]
    %v3158 = vld [vmem:[%s0 + $0x24] sm:$0xff]
    %v3159 = vld [vmem:[%s0 + $0x2c] sm:$0xff]
    %v3160 = vld [vmem:[%s0 + $0x34] sm:$0xf]
    %v3161 = vmul.f32 %v3156, %v2903
    %v3162 = vmul.f32 %v3157, %v2905
    %v3163 = vmul.f32 %v3158, %v2907
    %v3164 = vmul.f32 %v3159, %v2909
    %v3165 = vmul.f32 %v3160, %v2902
    %v3171 = vcombine.low %v3161, %v3161
    %v3172 = vcombine.low %v3162, %v3162
    %v3173 = vcombine.low %v3163, %v3163
    %v3174 = vcombine.low %v3164, %v3164
    %v3175 = vcombine.low %v3165, %v3165
    %3176 = vrot.lane.b32.xlu0 %v3171, 112
    %v3177 = vpop.permute.xlu0 %3176
    %3178 = vrot.lane.b32.xlu0 %v3161, 112
    %v3179 = vpop.permute.xlu0 %3178
    %3180 = vrot.lane.b32.xlu0 %v3172, 112
    %v3181 = vpop.permute.xlu0 %3180
    %3182 = vrot.lane.b32.xlu0 %v3162, 112
    %v3183 = vpop.permute.xlu0 %3182
    %3184 = vrot.lane.b32.xlu0 %v3173, 112
    %v3185 = vpop.permute.xlu0 %3184
    %3186 = vrot.lane.b32.xlu0 %v3163, 112
    %v3187 = vpop.permute.xlu0 %3186
    %3188 = vrot.lane.b32.xlu0 %v3174, 112
    %v3189 = vpop.permute.xlu0 %3188
    %3190 = vrot.lane.b32.xlu0 %v3164, 112
    %v3191 = vpop.permute.xlu0 %3190
    %3192 = vrot.lane.b32.xlu0 %v3175, 112
    %v3193 = vpop.permute.xlu0 %3192
    %v3194 = vsel %vm582, %v3177, %v3179
    %v3195 = vsel %vm582, %v3179, %v3181
    %v3196 = vsel %vm582, %v3181, %v3183
    %v3197 = vsel %vm582, %v3183, %v3185
    %v3198 = vsel %vm582, %v3185, %v3187
    %v3199 = vsel %vm582, %v3187, %v3189
    %v3200 = vsel %vm582, %v3189, %v3191
    %v3201 = vsel %vm582, %v3191, %v3193
    %3210 = vst [vmem:[#allocation2 + $0x600] sm:$0xf0] %v3194
    %3211 = vst [vmem:[#allocation2 + $0x608] sm:$0xf0] %v3195
    %3212 = vst [vmem:[#allocation2 + $0x610] sm:$0xf0] %v3196
    %3213 = vst [vmem:[#allocation2 + $0x618] sm:$0xf0] %v3197
    %3214 = vst [vmem:[#allocation2 + $0x620] sm:$0xf0] %v3198
    %3215 = vst [vmem:[#allocation2 + $0x628] sm:$0xf0] %v3199
    %3216 = vst [vmem:[#allocation2 + $0x630] sm:$0xf0] %v3200
    %3217 = vst [vmem:[#allocation2 + $0x638] sm:$0xf0] %v3201
    %v3218 = vld [vmem:[%s216 + $0x14] sm:$0xff]
    %v3219 = vld [vmem:[%s216 + $0x1c] sm:$0xff]
    %v3220 = vld [vmem:[%s216 + $0x24] sm:$0xff]
    %v3221 = vld [vmem:[%s216 + $0x2c] sm:$0xff]
    %v3222 = vld [vmem:[%s216 + $0x34] sm:$0xf]
    %v3223 = vmul.f32 %v3218, %v2903
    %v3224 = vmul.f32 %v3219, %v2905
    %v3225 = vmul.f32 %v3220, %v2907
    %v3226 = vmul.f32 %v3221, %v2909
    %v3227 = vmul.f32 %v3222, %v2902
    %v3233 = vcombine.low %v3223, %v3223
    %v3234 = vcombine.low %v3224, %v3224
    %v3235 = vcombine.low %v3225, %v3225
    %v3236 = vcombine.low %v3226, %v3226
    %v3237 = vcombine.low %v3227, %v3227
    %3238 = vrot.lane.b32.xlu0 %v3233, 112
    %v3239 = vpop.permute.xlu0 %3238
    %3240 = vrot.lane.b32.xlu0 %v3223, 112
    %v3241 = vpop.permute.xlu0 %3240
    %3242 = vrot.lane.b32.xlu0 %v3234, 112
    %v3243 = vpop.permute.xlu0 %3242
    %3244 = vrot.lane.b32.xlu0 %v3224, 112
    %v3245 = vpop.permute.xlu0 %3244
    %3246 = vrot.lane.b32.xlu0 %v3235, 112
    %v3247 = vpop.permute.xlu0 %3246
    %3248 = vrot.lane.b32.xlu0 %v3225, 112
    %v3249 = vpop.permute.xlu0 %3248
    %3250 = vrot.lane.b32.xlu0 %v3236, 112
    %v3251 = vpop.permute.xlu0 %3250
    %3252 = vrot.lane.b32.xlu0 %v3226, 112
    %v3253 = vpop.permute.xlu0 %3252
    %3254 = vrot.lane.b32.xlu0 %v3237, 112
    %v3255 = vpop.permute.xlu0 %3254
    %v3256 = vsel %vm582, %v3239, %v3241
    %v3257 = vsel %vm582, %v3241, %v3243
    %v3258 = vsel %vm582, %v3243, %v3245
    %v3259 = vsel %vm582, %v3245, %v3247
    %v3260 = vsel %vm582, %v3247, %v3249
    %v3261 = vsel %vm582, %v3249, %v3251
    %v3262 = vsel %vm582, %v3251, %v3253
    %v3263 = vsel %vm582, %v3253, %v3255
    %3272 = vst [vmem:[#allocation2 + $0x640] sm:$0xf0] %v3256
    %3273 = vst [vmem:[#allocation2 + $0x648] sm:$0xf0] %v3257
    %3274 = vst [vmem:[#allocation2 + $0x650] sm:$0xf0] %v3258
    %3275 = vst [vmem:[#allocation2 + $0x658] sm:$0xf0] %v3259
    %3276 = vst [vmem:[#allocation2 + $0x660] sm:$0xf0] %v3260
    %3277 = vst [vmem:[#allocation2 + $0x668] sm:$0xf0] %v3261
    %3278 = vst [vmem:[#allocation2 + $0x670] sm:$0xf0] %v3262
    %3279 = vst [vmem:[#allocation2 + $0x678] sm:$0xf0] %v3263
    %s3280 = scalar_lea.vmem %s5, 64
    %v3281 = vld [vmem:[%s3280] ss:$8 sm:$0xf]
    %v3282 = vld [vmem:[%s3280] ss:$8 sm:$0xf0]
    %v3283 = vor.u32 %v3281, %v3282
    %v3284 = vld [vmem:[%s0 + $0x4] sm:$0xff]
    %v3285 = vld [vmem:[%s0 + $0xc] sm:$0xff]
    %v3286 = vld [vmem:[%s0 + $0x14] sm:$0xff]
    %v3287 = vld [vmem:[%s0 + $0x1c] sm:$0xff]
    %v3288 = vld [vmem:[%s0 + $0x24] sm:$0xf]
    %v3290 = vlaneseq
    %v3291 = vshrl.u32 %v3290, 7
    %v3292 = vsub.s32 0, %v3291
    %v3293 = vrot.slane %v3283, %v3292
    %v3294 = vlaneseq
    %v3295 = vshrl.u32 %v3294, 7
    %v3296 = vsub.s32 1, %v3295
    %v3297 = vrot.slane %v3283, %v3296
    %v3298 = vlaneseq
    %v3299 = vshrl.u32 %v3298, 7
    %v3300 = vsub.s32 2, %v3299
    %v3301 = vrot.slane %v3283, %v3300
    %v3302 = vlaneseq
    %v3303 = vshrl.u32 %v3302, 7
    %v3304 = vsub.s32 3, %v3303
    %v3305 = vrot.slane %v3283, %v3304
    %v3306 = vlaneseq
    %v3307 = vshrl.u32 %v3306, 7
    %v3308 = vsub.s32 4, %v3307
    %v3309 = vrot.slane %v3283, %v3308
    %v3310 = vlaneseq
    %v3311 = vshrl.u32 %v3310, 7
    %v3312 = vsub.s32 5, %v3311
    %v3313 = vrot.slane %v3283, %v3312
    %v3314 = vlaneseq
    %v3315 = vshrl.u32 %v3314, 7
    %v3316 = vsub.s32 6, %v3315
    %v3317 = vrot.slane %v3283, %v3316
    %v3318 = vlaneseq
    %v3319 = vshrl.u32 %v3318, 7
    %v3320 = vsub.s32 7, %v3319
    %v3321 = vrot.slane %v3283, %v3320
    %v3322 = vcombine.low %v3293, %v3297
    %v3323 = vcombine.low %v3301, %v3305
    %v3324 = vcombine.low %v3309, %v3313
    %v3325 = vcombine.low %v3317, %v3321
    %3326 = vrot.lane.b32.xlu0 %v3322, 17
    %v3327 = vpop.permute.xlu0 %3326
    %3328 = vrot.lane.b32.xlu0 %v3323, 17
    %v3329 = vpop.permute.xlu0 %3328
    %3330 = vrot.lane.b32.xlu0 %v3324, 17
    %v3331 = vpop.permute.xlu0 %3330
    %3332 = vrot.lane.b32.xlu0 %v3325, 17
    %v3333 = vpop.permute.xlu0 %3332
    %v3334 = vrot.slane %v3327, 4
    %v3335 = vrot.slane %v3329, 4
    %v3336 = vrot.slane %v3331, 4
    %v3337 = vrot.slane %v3333, 4
    %v3338 = vsel %vm191, %v3334, %v3327
    %v3339 = vsel %vm147, %v3334, %v3335
    %v3340 = vsel %vm191, %v3339, %v3329
    %v3341 = vsel %vm147, %v3335, %v3336
    %v3342 = vsel %vm191, %v3341, %v3331
    %v3343 = vsel %vm147, %v3336, %v3337
    %v3344 = vsel %vm191, %v3343, %v3333
    %v3350 = vmul.f32 %v3284, %v3338
    %v3351 = vmul.f32 %v3285, %v3340
    %v3352 = vmul.f32 %v3286, %v3342
    %v3353 = vmul.f32 %v3287, %v3344
    %v3354 = vmul.f32 %v3288, %v3337
    %v3360 = vcombine.high %v3350, %v3350
    %v3361 = vcombine.high %v3351, %v3351
    %v3362 = vcombine.high %v3352, %v3352
    %v3363 = vcombine.high %v3353, %v3353
    %3364 = vrot.lane.b32.xlu0 %v3350, 111
    %v3365 = vpop.permute.xlu0 %3364
    %3366 = vrot.lane.b32.xlu0 %v3360, 111
    %v3367 = vpop.permute.xlu0 %3366
    %3368 = vrot.lane.b32.xlu0 %v3351, 111
    %v3369 = vpop.permute.xlu0 %3368
    %3370 = vrot.lane.b32.xlu0 %v3361, 111
    %v3371 = vpop.permute.xlu0 %3370
    %3372 = vrot.lane.b32.xlu0 %v3352, 111
    %v3373 = vpop.permute.xlu0 %3372
    %3374 = vrot.lane.b32.xlu0 %v3362, 111
    %v3375 = vpop.permute.xlu0 %3374
    %3376 = vrot.lane.b32.xlu0 %v3353, 111
    %v3377 = vpop.permute.xlu0 %3376
    %3378 = vrot.lane.b32.xlu0 %v3363, 111
    %v3379 = vpop.permute.xlu0 %3378
    %3380 = vrot.lane.b32.xlu0 %v3354, 111
    %v3381 = vpop.permute.xlu0 %3380
    %v3382 = vsel %vm145, %v3365, %v3367
    %v3383 = vsel %vm145, %v3367, %v3369
    %v3384 = vsel %vm145, %v3369, %v3371
    %v3385 = vsel %vm145, %v3371, %v3373
    %v3386 = vsel %vm145, %v3373, %v3375
    %v3387 = vsel %vm145, %v3375, %v3377
    %v3388 = vsel %vm145, %v3377, %v3379
    %v3389 = vsel %vm145, %v3379, %v3381
    %3398 = vst [vmem:[#allocation2 + $0x200] sm:$0xf] %v3382
    %3399 = vst [vmem:[#allocation2 + $0x208] sm:$0xf] %v3383
    %3400 = vst [vmem:[#allocation2 + $0x210] sm:$0xf] %v3384
    %3401 = vst [vmem:[#allocation2 + $0x218] sm:$0xf] %v3385
    %3402 = vst [vmem:[#allocation2 + $0x220] sm:$0xf] %v3386
    %3403 = vst [vmem:[#allocation2 + $0x228] sm:$0xf] %v3387
    %3404 = vst [vmem:[#allocation2 + $0x230] sm:$0xf] %v3388
    %3405 = vst [vmem:[#allocation2 + $0x238] sm:$0xf] %v3389
    %v3406 = vld [vmem:[%s216 + $0x4] sm:$0xff]
    %v3407 = vld [vmem:[%s216 + $0xc] sm:$0xff]
    %v3408 = vld [vmem:[%s216 + $0x14] sm:$0xff]
    %v3409 = vld [vmem:[%s216 + $0x1c] sm:$0xff]
    %v3410 = vld [vmem:[%s216 + $0x24] sm:$0xf]
    %v3411 = vmul.f32 %v3406, %v3338
    %v3412 = vmul.f32 %v3407, %v3340
    %v3413 = vmul.f32 %v3408, %v3342
    %v3414 = vmul.f32 %v3409, %v3344
    %v3415 = vmul.f32 %v3410, %v3337
    %v3421 = vcombine.high %v3411, %v3411
    %v3422 = vcombine.high %v3412, %v3412
    %v3423 = vcombine.high %v3413, %v3413
    %v3424 = vcombine.high %v3414, %v3414
    %3425 = vrot.lane.b32.xlu0 %v3411, 111
    %v3426 = vpop.permute.xlu0 %3425
    %3427 = vrot.lane.b32.xlu0 %v3421, 111
    %v3428 = vpop.permute.xlu0 %3427
    %3429 = vrot.lane.b32.xlu0 %v3412, 111
    %v3430 = vpop.permute.xlu0 %3429
    %3431 = vrot.lane.b32.xlu0 %v3422, 111
    %v3432 = vpop.permute.xlu0 %3431
    %3433 = vrot.lane.b32.xlu0 %v3413, 111
    %v3434 = vpop.permute.xlu0 %3433
    %3435 = vrot.lane.b32.xlu0 %v3423, 111
    %v3436 = vpop.permute.xlu0 %3435
    %3437 = vrot.lane.b32.xlu0 %v3414, 111
    %v3438 = vpop.permute.xlu0 %3437
    %3439 = vrot.lane.b32.xlu0 %v3424, 111
    %v3440 = vpop.permute.xlu0 %3439
    %3441 = vrot.lane.b32.xlu0 %v3415, 111
    %v3442 = vpop.permute.xlu0 %3441
    %v3443 = vsel %vm145, %v3426, %v3428
    %v3444 = vsel %vm145, %v3428, %v3430
    %v3445 = vsel %vm145, %v3430, %v3432
    %v3446 = vsel %vm145, %v3432, %v3434
    %v3447 = vsel %vm145, %v3434, %v3436
    %v3448 = vsel %vm145, %v3436, %v3438
    %v3449 = vsel %vm145, %v3438, %v3440
    %v3450 = vsel %vm145, %v3440, %v3442
    %3459 = vst [vmem:[#allocation2 + $0x240] sm:$0xf] %v3443
    %3460 = vst [vmem:[#allocation2 + $0x248] sm:$0xf] %v3444
    %3461 = vst [vmem:[#allocation2 + $0x250] sm:$0xf] %v3445
    %3462 = vst [vmem:[#allocation2 + $0x258] sm:$0xf] %v3446
    %3463 = vst [vmem:[#allocation2 + $0x260] sm:$0xf] %v3447
    %3464 = vst [vmem:[#allocation2 + $0x268] sm:$0xf] %v3448
    %3465 = vst [vmem:[#allocation2 + $0x270] sm:$0xf] %v3449
    %3466 = vst [vmem:[#allocation2 + $0x278] sm:$0xf] %v3450
    %v3467 = vld [vmem:[%s0 + $0xc] sm:$0xff]
    %v3468 = vld [vmem:[%s0 + $0x14] sm:$0xff]
    %v3469 = vld [vmem:[%s0 + $0x1c] sm:$0xff]
    %v3470 = vld [vmem:[%s0 + $0x24] sm:$0xff]
    %v3471 = vld [vmem:[%s0 + $0x2c] sm:$0xf]
    %v3472 = vmul.f32 %v3467, %v3338
    %v3473 = vmul.f32 %v3468, %v3340
    %v3474 = vmul.f32 %v3469, %v3342
    %v3475 = vmul.f32 %v3470, %v3344
    %v3476 = vmul.f32 %v3471, %v3337
    %v3482 = vcombine.low %v3472, %v3472
    %v3483 = vcombine.low %v3473, %v3473
    %v3484 = vcombine.low %v3474, %v3474
    %v3485 = vcombine.low %v3475, %v3475
    %v3486 = vcombine.low %v3476, %v3476
    %3487 = vrot.lane.b32.xlu0 %v3482, 111
    %v3488 = vpop.permute.xlu0 %3487
    %3489 = vrot.lane.b32.xlu0 %v3472, 111
    %v3490 = vpop.permute.xlu0 %3489
    %3491 = vrot.lane.b32.xlu0 %v3483, 111
    %v3492 = vpop.permute.xlu0 %3491
    %3493 = vrot.lane.b32.xlu0 %v3473, 111
    %v3494 = vpop.permute.xlu0 %3493
    %3495 = vrot.lane.b32.xlu0 %v3484, 111
    %v3496 = vpop.permute.xlu0 %3495
    %3497 = vrot.lane.b32.xlu0 %v3474, 111
    %v3498 = vpop.permute.xlu0 %3497
    %3499 = vrot.lane.b32.xlu0 %v3485, 111
    %v3500 = vpop.permute.xlu0 %3499
    %3501 = vrot.lane.b32.xlu0 %v3475, 111
    %v3502 = vpop.permute.xlu0 %3501
    %3503 = vrot.lane.b32.xlu0 %v3486, 111
    %v3504 = vpop.permute.xlu0 %3503
    %v3505 = vsel %vm145, %v3488, %v3490
    %v3506 = vsel %vm145, %v3490, %v3492
    %v3507 = vsel %vm145, %v3492, %v3494
    %v3508 = vsel %vm145, %v3494, %v3496
    %v3509 = vsel %vm145, %v3496, %v3498
    %v3510 = vsel %vm145, %v3498, %v3500
    %v3511 = vsel %vm145, %v3500, %v3502
    %v3512 = vsel %vm145, %v3502, %v3504
    %3521 = vst [vmem:[#allocation2 + $0x400] sm:$0xf0] %v3505
    %3522 = vst [vmem:[#allocation2 + $0x408] sm:$0xf0] %v3506
    %3523 = vst [vmem:[#allocation2 + $0x410] sm:$0xf0] %v3507
    %3524 = vst [vmem:[#allocation2 + $0x418] sm:$0xf0] %v3508
    %3525 = vst [vmem:[#allocation2 + $0x420] sm:$0xf0] %v3509
    %3526 = vst [vmem:[#allocation2 + $0x428] sm:$0xf0] %v3510
    %3527 = vst [vmem:[#allocation2 + $0x430] sm:$0xf0] %v3511
    %3528 = vst [vmem:[#allocation2 + $0x438] sm:$0xf0] %v3512
    %v3529 = vld [vmem:[%s216 + $0xc] sm:$0xff]
    %v3530 = vld [vmem:[%s216 + $0x14] sm:$0xff]
    %v3531 = vld [vmem:[%s216 + $0x1c] sm:$0xff]
    %v3532 = vld [vmem:[%s216 + $0x24] sm:$0xff]
    %v3533 = vld [vmem:[%s216 + $0x2c] sm:$0xf]
    %v3534 = vmul.f32 %v3529, %v3338
    %v3535 = vmul.f32 %v3530, %v3340
    %v3536 = vmul.f32 %v3531, %v3342
    %v3537 = vmul.f32 %v3532, %v3344
    %v3538 = vmul.f32 %v3533, %v3337
    %v3544 = vcombine.low %v3534, %v3534
    %v3545 = vcombine.low %v3535, %v3535
    %v3546 = vcombine.low %v3536, %v3536
    %v3547 = vcombine.low %v3537, %v3537
    %v3548 = vcombine.low %v3538, %v3538
    %3549 = vrot.lane.b32.xlu0 %v3544, 111
    %v3550 = vpop.permute.xlu0 %3549
    %3551 = vrot.lane.b32.xlu0 %v3534, 111
    %v3552 = vpop.permute.xlu0 %3551
    %3553 = vrot.lane.b32.xlu0 %v3545, 111
    %v3554 = vpop.permute.xlu0 %3553
    %3555 = vrot.lane.b32.xlu0 %v3535, 111
    %v3556 = vpop.permute.xlu0 %3555
    %3557 = vrot.lane.b32.xlu0 %v3546, 111
    %v3558 = vpop.permute.xlu0 %3557
    %3559 = vrot.lane.b32.xlu0 %v3536, 111
    %v3560 = vpop.permute.xlu0 %3559
    %3561 = vrot.lane.b32.xlu0 %v3547, 111
    %v3562 = vpop.permute.xlu0 %3561
    %3563 = vrot.lane.b32.xlu0 %v3537, 111
    %v3564 = vpop.permute.xlu0 %3563
    %3565 = vrot.lane.b32.xlu0 %v3548, 111
    %v3566 = vpop.permute.xlu0 %3565
    %v3567 = vsel %vm145, %v3550, %v3552
    %v3568 = vsel %vm145, %v3552, %v3554
    %v3569 = vsel %vm145, %v3554, %v3556
    %v3570 = vsel %vm145, %v3556, %v3558
    %v3571 = vsel %vm145, %v3558, %v3560
    %v3572 = vsel %vm145, %v3560, %v3562
    %v3573 = vsel %vm145, %v3562, %v3564
    %v3574 = vsel %vm145, %v3564, %v3566
    %3583 = vst [vmem:[#allocation2 + $0x440] sm:$0xf0] %v3567
    %3584 = vst [vmem:[#allocation2 + $0x448] sm:$0xf0] %v3568
    %3585 = vst [vmem:[#allocation2 + $0x450] sm:$0xf0] %v3569
    %3586 = vst [vmem:[#allocation2 + $0x458] sm:$0xf0] %v3570
    %3587 = vst [vmem:[#allocation2 + $0x460] sm:$0xf0] %v3571
    %3588 = vst [vmem:[#allocation2 + $0x468] sm:$0xf0] %v3572
    %3589 = vst [vmem:[#allocation2 + $0x470] sm:$0xf0] %v3573
    %3590 = vst [vmem:[#allocation2 + $0x478] sm:$0xf0] %v3574
    %v3591 = vld [vmem:[%s0 + $0x14] sm:$0xff]
    %v3592 = vld [vmem:[%s0 + $0x1c] sm:$0xff]
    %v3593 = vld [vmem:[%s0 + $0x24] sm:$0xff]
    %v3594 = vld [vmem:[%s0 + $0x2c] sm:$0xff]
    %v3595 = vld [vmem:[%s0 + $0x34] sm:$0xf]
    %v3596 = vmul.f32 %v3591, %v3338
    %v3597 = vmul.f32 %v3592, %v3340
    %v3598 = vmul.f32 %v3593, %v3342
    %v3599 = vmul.f32 %v3594, %v3344
    %v3600 = vmul.f32 %v3595, %v3337
    %v3606 = vcombine.high %v3596, %v3596
    %v3607 = vcombine.high %v3597, %v3597
    %v3608 = vcombine.high %v3598, %v3598
    %v3609 = vcombine.high %v3599, %v3599
    %3610 = vrot.lane.b32.xlu0 %v3596, 111
    %v3611 = vpop.permute.xlu0 %3610
    %3612 = vrot.lane.b32.xlu0 %v3606, 111
    %v3613 = vpop.permute.xlu0 %3612
    %3614 = vrot.lane.b32.xlu0 %v3597, 111
    %v3615 = vpop.permute.xlu0 %3614
    %3616 = vrot.lane.b32.xlu0 %v3607, 111
    %v3617 = vpop.permute.xlu0 %3616
    %3618 = vrot.lane.b32.xlu0 %v3598, 111
    %v3619 = vpop.permute.xlu0 %3618
    %3620 = vrot.lane.b32.xlu0 %v3608, 111
    %v3621 = vpop.permute.xlu0 %3620
    %3622 = vrot.lane.b32.xlu0 %v3599, 111
    %v3623 = vpop.permute.xlu0 %3622
    %3624 = vrot.lane.b32.xlu0 %v3609, 111
    %v3625 = vpop.permute.xlu0 %3624
    %3626 = vrot.lane.b32.xlu0 %v3600, 111
    %v3627 = vpop.permute.xlu0 %3626
    %v3628 = vsel %vm145, %v3611, %v3613
    %v3629 = vsel %vm145, %v3613, %v3615
    %v3630 = vsel %vm145, %v3615, %v3617
    %v3631 = vsel %vm145, %v3617, %v3619
    %v3632 = vsel %vm145, %v3619, %v3621
    %v3633 = vsel %vm145, %v3621, %v3623
    %v3634 = vsel %vm145, %v3623, %v3625
    %v3635 = vsel %vm145, %v3625, %v3627
    %3644 = vst [vmem:[#allocation2 + $0x680] sm:$0xf] %v3628
    %3645 = vst [vmem:[#allocation2 + $0x688] sm:$0xf] %v3629
    %3646 = vst [vmem:[#allocation2 + $0x690] sm:$0xf] %v3630
    %3647 = vst [vmem:[#allocation2 + $0x698] sm:$0xf] %v3631
    %3648 = vst [vmem:[#allocation2 + $0x6a0] sm:$0xf] %v3632
    %3649 = vst [vmem:[#allocation2 + $0x6a8] sm:$0xf] %v3633
    %3650 = vst [vmem:[#allocation2 + $0x6b0] sm:$0xf] %v3634
    %3651 = vst [vmem:[#allocation2 + $0x6b8] sm:$0xf] %v3635
    %v3652 = vld [vmem:[%s216 + $0x14] sm:$0xff]
    %v3653 = vld [vmem:[%s216 + $0x1c] sm:$0xff]
    %v3654 = vld [vmem:[%s216 + $0x24] sm:$0xff]
    %v3655 = vld [vmem:[%s216 + $0x2c] sm:$0xff]
    %v3656 = vld [vmem:[%s216 + $0x34] sm:$0xf]
    %v3657 = vmul.f32 %v3652, %v3338
    %v3658 = vmul.f32 %v3653, %v3340
    %v3659 = vmul.f32 %v3654, %v3342
    %v3660 = vmul.f32 %v3655, %v3344
    %v3661 = vmul.f32 %v3656, %v3337
    %v3667 = vcombine.high %v3657, %v3657
    %v3668 = vcombine.high %v3658, %v3658
    %v3669 = vcombine.high %v3659, %v3659
    %v3670 = vcombine.high %v3660, %v3660
    %3671 = vrot.lane.b32.xlu0 %v3657, 111
    %v3672 = vpop.permute.xlu0 %3671
    %3673 = vrot.lane.b32.xlu0 %v3667, 111
    %v3674 = vpop.permute.xlu0 %3673
    %3675 = vrot.lane.b32.xlu0 %v3658, 111
    %v3676 = vpop.permute.xlu0 %3675
    %3677 = vrot.lane.b32.xlu0 %v3668, 111
    %v3678 = vpop.permute.xlu0 %3677
    %3679 = vrot.lane.b32.xlu0 %v3659, 111
    %v3680 = vpop.permute.xlu0 %3679
    %3681 = vrot.lane.b32.xlu0 %v3669, 111
    %v3682 = vpop.permute.xlu0 %3681
    %3683 = vrot.lane.b32.xlu0 %v3660, 111
    %v3684 = vpop.permute.xlu0 %3683
    %3685 = vrot.lane.b32.xlu0 %v3670, 111
    %v3686 = vpop.permute.xlu0 %3685
    %3687 = vrot.lane.b32.xlu0 %v3661, 111
    %v3688 = vpop.permute.xlu0 %3687
    %v3689 = vsel %vm145, %v3672, %v3674
    %v3690 = vsel %vm145, %v3674, %v3676
    %v3691 = vsel %vm145, %v3676, %v3678
    %v3692 = vsel %vm145, %v3678, %v3680
    %v3693 = vsel %vm145, %v3680, %v3682
    %v3694 = vsel %vm145, %v3682, %v3684
    %v3695 = vsel %vm145, %v3684, %v3686
    %v3696 = vsel %vm145, %v3686, %v3688
    %3705 = vst [vmem:[#allocation2 + $0x6c0] sm:$0xf] %v3689
    %3706 = vst [vmem:[#allocation2 + $0x6c8] sm:$0xf] %v3690
    %3707 = vst [vmem:[#allocation2 + $0x6d0] sm:$0xf] %v3691
    %3708 = vst [vmem:[#allocation2 + $0x6d8] sm:$0xf] %v3692
    %3709 = vst [vmem:[#allocation2 + $0x6e0] sm:$0xf] %v3693
    %3710 = vst [vmem:[#allocation2 + $0x6e8] sm:$0xf] %v3694
    %3711 = vst [vmem:[#allocation2 + $0x6f0] sm:$0xf] %v3695
    %3712 = vst [vmem:[#allocation2 + $0x6f8] sm:$0xf] %v3696
    %v3713 = vld [vmem:[%s1] sm:$0xff]
    %v3714 = vld [vmem:[#allocation2] sm:$0xff]
    %v3715 = vld [vmem:[#allocation2 + $0x8] sm:$0xff]
    %v3716 = vld [vmem:[#allocation2 + $0x10] sm:$0xff]
    %v3717 = vld [vmem:[#allocation2 + $0x18] sm:$0xff]
    %v3718 = vld [vmem:[#allocation2 + $0x20] sm:$0xff]
    %v3719 = vld [vmem:[#allocation2 + $0x28] sm:$0xff]
    %v3720 = vld [vmem:[#allocation2 + $0x30] sm:$0xff]
    %v3721 = vld [vmem:[#allocation2 + $0x38] sm:$0xff]
    %v3722 = vld [vmem:[#allocation2 + $0x40] sm:$0xff]
    %v3723 = vld [vmem:[#allocation2 + $0x48] sm:$0xff]
    %v3724 = vld [vmem:[#allocation2 + $0x50] sm:$0xff]
    %v3725 = vld [vmem:[#allocation2 + $0x58] sm:$0xff]
    %v3726 = vld [vmem:[#allocation2 + $0x60] sm:$0xff]
    %v3727 = vld [vmem:[#allocation2 + $0x68] sm:$0xff]
    %v3728 = vld [vmem:[#allocation2 + $0x70] sm:$0xff]
    %v3729 = vld [vmem:[#allocation2 + $0x78] sm:$0xff]
    %v3730 = vld [vmem:[#allocation2 + $0x80] sm:$0xff]
    %v3731 = vld [vmem:[#allocation2 + $0x88] sm:$0xff]
    %v3732 = vld [vmem:[#allocation2 + $0x90] sm:$0xff]
    %v3733 = vld [vmem:[#allocation2 + $0x98] sm:$0xff]
    %v3734 = vld [vmem:[#allocation2 + $0xa0] sm:$0xff]
    %v3735 = vld [vmem:[#allocation2 + $0xa8] sm:$0xff]
    %v3736 = vld [vmem:[#allocation2 + $0xb0] sm:$0xff]
    %v3737 = vld [vmem:[#allocation2 + $0xb8] sm:$0xff]
    %v3738 = vld [vmem:[#allocation2 + $0xc0] sm:$0xff]
    %v3739 = vld [vmem:[#allocation2 + $0xc8] sm:$0xff]
    %v3740 = vld [vmem:[#allocation2 + $0xd0] sm:$0xff]
    %v3741 = vld [vmem:[#allocation2 + $0xd8] sm:$0xff]
    %v3742 = vld [vmem:[#allocation2 + $0xe0] sm:$0xff]
    %v3743 = vld [vmem:[#allocation2 + $0xe8] sm:$0xff]
    %v3744 = vld [vmem:[#allocation2 + $0xf0] sm:$0xff]
    %v3745 = vld [vmem:[#allocation2 + $0xf8] sm:$0xff]
    %v3746 = vld [vmem:[#allocation2 + $0x100] sm:$0xff]
    %v3747 = vld [vmem:[#allocation2 + $0x108] sm:$0xff]
    %v3748 = vld [vmem:[#allocation2 + $0x110] sm:$0xff]
    %v3749 = vld [vmem:[#allocation2 + $0x118] sm:$0xff]
    %v3750 = vld [vmem:[#allocation2 + $0x120] sm:$0xff]
    %v3751 = vld [vmem:[#allocation2 + $0x128] sm:$0xff]
    %v3752 = vld [vmem:[#allocation2 + $0x130] sm:$0xff]
    %v3753 = vld [vmem:[#allocation2 + $0x138] sm:$0xff]
    %v3754 = vld [vmem:[#allocation2 + $0x140] sm:$0xff]
    %v3755 = vld [vmem:[#allocation2 + $0x148] sm:$0xff]
    %v3756 = vld [vmem:[#allocation2 + $0x150] sm:$0xff]
    %v3757 = vld [vmem:[#allocation2 + $0x158] sm:$0xff]
    %v3758 = vld [vmem:[#allocation2 + $0x160] sm:$0xff]
    %v3759 = vld [vmem:[#allocation2 + $0x168] sm:$0xff]
    %v3760 = vld [vmem:[#allocation2 + $0x170] sm:$0xff]
    %v3761 = vld [vmem:[#allocation2 + $0x178] sm:$0xff]
    %v3762 = vld [vmem:[#allocation2 + $0x180] sm:$0xff]
    %v3763 = vld [vmem:[#allocation2 + $0x188] sm:$0xff]
    %v3764 = vld [vmem:[#allocation2 + $0x190] sm:$0xff]
    %v3765 = vld [vmem:[#allocation2 + $0x198] sm:$0xff]
    %v3766 = vld [vmem:[#allocation2 + $0x1a0] sm:$0xff]
    %v3767 = vld [vmem:[#allocation2 + $0x1a8] sm:$0xff]
    %v3768 = vld [vmem:[#allocation2 + $0x1b0] sm:$0xff]
    %v3769 = vld [vmem:[#allocation2 + $0x1b8] sm:$0xff]
    %v3770 = vld [vmem:[#allocation2 + $0x1c0] sm:$0xff]
    %v3771 = vld [vmem:[#allocation2 + $0x1c8] sm:$0xff]
    %v3772 = vld [vmem:[#allocation2 + $0x1d0] sm:$0xff]
    %v3773 = vld [vmem:[#allocation2 + $0x1d8] sm:$0xff]
    %v3774 = vld [vmem:[#allocation2 + $0x1e0] sm:$0xff]
    %v3775 = vld [vmem:[#allocation2 + $0x1e8] sm:$0xff]
    %v3776 = vld [vmem:[#allocation2 + $0x1f0] sm:$0xff]
    %v3777 = vld [vmem:[#allocation2 + $0x1f8] sm:$0xff]
    %v3778 = vld [vmem:[#allocation2 + $0x200] sm:$0xff]
    %v3779 = vld [vmem:[#allocation2 + $0x208] sm:$0xff]
    %v3780 = vld [vmem:[#allocation2 + $0x210] sm:$0xff]
    %v3781 = vld [vmem:[#allocation2 + $0x218] sm:$0xff]
    %v3782 = vld [vmem:[#allocation2 + $0x220] sm:$0xff]
    %v3783 = vld [vmem:[#allocation2 + $0x228] sm:$0xff]
    %v3784 = vld [vmem:[#allocation2 + $0x230] sm:$0xff]
    %v3785 = vld [vmem:[#allocation2 + $0x238] sm:$0xff]
    %v3786 = vld [vmem:[#allocation2 + $0x240] sm:$0xff]
    %v3787 = vld [vmem:[#allocation2 + $0x248] sm:$0xff]
    %v3788 = vld [vmem:[#allocation2 + $0x250] sm:$0xff]
    %v3789 = vld [vmem:[#allocation2 + $0x258] sm:$0xff]
    %v3790 = vld [vmem:[#allocation2 + $0x260] sm:$0xff]
    %v3791 = vld [vmem:[#allocation2 + $0x268] sm:$0xff]
    %v3792 = vld [vmem:[#allocation2 + $0x270] sm:$0xff]
    %v3793 = vld [vmem:[#allocation2 + $0x278] sm:$0xff]
    %v3794 = vld [vmem:[#allocation2 + $0x280] sm:$0xff]
    %v3795 = vld [vmem:[#allocation2 + $0x288] sm:$0xff]
    %v3796 = vld [vmem:[#allocation2 + $0x290] sm:$0xff]
    %v3797 = vld [vmem:[#allocation2 + $0x298] sm:$0xff]
    %v3798 = vld [vmem:[#allocation2 + $0x2a0] sm:$0xff]
    %v3799 = vld [vmem:[#allocation2 + $0x2a8] sm:$0xff]
    %v3800 = vld [vmem:[#allocation2 + $0x2b0] sm:$0xff]
    %v3801 = vld [vmem:[#allocation2 + $0x2b8] sm:$0xff]
    %v3802 = vld [vmem:[#allocation2 + $0x2c0] sm:$0xff]
    %v3803 = vld [vmem:[#allocation2 + $0x2c8] sm:$0xff]
    %v3804 = vld [vmem:[#allocation2 + $0x2d0] sm:$0xff]
    %v3805 = vld [vmem:[#allocation2 + $0x2d8] sm:$0xff]
    %v3806 = vld [vmem:[#allocation2 + $0x2e0] sm:$0xff]
    %v3807 = vld [vmem:[#allocation2 + $0x2e8] sm:$0xff]
    %v3808 = vld [vmem:[#allocation2 + $0x2f0] sm:$0xff]
    %v3809 = vld [vmem:[#allocation2 + $0x2f8] sm:$0xff]
    %v3810 = vld [vmem:[#allocation2 + $0x300] sm:$0xff]
    %v3811 = vld [vmem:[#allocation2 + $0x308] sm:$0xff]
    %v3812 = vld [vmem:[#allocation2 + $0x310] sm:$0xff]
    %v3813 = vld [vmem:[#allocation2 + $0x318] sm:$0xff]
    %v3814 = vld [vmem:[#allocation2 + $0x320] sm:$0xff]
    %v3815 = vld [vmem:[#allocation2 + $0x328] sm:$0xff]
    %v3816 = vld [vmem:[#allocation2 + $0x330] sm:$0xff]
    %v3817 = vld [vmem:[#allocation2 + $0x338] sm:$0xff]
    %v3818 = vld [vmem:[#allocation2 + $0x340] sm:$0xff]
    %v3819 = vld [vmem:[#allocation2 + $0x348] sm:$0xff]
    %v3820 = vld [vmem:[#allocation2 + $0x350] sm:$0xff]
    %v3821 = vld [vmem:[#allocation2 + $0x358] sm:$0xff]
    %v3822 = vld [vmem:[#allocation2 + $0x360] sm:$0xff]
    %v3823 = vld [vmem:[#allocation2 + $0x368] sm:$0xff]
    %v3824 = vld [vmem:[#allocation2 + $0x370] sm:$0xff]
    %v3825 = vld [vmem:[#allocation2 + $0x378] sm:$0xff]
    %v3826 = vld [vmem:[#allocation2 + $0x380] sm:$0xff]
    %v3827 = vld [vmem:[#allocation2 + $0x388] sm:$0xff]
    %v3828 = vld [vmem:[#allocation2 + $0x390] sm:$0xff]
    %v3829 = vld [vmem:[#allocation2 + $0x398] sm:$0xff]
    %v3830 = vld [vmem:[#allocation2 + $0x3a0] sm:$0xff]
    %v3831 = vld [vmem:[#allocation2 + $0x3a8] sm:$0xff]
    %v3832 = vld [vmem:[#allocation2 + $0x3b0] sm:$0xff]
    %v3833 = vld [vmem:[#allocation2 + $0x3b8] sm:$0xff]
    %v3834 = vld [vmem:[#allocation2 + $0x3c0] sm:$0xff]
    %v3835 = vld [vmem:[#allocation2 + $0x3c8] sm:$0xff]
    %v3836 = vld [vmem:[#allocation2 + $0x3d0] sm:$0xff]
    %v3837 = vld [vmem:[#allocation2 + $0x3d8] sm:$0xff]
    %v3838 = vld [vmem:[#allocation2 + $0x3e0] sm:$0xff]
    %v3839 = vld [vmem:[#allocation2 + $0x3e8] sm:$0xff]
    %v3840 = vld [vmem:[#allocation2 + $0x3f0] sm:$0xff]
    %v3841 = vld [vmem:[#allocation2 + $0x3f8] sm:$0xff]
    %v3842 = vld [vmem:[#allocation2 + $0x400] sm:$0xff]
    %v3843 = vld [vmem:[#allocation2 + $0x408] sm:$0xff]
    %v3844 = vld [vmem:[#allocation2 + $0x410] sm:$0xff]
    %v3845 = vld [vmem:[#allocation2 + $0x418] sm:$0xff]
    %v3846 = vld [vmem:[#allocation2 + $0x420] sm:$0xff]
    %v3847 = vld [vmem:[#allocation2 + $0x428] sm:$0xff]
    %v3848 = vld [vmem:[#allocation2 + $0x430] sm:$0xff]
    %v3849 = vld [vmem:[#allocation2 + $0x438] sm:$0xff]
    %v3850 = vld [vmem:[#allocation2 + $0x440] sm:$0xff]
    %v3851 = vld [vmem:[#allocation2 + $0x448] sm:$0xff]
    %v3852 = vld [vmem:[#allocation2 + $0x450] sm:$0xff]
    %v3853 = vld [vmem:[#allocation2 + $0x458] sm:$0xff]
    %v3854 = vld [vmem:[#allocation2 + $0x460] sm:$0xff]
    %v3855 = vld [vmem:[#allocation2 + $0x468] sm:$0xff]
    %v3856 = vld [vmem:[#allocation2 + $0x470] sm:$0xff]
    %v3857 = vld [vmem:[#allocation2 + $0x478] sm:$0xff]
    %v3858 = vld [vmem:[#allocation2 + $0x480] sm:$0xff]
    %v3859 = vld [vmem:[#allocation2 + $0x488] sm:$0xff]
    %v3860 = vld [vmem:[#allocation2 + $0x490] sm:$0xff]
    %v3861 = vld [vmem:[#allocation2 + $0x498] sm:$0xff]
    %v3862 = vld [vmem:[#allocation2 + $0x4a0] sm:$0xff]
    %v3863 = vld [vmem:[#allocation2 + $0x4a8] sm:$0xff]
    %v3864 = vld [vmem:[#allocation2 + $0x4b0] sm:$0xff]
    %v3865 = vld [vmem:[#allocation2 + $0x4b8] sm:$0xff]
    %v3866 = vld [vmem:[#allocation2 + $0x4c0] sm:$0xff]
    %v3867 = vld [vmem:[#allocation2 + $0x4c8] sm:$0xff]
    %v3868 = vld [vmem:[#allocation2 + $0x4d0] sm:$0xff]
    %v3869 = vld [vmem:[#allocation2 + $0x4d8] sm:$0xff]
    %v3870 = vld [vmem:[#allocation2 + $0x4e0] sm:$0xff]
    %v3871 = vld [vmem:[#allocation2 + $0x4e8] sm:$0xff]
    %v3872 = vld [vmem:[#allocation2 + $0x4f0] sm:$0xff]
    %v3873 = vld [vmem:[#allocation2 + $0x4f8] sm:$0xff]
    %v3874 = vld [vmem:[#allocation2 + $0x500] sm:$0xff]
    %v3875 = vld [vmem:[#allocation2 + $0x508] sm:$0xff]
    %v3876 = vld [vmem:[#allocation2 + $0x510] sm:$0xff]
    %v3877 = vld [vmem:[#allocation2 + $0x518] sm:$0xff]
    %v3878 = vld [vmem:[#allocation2 + $0x520] sm:$0xff]
    %v3879 = vld [vmem:[#allocation2 + $0x528] sm:$0xff]
    %v3880 = vld [vmem:[#allocation2 + $0x530] sm:$0xff]
    %v3881 = vld [vmem:[#allocation2 + $0x538] sm:$0xff]
    %v3882 = vld [vmem:[#allocation2 + $0x540] sm:$0xff]
    %v3883 = vld [vmem:[#allocation2 + $0x548] sm:$0xff]
    %v3884 = vld [vmem:[#allocation2 + $0x550] sm:$0xff]
    %v3885 = vld [vmem:[#allocation2 + $0x558] sm:$0xff]
    %v3886 = vld [vmem:[#allocation2 + $0x560] sm:$0xff]
    %v3887 = vld [vmem:[#allocation2 + $0x568] sm:$0xff]
    %v3888 = vld [vmem:[#allocation2 + $0x570] sm:$0xff]
    %v3889 = vld [vmem:[#allocation2 + $0x578] sm:$0xff]
    %v3890 = vld [vmem:[#allocation2 + $0x580] sm:$0xff]
    %v3891 = vld [vmem:[#allocation2 + $0x588] sm:$0xff]
    %v3892 = vld [vmem:[#allocation2 + $0x590] sm:$0xff]
    %v3893 = vld [vmem:[#allocation2 + $0x598] sm:$0xff]
    %v3894 = vld [vmem:[#allocation2 + $0x5a0] sm:$0xff]
    %v3895 = vld [vmem:[#allocation2 + $0x5a8] sm:$0xff]
    %v3896 = vld [vmem:[#allocation2 + $0x5b0] sm:$0xff]
    %v3897 = vld [vmem:[#allocation2 + $0x5b8] sm:$0xff]
    %v3898 = vld [vmem:[#allocation2 + $0x5c0] sm:$0xff]
    %v3899 = vld [vmem:[#allocation2 + $0x5c8] sm:$0xff]
    %v3900 = vld [vmem:[#allocation2 + $0x5d0] sm:$0xff]
    %v3901 = vld [vmem:[#allocation2 + $0x5d8] sm:$0xff]
    %v3902 = vld [vmem:[#allocation2 + $0x5e0] sm:$0xff]
    %v3903 = vld [vmem:[#allocation2 + $0x5e8] sm:$0xff]
    %v3904 = vld [vmem:[#allocation2 + $0x5f0] sm:$0xff]
    %v3905 = vld [vmem:[#allocation2 + $0x5f8] sm:$0xff]
    %v3906 = vld [vmem:[#allocation2 + $0x600] sm:$0xff]
    %v3907 = vld [vmem:[#allocation2 + $0x608] sm:$0xff]
    %v3908 = vld [vmem:[#allocation2 + $0x610] sm:$0xff]
    %v3909 = vld [vmem:[#allocation2 + $0x618] sm:$0xff]
    %v3910 = vld [vmem:[#allocation2 + $0x620] sm:$0xff]
    %v3911 = vld [vmem:[#allocation2 + $0x628] sm:$0xff]
    %v3912 = vld [vmem:[#allocation2 + $0x630] sm:$0xff]
    %v3913 = vld [vmem:[#allocation2 + $0x638] sm:$0xff]
    %v3914 = vld [vmem:[#allocation2 + $0x640] sm:$0xff]
    %v3915 = vld [vmem:[#allocation2 + $0x648] sm:$0xff]
    %v3916 = vld [vmem:[#allocation2 + $0x650] sm:$0xff]
    %v3917 = vld [vmem:[#allocation2 + $0x658] sm:$0xff]
    %v3918 = vld [vmem:[#allocation2 + $0x660] sm:$0xff]
    %v3919 = vld [vmem:[#allocation2 + $0x668] sm:$0xff]
    %v3920 = vld [vmem:[#allocation2 + $0x670] sm:$0xff]
    %v3921 = vld [vmem:[#allocation2 + $0x678] sm:$0xff]
    %v3922 = vld [vmem:[#allocation2 + $0x680] sm:$0xff]
    %v3923 = vld [vmem:[#allocation2 + $0x688] sm:$0xff]
    %v3924 = vld [vmem:[#allocation2 + $0x690] sm:$0xff]
    %v3925 = vld [vmem:[#allocation2 + $0x698] sm:$0xff]
    %v3926 = vld [vmem:[#allocation2 + $0x6a0] sm:$0xff]
    %v3927 = vld [vmem:[#allocation2 + $0x6a8] sm:$0xff]
    %v3928 = vld [vmem:[#allocation2 + $0x6b0] sm:$0xff]
    %v3929 = vld [vmem:[#allocation2 + $0x6b8] sm:$0xff]
    %v3930 = vld [vmem:[#allocation2 + $0x6c0] sm:$0xff]
    %v3931 = vld [vmem:[#allocation2 + $0x6c8] sm:$0xff]
    %v3932 = vld [vmem:[#allocation2 + $0x6d0] sm:$0xff]
    %v3933 = vld [vmem:[#allocation2 + $0x6d8] sm:$0xff]
    %v3934 = vld [vmem:[#allocation2 + $0x6e0] sm:$0xff]
    %v3935 = vld [vmem:[#allocation2 + $0x6e8] sm:$0xff]
    %v3936 = vld [vmem:[#allocation2 + $0x6f0] sm:$0xff]
    %v3937 = vld [vmem:[#allocation2 + $0x6f8] sm:$0xff]
    %v3938 = vld [vmem:[#allocation2 + $0x700] sm:$0xff]
    %v3939 = vld [vmem:[#allocation2 + $0x708] sm:$0xff]
    %v3940 = vld [vmem:[#allocation2 + $0x710] sm:$0xff]
    %v3941 = vld [vmem:[#allocation2 + $0x718] sm:$0xff]
    %v3942 = vld [vmem:[#allocation2 + $0x720] sm:$0xff]
    %v3943 = vld [vmem:[#allocation2 + $0x728] sm:$0xff]
    %v3944 = vld [vmem:[#allocation2 + $0x730] sm:$0xff]
    %v3945 = vld [vmem:[#allocation2 + $0x738] sm:$0xff]
    %v3946 = vld [vmem:[#allocation2 + $0x740] sm:$0xff]
    %v3947 = vld [vmem:[#allocation2 + $0x748] sm:$0xff]
    %v3948 = vld [vmem:[#allocation2 + $0x750] sm:$0xff]
    %v3949 = vld [vmem:[#allocation2 + $0x758] sm:$0xff]
    %v3950 = vld [vmem:[#allocation2 + $0x760] sm:$0xff]
    %v3951 = vld [vmem:[#allocation2 + $0x768] sm:$0xff]
    %v3952 = vld [vmem:[#allocation2 + $0x770] sm:$0xff]
    %v3953 = vld [vmem:[#allocation2 + $0x778] sm:$0xff]
    %v3954 = vld [vmem:[#allocation2 + $0x780] sm:$0xff]
    %v3955 = vld [vmem:[#allocation2 + $0x788] sm:$0xff]
    %v3956 = vld [vmem:[#allocation2 + $0x790] sm:$0xff]
    %v3957 = vld [vmem:[#allocation2 + $0x798] sm:$0xff]
    %v3958 = vld [vmem:[#allocation2 + $0x7a0] sm:$0xff]
    %v3959 = vld [vmem:[#allocation2 + $0x7a8] sm:$0xff]
    %v3960 = vld [vmem:[#allocation2 + $0x7b0] sm:$0xff]
    %v3961 = vld [vmem:[#allocation2 + $0x7b8] sm:$0xff]
    %v3962 = vld [vmem:[#allocation2 + $0x7c0] sm:$0xff]
    %v3963 = vld [vmem:[#allocation2 + $0x7c8] sm:$0xff]
    %v3964 = vld [vmem:[#allocation2 + $0x7d0] sm:$0xff]
    %v3965 = vld [vmem:[#allocation2 + $0x7d8] sm:$0xff]
    %v3966 = vld [vmem:[#allocation2 + $0x7e0] sm:$0xff]
    %v3967 = vld [vmem:[#allocation2 + $0x7e8] sm:$0xff]
    %v3968 = vld [vmem:[#allocation2 + $0x7f0] sm:$0xff]
    %v3969 = vld [vmem:[#allocation2 + $0x7f8] sm:$0xff]
    %v3970 = vld [vmem:[%s2] sm:$0xff]
    %3972 = vset.pattern.permute.xlu0 0
    %3973 = vperm.xlu0 %3972, %v3970
    %v3974 = vpop.permute.xlu0 %3973
    %3976 = vmatprep.subr.mxu0 %v3715
    %3977 = vmatpush1.msra.mxu0 %v3714
    %3978 = vmatprep.subr.mxu0 %v3731
    %3979 = vmatpush1.msra.mxu0 %v3730
    %3980 = vmatprep.subr.mxu0 %v3747
    %3981 = vmatpush1.msra.mxu0 %v3746
    %3982 = vmatprep.subr.mxu0 %v3763
    %3983 = vmatpush1.msra.mxu0 %v3762
    %3984 = vmatprep.subr.mxu0 %v3779
    %3985 = vmatpush1.msra.mxu0 %v3778
    %3986 = vmatprep.subr.mxu0 %v3795
    %3987 = vmatpush1.msra.mxu0 %v3794
    %3988 = vmatprep.subr.mxu0 %v3811
    %3989 = vmatpush1.msra.mxu0 %v3810
    %3990 = vmatprep.subr.mxu0 %v3827
    %3991 = vmatpush1.msra.mxu0 %v3826
    %3992 = vmatprep.subr.mxu0 %v3843
    %3993 = vmatpush1.msra.mxu0 %v3842
    %3994 = vmatprep.subr.mxu0 %v3859
    %3995 = vmatpush1.msra.mxu0 %v3858
    %3996 = vmatprep.subr.mxu0 %v3875
    %3997 = vmatpush1.msra.mxu0 %v3874
    %3998 = vmatprep.subr.mxu0 %v3891
    %3999 = vmatpush1.msra.mxu0 %v3890
    %4000 = vmatprep.subr.mxu0 %v3907
    %4001 = vmatpush1.msra.mxu0 %v3906
    %4002 = vmatprep.subr.mxu0 %v3923
    %4003 = vmatpush1.msra.mxu0 %v3922
    %4004 = vmatprep.subr.mxu0 %v3939
    %4005 = vmatpush1.msra.mxu0 %v3938
    %4006 = vmatprep.subr.mxu0 %v3955
    %4007 = vmatpush1.msra.mxu0 %v3954
    %4008 = vmatprep.subr.mxu0 0.0
    %4009 = vmatpush1.msra.mxu0 0.0
    %4010 = vmatprep.subr.mxu0 0.0
    %4011 = vmatpush1.msra.mxu0 0.0
    %4012 = vmatprep.subr.mxu0 0.0
    %4013 = vmatpush1.msra.mxu0 0.0
    %4014 = vmatprep.subr.mxu0 0.0
    %4015 = vmatpush1.msra.mxu0 0.0
    %4016 = vmatprep.subr.mxu0 0.0
    %4017 = vmatpush1.msra.mxu0 0.0
    %4018 = vmatprep.subr.mxu0 0.0
    %4019 = vmatpush1.msra.mxu0 0.0
    %4020 = vmatprep.subr.mxu0 0.0
    %4021 = vmatpush1.msra.mxu0 0.0
    %4022 = vmatprep.subr.mxu0 0.0
    %4023 = vmatpush1.msra.mxu0 0.0
    %4024 = vmatprep.subr.mxu0 0.0
    %4025 = vmatpush1.msra.mxu0 0.0
    %4026 = vmatprep.subr.mxu0 0.0
    %4027 = vmatpush1.msra.mxu0 0.0
    %4028 = vmatprep.subr.mxu0 0.0
    %4029 = vmatpush1.msra.mxu0 0.0
    %4030 = vmatprep.subr.mxu0 0.0
    %4031 = vmatpush1.msra.mxu0 0.0
    %4032 = vmatprep.subr.mxu0 0.0
    %4033 = vmatpush1.msra.mxu0 0.0
    %4034 = vmatprep.subr.mxu0 0.0
    %4035 = vmatpush1.msra.mxu0 0.0
    %4036 = vmatprep.subr.mxu0 0.0
    %4037 = vmatpush1.msra.mxu0 0.0
    %4038 = vmatprep.subr.mxu0 0.0
    %4039 = vmatpush1.msra.mxu0 0.0
    %4040 = vmatprep.mubr.f32.mxu0 0.0
    %4041 = vmatmul.mubr.f32.gmra.mrb[0].mxu0 %v3713
    %v4042 = vpop.f32.mrb[0].mxu0
    %v4043 = vadd.f32 %v3974, %v4042
    %v4044 = vpop.f32.mrb[0].mxu0
    %v4045 = vadd.f32 %v3974, %v4044
    %4046 = vdwg.mxu0
    %4047 = vmatprep.subr.mxu0 %v3717
    %4048 = vmatpush1.msra.mxu0 %v3716
    %4049 = vmatprep.subr.mxu0 %v3733
    %4050 = vmatpush1.msra.mxu0 %v3732
    %4051 = vmatprep.subr.mxu0 %v3749
    %4052 = vmatpush1.msra.mxu0 %v3748
    %4053 = vmatprep.subr.mxu0 %v3765
    %4054 = vmatpush1.msra.mxu0 %v3764
    %4055 = vmatprep.subr.mxu0 %v3781
    %4056 = vmatpush1.msra.mxu0 %v3780
    %4057 = vmatprep.subr.mxu0 %v3797
    %4058 = vmatpush1.msra.mxu0 %v3796
    %4059 = vmatprep.subr.mxu0 %v3813
    %4060 = vmatpush1.msra.mxu0 %v3812
    %4061 = vmatprep.subr.mxu0 %v3829
    %4062 = vmatpush1.msra.mxu0 %v3828
    %4063 = vmatprep.subr.mxu0 %v3845
    %4064 = vmatpush1.msra.mxu0 %v3844
    %4065 = vmatprep.subr.mxu0 %v3861
    %4066 = vmatpush1.msra.mxu0 %v3860
    %4067 = vmatprep.subr.mxu0 %v3877
    %4068 = vmatpush1.msra.mxu0 %v3876
    %4069 = vmatprep.subr.mxu0 %v3893
    %4070 = vmatpush1.msra.mxu0 %v3892
    %4071 = vmatprep.subr.mxu0 %v3909
    %4072 = vmatpush1.msra.mxu0 %v3908
    %4073 = vmatprep.subr.mxu0 %v3925
    %4074 = vmatpush1.msra.mxu0 %v3924
    %4075 = vmatprep.subr.mxu0 %v3941
    %4076 = vmatpush1.msra.mxu0 %v3940
    %4077 = vmatprep.subr.mxu0 %v3957
    %4078 = vmatpush1.msra.mxu0 %v3956
    %4079 = vmatprep.subr.mxu0 0.0
    %4080 = vmatpush1.msra.mxu0 0.0
    %4081 = vmatprep.subr.mxu0 0.0
    %4082 = vmatpush1.msra.mxu0 0.0
    %4083 = vmatprep.subr.mxu0 0.0
    %4084 = vmatpush1.msra.mxu0 0.0
    %4085 = vmatprep.subr.mxu0 0.0
    %4086 = vmatpush1.msra.mxu0 0.0
    %4087 = vmatprep.subr.mxu0 0.0
    %4088 = vmatpush1.msra.mxu0 0.0
    %4089 = vmatprep.subr.mxu0 0.0
    %4090 = vmatpush1.msra.mxu0 0.0
    %4091 = vmatprep.subr.mxu0 0.0
    %4092 = vmatpush1.msra.mxu0 0.0
    %4093 = vmatprep.subr.mxu0 0.0
    %4094 = vmatpush1.msra.mxu0 0.0
    %4095 = vmatprep.subr.mxu0 0.0
    %4096 = vmatpush1.msra.mxu0 0.0
    %4097 = vmatprep.subr.mxu0 0.0
    %4098 = vmatpush1.msra.mxu0 0.0
    %4099 = vmatprep.subr.mxu0 0.0
    %4100 = vmatpush1.msra.mxu0 0.0
    %4101 = vmatprep.subr.mxu0 0.0
    %4102 = vmatpush1.msra.mxu0 0.0
    %4103 = vmatprep.subr.mxu0 0.0
    %4104 = vmatpush1.msra.mxu0 0.0
    %4105 = vmatprep.subr.mxu0 0.0
    %4106 = vmatpush1.msra.mxu0 0.0
    %4107 = vmatprep.subr.mxu0 0.0
    %4108 = vmatpush1.msra.mxu0 0.0
    %4109 = vmatprep.subr.mxu0 0.0
    %4110 = vmatpush1.msra.mxu0 0.0
    %4111 = vmatprep.mubr.f32.mxu0 0.0
    %4112 = vmatmul.mubr.f32.gmra.mrb[0].mxu0 %v3713
    %v4113 = vpop.f32.mrb[0].mxu0
    %v4114 = vadd.f32 %v3974, %v4113
    %v4115 = vpop.f32.mrb[0].mxu0
    %v4116 = vadd.f32 %v3974, %v4115
    %4117 = vdwg.mxu0
    %4118 = vmatprep.subr.mxu0 %v3719
    %4119 = vmatpush1.msra.mxu0 %v3718
    %4120 = vmatprep.subr.mxu0 %v3735
    %4121 = vmatpush1.msra.mxu0 %v3734
    %4122 = vmatprep.subr.mxu0 %v3751
    %4123 = vmatpush1.msra.mxu0 %v3750
    %4124 = vmatprep.subr.mxu0 %v3767
    %4125 = vmatpush1.msra.mxu0 %v3766
    %4126 = vmatprep.subr.mxu0 %v3783
    %4127 = vmatpush1.msra.mxu0 %v3782
    %4128 = vmatprep.subr.mxu0 %v3799
    %4129 = vmatpush1.msra.mxu0 %v3798
    %4130 = vmatprep.subr.mxu0 %v3815
    %4131 = vmatpush1.msra.mxu0 %v3814
    %4132 = vmatprep.subr.mxu0 %v3831
    %4133 = vmatpush1.msra.mxu0 %v3830
    %4134 = vmatprep.subr.mxu0 %v3847
    %4135 = vmatpush1.msra.mxu0 %v3846
    %4136 = vmatprep.subr.mxu0 %v3863
    %4137 = vmatpush1.msra.mxu0 %v3862
    %4138 = vmatprep.subr.mxu0 %v3879
    %4139 = vmatpush1.msra.mxu0 %v3878
    %4140 = vmatprep.subr.mxu0 %v3895
    %4141 = vmatpush1.msra.mxu0 %v3894
    %4142 = vmatprep.subr.mxu0 %v3911
    %4143 = vmatpush1.msra.mxu0 %v3910
    %4144 = vmatprep.subr.mxu0 %v3927
    %4145 = vmatpush1.msra.mxu0 %v3926
    %4146 = vmatprep.subr.mxu0 %v3943
    %4147 = vmatpush1.msra.mxu0 %v3942
    %4148 = vmatprep.subr.mxu0 %v3959
    %4149 = vmatpush1.msra.mxu0 %v3958
    %4150 = vmatprep.subr.mxu0 0.0
    %4151 = vmatpush1.msra.mxu0 0.0
    %4152 = vmatprep.subr.mxu0 0.0
    %4153 = vmatpush1.msra.mxu0 0.0
    %4154 = vmatprep.subr.mxu0 0.0
    %4155 = vmatpush1.msra.mxu0 0.0
    %4156 = vmatprep.subr.mxu0 0.0
    %4157 = vmatpush1.msra.mxu0 0.0
    %4158 = vmatprep.subr.mxu0 0.0
    %4159 = vmatpush1.msra.mxu0 0.0
    %4160 = vmatprep.subr.mxu0 0.0
    %4161 = vmatpush1.msra.mxu0 0.0
    %4162 = vmatprep.subr.mxu0 0.0
    %4163 = vmatpush1.msra.mxu0 0.0
    %4164 = vmatprep.subr.mxu0 0.0
    %4165 = vmatpush1.msra.mxu0 0.0
    %4166 = vmatprep.subr.mxu0 0.0
    %4167 = vmatpush1.msra.mxu0 0.0
    %4168 = vmatprep.subr.mxu0 0.0
    %4169 = vmatpush1.msra.mxu0 0.0
    %4170 = vmatprep.subr.mxu0 0.0
    %4171 = vmatpush1.msra.mxu0 0.0
    %4172 = vmatprep.subr.mxu0 0.0
    %4173 = vmatpush1.msra.mxu0 0.0
    %4174 = vmatprep.subr.mxu0 0.0
    %4175 = vmatpush1.msra.mxu0 0.0
    %4176 = vmatprep.subr.mxu0 0.0
    %4177 = vmatpush1.msra.mxu0 0.0
    %4178 = vmatprep.subr.mxu0 0.0
    %4179 = vmatpush1.msra.mxu0 0.0
    %4180 = vmatprep.subr.mxu0 0.0
    %4181 = vmatpush1.msra.mxu0 0.0
    %4182 = vmatprep.mubr.f32.mxu0 0.0
    %4183 = vmatmul.mubr.f32.gmra.mrb[0].mxu0 %v3713
    %v4184 = vpop.f32.mrb[0].mxu0
    %v4185 = vadd.f32 %v3974, %v4184
    %v4186 = vpop.f32.mrb[0].mxu0
    %v4187 = vadd.f32 %v3974, %v4186
    %4188 = vdwg.mxu0
    %4189 = vmatprep.subr.mxu0 %v3721
    %4190 = vmatpush1.msra.mxu0 %v3720
    %4191 = vmatprep.subr.mxu0 %v3737
    %4192 = vmatpush1.msra.mxu0 %v3736
    %4193 = vmatprep.subr.mxu0 %v3753
    %4194 = vmatpush1.msra.mxu0 %v3752
    %4195 = vmatprep.subr.mxu0 %v3769
    %4196 = vmatpush1.msra.mxu0 %v3768
    %4197 = vmatprep.subr.mxu0 %v3785
    %4198 = vmatpush1.msra.mxu0 %v3784
    %4199 = vmatprep.subr.mxu0 %v3801
    %4200 = vmatpush1.msra.mxu0 %v3800
    %4201 = vmatprep.subr.mxu0 %v3817
    %4202 = vmatpush1.msra.mxu0 %v3816
    %4203 = vmatprep.subr.mxu0 %v3833
    %4204 = vmatpush1.msra.mxu0 %v3832
    %4205 = vmatprep.subr.mxu0 %v3849
    %4206 = vmatpush1.msra.mxu0 %v3848
    %4207 = vmatprep.subr.mxu0 %v3865
    %4208 = vmatpush1.msra.mxu0 %v3864
    %4209 = vmatprep.subr.mxu0 %v3881
    %4210 = vmatpush1.msra.mxu0 %v3880
    %4211 = vmatprep.subr.mxu0 %v3897
    %4212 = vmatpush1.msra.mxu0 %v3896
    %4213 = vmatprep.subr.mxu0 %v3913
    %4214 = vmatpush1.msra.mxu0 %v3912
    %4215 = vmatprep.subr.mxu0 %v3929
    %4216 = vmatpush1.msra.mxu0 %v3928
    %4217 = vmatprep.subr.mxu0 %v3945
    %4218 = vmatpush1.msra.mxu0 %v3944
    %4219 = vmatprep.subr.mxu0 %v3961
    %4220 = vmatpush1.msra.mxu0 %v3960
    %4221 = vmatprep.subr.mxu0 0.0
    %4222 = vmatpush1.msra.mxu0 0.0
    %4223 = vmatprep.subr.mxu0 0.0
    %4224 = vmatpush1.msra.mxu0 0.0
    %4225 = vmatprep.subr.mxu0 0.0
    %4226 = vmatpush1.msra.mxu0 0.0
    %4227 = vmatprep.subr.mxu0 0.0
    %4228 = vmatpush1.msra.mxu0 0.0
    %4229 = vmatprep.subr.mxu0 0.0
    %4230 = vmatpush1.msra.mxu0 0.0
    %4231 = vmatprep.subr.mxu0 0.0
    %4232 = vmatpush1.msra.mxu0 0.0
    %4233 = vmatprep.subr.mxu0 0.0
    %4234 = vmatpush1.msra.mxu0 0.0
    %4235 = vmatprep.subr.mxu0 0.0
    %4236 = vmatpush1.msra.mxu0 0.0
    %4237 = vmatprep.subr.mxu0 0.0
    %4238 = vmatpush1.msra.mxu0 0.0
    %4239 = vmatprep.subr.mxu0 0.0
    %4240 = vmatpush1.msra.mxu0 0.0
    %4241 = vmatprep.subr.mxu0 0.0
    %4242 = vmatpush1.msra.mxu0 0.0
    %4243 = vmatprep.subr.mxu0 0.0
    %4244 = vmatpush1.msra.mxu0 0.0
    %4245 = vmatprep.subr.mxu0 0.0
    %4246 = vmatpush1.msra.mxu0 0.0
    %4247 = vmatprep.subr.mxu0 0.0
    %4248 = vmatpush1.msra.mxu0 0.0
    %4249 = vmatprep.subr.mxu0 0.0
    %4250 = vmatpush1.msra.mxu0 0.0
    %4251 = vmatprep.subr.mxu0 0.0
    %4252 = vmatpush1.msra.mxu0 0.0
    %4253 = vmatprep.mubr.f32.mxu0 0.0
    %4254 = vmatmul.mubr.f32.gmra.mrb[0].mxu0 %v3713
    %v4255 = vpop.f32.mrb[0].mxu0
    %v4256 = vadd.f32 %v3974, %v4255
    %v4257 = vpop.f32.mrb[0].mxu0
    %v4258 = vadd.f32 %v3974, %v4257
    %4259 = vdwg.mxu0
    %4260 = vmatprep.subr.mxu0 %v3723
    %4261 = vmatpush1.msra.mxu0 %v3722
    %4262 = vmatprep.subr.mxu0 %v3739
    %4263 = vmatpush1.msra.mxu0 %v3738
    %4264 = vmatprep.subr.mxu0 %v3755
    %4265 = vmatpush1.msra.mxu0 %v3754
    %4266 = vmatprep.subr.mxu0 %v3771
    %4267 = vmatpush1.msra.mxu0 %v3770
    %4268 = vmatprep.subr.mxu0 %v3787
    %4269 = vmatpush1.msra.mxu0 %v3786
    %4270 = vmatprep.subr.mxu0 %v3803
    %4271 = vmatpush1.msra.mxu0 %v3802
    %4272 = vmatprep.subr.mxu0 %v3819
    %4273 = vmatpush1.msra.mxu0 %v3818
    %4274 = vmatprep.subr.mxu0 %v3835
    %4275 = vmatpush1.msra.mxu0 %v3834
    %4276 = vmatprep.subr.mxu0 %v3851
    %4277 = vmatpush1.msra.mxu0 %v3850
    %4278 = vmatprep.subr.mxu0 %v3867
    %4279 = vmatpush1.msra.mxu0 %v3866
    %4280 = vmatprep.subr.mxu0 %v3883
    %4281 = vmatpush1.msra.mxu0 %v3882
    %4282 = vmatprep.subr.mxu0 %v3899
    %4283 = vmatpush1.msra.mxu0 %v3898
    %4284 = vmatprep.subr.mxu0 %v3915
    %4285 = vmatpush1.msra.mxu0 %v3914
    %4286 = vmatprep.subr.mxu0 %v3931
    %4287 = vmatpush1.msra.mxu0 %v3930
    %4288 = vmatprep.subr.mxu0 %v3947
    %4289 = vmatpush1.msra.mxu0 %v3946
    %4290 = vmatprep.subr.mxu0 %v3963
    %4291 = vmatpush1.msra.mxu0 %v3962
    %4292 = vmatprep.subr.mxu0 0.0
    %4293 = vmatpush1.msra.mxu0 0.0
    %4294 = vmatprep.subr.mxu0 0.0
    %4295 = vmatpush1.msra.mxu0 0.0
    %4296 = vmatprep.subr.mxu0 0.0
    %4297 = vmatpush1.msra.mxu0 0.0
    %4298 = vmatprep.subr.mxu0 0.0
    %4299 = vmatpush1.msra.mxu0 0.0
    %4300 = vmatprep.subr.mxu0 0.0
    %4301 = vmatpush1.msra.mxu0 0.0
    %4302 = vmatprep.subr.mxu0 0.0
    %4303 = vmatpush1.msra.mxu0 0.0
    %4304 = vmatprep.subr.mxu0 0.0
    %4305 = vmatpush1.msra.mxu0 0.0
    %4306 = vmatprep.subr.mxu0 0.0
    %4307 = vmatpush1.msra.mxu0 0.0
    %4308 = vmatprep.subr.mxu0 0.0
    %4309 = vmatpush1.msra.mxu0 0.0
    %4310 = vmatprep.subr.mxu0 0.0
    %4311 = vmatpush1.msra.mxu0 0.0
    %4312 = vmatprep.subr.mxu0 0.0
    %4313 = vmatpush1.msra.mxu0 0.0
    %4314 = vmatprep.subr.mxu0 0.0
    %4315 = vmatpush1.msra.mxu0 0.0
    %4316 = vmatprep.subr.mxu0 0.0
    %4317 = vmatpush1.msra.mxu0 0.0
    %4318 = vmatprep.subr.mxu0 0.0
    %4319 = vmatpush1.msra.mxu0 0.0
    %4320 = vmatprep.subr.mxu0 0.0
    %4321 = vmatpush1.msra.mxu0 0.0
    %4322 = vmatprep.subr.mxu0 0.0
    %4323 = vmatpush1.msra.mxu0 0.0
    %4324 = vmatprep.mubr.f32.mxu0 0.0
    %4325 = vmatmul.mubr.f32.gmra.mrb[0].mxu0 %v3713
    %v4326 = vpop.f32.mrb[0].mxu0
    %v4327 = vadd.f32 %v3974, %v4326
    %v4328 = vpop.f32.mrb[0].mxu0
    %v4329 = vadd.f32 %v3974, %v4328
    %4330 = vdwg.mxu0
    %4331 = vmatprep.subr.mxu0 %v3725
    %4332 = vmatpush1.msra.mxu0 %v3724
    %4333 = vmatprep.subr.mxu0 %v3741
    %4334 = vmatpush1.msra.mxu0 %v3740
    %4335 = vmatprep.subr.mxu0 %v3757
    %4336 = vmatpush1.msra.mxu0 %v3756
    %4337 = vmatprep.subr.mxu0 %v3773
    %4338 = vmatpush1.msra.mxu0 %v3772
    %4339 = vmatprep.subr.mxu0 %v3789
    %4340 = vmatpush1.msra.mxu0 %v3788
    %4341 = vmatprep.subr.mxu0 %v3805
    %4342 = vmatpush1.msra.mxu0 %v3804
    %4343 = vmatprep.subr.mxu0 %v3821
    %4344 = vmatpush1.msra.mxu0 %v3820
    %4345 = vmatprep.subr.mxu0 %v3837
    %4346 = vmatpush1.msra.mxu0 %v3836
    %4347 = vmatprep.subr.mxu0 %v3853
    %4348 = vmatpush1.msra.mxu0 %v3852
    %4349 = vmatprep.subr.mxu0 %v3869
    %4350 = vmatpush1.msra.mxu0 %v3868
    %4351 = vmatprep.subr.mxu0 %v3885
    %4352 = vmatpush1.msra.mxu0 %v3884
    %4353 = vmatprep.subr.mxu0 %v3901
    %4354 = vmatpush1.msra.mxu0 %v3900
    %4355 = vmatprep.subr.mxu0 %v3917
    %4356 = vmatpush1.msra.mxu0 %v3916
    %4357 = vmatprep.subr.mxu0 %v3933
    %4358 = vmatpush1.msra.mxu0 %v3932
    %4359 = vmatprep.subr.mxu0 %v3949
    %4360 = vmatpush1.msra.mxu0 %v3948
    %4361 = vmatprep.subr.mxu0 %v3965
    %4362 = vmatpush1.msra.mxu0 %v3964
    %4363 = vmatprep.subr.mxu0 0.0
    %4364 = vmatpush1.msra.mxu0 0.0
    %4365 = vmatprep.subr.mxu0 0.0
    %4366 = vmatpush1.msra.mxu0 0.0
    %4367 = vmatprep.subr.mxu0 0.0
    %4368 = vmatpush1.msra.mxu0 0.0
    %4369 = vmatprep.subr.mxu0 0.0
    %4370 = vmatpush1.msra.mxu0 0.0
    %4371 = vmatprep.subr.mxu0 0.0
    %4372 = vmatpush1.msra.mxu0 0.0
    %4373 = vmatprep.subr.mxu0 0.0
    %4374 = vmatpush1.msra.mxu0 0.0
    %4375 = vmatprep.subr.mxu0 0.0
    %4376 = vmatpush1.msra.mxu0 0.0
    %4377 = vmatprep.subr.mxu0 0.0
    %4378 = vmatpush1.msra.mxu0 0.0
    %4379 = vmatprep.subr.mxu0 0.0
    %4380 = vmatpush1.msra.mxu0 0.0
    %4381 = vmatprep.subr.mxu0 0.0
    %4382 = vmatpush1.msra.mxu0 0.0
    %4383 = vmatprep.subr.mxu0 0.0
    %4384 = vmatpush1.msra.mxu0 0.0
    %4385 = vmatprep.subr.mxu0 0.0
    %4386 = vmatpush1.msra.mxu0 0.0
    %4387 = vmatprep.subr.mxu0 0.0
    %4388 = vmatpush1.msra.mxu0 0.0
    %4389 = vmatprep.subr.mxu0 0.0
    %4390 = vmatpush1.msra.mxu0 0.0
    %4391 = vmatprep.subr.mxu0 0.0
    %4392 = vmatpush1.msra.mxu0 0.0
    %4393 = vmatprep.subr.mxu0 0.0
    %4394 = vmatpush1.msra.mxu0 0.0
    %4395 = vmatprep.mubr.f32.mxu0 0.0
    %4396 = vmatmul.mubr.f32.gmra.mrb[0].mxu0 %v3713
    %v4397 = vpop.f32.mrb[0].mxu0
    %v4398 = vadd.f32 %v3974, %v4397
    %v4399 = vpop.f32.mrb[0].mxu0
    %v4400 = vadd.f32 %v3974, %v4399
    %4401 = vdwg.mxu0
    %4402 = vmatprep.subr.mxu0 %v3727
    %4403 = vmatpush1.msra.mxu0 %v3726
    %4404 = vmatprep.subr.mxu0 %v3743
    %4405 = vmatpush1.msra.mxu0 %v3742
    %4406 = vmatprep.subr.mxu0 %v3759
    %4407 = vmatpush1.msra.mxu0 %v3758
    %4408 = vmatprep.subr.mxu0 %v3775
    %4409 = vmatpush1.msra.mxu0 %v3774
    %4410 = vmatprep.subr.mxu0 %v3791
    %4411 = vmatpush1.msra.mxu0 %v3790
    %4412 = vmatprep.subr.mxu0 %v3807
    %4413 = vmatpush1.msra.mxu0 %v3806
    %4414 = vmatprep.subr.mxu0 %v3823
    %4415 = vmatpush1.msra.mxu0 %v3822
    %4416 = vmatprep.subr.mxu0 %v3839
    %4417 = vmatpush1.msra.mxu0 %v3838
    %4418 = vmatprep.subr.mxu0 %v3855
    %4419 = vmatpush1.msra.mxu0 %v3854
    %4420 = vmatprep.subr.mxu0 %v3871
    %4421 = vmatpush1.msra.mxu0 %v3870
    %4422 = vmatprep.subr.mxu0 %v3887
    %4423 = vmatpush1.msra.mxu0 %v3886
    %4424 = vmatprep.subr.mxu0 %v3903
    %4425 = vmatpush1.msra.mxu0 %v3902
    %4426 = vmatprep.subr.mxu0 %v3919
    %4427 = vmatpush1.msra.mxu0 %v3918
    %4428 = vmatprep.subr.mxu0 %v3935
    %4429 = vmatpush1.msra.mxu0 %v3934
    %4430 = vmatprep.subr.mxu0 %v3951
    %4431 = vmatpush1.msra.mxu0 %v3950
    %4432 = vmatprep.subr.mxu0 %v3967
    %4433 = vmatpush1.msra.mxu0 %v3966
    %4434 = vmatprep.subr.mxu0 0.0
    %4435 = vmatpush1.msra.mxu0 0.0
    %4436 = vmatprep.subr.mxu0 0.0
    %4437 = vmatpush1.msra.mxu0 0.0
    %4438 = vmatprep.subr.mxu0 0.0
    %4439 = vmatpush1.msra.mxu0 0.0
    %4440 = vmatprep.subr.mxu0 0.0
    %4441 = vmatpush1.msra.mxu0 0.0
    %4442 = vmatprep.subr.mxu0 0.0
    %4443 = vmatpush1.msra.mxu0 0.0
    %4444 = vmatprep.subr.mxu0 0.0
    %4445 = vmatpush1.msra.mxu0 0.0
    %4446 = vmatprep.subr.mxu0 0.0
    %4447 = vmatpush1.msra.mxu0 0.0
    %4448 = vmatprep.subr.mxu0 0.0
    %4449 = vmatpush1.msra.mxu0 0.0
    %4450 = vmatprep.subr.mxu0 0.0
    %4451 = vmatpush1.msra.mxu0 0.0
    %4452 = vmatprep.subr.mxu0 0.0
    %4453 = vmatpush1.msra.mxu0 0.0
    %4454 = vmatprep.subr.mxu0 0.0
    %4455 = vmatpush1.msra.mxu0 0.0
    %4456 = vmatprep.subr.mxu0 0.0
    %4457 = vmatpush1.msra.mxu0 0.0
    %4458 = vmatprep.subr.mxu0 0.0
    %4459 = vmatpush1.msra.mxu0 0.0
    %4460 = vmatprep.subr.mxu0 0.0
    %4461 = vmatpush1.msra.mxu0 0.0
    %4462 = vmatprep.subr.mxu0 0.0
    %4463 = vmatpush1.msra.mxu0 0.0
    %4464 = vmatprep.subr.mxu0 0.0
    %4465 = vmatpush1.msra.mxu0 0.0
    %4466 = vmatprep.mubr.f32.mxu0 0.0
    %4467 = vmatmul.mubr.f32.gmra.mrb[0].mxu0 %v3713
    %v4468 = vpop.f32.mrb[0].mxu0
    %v4469 = vadd.f32 %v3974, %v4468
    %v4470 = vpop.f32.mrb[0].mxu0
    %v4471 = vadd.f32 %v3974, %v4470
    %4472 = vdwg.mxu0
    %4473 = vmatprep.subr.mxu0 %v3729
    %4474 = vmatpush1.msra.mxu0 %v3728
    %4475 = vmatprep.subr.mxu0 %v3745
    %4476 = vmatpush1.msra.mxu0 %v3744
    %4477 = vmatprep.subr.mxu0 %v3761
    %4478 = vmatpush1.msra.mxu0 %v3760
    %4479 = vmatprep.subr.mxu0 %v3777
    %4480 = vmatpush1.msra.mxu0 %v3776
    %4481 = vmatprep.subr.mxu0 %v3793
    %4482 = vmatpush1.msra.mxu0 %v3792
    %4483 = vmatprep.subr.mxu0 %v3809
    %4484 = vmatpush1.msra.mxu0 %v3808
    %4485 = vmatprep.subr.mxu0 %v3825
    %4486 = vmatpush1.msra.mxu0 %v3824
    %4487 = vmatprep.subr.mxu0 %v3841
    %4488 = vmatpush1.msra.mxu0 %v3840
    %4489 = vmatprep.subr.mxu0 %v3857
    %4490 = vmatpush1.msra.mxu0 %v3856
    %4491 = vmatprep.subr.mxu0 %v3873
    %4492 = vmatpush1.msra.mxu0 %v3872
    %4493 = vmatprep.subr.mxu0 %v3889
    %4494 = vmatpush1.msra.mxu0 %v3888
    %4495 = vmatprep.subr.mxu0 %v3905
    %4496 = vmatpush1.msra.mxu0 %v3904
    %4497 = vmatprep.subr.mxu0 %v3921
    %4498 = vmatpush1.msra.mxu0 %v3920
    %4499 = vmatprep.subr.mxu0 %v3937
    %4500 = vmatpush1.msra.mxu0 %v3936
    %4501 = vmatprep.subr.mxu0 %v3953
    %4502 = vmatpush1.msra.mxu0 %v3952
    %4503 = vmatprep.subr.mxu0 %v3969
    %4504 = vmatpush1.msra.mxu0 %v3968
    %4505 = vmatprep.subr.mxu0 0.0
    %4506 = vmatpush1.msra.mxu0 0.0
    %4507 = vmatprep.subr.mxu0 0.0
    %4508 = vmatpush1.msra.mxu0 0.0
    %4509 = vmatprep.subr.mxu0 0.0
    %4510 = vmatpush1.msra.mxu0 0.0
    %4511 = vmatprep.subr.mxu0 0.0
    %4512 = vmatpush1.msra.mxu0 0.0
    %4513 = vmatprep.subr.mxu0 0.0
    %4514 = vmatpush1.msra.mxu0 0.0
    %4515 = vmatprep.subr.mxu0 0.0
    %4516 = vmatpush1.msra.mxu0 0.0
    %4517 = vmatprep.subr.mxu0 0.0
    %4518 = vmatpush1.msra.mxu0 0.0
    %4519 = vmatprep.subr.mxu0 0.0
    %4520 = vmatpush1.msra.mxu0 0.0
    %4521 = vmatprep.subr.mxu0 0.0
    %4522 = vmatpush1.msra.mxu0 0.0
    %4523 = vmatprep.subr.mxu0 0.0
    %4524 = vmatpush1.msra.mxu0 0.0
    %4525 = vmatprep.subr.mxu0 0.0
    %4526 = vmatpush1.msra.mxu0 0.0
    %4527 = vmatprep.subr.mxu0 0.0
    %4528 = vmatpush1.msra.mxu0 0.0
    %4529 = vmatprep.subr.mxu0 0.0
    %4530 = vmatpush1.msra.mxu0 0.0
    %4531 = vmatprep.subr.mxu0 0.0
    %4532 = vmatpush1.msra.mxu0 0.0
    %4533 = vmatprep.subr.mxu0 0.0
    %4534 = vmatpush1.msra.mxu0 0.0
    %4535 = vmatprep.subr.mxu0 0.0
    %4536 = vmatpush1.msra.mxu0 0.0
    %4537 = vmatprep.mubr.f32.mxu0 0.0
    %4538 = vmatmul.mubr.f32.gmra.mrb[0].mxu0 %v3713
    %v4539 = vpop.f32.mrb[0].mxu0
    %v4540 = vadd.f32 %v3974, %v4539
    %v4541 = vpop.f32.mrb[0].mxu0
    %v4542 = vadd.f32 %v3974, %v4541
    %4543 = vdwg.mxu0
    %v4544 = vadd.f32 %v4043, %v4045
    %v4545 = vadd.f32 %v4544, %v4114
    %v4546 = vadd.f32 %v4545, %v4116
    %v4547 = vadd.f32 %v4546, %v4185
    %v4548 = vadd.f32 %v4547, %v4187
    %v4549 = vadd.f32 %v4548, %v4256
    %v4550 = vadd.f32 %v4549, %v4258
    %v4551 = vadd.f32 %v4550, %v4327
    %v4552 = vadd.f32 %v4551, %v4329
    %v4553 = vadd.f32 %v4552, %v4398
    %v4554 = vadd.f32 %v4553, %v4400
    %v4555 = vadd.f32 %v4554, %v4469
    %v4556 = vadd.f32 %v4555, %v4471
    %v4557 = vadd.f32 %v4556, %v4540
    %v4558 = vadd.f32 %v4557, %v4542
    %4559 = vadd.xlane.f32.xlu0 %v4558
    %v4560 = vpop.xlane.xlu0 %4559
    %v4561 = vrcp.pop 2048.0
    %v4562 = vmul.f32 %v4560, %v4561
    %v4563 = vsub.f32 %v4043, %v4562
    %v4564 = vsub.f32 %v4045, %v4562
    %v4565 = vsub.f32 %v4114, %v4562
    %v4566 = vsub.f32 %v4116, %v4562
    %v4567 = vsub.f32 %v4185, %v4562
    %v4568 = vsub.f32 %v4187, %v4562
    %v4569 = vsub.f32 %v4256, %v4562
    %v4570 = vsub.f32 %v4258, %v4562
    %v4571 = vsub.f32 %v4327, %v4562
    %v4572 = vsub.f32 %v4329, %v4562
    %v4573 = vsub.f32 %v4398, %v4562
    %v4574 = vsub.f32 %v4400, %v4562
    %v4575 = vsub.f32 %v4469, %v4562
    %v4576 = vsub.f32 %v4471, %v4562
    %v4577 = vsub.f32 %v4540, %v4562
    %v4578 = vsub.f32 %v4542, %v4562
    %v4579 = vmul.f32 %v4563, %v4563
    %v4580 = vmul.f32 %v4564, %v4564
    %v4581 = vmul.f32 %v4565, %v4565
    %v4582 = vmul.f32 %v4566, %v4566
    %v4583 = vmul.f32 %v4567, %v4567
    %v4584 = vmul.f32 %v4568, %v4568
    %v4585 = vmul.f32 %v4569, %v4569
    %v4586 = vmul.f32 %v4570, %v4570
    %v4587 = vmul.f32 %v4571, %v4571
    %v4588 = vmul.f32 %v4572, %v4572
    %v4589 = vmul.f32 %v4573, %v4573
    %v4590 = vmul.f32 %v4574, %v4574
    %v4591 = vmul.f32 %v4575, %v4575
    %v4592 = vmul.f32 %v4576, %v4576
    %v4593 = vmul.f32 %v4577, %v4577
    %v4594 = vmul.f32 %v4578, %v4578
    %v4595 = vadd.f32 %v4579, %v4580
    %v4596 = vadd.f32 %v4595, %v4581
    %v4597 = vadd.f32 %v4596, %v4582
    %v4598 = vadd.f32 %v4597, %v4583
    %v4599 = vadd.f32 %v4598, %v4584
    %v4600 = vadd.f32 %v4599, %v4585
    %v4601 = vadd.f32 %v4600, %v4586
    %v4602 = vadd.f32 %v4601, %v4587
    %v4603 = vadd.f32 %v4602, %v4588
    %v4604 = vadd.f32 %v4603, %v4589
    %v4605 = vadd.f32 %v4604, %v4590
    %v4606 = vadd.f32 %v4605, %v4591
    %v4607 = vadd.f32 %v4606, %v4592
    %v4608 = vadd.f32 %v4607, %v4593
    %v4609 = vadd.f32 %v4608, %v4594
    %4610 = vadd.xlane.f32.xlu0 %v4609
    %v4611 = vpop.xlane.xlu0 %4610
    %v4612 = vmul.f32 %v4611, %v4561
    %v4613 = vld [vmem:[%s3] sm:$0xff]
    %v4614 = vadd.f32 %v4612, 1e-05
    %v4615 = vrsqrt.pop %v4614
    %v4616 = vmul.f32 %v4613, %v4615
    %4618 = vset.pattern.permute.xlu0 0
    %4619 = vperm.xlu0 %4618, %v4616
    %v4620 = vpop.permute.xlu0 %4619
    %v4622 = vmul.f32 %v4563, %v4620
    %v4623 = vmul.f32 %v4564, %v4620
    %v4624 = vmul.f32 %v4565, %v4620
    %v4625 = vmul.f32 %v4566, %v4620
    %v4626 = vmul.f32 %v4567, %v4620
    %v4627 = vmul.f32 %v4568, %v4620
    %v4628 = vmul.f32 %v4569, %v4620
    %v4629 = vmul.f32 %v4570, %v4620
    %v4630 = vmul.f32 %v4571, %v4620
    %v4631 = vmul.f32 %v4572, %v4620
    %v4632 = vmul.f32 %v4573, %v4620
    %v4633 = vmul.f32 %v4574, %v4620
    %v4634 = vmul.f32 %v4575, %v4620
    %v4635 = vmul.f32 %v4576, %v4620
    %v4636 = vmul.f32 %v4577, %v4620
    %v4637 = vmul.f32 %v4578, %v4620
    %v4638 = vld [vmem:[%s4] sm:$0xff]
    %4640 = vset.pattern.permute.xlu0 0
    %4641 = vperm.xlu0 %4640, %v4638
    %v4642 = vpop.permute.xlu0 %4641
    %v4644 = vadd.f32 %v4622, %v4642
    %v4645 = vadd.f32 %v4623, %v4642
    %v4646 = vadd.f32 %v4624, %v4642
    %v4647 = vadd.f32 %v4625, %v4642
    %v4648 = vadd.f32 %v4626, %v4642
    %v4649 = vadd.f32 %v4627, %v4642
    %v4650 = vadd.f32 %v4628, %v4642
    %v4651 = vadd.f32 %v4629, %v4642
    %v4652 = vadd.f32 %v4630, %v4642
    %v4653 = vadd.f32 %v4631, %v4642
    %v4654 = vadd.f32 %v4632, %v4642
    %v4655 = vadd.f32 %v4633, %v4642
    %v4656 = vadd.f32 %v4634, %v4642
    %v4657 = vadd.f32 %v4635, %v4642
    %v4658 = vadd.f32 %v4636, %v4642
    %v4659 = vadd.f32 %v4637, %v4642
    %v4660 = vmax.f32 %v4644, 0.0
    %v4661 = vmax.f32 %v4645, 0.0
    %v4662 = vmax.f32 %v4646, 0.0
    %v4663 = vmax.f32 %v4647, 0.0
    %v4664 = vmax.f32 %v4648, 0.0
    %v4665 = vmax.f32 %v4649, 0.0
    %v4666 = vmax.f32 %v4650, 0.0
    %v4667 = vmax.f32 %v4651, 0.0
    %v4668 = vmax.f32 %v4652, 0.0
    %v4669 = vmax.f32 %v4653, 0.0
    %v4670 = vmax.f32 %v4654, 0.0
    %v4671 = vmax.f32 %v4655, 0.0
    %v4672 = vmax.f32 %v4656, 0.0
    %v4673 = vmax.f32 %v4657, 0.0
    %v4674 = vmax.f32 %v4658, 0.0
    %v4675 = vmax.f32 %v4659, 0.0
    %v4676 = vld [vmem:[#allocation3] sm:$0xff]
    %v4677 = vld [vmem:[#allocation3 + $0x8] sm:$0xff]
    %v4678 = vld [vmem:[#allocation3 + $0x10] sm:$0xff]
    %v4679 = vld [vmem:[#allocation3 + $0x18] sm:$0xff]
    %v4680 = vld [vmem:[#allocation3 + $0x20] sm:$0xff]
    %v4681 = vld [vmem:[#allocation3 + $0x28] sm:$0xff]
    %v4682 = vld [vmem:[#allocation3 + $0x30] sm:$0xff]
    %v4683 = vld [vmem:[#allocation3 + $0x38] sm:$0xff]
    %v4684 = vld [vmem:[#allocation3 + $0x40] sm:$0xff]
    %v4685 = vld [vmem:[#allocation3 + $0x48] sm:$0xff]
    %v4686 = vld [vmem:[#allocation3 + $0x50] sm:$0xff]
    %v4687 = vld [vmem:[#allocation3 + $0x58] sm:$0xff]
    %v4688 = vld [vmem:[#allocation3 + $0x60] sm:$0xff]
    %v4689 = vld [vmem:[#allocation3 + $0x68] sm:$0xff]
    %v4690 = vld [vmem:[#allocation3 + $0x70] sm:$0xff]
    %v4691 = vld [vmem:[#allocation3 + $0x78] sm:$0xff]
    %v4692 = vld [vmem:[#allocation3 + $0x80] sm:$0xff]
    %v4693 = vld [vmem:[#allocation3 + $0x88] sm:$0xff]
    %v4694 = vld [vmem:[#allocation3 + $0x90] sm:$0xff]
    %v4695 = vld [vmem:[#allocation3 + $0x98] sm:$0xff]
    %v4696 = vld [vmem:[#allocation3 + $0xa0] sm:$0xff]
    %v4697 = vld [vmem:[#allocation3 + $0xa8] sm:$0xff]
    %v4698 = vld [vmem:[#allocation3 + $0xb0] sm:$0xff]
    %v4699 = vld [vmem:[#allocation3 + $0xb8] sm:$0xff]
    %v4700 = vld [vmem:[#allocation3 + $0xc0] sm:$0xff]
    %v4701 = vld [vmem:[#allocation3 + $0xc8] sm:$0xff]
    %v4702 = vld [vmem:[#allocation3 + $0xd0] sm:$0xff]
    %v4703 = vld [vmem:[#allocation3 + $0xd8] sm:$0xff]
    %v4704 = vld [vmem:[#allocation3 + $0xe0] sm:$0xff]
    %v4705 = vld [vmem:[#allocation3 + $0xe8] sm:$0xff]
    %v4706 = vld [vmem:[#allocation3 + $0xf0] sm:$0xff]
    %v4707 = vld [vmem:[#allocation3 + $0xf8] sm:$0xff]
    %v4708 = vld [vmem:[#allocation3 + $0x100] sm:$0xff]
    %v4709 = vld [vmem:[#allocation3 + $0x108] sm:$0xff]
    %v4710 = vld [vmem:[#allocation3 + $0x110] sm:$0xff]
    %v4711 = vld [vmem:[#allocation3 + $0x118] sm:$0xff]
    %v4712 = vld [vmem:[#allocation3 + $0x120] sm:$0xff]
    %v4713 = vld [vmem:[#allocation3 + $0x128] sm:$0xff]
    %v4714 = vld [vmem:[#allocation3 + $0x130] sm:$0xff]
    %v4715 = vld [vmem:[#allocation3 + $0x138] sm:$0xff]
    %v4716 = vld [vmem:[#allocation3 + $0x140] sm:$0xff]
    %v4717 = vld [vmem:[#allocation3 + $0x148] sm:$0xff]
    %v4718 = vld [vmem:[#allocation3 + $0x150] sm:$0xff]
    %v4719 = vld [vmem:[#allocation3 + $0x158] sm:$0xff]
    %v4720 = vld [vmem:[#allocation3 + $0x160] sm:$0xff]
    %v4721 = vld [vmem:[#allocation3 + $0x168] sm:$0xff]
    %v4722 = vld [vmem:[#allocation3 + $0x170] sm:$0xff]
    %v4723 = vld [vmem:[#allocation3 + $0x178] sm:$0xff]
    %v4724 = vld [vmem:[#allocation3 + $0x180] sm:$0xff]
    %v4725 = vld [vmem:[#allocation3 + $0x188] sm:$0xff]
    %v4726 = vld [vmem:[#allocation3 + $0x190] sm:$0xff]
    %v4727 = vld [vmem:[#allocation3 + $0x198] sm:$0xff]
    %v4728 = vld [vmem:[#allocation3 + $0x1a0] sm:$0xff]
    %v4729 = vld [vmem:[#allocation3 + $0x1a8] sm:$0xff]
    %v4730 = vld [vmem:[#allocation3 + $0x1b0] sm:$0xff]
    %v4731 = vld [vmem:[#allocation3 + $0x1b8] sm:$0xff]
    %v4732 = vld [vmem:[#allocation3 + $0x1c0] sm:$0xff]
    %v4733 = vld [vmem:[#allocation3 + $0x1c8] sm:$0xff]
    %v4734 = vld [vmem:[#allocation3 + $0x1d0] sm:$0xff]
    %v4735 = vld [vmem:[#allocation3 + $0x1d8] sm:$0xff]
    %v4736 = vld [vmem:[#allocation3 + $0x1e0] sm:$0xff]
    %v4737 = vld [vmem:[#allocation3 + $0x1e8] sm:$0xff]
    %v4738 = vld [vmem:[#allocation3 + $0x1f0] sm:$0xff]
    %v4739 = vld [vmem:[#allocation3 + $0x1f8] sm:$0xff]
    %v4740 = vld [vmem:[#allocation3 + $0x200] sm:$0xff]
    %v4741 = vld [vmem:[#allocation3 + $0x208] sm:$0xff]
    %v4742 = vld [vmem:[#allocation3 + $0x210] sm:$0xff]
    %v4743 = vld [vmem:[#allocation3 + $0x218] sm:$0xff]
    %v4744 = vld [vmem:[#allocation3 + $0x220] sm:$0xff]
    %v4745 = vld [vmem:[#allocation3 + $0x228] sm:$0xff]
    %v4746 = vld [vmem:[#allocation3 + $0x230] sm:$0xff]
    %v4747 = vld [vmem:[#allocation3 + $0x238] sm:$0xff]
    %v4748 = vld [vmem:[#allocation3 + $0x240] sm:$0xff]
    %v4749 = vld [vmem:[#allocation3 + $0x248] sm:$0xff]
    %v4750 = vld [vmem:[#allocation3 + $0x250] sm:$0xff]
    %v4751 = vld [vmem:[#allocation3 + $0x258] sm:$0xff]
    %v4752 = vld [vmem:[#allocation3 + $0x260] sm:$0xff]
    %v4753 = vld [vmem:[#allocation3 + $0x268] sm:$0xff]
    %v4754 = vld [vmem:[#allocation3 + $0x270] sm:$0xff]
    %v4755 = vld [vmem:[#allocation3 + $0x278] sm:$0xff]
    %v4756 = vld [vmem:[#allocation3 + $0x280] sm:$0xff]
    %v4757 = vld [vmem:[#allocation3 + $0x288] sm:$0xff]
    %v4758 = vld [vmem:[#allocation3 + $0x290] sm:$0xff]
    %v4759 = vld [vmem:[#allocation3 + $0x298] sm:$0xff]
    %v4760 = vld [vmem:[#allocation3 + $0x2a0] sm:$0xff]
    %v4761 = vld [vmem:[#allocation3 + $0x2a8] sm:$0xff]
    %v4762 = vld [vmem:[#allocation3 + $0x2b0] sm:$0xff]
    %v4763 = vld [vmem:[#allocation3 + $0x2b8] sm:$0xff]
    %v4764 = vld [vmem:[#allocation3 + $0x2c0] sm:$0xff]
    %v4765 = vld [vmem:[#allocation3 + $0x2c8] sm:$0xff]
    %v4766 = vld [vmem:[#allocation3 + $0x2d0] sm:$0xff]
    %v4767 = vld [vmem:[#allocation3 + $0x2d8] sm:$0xff]
    %v4768 = vld [vmem:[#allocation3 + $0x2e0] sm:$0xff]
    %v4769 = vld [vmem:[#allocation3 + $0x2e8] sm:$0xff]
    %v4770 = vld [vmem:[#allocation3 + $0x2f0] sm:$0xff]
    %v4771 = vld [vmem:[#allocation3 + $0x2f8] sm:$0xff]
    %v4772 = vld [vmem:[#allocation3 + $0x300] sm:$0xff]
    %v4773 = vld [vmem:[#allocation3 + $0x308] sm:$0xff]
    %v4774 = vld [vmem:[#allocation3 + $0x310] sm:$0xff]
    %v4775 = vld [vmem:[#allocation3 + $0x318] sm:$0xff]
    %v4776 = vld [vmem:[#allocation3 + $0x320] sm:$0xff]
    %v4777 = vld [vmem:[#allocation3 + $0x328] sm:$0xff]
    %v4778 = vld [vmem:[#allocation3 + $0x330] sm:$0xff]
    %v4779 = vld [vmem:[#allocation3 + $0x338] sm:$0xff]
    %v4780 = vld [vmem:[#allocation3 + $0x340] sm:$0xff]
    %v4781 = vld [vmem:[#allocation3 + $0x348] sm:$0xff]
    %v4782 = vld [vmem:[#allocation3 + $0x350] sm:$0xff]
    %v4783 = vld [vmem:[#allocation3 + $0x358] sm:$0xff]
    %v4784 = vld [vmem:[#allocation3 + $0x360] sm:$0xff]
    %v4785 = vld [vmem:[#allocation3 + $0x368] sm:$0xff]
    %v4786 = vld [vmem:[#allocation3 + $0x370] sm:$0xff]
    %v4787 = vld [vmem:[#allocation3 + $0x378] sm:$0xff]
    %v4788 = vld [vmem:[#allocation3 + $0x380] sm:$0xff]
    %v4789 = vld [vmem:[#allocation3 + $0x388] sm:$0xff]
    %v4790 = vld [vmem:[#allocation3 + $0x390] sm:$0xff]
    %v4791 = vld [vmem:[#allocation3 + $0x398] sm:$0xff]
    %v4792 = vld [vmem:[#allocation3 + $0x3a0] sm:$0xff]
    %v4793 = vld [vmem:[#allocation3 + $0x3a8] sm:$0xff]
    %v4794 = vld [vmem:[#allocation3 + $0x3b0] sm:$0xff]
    %v4795 = vld [vmem:[#allocation3 + $0x3b8] sm:$0xff]
    %v4796 = vld [vmem:[#allocation3 + $0x3c0] sm:$0xff]
    %v4797 = vld [vmem:[#allocation3 + $0x3c8] sm:$0xff]
    %v4798 = vld [vmem:[#allocation3 + $0x3d0] sm:$0xff]
    %v4799 = vld [vmem:[#allocation3 + $0x3d8] sm:$0xff]
    %v4800 = vld [vmem:[#allocation3 + $0x3e0] sm:$0xff]
    %v4801 = vld [vmem:[#allocation3 + $0x3e8] sm:$0xff]
    %v4802 = vld [vmem:[#allocation3 + $0x3f0] sm:$0xff]
    %v4803 = vld [vmem:[#allocation3 + $0x3f8] sm:$0xff]
    %v4804 = vld [vmem:[#allocation3 + $0x400] sm:$0xff]
    %v4805 = vld [vmem:[#allocation3 + $0x408] sm:$0xff]
    %v4806 = vld [vmem:[#allocation3 + $0x410] sm:$0xff]
    %v4807 = vld [vmem:[#allocation3 + $0x418] sm:$0xff]
    %v4808 = vld [vmem:[#allocation3 + $0x420] sm:$0xff]
    %v4809 = vld [vmem:[#allocation3 + $0x428] sm:$0xff]
    %v4810 = vld [vmem:[#allocation3 + $0x430] sm:$0xff]
    %v4811 = vld [vmem:[#allocation3 + $0x438] sm:$0xff]
    %v4812 = vld [vmem:[#allocation3 + $0x440] sm:$0xff]
    %v4813 = vld [vmem:[#allocation3 + $0x448] sm:$0xff]
    %v4814 = vld [vmem:[#allocation3 + $0x450] sm:$0xff]
    %v4815 = vld [vmem:[#allocation3 + $0x458] sm:$0xff]
    %v4816 = vld [vmem:[#allocation3 + $0x460] sm:$0xff]
    %v4817 = vld [vmem:[#allocation3 + $0x468] sm:$0xff]
    %v4818 = vld [vmem:[#allocation3 + $0x470] sm:$0xff]
    %v4819 = vld [vmem:[#allocation3 + $0x478] sm:$0xff]
    %v4820 = vld [vmem:[#allocation3 + $0x480] sm:$0xff]
    %v4821 = vld [vmem:[#allocation3 + $0x488] sm:$0xff]
    %v4822 = vld [vmem:[#allocation3 + $0x490] sm:$0xff]
    %v4823 = vld [vmem:[#allocation3 + $0x498] sm:$0xff]
    %v4824 = vld [vmem:[#allocation3 + $0x4a0] sm:$0xff]
    %v4825 = vld [vmem:[#allocation3 + $0x4a8] sm:$0xff]
    %v4826 = vld [vmem:[#allocation3 + $0x4b0] sm:$0xff]
    %v4827 = vld [vmem:[#allocation3 + $0x4b8] sm:$0xff]
    %v4828 = vld [vmem:[#allocation3 + $0x4c0] sm:$0xff]
    %v4829 = vld [vmem:[#allocation3 + $0x4c8] sm:$0xff]
    %v4830 = vld [vmem:[#allocation3 + $0x4d0] sm:$0xff]
    %v4831 = vld [vmem:[#allocation3 + $0x4d8] sm:$0xff]
    %v4832 = vld [vmem:[#allocation3 + $0x4e0] sm:$0xff]
    %v4833 = vld [vmem:[#allocation3 + $0x4e8] sm:$0xff]
    %v4834 = vld [vmem:[#allocation3 + $0x4f0] sm:$0xff]
    %v4835 = vld [vmem:[#allocation3 + $0x4f8] sm:$0xff]
    %v4836 = vld [vmem:[#allocation3 + $0x500] sm:$0xff]
    %v4837 = vld [vmem:[#allocation3 + $0x508] sm:$0xff]
    %v4838 = vld [vmem:[#allocation3 + $0x510] sm:$0xff]
    %v4839 = vld [vmem:[#allocation3 + $0x518] sm:$0xff]
    %v4840 = vld [vmem:[#allocation3 + $0x520] sm:$0xff]
    %v4841 = vld [vmem:[#allocation3 + $0x528] sm:$0xff]
    %v4842 = vld [vmem:[#allocation3 + $0x530] sm:$0xff]
    %v4843 = vld [vmem:[#allocation3 + $0x538] sm:$0xff]
    %v4844 = vld [vmem:[#allocation3 + $0x540] sm:$0xff]
    %v4845 = vld [vmem:[#allocation3 + $0x548] sm:$0xff]
    %v4846 = vld [vmem:[#allocation3 + $0x550] sm:$0xff]
    %v4847 = vld [vmem:[#allocation3 + $0x558] sm:$0xff]
    %v4848 = vld [vmem:[#allocation3 + $0x560] sm:$0xff]
    %v4849 = vld [vmem:[#allocation3 + $0x568] sm:$0xff]
    %v4850 = vld [vmem:[#allocation3 + $0x570] sm:$0xff]
    %v4851 = vld [vmem:[#allocation3 + $0x578] sm:$0xff]
    %v4852 = vld [vmem:[#allocation3 + $0x580] sm:$0xff]
    %v4853 = vld [vmem:[#allocation3 + $0x588] sm:$0xff]
    %v4854 = vld [vmem:[#allocation3 + $0x590] sm:$0xff]
    %v4855 = vld [vmem:[#allocation3 + $0x598] sm:$0xff]
    %v4856 = vld [vmem:[#allocation3 + $0x5a0] sm:$0xff]
    %v4857 = vld [vmem:[#allocation3 + $0x5a8] sm:$0xff]
    %v4858 = vld [vmem:[#allocation3 + $0x5b0] sm:$0xff]
    %v4859 = vld [vmem:[#allocation3 + $0x5b8] sm:$0xff]
    %v4860 = vld [vmem:[#allocation3 + $0x5c0] sm:$0xff]
    %v4861 = vld [vmem:[#allocation3 + $0x5c8] sm:$0xff]
    %v4862 = vld [vmem:[#allocation3 + $0x5d0] sm:$0xff]
    %v4863 = vld [vmem:[#allocation3 + $0x5d8] sm:$0xff]
    %v4864 = vld [vmem:[#allocation3 + $0x5e0] sm:$0xff]
    %v4865 = vld [vmem:[#allocation3 + $0x5e8] sm:$0xff]
    %v4866 = vld [vmem:[#allocation3 + $0x5f0] sm:$0xff]
    %v4867 = vld [vmem:[#allocation3 + $0x5f8] sm:$0xff]
    %v4868 = vld [vmem:[#allocation3 + $0x600] sm:$0xff]
    %v4869 = vld [vmem:[#allocation3 + $0x608] sm:$0xff]
    %v4870 = vld [vmem:[#allocation3 + $0x610] sm:$0xff]
    %v4871 = vld [vmem:[#allocation3 + $0x618] sm:$0xff]
    %v4872 = vld [vmem:[#allocation3 + $0x620] sm:$0xff]
    %v4873 = vld [vmem:[#allocation3 + $0x628] sm:$0xff]
    %v4874 = vld [vmem:[#allocation3 + $0x630] sm:$0xff]
    %v4875 = vld [vmem:[#allocation3 + $0x638] sm:$0xff]
    %v4876 = vld [vmem:[#allocation3 + $0x640] sm:$0xff]
    %v4877 = vld [vmem:[#allocation3 + $0x648] sm:$0xff]
    %v4878 = vld [vmem:[#allocation3 + $0x650] sm:$0xff]
    %v4879 = vld [vmem:[#allocation3 + $0x658] sm:$0xff]
    %v4880 = vld [vmem:[#allocation3 + $0x660] sm:$0xff]
    %v4881 = vld [vmem:[#allocation3 + $0x668] sm:$0xff]
    %v4882 = vld [vmem:[#allocation3 + $0x670] sm:$0xff]
    %v4883 = vld [vmem:[#allocation3 + $0x678] sm:$0xff]
    %v4884 = vld [vmem:[#allocation3 + $0x680] sm:$0xff]
    %v4885 = vld [vmem:[#allocation3 + $0x688] sm:$0xff]
    %v4886 = vld [vmem:[#allocation3 + $0x690] sm:$0xff]
    %v4887 = vld [vmem:[#allocation3 + $0x698] sm:$0xff]
    %v4888 = vld [vmem:[#allocation3 + $0x6a0] sm:$0xff]
    %v4889 = vld [vmem:[#allocation3 + $0x6a8] sm:$0xff]
    %v4890 = vld [vmem:[#allocation3 + $0x6b0] sm:$0xff]
    %v4891 = vld [vmem:[#allocation3 + $0x6b8] sm:$0xff]
    %v4892 = vld [vmem:[#allocation3 + $0x6c0] sm:$0xff]
    %v4893 = vld [vmem:[#allocation3 + $0x6c8] sm:$0xff]
    %v4894 = vld [vmem:[#allocation3 + $0x6d0] sm:$0xff]
    %v4895 = vld [vmem:[#allocation3 + $0x6d8] sm:$0xff]
    %v4896 = vld [vmem:[#allocation3 + $0x6e0] sm:$0xff]
    %v4897 = vld [vmem:[#allocation3 + $0x6e8] sm:$0xff]
    %v4898 = vld [vmem:[#allocation3 + $0x6f0] sm:$0xff]
    %v4899 = vld [vmem:[#allocation3 + $0x6f8] sm:$0xff]
    %v4900 = vld [vmem:[#allocation3 + $0x700] sm:$0xff]
    %v4901 = vld [vmem:[#allocation3 + $0x708] sm:$0xff]
    %v4902 = vld [vmem:[#allocation3 + $0x710] sm:$0xff]
    %v4903 = vld [vmem:[#allocation3 + $0x718] sm:$0xff]
    %v4904 = vld [vmem:[#allocation3 + $0x720] sm:$0xff]
    %v4905 = vld [vmem:[#allocation3 + $0x728] sm:$0xff]
    %v4906 = vld [vmem:[#allocation3 + $0x730] sm:$0xff]
    %v4907 = vld [vmem:[#allocation3 + $0x738] sm:$0xff]
    %v4908 = vld [vmem:[#allocation3 + $0x740] sm:$0xff]
    %v4909 = vld [vmem:[#allocation3 + $0x748] sm:$0xff]
    %v4910 = vld [vmem:[#allocation3 + $0x750] sm:$0xff]
    %v4911 = vld [vmem:[#allocation3 + $0x758] sm:$0xff]
    %v4912 = vld [vmem:[#allocation3 + $0x760] sm:$0xff]
    %v4913 = vld [vmem:[#allocation3 + $0x768] sm:$0xff]
    %v4914 = vld [vmem:[#allocation3 + $0x770] sm:$0xff]
    %v4915 = vld [vmem:[#allocation3 + $0x778] sm:$0xff]
    %v4916 = vld [vmem:[#allocation3 + $0x780] sm:$0xff]
    %v4917 = vld [vmem:[#allocation3 + $0x788] sm:$0xff]
    %v4918 = vld [vmem:[#allocation3 + $0x790] sm:$0xff]
    %v4919 = vld [vmem:[#allocation3 + $0x798] sm:$0xff]
    %v4920 = vld [vmem:[#allocation3 + $0x7a0] sm:$0xff]
    %v4921 = vld [vmem:[#allocation3 + $0x7a8] sm:$0xff]
    %v4922 = vld [vmem:[#allocation3 + $0x7b0] sm:$0xff]
    %v4923 = vld [vmem:[#allocation3 + $0x7b8] sm:$0xff]
    %v4924 = vld [vmem:[#allocation3 + $0x7c0] sm:$0xff]
    %v4925 = vld [vmem:[#allocation3 + $0x7c8] sm:$0xff]
    %v4926 = vld [vmem:[#allocation3 + $0x7d0] sm:$0xff]
    %v4927 = vld [vmem:[#allocation3 + $0x7d8] sm:$0xff]
    %v4928 = vld [vmem:[#allocation3 + $0x7e0] sm:$0xff]
    %v4929 = vld [vmem:[#allocation3 + $0x7e8] sm:$0xff]
    %v4930 = vld [vmem:[#allocation3 + $0x7f0] sm:$0xff]
    %v4931 = vld [vmem:[#allocation3 + $0x7f8] sm:$0xff]
    %4932 = vmatprep.subr.mxu0 %v4677
    %4933 = vmatpush1.msra.mxu0 %v4676
    %4934 = vmatprep.subr.mxu0 %v4679
    %4935 = vmatpush1.msra.mxu0 %v4678
    %4936 = vmatprep.subr.mxu0 %v4681
    %4937 = vmatpush1.msra.mxu0 %v4680
    %4938 = vmatprep.subr.mxu0 %v4683
    %4939 = vmatpush1.msra.mxu0 %v4682
    %4940 = vmatprep.subr.mxu0 %v4685
    %4941 = vmatpush1.msra.mxu0 %v4684
    %4942 = vmatprep.subr.mxu0 %v4687
    %4943 = vmatpush1.msra.mxu0 %v4686
    %4944 = vmatprep.subr.mxu0 %v4689
    %4945 = vmatpush1.msra.mxu0 %v4688
    %4946 = vmatprep.subr.mxu0 %v4691
    %4947 = vmatpush1.msra.mxu0 %v4690
    %4948 = vmatprep.subr.mxu0 %v4693
    %4949 = vmatpush1.msra.mxu0 %v4692
    %4950 = vmatprep.subr.mxu0 %v4695
    %4951 = vmatpush1.msra.mxu0 %v4694
    %4952 = vmatprep.subr.mxu0 %v4697
    %4953 = vmatpush1.msra.mxu0 %v4696
    %4954 = vmatprep.subr.mxu0 %v4699
    %4955 = vmatpush1.msra.mxu0 %v4698
    %4956 = vmatprep.subr.mxu0 %v4701
    %4957 = vmatpush1.msra.mxu0 %v4700
    %4958 = vmatprep.subr.mxu0 %v4703
    %4959 = vmatpush1.msra.mxu0 %v4702
    %4960 = vmatprep.subr.mxu0 %v4705
    %4961 = vmatpush1.msra.mxu0 %v4704
    %4962 = vmatprep.subr.mxu0 %v4707
    %4963 = vmatpush1.msra.mxu0 %v4706
    %4964 = vmatprep.subr.mxu0 %v4709
    %4965 = vmatpush1.msra.mxu0 %v4708
    %4966 = vmatprep.subr.mxu0 %v4711
    %4967 = vmatpush1.msra.mxu0 %v4710
    %4968 = vmatprep.subr.mxu0 %v4713
    %4969 = vmatpush1.msra.mxu0 %v4712
    %4970 = vmatprep.subr.mxu0 %v4715
    %4971 = vmatpush1.msra.mxu0 %v4714
    %4972 = vmatprep.subr.mxu0 %v4717
    %4973 = vmatpush1.msra.mxu0 %v4716
    %4974 = vmatprep.subr.mxu0 %v4719
    %4975 = vmatpush1.msra.mxu0 %v4718
    %4976 = vmatprep.subr.mxu0 %v4721
    %4977 = vmatpush1.msra.mxu0 %v4720
    %4978 = vmatprep.subr.mxu0 %v4723
    %4979 = vmatpush1.msra.mxu0 %v4722
    %4980 = vmatprep.subr.mxu0 %v4725
    %4981 = vmatpush1.msra.mxu0 %v4724
    %4982 = vmatprep.subr.mxu0 %v4727
    %4983 = vmatpush1.msra.mxu0 %v4726
    %4984 = vmatprep.subr.mxu0 %v4729
    %4985 = vmatpush1.msra.mxu0 %v4728
    %4986 = vmatprep.subr.mxu0 %v4731
    %4987 = vmatpush1.msra.mxu0 %v4730
    %4988 = vmatprep.subr.mxu0 %v4733
    %4989 = vmatpush1.msra.mxu0 %v4732
    %4990 = vmatprep.subr.mxu0 %v4735
    %4991 = vmatpush1.msra.mxu0 %v4734
    %4992 = vmatprep.subr.mxu0 %v4737
    %4993 = vmatpush1.msra.mxu0 %v4736
    %4994 = vmatprep.subr.mxu0 %v4739
    %4995 = vmatpush1.msra.mxu0 %v4738
    %4996 = vmatprep.mubr.f32.mxu0 %v4661
    %4997 = vmatmul.mubr.f32.gmra.mrb[0].mxu0 %v4660
    %v4998 = vpop.f32.mrb[0].mxu0
    %v4999 = vadd.f32 0.0, %v4998
    %v5000 = vpop.f32.mrb[0].mxu0
    %v5001 = vadd.f32 0.0, %v5000
    %5002 = vdwg.mxu0
    %5003 = vmatprep.subr.mxu0 %v4741
    %5004 = vmatpush1.msra.mxu0 %v4740
    %5005 = vmatprep.subr.mxu0 %v4743
    %5006 = vmatpush1.msra.mxu0 %v4742
    %5007 = vmatprep.subr.mxu0 %v4745
    %5008 = vmatpush1.msra.mxu0 %v4744
    %5009 = vmatprep.subr.mxu0 %v4747
    %5010 = vmatpush1.msra.mxu0 %v4746
    %5011 = vmatprep.subr.mxu0 %v4749
    %5012 = vmatpush1.msra.mxu0 %v4748
    %5013 = vmatprep.subr.mxu0 %v4751
    %5014 = vmatpush1.msra.mxu0 %v4750
    %5015 = vmatprep.subr.mxu0 %v4753
    %5016 = vmatpush1.msra.mxu0 %v4752
    %5017 = vmatprep.subr.mxu0 %v4755
    %5018 = vmatpush1.msra.mxu0 %v4754
    %5019 = vmatprep.subr.mxu0 %v4757
    %5020 = vmatpush1.msra.mxu0 %v4756
    %5021 = vmatprep.subr.mxu0 %v4759
    %5022 = vmatpush1.msra.mxu0 %v4758
    %5023 = vmatprep.subr.mxu0 %v4761
    %5024 = vmatpush1.msra.mxu0 %v4760
    %5025 = vmatprep.subr.mxu0 %v4763
    %5026 = vmatpush1.msra.mxu0 %v4762
    %5027 = vmatprep.subr.mxu0 %v4765
    %5028 = vmatpush1.msra.mxu0 %v4764
    %5029 = vmatprep.subr.mxu0 %v4767
    %5030 = vmatpush1.msra.mxu0 %v4766
    %5031 = vmatprep.subr.mxu0 %v4769
    %5032 = vmatpush1.msra.mxu0 %v4768
    %5033 = vmatprep.subr.mxu0 %v4771
    %5034 = vmatpush1.msra.mxu0 %v4770
    %5035 = vmatprep.subr.mxu0 %v4773
    %5036 = vmatpush1.msra.mxu0 %v4772
    %5037 = vmatprep.subr.mxu0 %v4775
    %5038 = vmatpush1.msra.mxu0 %v4774
    %5039 = vmatprep.subr.mxu0 %v4777
    %5040 = vmatpush1.msra.mxu0 %v4776
    %5041 = vmatprep.subr.mxu0 %v4779
    %5042 = vmatpush1.msra.mxu0 %v4778
    %5043 = vmatprep.subr.mxu0 %v4781
    %5044 = vmatpush1.msra.mxu0 %v4780
    %5045 = vmatprep.subr.mxu0 %v4783
    %5046 = vmatpush1.msra.mxu0 %v4782
    %5047 = vmatprep.subr.mxu0 %v4785
    %5048 = vmatpush1.msra.mxu0 %v4784
    %5049 = vmatprep.subr.mxu0 %v4787
    %5050 = vmatpush1.msra.mxu0 %v4786
    %5051 = vmatprep.subr.mxu0 %v4789
    %5052 = vmatpush1.msra.mxu0 %v4788
    %5053 = vmatprep.subr.mxu0 %v4791
    %5054 = vmatpush1.msra.mxu0 %v4790
    %5055 = vmatprep.subr.mxu0 %v4793
    %5056 = vmatpush1.msra.mxu0 %v4792
    %5057 = vmatprep.subr.mxu0 %v4795
    %5058 = vmatpush1.msra.mxu0 %v4794
    %5059 = vmatprep.subr.mxu0 %v4797
    %5060 = vmatpush1.msra.mxu0 %v4796
    %5061 = vmatprep.subr.mxu0 %v4799
    %5062 = vmatpush1.msra.mxu0 %v4798
    %5063 = vmatprep.subr.mxu0 %v4801
    %5064 = vmatpush1.msra.mxu0 %v4800
    %5065 = vmatprep.subr.mxu0 %v4803
    %5066 = vmatpush1.msra.mxu0 %v4802
    %5067 = vmatprep.mubr.f32.mxu0 %v4663
    %5068 = vmatmul.mubr.f32.gmra.mrb[0].mxu0 %v4662
    %v5069 = vpop.f32.mrb[0].mxu0
    %v5070 = vadd.f32 %v4999, %v5069
    %v5071 = vpop.f32.mrb[0].mxu0
    %v5072 = vadd.f32 %v5001, %v5071
    %5073 = vdwg.mxu0
    %5074 = vmatprep.subr.mxu0 %v4805
    %5075 = vmatpush1.msra.mxu0 %v4804
    %5076 = vmatprep.subr.mxu0 %v4807
    %5077 = vmatpush1.msra.mxu0 %v4806
    %5078 = vmatprep.subr.mxu0 %v4809
    %5079 = vmatpush1.msra.mxu0 %v4808
    %5080 = vmatprep.subr.mxu0 %v4811
    %5081 = vmatpush1.msra.mxu0 %v4810
    %5082 = vmatprep.subr.mxu0 %v4813
    %5083 = vmatpush1.msra.mxu0 %v4812
    %5084 = vmatprep.subr.mxu0 %v4815
    %5085 = vmatpush1.msra.mxu0 %v4814
    %5086 = vmatprep.subr.mxu0 %v4817
    %5087 = vmatpush1.msra.mxu0 %v4816
    %5088 = vmatprep.subr.mxu0 %v4819
    %5089 = vmatpush1.msra.mxu0 %v4818
    %5090 = vmatprep.subr.mxu0 %v4821
    %5091 = vmatpush1.msra.mxu0 %v4820
    %5092 = vmatprep.subr.mxu0 %v4823
    %5093 = vmatpush1.msra.mxu0 %v4822
    %5094 = vmatprep.subr.mxu0 %v4825
    %5095 = vmatpush1.msra.mxu0 %v4824
    %5096 = vmatprep.subr.mxu0 %v4827
    %5097 = vmatpush1.msra.mxu0 %v4826
    %5098 = vmatprep.subr.mxu0 %v4829
    %5099 = vmatpush1.msra.mxu0 %v4828
    %5100 = vmatprep.subr.mxu0 %v4831
    %5101 = vmatpush1.msra.mxu0 %v4830
    %5102 = vmatprep.subr.mxu0 %v4833
    %5103 = vmatpush1.msra.mxu0 %v4832
    %5104 = vmatprep.subr.mxu0 %v4835
    %5105 = vmatpush1.msra.mxu0 %v4834
    %5106 = vmatprep.subr.mxu0 %v4837
    %5107 = vmatpush1.msra.mxu0 %v4836
    %5108 = vmatprep.subr.mxu0 %v4839
    %5109 = vmatpush1.msra.mxu0 %v4838
    %5110 = vmatprep.subr.mxu0 %v4841
    %5111 = vmatpush1.msra.mxu0 %v4840
    %5112 = vmatprep.subr.mxu0 %v4843
    %5113 = vmatpush1.msra.mxu0 %v4842
    %5114 = vmatprep.subr.mxu0 %v4845
    %5115 = vmatpush1.msra.mxu0 %v4844
    %5116 = vmatprep.subr.mxu0 %v4847
    %5117 = vmatpush1.msra.mxu0 %v4846
    %5118 = vmatprep.subr.mxu0 %v4849
    %5119 = vmatpush1.msra.mxu0 %v4848
    %5120 = vmatprep.subr.mxu0 %v4851
    %5121 = vmatpush1.msra.mxu0 %v4850
    %5122 = vmatprep.subr.mxu0 %v4853
    %5123 = vmatpush1.msra.mxu0 %v4852
    %5124 = vmatprep.subr.mxu0 %v4855
    %5125 = vmatpush1.msra.mxu0 %v4854
    %5126 = vmatprep.subr.mxu0 %v4857
    %5127 = vmatpush1.msra.mxu0 %v4856
    %5128 = vmatprep.subr.mxu0 %v4859
    %5129 = vmatpush1.msra.mxu0 %v4858
    %5130 = vmatprep.subr.mxu0 %v4861
    %5131 = vmatpush1.msra.mxu0 %v4860
    %5132 = vmatprep.subr.mxu0 %v4863
    %5133 = vmatpush1.msra.mxu0 %v4862
    %5134 = vmatprep.subr.mxu0 %v4865
    %5135 = vmatpush1.msra.mxu0 %v4864
    %5136 = vmatprep.subr.mxu0 %v4867
    %5137 = vmatpush1.msra.mxu0 %v4866
    %5138 = vmatprep.mubr.f32.mxu0 %v4665
    %5139 = vmatmul.mubr.f32.gmra.mrb[0].mxu0 %v4664
    %v5140 = vpop.f32.mrb[0].mxu0
    %v5141 = vadd.f32 %v5070, %v5140
    %v5142 = vpop.f32.mrb[0].mxu0
    %v5143 = vadd.f32 %v5072, %v5142
    %5144 = vdwg.mxu0
    %5145 = vmatprep.subr.mxu0 %v4869
    %5146 = vmatpush1.msra.mxu0 %v4868
    %5147 = vmatprep.subr.mxu0 %v4871
    %5148 = vmatpush1.msra.mxu0 %v4870
    %5149 = vmatprep.subr.mxu0 %v4873
    %5150 = vmatpush1.msra.mxu0 %v4872
    %5151 = vmatprep.subr.mxu0 %v4875
    %5152 = vmatpush1.msra.mxu0 %v4874
    %5153 = vmatprep.subr.mxu0 %v4877
    %5154 = vmatpush1.msra.mxu0 %v4876
    %5155 = vmatprep.subr.mxu0 %v4879
    %5156 = vmatpush1.msra.mxu0 %v4878
    %5157 = vmatprep.subr.mxu0 %v4881
    %5158 = vmatpush1.msra.mxu0 %v4880
    %5159 = vmatprep.subr.mxu0 %v4883
    %5160 = vmatpush1.msra.mxu0 %v4882
    %5161 = vmatprep.subr.mxu0 %v4885
    %5162 = vmatpush1.msra.mxu0 %v4884
    %5163 = vmatprep.subr.mxu0 %v4887
    %5164 = vmatpush1.msra.mxu0 %v4886
    %5165 = vmatprep.subr.mxu0 %v4889
    %5166 = vmatpush1.msra.mxu0 %v4888
    %5167 = vmatprep.subr.mxu0 %v4891
    %5168 = vmatpush1.msra.mxu0 %v4890
    %5169 = vmatprep.subr.mxu0 %v4893
    %5170 = vmatpush1.msra.mxu0 %v4892
    %5171 = vmatprep.subr.mxu0 %v4895
    %5172 = vmatpush1.msra.mxu0 %v4894
    %5173 = vmatprep.subr.mxu0 %v4897
    %5174 = vmatpush1.msra.mxu0 %v4896
    %5175 = vmatprep.subr.mxu0 %v4899
    %5176 = vmatpush1.msra.mxu0 %v4898
    %5177 = vmatprep.subr.mxu0 %v4901
    %5178 = vmatpush1.msra.mxu0 %v4900
    %5179 = vmatprep.subr.mxu0 %v4903
    %5180 = vmatpush1.msra.mxu0 %v4902
    %5181 = vmatprep.subr.mxu0 %v4905
    %5182 = vmatpush1.msra.mxu0 %v4904
    %5183 = vmatprep.subr.mxu0 %v4907
    %5184 = vmatpush1.msra.mxu0 %v4906
    %5185 = vmatprep.subr.mxu0 %v4909
    %5186 = vmatpush1.msra.mxu0 %v4908
    %5187 = vmatprep.subr.mxu0 %v4911
    %5188 = vmatpush1.msra.mxu0 %v4910
    %5189 = vmatprep.subr.mxu0 %v4913
    %5190 = vmatpush1.msra.mxu0 %v4912
    %5191 = vmatprep.subr.mxu0 %v4915
    %5192 = vmatpush1.msra.mxu0 %v4914
    %5193 = vmatprep.subr.mxu0 %v4917
    %5194 = vmatpush1.msra.mxu0 %v4916
    %5195 = vmatprep.subr.mxu0 %v4919
    %5196 = vmatpush1.msra.mxu0 %v4918
    %5197 = vmatprep.subr.mxu0 %v4921
    %5198 = vmatpush1.msra.mxu0 %v4920
    %5199 = vmatprep.subr.mxu0 %v4923
    %5200 = vmatpush1.msra.mxu0 %v4922
    %5201 = vmatprep.subr.mxu0 %v4925
    %5202 = vmatpush1.msra.mxu0 %v4924
    %5203 = vmatprep.subr.mxu0 %v4927
    %5204 = vmatpush1.msra.mxu0 %v4926
    %5205 = vmatprep.subr.mxu0 %v4929
    %5206 = vmatpush1.msra.mxu0 %v4928
    %5207 = vmatprep.subr.mxu0 %v4931
    %5208 = vmatpush1.msra.mxu0 %v4930
    %5209 = vmatprep.mubr.f32.mxu0 %v4667
    %5210 = vmatmul.mubr.f32.gmra.mrb[0].mxu0 %v4666
    %v5211 = vpop.f32.mrb[0].mxu0
    %v5212 = vadd.f32 %v5141, %v5211
    %v5213 = vpop.f32.mrb[0].mxu0
    %v5214 = vadd.f32 %v5143, %v5213
    %5215 = vdwg.mxu0
    %5216 = vst [vmem:[%s7] sm:$0xff] %v5212
    %5217 = vst [vmem:[%s7 + $0x8] sm:$0xff] %v5214
    %v5218 = vld [vmem:[#allocation3] sm:$0xff]
    %v5219 = vld [vmem:[#allocation3 + $0x8] sm:$0xff]
    %v5220 = vld [vmem:[#allocation3 + $0x10] sm:$0xff]
    %v5221 = vld [vmem:[#allocation3 + $0x18] sm:$0xff]
    %v5222 = vld [vmem:[#allocation3 + $0x20] sm:$0xff]
    %v5223 = vld [vmem:[#allocation3 + $0x28] sm:$0xff]
    %v5224 = vld [vmem:[#allocation3 + $0x30] sm:$0xff]
    %v5225 = vld [vmem:[#allocation3 + $0x38] sm:$0xff]
    %v5226 = vld [vmem:[#allocation3 + $0x40] sm:$0xff]
    %v5227 = vld [vmem:[#allocation3 + $0x48] sm:$0xff]
    %v5228 = vld [vmem:[#allocation3 + $0x50] sm:$0xff]
    %v5229 = vld [vmem:[#allocation3 + $0x58] sm:$0xff]
    %v5230 = vld [vmem:[#allocation3 + $0x60] sm:$0xff]
    %v5231 = vld [vmem:[#allocation3 + $0x68] sm:$0xff]
    %v5232 = vld [vmem:[#allocation3 + $0x70] sm:$0xff]
    %v5233 = vld [vmem:[#allocation3 + $0x78] sm:$0xff]
    %v5234 = vld [vmem:[#allocation3 + $0x80] sm:$0xff]
    %v5235 = vld [vmem:[#allocation3 + $0x88] sm:$0xff]
    %v5236 = vld [vmem:[#allocation3 + $0x90] sm:$0xff]
    %v5237 = vld [vmem:[#allocation3 + $0x98] sm:$0xff]
    %v5238 = vld [vmem:[#allocation3 + $0xa0] sm:$0xff]
    %v5239 = vld [vmem:[#allocation3 + $0xa8] sm:$0xff]
    %v5240 = vld [vmem:[#allocation3 + $0xb0] sm:$0xff]
    %v5241 = vld [vmem:[#allocation3 + $0xb8] sm:$0xff]
    %v5242 = vld [vmem:[#allocation3 + $0xc0] sm:$0xff]
    %v5243 = vld [vmem:[#allocation3 + $0xc8] sm:$0xff]
    %v5244 = vld [vmem:[#allocation3 + $0xd0] sm:$0xff]
    %v5245 = vld [vmem:[#allocation3 + $0xd8] sm:$0xff]
    %v5246 = vld [vmem:[#allocation3 + $0xe0] sm:$0xff]
    %v5247 = vld [vmem:[#allocation3 + $0xe8] sm:$0xff]
    %v5248 = vld [vmem:[#allocation3 + $0xf0] sm:$0xff]
    %v5249 = vld [vmem:[#allocation3 + $0xf8] sm:$0xff]
    %v5250 = vld [vmem:[#allocation3 + $0x100] sm:$0xff]
    %v5251 = vld [vmem:[#allocation3 + $0x108] sm:$0xff]
    %v5252 = vld [vmem:[#allocation3 + $0x110] sm:$0xff]
    %v5253 = vld [vmem:[#allocation3 + $0x118] sm:$0xff]
    %v5254 = vld [vmem:[#allocation3 + $0x120] sm:$0xff]
    %v5255 = vld [vmem:[#allocation3 + $0x128] sm:$0xff]
    %v5256 = vld [vmem:[#allocation3 + $0x130] sm:$0xff]
    %v5257 = vld [vmem:[#allocation3 + $0x138] sm:$0xff]
    %v5258 = vld [vmem:[#allocation3 + $0x140] sm:$0xff]
    %v5259 = vld [vmem:[#allocation3 + $0x148] sm:$0xff]
    %v5260 = vld [vmem:[#allocation3 + $0x150] sm:$0xff]
    %v5261 = vld [vmem:[#allocation3 + $0x158] sm:$0xff]
    %v5262 = vld [vmem:[#allocation3 + $0x160] sm:$0xff]
    %v5263 = vld [vmem:[#allocation3 + $0x168] sm:$0xff]
    %v5264 = vld [vmem:[#allocation3 + $0x170] sm:$0xff]
    %v5265 = vld [vmem:[#allocation3 + $0x178] sm:$0xff]
    %v5266 = vld [vmem:[#allocation3 + $0x180] sm:$0xff]
    %v5267 = vld [vmem:[#allocation3 + $0x188] sm:$0xff]
    %v5268 = vld [vmem:[#allocation3 + $0x190] sm:$0xff]
    %v5269 = vld [vmem:[#allocation3 + $0x198] sm:$0xff]
    %v5270 = vld [vmem:[#allocation3 + $0x1a0] sm:$0xff]
    %v5271 = vld [vmem:[#allocation3 + $0x1a8] sm:$0xff]
    %v5272 = vld [vmem:[#allocation3 + $0x1b0] sm:$0xff]
    %v5273 = vld [vmem:[#allocation3 + $0x1b8] sm:$0xff]
    %v5274 = vld [vmem:[#allocation3 + $0x1c0] sm:$0xff]
    %v5275 = vld [vmem:[#allocation3 + $0x1c8] sm:$0xff]
    %v5276 = vld [vmem:[#allocation3 + $0x1d0] sm:$0xff]
    %v5277 = vld [vmem:[#allocation3 + $0x1d8] sm:$0xff]
    %v5278 = vld [vmem:[#allocation3 + $0x1e0] sm:$0xff]
    %v5279 = vld [vmem:[#allocation3 + $0x1e8] sm:$0xff]
    %v5280 = vld [vmem:[#allocation3 + $0x1f0] sm:$0xff]
    %v5281 = vld [vmem:[#allocation3 + $0x1f8] sm:$0xff]
    %v5282 = vld [vmem:[#allocation3 + $0x200] sm:$0xff]
    %v5283 = vld [vmem:[#allocation3 + $0x208] sm:$0xff]
    %v5284 = vld [vmem:[#allocation3 + $0x210] sm:$0xff]
    %v5285 = vld [vmem:[#allocation3 + $0x218] sm:$0xff]
    %v5286 = vld [vmem:[#allocation3 + $0x220] sm:$0xff]
    %v5287 = vld [vmem:[#allocation3 + $0x228] sm:$0xff]
    %v5288 = vld [vmem:[#allocation3 + $0x230] sm:$0xff]
    %v5289 = vld [vmem:[#allocation3 + $0x238] sm:$0xff]
    %v5290 = vld [vmem:[#allocation3 + $0x240] sm:$0xff]
    %v5291 = vld [vmem:[#allocation3 + $0x248] sm:$0xff]
    %v5292 = vld [vmem:[#allocation3 + $0x250] sm:$0xff]
    %v5293 = vld [vmem:[#allocation3 + $0x258] sm:$0xff]
    %v5294 = vld [vmem:[#allocation3 + $0x260] sm:$0xff]
    %v5295 = vld [vmem:[#allocation3 + $0x268] sm:$0xff]
    %v5296 = vld [vmem:[#allocation3 + $0x270] sm:$0xff]
    %v5297 = vld [vmem:[#allocation3 + $0x278] sm:$0xff]
    %v5298 = vld [vmem:[#allocation3 + $0x280] sm:$0xff]
    %v5299 = vld [vmem:[#allocation3 + $0x288] sm:$0xff]
    %v5300 = vld [vmem:[#allocation3 + $0x290] sm:$0xff]
    %v5301 = vld [vmem:[#allocation3 + $0x298] sm:$0xff]
    %v5302 = vld [vmem:[#allocation3 + $0x2a0] sm:$0xff]
    %v5303 = vld [vmem:[#allocation3 + $0x2a8] sm:$0xff]
    %v5304 = vld [vmem:[#allocation3 + $0x2b0] sm:$0xff]
    %v5305 = vld [vmem:[#allocation3 + $0x2b8] sm:$0xff]
    %v5306 = vld [vmem:[#allocation3 + $0x2c0] sm:$0xff]
    %v5307 = vld [vmem:[#allocation3 + $0x2c8] sm:$0xff]
    %v5308 = vld [vmem:[#allocation3 + $0x2d0] sm:$0xff]
    %v5309 = vld [vmem:[#allocation3 + $0x2d8] sm:$0xff]
    %v5310 = vld [vmem:[#allocation3 + $0x2e0] sm:$0xff]
    %v5311 = vld [vmem:[#allocation3 + $0x2e8] sm:$0xff]
    %v5312 = vld [vmem:[#allocation3 + $0x2f0] sm:$0xff]
    %v5313 = vld [vmem:[#allocation3 + $0x2f8] sm:$0xff]
    %v5314 = vld [vmem:[#allocation3 + $0x300] sm:$0xff]
    %v5315 = vld [vmem:[#allocation3 + $0x308] sm:$0xff]
    %v5316 = vld [vmem:[#allocation3 + $0x310] sm:$0xff]
    %v5317 = vld [vmem:[#allocation3 + $0x318] sm:$0xff]
    %v5318 = vld [vmem:[#allocation3 + $0x320] sm:$0xff]
    %v5319 = vld [vmem:[#allocation3 + $0x328] sm:$0xff]
    %v5320 = vld [vmem:[#allocation3 + $0x330] sm:$0xff]
    %v5321 = vld [vmem:[#allocation3 + $0x338] sm:$0xff]
    %v5322 = vld [vmem:[#allocation3 + $0x340] sm:$0xff]
    %v5323 = vld [vmem:[#allocation3 + $0x348] sm:$0xff]
    %v5324 = vld [vmem:[#allocation3 + $0x350] sm:$0xff]
    %v5325 = vld [vmem:[#allocation3 + $0x358] sm:$0xff]
    %v5326 = vld [vmem:[#allocation3 + $0x360] sm:$0xff]
    %v5327 = vld [vmem:[#allocation3 + $0x368] sm:$0xff]
    %v5328 = vld [vmem:[#allocation3 + $0x370] sm:$0xff]
    %v5329 = vld [vmem:[#allocation3 + $0x378] sm:$0xff]
    %v5330 = vld [vmem:[#allocation3 + $0x380] sm:$0xff]
    %v5331 = vld [vmem:[#allocation3 + $0x388] sm:$0xff]
    %v5332 = vld [vmem:[#allocation3 + $0x390] sm:$0xff]
    %v5333 = vld [vmem:[#allocation3 + $0x398] sm:$0xff]
    %v5334 = vld [vmem:[#allocation3 + $0x3a0] sm:$0xff]
    %v5335 = vld [vmem:[#allocation3 + $0x3a8] sm:$0xff]
    %v5336 = vld [vmem:[#allocation3 + $0x3b0] sm:$0xff]
    %v5337 = vld [vmem:[#allocation3 + $0x3b8] sm:$0xff]
    %v5338 = vld [vmem:[#allocation3 + $0x3c0] sm:$0xff]
    %v5339 = vld [vmem:[#allocation3 + $0x3c8] sm:$0xff]
    %v5340 = vld [vmem:[#allocation3 + $0x3d0] sm:$0xff]
    %v5341 = vld [vmem:[#allocation3 + $0x3d8] sm:$0xff]
    %v5342 = vld [vmem:[#allocation3 + $0x3e0] sm:$0xff]
    %v5343 = vld [vmem:[#allocation3 + $0x3e8] sm:$0xff]
    %v5344 = vld [vmem:[#allocation3 + $0x3f0] sm:$0xff]
    %v5345 = vld [vmem:[#allocation3 + $0x3f8] sm:$0xff]
    %v5346 = vld [vmem:[#allocation3 + $0x400] sm:$0xff]
    %v5347 = vld [vmem:[#allocation3 + $0x408] sm:$0xff]
    %v5348 = vld [vmem:[#allocation3 + $0x410] sm:$0xff]
    %v5349 = vld [vmem:[#allocation3 + $0x418] sm:$0xff]
    %v5350 = vld [vmem:[#allocation3 + $0x420] sm:$0xff]
    %v5351 = vld [vmem:[#allocation3 + $0x428] sm:$0xff]
    %v5352 = vld [vmem:[#allocation3 + $0x430] sm:$0xff]
    %v5353 = vld [vmem:[#allocation3 + $0x438] sm:$0xff]
    %v5354 = vld [vmem:[#allocation3 + $0x440] sm:$0xff]
    %v5355 = vld [vmem:[#allocation3 + $0x448] sm:$0xff]
    %v5356 = vld [vmem:[#allocation3 + $0x450] sm:$0xff]
    %v5357 = vld [vmem:[#allocation3 + $0x458] sm:$0xff]
    %v5358 = vld [vmem:[#allocation3 + $0x460] sm:$0xff]
    %v5359 = vld [vmem:[#allocation3 + $0x468] sm:$0xff]
    %v5360 = vld [vmem:[#allocation3 + $0x470] sm:$0xff]
    %v5361 = vld [vmem:[#allocation3 + $0x478] sm:$0xff]
    %v5362 = vld [vmem:[#allocation3 + $0x480] sm:$0xff]
    %v5363 = vld [vmem:[#allocation3 + $0x488] sm:$0xff]
    %v5364 = vld [vmem:[#allocation3 + $0x490] sm:$0xff]
    %v5365 = vld [vmem:[#allocation3 + $0x498] sm:$0xff]
    %v5366 = vld [vmem:[#allocation3 + $0x4a0] sm:$0xff]
    %v5367 = vld [vmem:[#allocation3 + $0x4a8] sm:$0xff]
    %v5368 = vld [vmem:[#allocation3 + $0x4b0] sm:$0xff]
    %v5369 = vld [vmem:[#allocation3 + $0x4b8] sm:$0xff]
    %v5370 = vld [vmem:[#allocation3 + $0x4c0] sm:$0xff]
    %v5371 = vld [vmem:[#allocation3 + $0x4c8] sm:$0xff]
    %v5372 = vld [vmem:[#allocation3 + $0x4d0] sm:$0xff]
    %v5373 = vld [vmem:[#allocation3 + $0x4d8] sm:$0xff]
    %v5374 = vld [vmem:[#allocation3 + $0x4e0] sm:$0xff]
    %v5375 = vld [vmem:[#allocation3 + $0x4e8] sm:$0xff]
    %v5376 = vld [vmem:[#allocation3 + $0x4f0] sm:$0xff]
    %v5377 = vld [vmem:[#allocation3 + $0x4f8] sm:$0xff]
    %v5378 = vld [vmem:[#allocation3 + $0x500] sm:$0xff]
    %v5379 = vld [vmem:[#allocation3 + $0x508] sm:$0xff]
    %v5380 = vld [vmem:[#allocation3 + $0x510] sm:$0xff]
    %v5381 = vld [vmem:[#allocation3 + $0x518] sm:$0xff]
    %v5382 = vld [vmem:[#allocation3 + $0x520] sm:$0xff]
    %v5383 = vld [vmem:[#allocation3 + $0x528] sm:$0xff]
    %v5384 = vld [vmem:[#allocation3 + $0x530] sm:$0xff]
    %v5385 = vld [vmem:[#allocation3 + $0x538] sm:$0xff]
    %v5386 = vld [vmem:[#allocation3 + $0x540] sm:$0xff]
    %v5387 = vld [vmem:[#allocation3 + $0x548] sm:$0xff]
    %v5388 = vld [vmem:[#allocation3 + $0x550] sm:$0xff]
    %v5389 = vld [vmem:[#allocation3 + $0x558] sm:$0xff]
    %v5390 = vld [vmem:[#allocation3 + $0x560] sm:$0xff]
    %v5391 = vld [vmem:[#allocation3 + $0x568] sm:$0xff]
    %v5392 = vld [vmem:[#allocation3 + $0x570] sm:$0xff]
    %v5393 = vld [vmem:[#allocation3 + $0x578] sm:$0xff]
    %v5394 = vld [vmem:[#allocation3 + $0x580] sm:$0xff]
    %v5395 = vld [vmem:[#allocation3 + $0x588] sm:$0xff]
    %v5396 = vld [vmem:[#allocation3 + $0x590] sm:$0xff]
    %v5397 = vld [vmem:[#allocation3 + $0x598] sm:$0xff]
    %v5398 = vld [vmem:[#allocation3 + $0x5a0] sm:$0xff]
    %v5399 = vld [vmem:[#allocation3 + $0x5a8] sm:$0xff]
    %v5400 = vld [vmem:[#allocation3 + $0x5b0] sm:$0xff]
    %v5401 = vld [vmem:[#allocation3 + $0x5b8] sm:$0xff]
    %v5402 = vld [vmem:[#allocation3 + $0x5c0] sm:$0xff]
    %v5403 = vld [vmem:[#allocation3 + $0x5c8] sm:$0xff]
    %v5404 = vld [vmem:[#allocation3 + $0x5d0] sm:$0xff]
    %v5405 = vld [vmem:[#allocation3 + $0x5d8] sm:$0xff]
    %v5406 = vld [vmem:[#allocation3 + $0x5e0] sm:$0xff]
    %v5407 = vld [vmem:[#allocation3 + $0x5e8] sm:$0xff]
    %v5408 = vld [vmem:[#allocation3 + $0x5f0] sm:$0xff]
    %v5409 = vld [vmem:[#allocation3 + $0x5f8] sm:$0xff]
    %v5410 = vld [vmem:[#allocation3 + $0x600] sm:$0xff]
    %v5411 = vld [vmem:[#allocation3 + $0x608] sm:$0xff]
    %v5412 = vld [vmem:[#allocation3 + $0x610] sm:$0xff]
    %v5413 = vld [vmem:[#allocation3 + $0x618] sm:$0xff]
    %v5414 = vld [vmem:[#allocation3 + $0x620] sm:$0xff]
    %v5415 = vld [vmem:[#allocation3 + $0x628] sm:$0xff]
    %v5416 = vld [vmem:[#allocation3 + $0x630] sm:$0xff]
    %v5417 = vld [vmem:[#allocation3 + $0x638] sm:$0xff]
    %v5418 = vld [vmem:[#allocation3 + $0x640] sm:$0xff]
    %v5419 = vld [vmem:[#allocation3 + $0x648] sm:$0xff]
    %v5420 = vld [vmem:[#allocation3 + $0x650] sm:$0xff]
    %v5421 = vld [vmem:[#allocation3 + $0x658] sm:$0xff]
    %v5422 = vld [vmem:[#allocation3 + $0x660] sm:$0xff]
    %v5423 = vld [vmem:[#allocation3 + $0x668] sm:$0xff]
    %v5424 = vld [vmem:[#allocation3 + $0x670] sm:$0xff]
    %v5425 = vld [vmem:[#allocation3 + $0x678] sm:$0xff]
    %v5426 = vld [vmem:[#allocation3 + $0x680] sm:$0xff]
    %v5427 = vld [vmem:[#allocation3 + $0x688] sm:$0xff]
    %v5428 = vld [vmem:[#allocation3 + $0x690] sm:$0xff]
    %v5429 = vld [vmem:[#allocation3 + $0x698] sm:$0xff]
    %v5430 = vld [vmem:[#allocation3 + $0x6a0] sm:$0xff]
    %v5431 = vld [vmem:[#allocation3 + $0x6a8] sm:$0xff]
    %v5432 = vld [vmem:[#allocation3 + $0x6b0] sm:$0xff]
    %v5433 = vld [vmem:[#allocation3 + $0x6b8] sm:$0xff]
    %v5434 = vld [vmem:[#allocation3 + $0x6c0] sm:$0xff]
    %v5435 = vld [vmem:[#allocation3 + $0x6c8] sm:$0xff]
    %v5436 = vld [vmem:[#allocation3 + $0x6d0] sm:$0xff]
    %v5437 = vld [vmem:[#allocation3 + $0x6d8] sm:$0xff]
    %v5438 = vld [vmem:[#allocation3 + $0x6e0] sm:$0xff]
    %v5439 = vld [vmem:[#allocation3 + $0x6e8] sm:$0xff]
    %v5440 = vld [vmem:[#allocation3 + $0x6f0] sm:$0xff]
    %v5441 = vld [vmem:[#allocation3 + $0x6f8] sm:$0xff]
    %v5442 = vld [vmem:[#allocation3 + $0x700] sm:$0xff]
    %v5443 = vld [vmem:[#allocation3 + $0x708] sm:$0xff]
    %v5444 = vld [vmem:[#allocation3 + $0x710] sm:$0xff]
    %v5445 = vld [vmem:[#allocation3 + $0x718] sm:$0xff]
    %v5446 = vld [vmem:[#allocation3 + $0x720] sm:$0xff]
    %v5447 = vld [vmem:[#allocation3 + $0x728] sm:$0xff]
    %v5448 = vld [vmem:[#allocation3 + $0x730] sm:$0xff]
    %v5449 = vld [vmem:[#allocation3 + $0x738] sm:$0xff]
    %v5450 = vld [vmem:[#allocation3 + $0x740] sm:$0xff]
    %v5451 = vld [vmem:[#allocation3 + $0x748] sm:$0xff]
    %v5452 = vld [vmem:[#allocation3 + $0x750] sm:$0xff]
    %v5453 = vld [vmem:[#allocation3 + $0x758] sm:$0xff]
    %v5454 = vld [vmem:[#allocation3 + $0x760] sm:$0xff]
    %v5455 = vld [vmem:[#allocation3 + $0x768] sm:$0xff]
    %v5456 = vld [vmem:[#allocation3 + $0x770] sm:$0xff]
    %v5457 = vld [vmem:[#allocation3 + $0x778] sm:$0xff]
    %v5458 = vld [vmem:[#allocation3 + $0x780] sm:$0xff]
    %v5459 = vld [vmem:[#allocation3 + $0x788] sm:$0xff]
    %v5460 = vld [vmem:[#allocation3 + $0x790] sm:$0xff]
    %v5461 = vld [vmem:[#allocation3 + $0x798] sm:$0xff]
    %v5462 = vld [vmem:[#allocation3 + $0x7a0] sm:$0xff]
    %v5463 = vld [vmem:[#allocation3 + $0x7a8] sm:$0xff]
    %v5464 = vld [vmem:[#allocation3 + $0x7b0] sm:$0xff]
    %v5465 = vld [vmem:[#allocation3 + $0x7b8] sm:$0xff]
    %v5466 = vld [vmem:[#allocation3 + $0x7c0] sm:$0xff]
    %v5467 = vld [vmem:[#allocation3 + $0x7c8] sm:$0xff]
    %v5468 = vld [vmem:[#allocation3 + $0x7d0] sm:$0xff]
    %v5469 = vld [vmem:[#allocation3 + $0x7d8] sm:$0xff]
    %v5470 = vld [vmem:[#allocation3 + $0x7e0] sm:$0xff]
    %v5471 = vld [vmem:[#allocation3 + $0x7e8] sm:$0xff]
    %v5472 = vld [vmem:[#allocation3 + $0x7f0] sm:$0xff]
    %v5473 = vld [vmem:[#allocation3 + $0x7f8] sm:$0xff]
    %5474 = vmatprep.subr.mxu0 %v5219
    %5475 = vmatpush1.msra.mxu0 %v5218
    %5476 = vmatprep.subr.mxu0 %v5221
    %5477 = vmatpush1.msra.mxu0 %v5220
    %5478 = vmatprep.subr.mxu0 %v5223
    %5479 = vmatpush1.msra.mxu0 %v5222
    %5480 = vmatprep.subr.mxu0 %v5225
    %5481 = vmatpush1.msra.mxu0 %v5224
    %5482 = vmatprep.subr.mxu0 %v5227
    %5483 = vmatpush1.msra.mxu0 %v5226
    %5484 = vmatprep.subr.mxu0 %v5229
    %5485 = vmatpush1.msra.mxu0 %v5228
    %5486 = vmatprep.subr.mxu0 %v5231
    %5487 = vmatpush1.msra.mxu0 %v5230
    %5488 = vmatprep.subr.mxu0 %v5233
    %5489 = vmatpush1.msra.mxu0 %v5232
    %5490 = vmatprep.subr.mxu0 %v5235
    %5491 = vmatpush1.msra.mxu0 %v5234
    %5492 = vmatprep.subr.mxu0 %v5237
    %5493 = vmatpush1.msra.mxu0 %v5236
    %5494 = vmatprep.subr.mxu0 %v5239
    %5495 = vmatpush1.msra.mxu0 %v5238
    %5496 = vmatprep.subr.mxu0 %v5241
    %5497 = vmatpush1.msra.mxu0 %v5240
    %5498 = vmatprep.subr.mxu0 %v5243
    %5499 = vmatpush1.msra.mxu0 %v5242
    %5500 = vmatprep.subr.mxu0 %v5245
    %5501 = vmatpush1.msra.mxu0 %v5244
    %5502 = vmatprep.subr.mxu0 %v5247
    %5503 = vmatpush1.msra.mxu0 %v5246
    %5504 = vmatprep.subr.mxu0 %v5249
    %5505 = vmatpush1.msra.mxu0 %v5248
    %5506 = vmatprep.subr.mxu0 %v5251
    %5507 = vmatpush1.msra.mxu0 %v5250
    %5508 = vmatprep.subr.mxu0 %v5253
    %5509 = vmatpush1.msra.mxu0 %v5252
    %5510 = vmatprep.subr.mxu0 %v5255
    %5511 = vmatpush1.msra.mxu0 %v5254
    %5512 = vmatprep.subr.mxu0 %v5257
    %5513 = vmatpush1.msra.mxu0 %v5256
    %5514 = vmatprep.subr.mxu0 %v5259
    %5515 = vmatpush1.msra.mxu0 %v5258
    %5516 = vmatprep.subr.mxu0 %v5261
    %5517 = vmatpush1.msra.mxu0 %v5260
    %5518 = vmatprep.subr.mxu0 %v5263
    %5519 = vmatpush1.msra.mxu0 %v5262
    %5520 = vmatprep.subr.mxu0 %v5265
    %5521 = vmatpush1.msra.mxu0 %v5264
    %5522 = vmatprep.subr.mxu0 %v5267
    %5523 = vmatpush1.msra.mxu0 %v5266
    %5524 = vmatprep.subr.mxu0 %v5269
    %5525 = vmatpush1.msra.mxu0 %v5268
    %5526 = vmatprep.subr.mxu0 %v5271
    %5527 = vmatpush1.msra.mxu0 %v5270
    %5528 = vmatprep.subr.mxu0 %v5273
    %5529 = vmatpush1.msra.mxu0 %v5272
    %5530 = vmatprep.subr.mxu0 %v5275
    %5531 = vmatpush1.msra.mxu0 %v5274
    %5532 = vmatprep.subr.mxu0 %v5277
    %5533 = vmatpush1.msra.mxu0 %v5276
    %5534 = vmatprep.subr.mxu0 %v5279
    %5535 = vmatpush1.msra.mxu0 %v5278
    %5536 = vmatprep.subr.mxu0 %v5281
    %5537 = vmatpush1.msra.mxu0 %v5280
    %5538 = vmatprep.mubr.f32.mxu0 %v4669
    %5539 = vmatmul.mubr.f32.gmra.mrb[0].mxu0 %v4668
    %v5540 = vpop.f32.mrb[0].mxu0
    %v5541 = vadd.f32 0.0, %v5540
    %v5542 = vpop.f32.mrb[0].mxu0
    %v5543 = vadd.f32 0.0, %v5542
    %5544 = vdwg.mxu0
    %5545 = vmatprep.subr.mxu0 %v5283
    %5546 = vmatpush1.msra.mxu0 %v5282
    %5547 = vmatprep.subr.mxu0 %v5285
    %5548 = vmatpush1.msra.mxu0 %v5284
    %5549 = vmatprep.subr.mxu0 %v5287
    %5550 = vmatpush1.msra.mxu0 %v5286
    %5551 = vmatprep.subr.mxu0 %v5289
    %5552 = vmatpush1.msra.mxu0 %v5288
    %5553 = vmatprep.subr.mxu0 %v5291
    %5554 = vmatpush1.msra.mxu0 %v5290
    %5555 = vmatprep.subr.mxu0 %v5293
    %5556 = vmatpush1.msra.mxu0 %v5292
    %5557 = vmatprep.subr.mxu0 %v5295
    %5558 = vmatpush1.msra.mxu0 %v5294
    %5559 = vmatprep.subr.mxu0 %v5297
    %5560 = vmatpush1.msra.mxu0 %v5296
    %5561 = vmatprep.subr.mxu0 %v5299
    %5562 = vmatpush1.msra.mxu0 %v5298
    %5563 = vmatprep.subr.mxu0 %v5301
    %5564 = vmatpush1.msra.mxu0 %v5300
    %5565 = vmatprep.subr.mxu0 %v5303
    %5566 = vmatpush1.msra.mxu0 %v5302
    %5567 = vmatprep.subr.mxu0 %v5305
    %5568 = vmatpush1.msra.mxu0 %v5304
    %5569 = vmatprep.subr.mxu0 %v5307
    %5570 = vmatpush1.msra.mxu0 %v5306
    %5571 = vmatprep.subr.mxu0 %v5309
    %5572 = vmatpush1.msra.mxu0 %v5308
    %5573 = vmatprep.subr.mxu0 %v5311
    %5574 = vmatpush1.msra.mxu0 %v5310
    %5575 = vmatprep.subr.mxu0 %v5313
    %5576 = vmatpush1.msra.mxu0 %v5312
    %5577 = vmatprep.subr.mxu0 %v5315
    %5578 = vmatpush1.msra.mxu0 %v5314
    %5579 = vmatprep.subr.mxu0 %v5317
    %5580 = vmatpush1.msra.mxu0 %v5316
    %5581 = vmatprep.subr.mxu0 %v5319
    %5582 = vmatpush1.msra.mxu0 %v5318
    %5583 = vmatprep.subr.mxu0 %v5321
    %5584 = vmatpush1.msra.mxu0 %v5320
    %5585 = vmatprep.subr.mxu0 %v5323
    %5586 = vmatpush1.msra.mxu0 %v5322
    %5587 = vmatprep.subr.mxu0 %v5325
    %5588 = vmatpush1.msra.mxu0 %v5324
    %5589 = vmatprep.subr.mxu0 %v5327
    %5590 = vmatpush1.msra.mxu0 %v5326
    %5591 = vmatprep.subr.mxu0 %v5329
    %5592 = vmatpush1.msra.mxu0 %v5328
    %5593 = vmatprep.subr.mxu0 %v5331
    %5594 = vmatpush1.msra.mxu0 %v5330
    %5595 = vmatprep.subr.mxu0 %v5333
    %5596 = vmatpush1.msra.mxu0 %v5332
    %5597 = vmatprep.subr.mxu0 %v5335
    %5598 = vmatpush1.msra.mxu0 %v5334
    %5599 = vmatprep.subr.mxu0 %v5337
    %5600 = vmatpush1.msra.mxu0 %v5336
    %5601 = vmatprep.subr.mxu0 %v5339
    %5602 = vmatpush1.msra.mxu0 %v5338
    %5603 = vmatprep.subr.mxu0 %v5341
    %5604 = vmatpush1.msra.mxu0 %v5340
    %5605 = vmatprep.subr.mxu0 %v5343
    %5606 = vmatpush1.msra.mxu0 %v5342
    %5607 = vmatprep.subr.mxu0 %v5345
    %5608 = vmatpush1.msra.mxu0 %v5344
    %5609 = vmatprep.mubr.f32.mxu0 %v4671
    %5610 = vmatmul.mubr.f32.gmra.mrb[0].mxu0 %v4670
    %v5611 = vpop.f32.mrb[0].mxu0
    %v5612 = vadd.f32 %v5541, %v5611
    %v5613 = vpop.f32.mrb[0].mxu0
    %v5614 = vadd.f32 %v5543, %v5613
    %5615 = vdwg.mxu0
    %5616 = vmatprep.subr.mxu0 %v5347
    %5617 = vmatpush1.msra.mxu0 %v5346
    %5618 = vmatprep.subr.mxu0 %v5349
    %5619 = vmatpush1.msra.mxu0 %v5348
    %5620 = vmatprep.subr.mxu0 %v5351
    %5621 = vmatpush1.msra.mxu0 %v5350
    %5622 = vmatprep.subr.mxu0 %v5353
    %5623 = vmatpush1.msra.mxu0 %v5352
    %5624 = vmatprep.subr.mxu0 %v5355
    %5625 = vmatpush1.msra.mxu0 %v5354
    %5626 = vmatprep.subr.mxu0 %v5357
    %5627 = vmatpush1.msra.mxu0 %v5356
    %5628 = vmatprep.subr.mxu0 %v5359
    %5629 = vmatpush1.msra.mxu0 %v5358
    %5630 = vmatprep.subr.mxu0 %v5361
    %5631 = vmatpush1.msra.mxu0 %v5360
    %5632 = vmatprep.subr.mxu0 %v5363
    %5633 = vmatpush1.msra.mxu0 %v5362
    %5634 = vmatprep.subr.mxu0 %v5365
    %5635 = vmatpush1.msra.mxu0 %v5364
    %5636 = vmatprep.subr.mxu0 %v5367
    %5637 = vmatpush1.msra.mxu0 %v5366
    %5638 = vmatprep.subr.mxu0 %v5369
    %5639 = vmatpush1.msra.mxu0 %v5368
    %5640 = vmatprep.subr.mxu0 %v5371
    %5641 = vmatpush1.msra.mxu0 %v5370
    %5642 = vmatprep.subr.mxu0 %v5373
    %5643 = vmatpush1.msra.mxu0 %v5372
    %5644 = vmatprep.subr.mxu0 %v5375
    %5645 = vmatpush1.msra.mxu0 %v5374
    %5646 = vmatprep.subr.mxu0 %v5377
    %5647 = vmatpush1.msra.mxu0 %v5376
    %5648 = vmatprep.subr.mxu0 %v5379
    %5649 = vmatpush1.msra.mxu0 %v5378
    %5650 = vmatprep.subr.mxu0 %v5381
    %5651 = vmatpush1.msra.mxu0 %v5380
    %5652 = vmatprep.subr.mxu0 %v5383
    %5653 = vmatpush1.msra.mxu0 %v5382
    %5654 = vmatprep.subr.mxu0 %v5385
    %5655 = vmatpush1.msra.mxu0 %v5384
    %5656 = vmatprep.subr.mxu0 %v5387
    %5657 = vmatpush1.msra.mxu0 %v5386
    %5658 = vmatprep.subr.mxu0 %v5389
    %5659 = vmatpush1.msra.mxu0 %v5388
    %5660 = vmatprep.subr.mxu0 %v5391
    %5661 = vmatpush1.msra.mxu0 %v5390
    %5662 = vmatprep.subr.mxu0 %v5393
    %5663 = vmatpush1.msra.mxu0 %v5392
    %5664 = vmatprep.subr.mxu0 %v5395
    %5665 = vmatpush1.msra.mxu0 %v5394
    %5666 = vmatprep.subr.mxu0 %v5397
    %5667 = vmatpush1.msra.mxu0 %v5396
    %5668 = vmatprep.subr.mxu0 %v5399
    %5669 = vmatpush1.msra.mxu0 %v5398
    %5670 = vmatprep.subr.mxu0 %v5401
    %5671 = vmatpush1.msra.mxu0 %v5400
    %5672 = vmatprep.subr.mxu0 %v5403
    %5673 = vmatpush1.msra.mxu0 %v5402
    %5674 = vmatprep.subr.mxu0 %v5405
    %5675 = vmatpush1.msra.mxu0 %v5404
    %5676 = vmatprep.subr.mxu0 %v5407
    %5677 = vmatpush1.msra.mxu0 %v5406
    %5678 = vmatprep.subr.mxu0 %v5409
    %5679 = vmatpush1.msra.mxu0 %v5408
    %5680 = vmatprep.mubr.f32.mxu0 %v4673
    %5681 = vmatmul.mubr.f32.gmra.mrb[0].mxu0 %v4672
    %v5682 = vpop.f32.mrb[0].mxu0
    %v5683 = vadd.f32 %v5612, %v5682
    %v5684 = vpop.f32.mrb[0].mxu0
    %v5685 = vadd.f32 %v5614, %v5684
    %5686 = vdwg.mxu0
    %5687 = vmatprep.subr.mxu0 %v5411
    %5688 = vmatpush1.msra.mxu0 %v5410
    %5689 = vmatprep.subr.mxu0 %v5413
    %5690 = vmatpush1.msra.mxu0 %v5412
    %5691 = vmatprep.subr.mxu0 %v5415
    %5692 = vmatpush1.msra.mxu0 %v5414
    %5693 = vmatprep.subr.mxu0 %v5417
    %5694 = vmatpush1.msra.mxu0 %v5416
    %5695 = vmatprep.subr.mxu0 %v5419
    %5696 = vmatpush1.msra.mxu0 %v5418
    %5697 = vmatprep.subr.mxu0 %v5421
    %5698 = vmatpush1.msra.mxu0 %v5420
    %5699 = vmatprep.subr.mxu0 %v5423
    %5700 = vmatpush1.msra.mxu0 %v5422
    %5701 = vmatprep.subr.mxu0 %v5425
    %5702 = vmatpush1.msra.mxu0 %v5424
    %5703 = vmatprep.subr.mxu0 %v5427
    %5704 = vmatpush1.msra.mxu0 %v5426
    %5705 = vmatprep.subr.mxu0 %v5429
    %5706 = vmatpush1.msra.mxu0 %v5428
    %5707 = vmatprep.subr.mxu0 %v5431
    %5708 = vmatpush1.msra.mxu0 %v5430
    %5709 = vmatprep.subr.mxu0 %v5433
    %5710 = vmatpush1.msra.mxu0 %v5432
    %5711 = vmatprep.subr.mxu0 %v5435
    %5712 = vmatpush1.msra.mxu0 %v5434
    %5713 = vmatprep.subr.mxu0 %v5437
    %5714 = vmatpush1.msra.mxu0 %v5436
    %5715 = vmatprep.subr.mxu0 %v5439
    %5716 = vmatpush1.msra.mxu0 %v5438
    %5717 = vmatprep.subr.mxu0 %v5441
    %5718 = vmatpush1.msra.mxu0 %v5440
    %5719 = vmatprep.subr.mxu0 %v5443
    %5720 = vmatpush1.msra.mxu0 %v5442
    %5721 = vmatprep.subr.mxu0 %v5445
    %5722 = vmatpush1.msra.mxu0 %v5444
    %5723 = vmatprep.subr.mxu0 %v5447
    %5724 = vmatpush1.msra.mxu0 %v5446
    %5725 = vmatprep.subr.mxu0 %v5449
    %5726 = vmatpush1.msra.mxu0 %v5448
    %5727 = vmatprep.subr.mxu0 %v5451
    %5728 = vmatpush1.msra.mxu0 %v5450
    %5729 = vmatprep.subr.mxu0 %v5453
    %5730 = vmatpush1.msra.mxu0 %v5452
    %5731 = vmatprep.subr.mxu0 %v5455
    %5732 = vmatpush1.msra.mxu0 %v5454
    %5733 = vmatprep.subr.mxu0 %v5457
    %5734 = vmatpush1.msra.mxu0 %v5456
    %5735 = vmatprep.subr.mxu0 %v5459
    %5736 = vmatpush1.msra.mxu0 %v5458
    %5737 = vmatprep.subr.mxu0 %v5461
    %5738 = vmatpush1.msra.mxu0 %v5460
    %5739 = vmatprep.subr.mxu0 %v5463
    %5740 = vmatpush1.msra.mxu0 %v5462
    %5741 = vmatprep.subr.mxu0 %v5465
    %5742 = vmatpush1.msra.mxu0 %v5464
    %5743 = vmatprep.subr.mxu0 %v5467
    %5744 = vmatpush1.msra.mxu0 %v5466
    %5745 = vmatprep.subr.mxu0 %v5469
    %5746 = vmatpush1.msra.mxu0 %v5468
    %5747 = vmatprep.subr.mxu0 %v5471
    %5748 = vmatpush1.msra.mxu0 %v5470
    %5749 = vmatprep.subr.mxu0 %v5473
    %5750 = vmatpush1.msra.mxu0 %v5472
    %5751 = vmatprep.mubr.f32.mxu0 %v4675
    %5752 = vmatmul.mubr.f32.gmra.mrb[0].mxu0 %v4674
    %v5753 = vpop.f32.mrb[0].mxu0
    %v5754 = vadd.f32 %v5683, %v5753
    %v5755 = vpop.f32.mrb[0].mxu0
    %v5756 = vadd.f32 %v5685, %v5755
    %5757 = vdwg.mxu0
    %s5758 = scalar_lea.vmem %s7, 16
    %5759 = vst [vmem:[%s5758] sm:$0xff] %v5754
    %5760 = vst [vmem:[%s5758 + $0x8] sm:$0xff] %v5756
    // Predicated region
    $region34: #{down_block3d.1} parent=1 // pred_check
      _
    $region35: #{down_block3d.1} parent=1 // pred_check_branch
      %5762 = sbr.rel (0) target = $region37
    $region36: #{down_block3d.1} parent=1 // pred_region
      _
    $region37: #{down_block3d.1} parent=1 // pred_fallthru
      _
    // Predicated region
    $region38: #{down_block3d.1} parent=1 // pred_check
      _
    $region39: #{down_block3d.1} parent=1 // pred_check_branch
      %5764 = sbr.rel (0) target = $region41
    $region40: #{down_block3d.1} parent=1 // pred_region
      _
    $region41: #{down_block3d.1} parent=1 // pred_fallthru
      _
    %5765 = vsyncpa [#allocation4], 1

</llo_original>
